<compile_context>
chip_gen: v7x
topology: tpu7x:2x2x1
jax: 0.10.0
libtpu: 0.0.40
codegen_flags: <defaults>
</compile_context>

<pallas_src>
import jax
import jax.numpy as jnp
from jax.experimental import pallas as pl
from jax.experimental.pallas import tpu as pltpu  # noqa: F401  (TPU backend)

EPS = 1e-5  # PyTorch BatchNorm2d default eps


# ---------------------------------------------------------------------------
# Pallas kernels
# ---------------------------------------------------------------------------
def conv_bn_relu_kernel(p_ref, w_ref, b_ref, g_ref, beta_ref, o_ref):
    """(M, K) im2col slab @ (K, Cout) weight + bias + BN(train) + ReLU."""
    x = jnp.dot(p_ref[...], w_ref[...], preferred_element_type=jnp.float32)
    x = x + b_ref[...]
    inv_m = 1.0 / x.shape[0]
    # One-pass batch statistics over rows == over (N, H, W); biased variance,
    # exactly BatchNorm2d's train-mode normalization statistics.
    mean = jnp.sum(x, axis=0, keepdims=True) * inv_m
    var = jnp.sum(x * x, axis=0, keepdims=True) * inv_m - mean * mean
    y = g_ref[...] * (x - mean) * jax.lax.rsqrt(var + EPS) + beta_ref[...]
    o_ref[...] = jnp.maximum(y, 0.0)  # ReLU


def conv_bn_relu_fc_kernel(p_ref, w_ref, b_ref, g_ref, beta_ref,
                           wfc_ref, sel_ref, bfc_ref, o_ref):
    """Last conv layer + BN + ReLU + Linear(Cout*3*3 -> 1), fully fused."""
    x = jnp.dot(p_ref[...], w_ref[...], preferred_element_type=jnp.float32)
    x = x + b_ref[...]
    inv_m = 1.0 / x.shape[0]
    mean = jnp.sum(x, axis=0, keepdims=True) * inv_m
    var = jnp.sum(x * x, axis=0, keepdims=True) * inv_m - mean * mean
    y = g_ref[...] * (x - mean) * jax.lax.rsqrt(var + EPS) + beta_ref[...]
    y = jnp.maximum(y, 0.0)                                    # (M, Cout)
    # Linear as VPU multiply + reductions (avoids an Nout=1 MXU matmul and a
    # separate pallas_call):
    #   wfc_ref : fc weight re-ordered to (h, w, c) and tiled over the batch,
    #   sel_ref : sel[n, m] = 1 iff slab row m belongs to sample n.
    t = jnp.dot(sel_ref[...], y * wfc_ref[...],
                preferred_element_type=jnp.float32)            # (N, Cout)
    o_ref[...] = jnp.sum(t, axis=1, keepdims=True) + bfc_ref[...]  # (N, 1)


# ---------------------------------------------------------------------------
# Glue (NHWC im2col, weight re-layout) in plain JAX — fused under one jit
# ---------------------------------------------------------------------------
def _round_up(v, m):
    return ((v + m - 1) // m) * m


def _out_hw(h, k=5, stride=2, pad=1):
    return (h + 2 * pad - k) // stride + 1


def extract_patches(x, Ho, Wo, k=5, stride=2, pad=1, k_pad=None):
    """NHWC x -> (N*Ho*Wo, k*k*C [zero-padded to k_pad]) im2col slab.

    Column (feature) order is (kh, kw, cin)."""
    N, H, W, C = x.shape
    xp = jnp.pad(x, ((0, 0), (pad, pad), (pad, pad), (0, 0)))
    cols = []
    for kh in range(k):
        for kw in range(k):
            cols.append(xp[:, kh: kh + stride * (Ho - 1) + 1: stride,
                           kw: kw + stride * (Wo - 1) + 1: stride, :])
    p = jnp.concatenate(cols, axis=-1).reshape(N * Ho * Wo, k * k * C)
    if k_pad is not None and k_pad > p.shape[1]:
        p = jnp.pad(p, ((0, 0), (0, k_pad - p.shape[1])))
    return p


def prep_conv_weight(w, k_pad=None):
    """PyTorch (Cout, Cin, k, k) -> (k*k*Cin [padded], Cout), rows = (kh,kw,cin)."""
    Cout = w.shape[0]
    wm = jnp.transpose(w, (2, 3, 1, 0)).reshape(-1, Cout)
    if k_pad is not None and k_pad > wm.shape[0]:
        wm = jnp.pad(wm, ((0, k_pad - wm.shape[0]), (0, 0)))
    return wm


def full_block(shape):
    return pl.BlockSpec(shape, lambda: (0,) * len(shape))


def conv_bn_relu(x, w, b, gamma, beta):
    """Conv2d(k=5,s=2,p=1) + BatchNorm2d(train) + ReLU.  NHWC -> NHWC."""
    N, H, W, Cin = x.shape
    Cout = w.shape[0]
    Ho, Wo = _out_hw(H), _out_hw(W)
    K = 25 * Cin
    Kp = _round_up(K, 128) if K <= 128 else _round_up(K, 8)
    p = extract_patches(x, Ho, Wo, k_pad=Kp)
    wm = prep_conv_weight(w, k_pad=Kp)
    M = N * Ho * Wo
    out = pl.pallas_call(
        conv_bn_relu_kernel,
        out_shape=jax.ShapeDtypeStruct((M, Cout), jnp.float32),
        in_specs=[full_block((M, Kp)),
                  full_block((Kp, Cout)),
                  full_block((1, Cout)),
                  full_block((1, Cout)),
                  full_block((1, Cout))],
        out_specs=full_block((M, Cout)),
    )(p, wm, b.reshape(1, Cout), gamma.reshape(1, Cout), beta.reshape(1, Cout))
    # rows are already ordered (n, ho, wo) -> this reshape IS the NHWC activation
    return out.reshape(N, Ho, Wo, Cout)


def conv_bn_relu_fc(x, w, b, gamma, beta, fcw, fcb):
    """Last conv+BN+ReLU layer fused with the final Linear.  NHWC -> (N, 1)."""
    N, H, W, Cin = x.shape
    Cout = w.shape[0]
    Ho, Wo = _out_hw(H), _out_hw(W)          # 3, 3 for input_size=65
    K = 25 * Cin
    Kp = _round_up(K, 128) if K <= 128 else _round_up(K, 8)
    p = extract_patches(x, Ho, Wo, k_pad=Kp)
    wm = prep_conv_weight(w, k_pad=Kp)
    M = N * Ho * Wo

    # PyTorch fc weight is (1, Cout*Ho*Wo) flattened in (c, h, w) order;
    # re-order to (h, w, c) so it lines up with the kernel's (n, h, w)-row /
    # channel-lane slab, then tile over the batch.  (output_dim == 1 path.)
    wfc = fcw.reshape(Cout, Ho, Wo).transpose(1, 2, 0).reshape(Ho * Wo, Cout)
    wfc = jnp.tile(wfc, (N, 1))                                       # (M, Cout)
    sel = jnp.repeat(jnp.eye(N, dtype=jnp.float32), Ho * Wo, axis=1)  # (N, M)

    return pl.pallas_call(
        conv_bn_relu_fc_kernel,
        out_shape=jax.ShapeDtypeStruct((N, 1), jnp.float32),
        in_specs=[full_block((M, Kp)),
                  full_block((Kp, Cout)),
                  full_block((1, Cout)),
                  full_block((1, Cout)),
                  full_block((1, Cout)),
                  full_block((M, Cout)),
                  full_block((N, M)),
                  full_block((1, 1))],
        out_specs=full_block((N, 1)),
    )(p, wm, b.reshape(1, Cout), gamma.reshape(1, Cout), beta.reshape(1, Cout),
      wfc, sel, fcb.reshape(1, 1))


# ---------------------------------------------------------------------------
# Parameters (deterministic, mimicking utils.initialize_weights:
#   Conv weight ~ N(0, 0.02), bias = 0; BN gamma ~ N(1, 0.02), beta = 0;
#   Linear weight ~ N(0, 0.02), bias = 0)
# ---------------------------------------------------------------------------
def init_params(key, input_dim=3, output_dim=1):
    chans = [input_dim, 32, 64, 128, 256]
    keys = jax.random.split(key, 9)
    convs = []
    for i in range(4):
        cw = 0.02 * jax.random.normal(keys[2 * i], (chans[i + 1], chans[i], 5, 5),
                                      dtype=jnp.float32)
        cb = jnp.zeros((chans[i + 1],), jnp.float32)
        g = 1.0 + 0.02 * jax.random.normal(keys[2 * i + 1], (chans[i + 1],),
                                           dtype=jnp.float32)
        bt = jnp.zeros((chans[i + 1],), jnp.float32)
        convs.append((cw, cb, g, bt))
    fcw = 0.02 * jax.random.normal(keys[8], (output_dim, 256 * 3 * 3),
                                   dtype=jnp.float32)
    fcb = jnp.zeros((output_dim,), jnp.float32)
    return convs, (fcw, fcb)


def discriminator_forward(x_nchw, convs, fc):
    # Single layout change: PyTorch NCHW -> NHWC; everything stays NHWC after.
    x = jnp.transpose(x_nchw, (0, 2, 3, 1))
    for (w, b, g, bt) in convs[:-1]:
        x = conv_bn_relu(x, w, b, g, bt)
    w, b, g, bt = convs[-1]
    return conv_bn_relu_fc(x, w, b, g, bt, fc[0], fc[1])    # (N, 1)


# ---------------------------------------------------------------------------
if __name__ == "__main__":
    key = jax.random.PRNGKey(0)
    pkey, xkey = jax.random.split(key)
    convs, fc = init_params(pkey, input_dim=3, output_dim=1)

    # input_size=65 so the conv stack ends at 3x3 (fc expects 256*3*3 = 2304).
    x = jax.random.normal(xkey, (2, 3, 65, 65), dtype=jnp.float32)

    fwd = jax.jit(discriminator_forward)
    out = jax.block_until_ready(fwd(x, convs, fc))
    assert out.shape == (2, 1) and out.dtype == jnp.float32
    print("KERNEL_OK")
</pallas_src>

<mosaic_0001>
module attributes {stable_mosaic.version = 11 : i64} {
  func.func @conv_bn_relu_kernel(%arg0: memref<2048x128xf32, #tpu.memory_space<vmem>>, %arg1: memref<128x32xf32, #tpu.memory_space<vmem>>, %arg2: memref<1x32xf32, #tpu.memory_space<vmem>>, %arg3: memref<1x32xf32, #tpu.memory_space<vmem>>, %arg4: memref<1x32xf32, #tpu.memory_space<vmem>>, %arg5: memref<2048x32xf32, #tpu.memory_space<vmem>>) attributes {dimension_semantics = [], scalar_prefetch = 0 : i64, scratch_operands = 0 : i64, tpu.core_type = #tpu.core_type<tc>} {
    %c0 = arith.constant 0 : index
    %c0_0 = arith.constant 0 : index
    %0 = vector.load %arg0[%c0, %c0_0] : memref<2048x128xf32, #tpu.memory_space<vmem>>, vector<2048x128xf32>
    %c0_1 = arith.constant 0 : index
    %c0_2 = arith.constant 0 : index
    %1 = vector.load %arg1[%c0_1, %c0_2] : memref<128x32xf32, #tpu.memory_space<vmem>>, vector<128x32xf32>
    %cst = arith.constant dense<0.000000e+00> : vector<2048x32xf32>
    %2 = tpu.matmul %0, %1, %cst {dimension_numbers = #tpu.dot_dimension_numbers<[1], [0], [0], [1], [0, 0, 1, 1], [], []>} : vector<2048x128xf32>, vector<128x32xf32>, vector<2048x32xf32> -> vector<2048x32xf32>
    %c0_3 = arith.constant 0 : index
    %c0_4 = arith.constant 0 : index
    %3 = vector.load %arg2[%c0_3, %c0_4] : memref<1x32xf32, #tpu.memory_space<vmem>>, vector<1x32xf32>
    %4 = vector.broadcast %3 : vector<1x32xf32> to vector<2048x32xf32>
    %5 = arith.addf %2, %4 : vector<2048x32xf32>
    %cst_5 = arith.constant dense<0.000000e+00> : vector<32xf32>
    %6 = vector.multi_reduction <add>, %5, %cst_5 [0] : vector<2048x32xf32> to vector<32xf32>
    %7 = vector.shape_cast %6 : vector<32xf32> to vector<1x32xf32>
    %cst_6 = arith.constant 4.8828125E-4 : f32
    %8 = vector.broadcast %cst_6 : f32 to vector<1x32xf32>
    %9 = arith.mulf %7, %8 : vector<1x32xf32>
    %10 = arith.mulf %5, %5 : vector<2048x32xf32>
    %cst_7 = arith.constant dense<0.000000e+00> : vector<32xf32>
    %11 = vector.multi_reduction <add>, %10, %cst_7 [0] : vector<2048x32xf32> to vector<32xf32>
    %12 = vector.shape_cast %11 : vector<32xf32> to vector<1x32xf32>
    %cst_8 = arith.constant 4.8828125E-4 : f32
    %13 = vector.broadcast %cst_8 : f32 to vector<1x32xf32>
    %14 = arith.mulf %12, %13 : vector<1x32xf32>
    %15 = arith.mulf %9, %9 : vector<1x32xf32>
    %16 = arith.subf %14, %15 : vector<1x32xf32>
    %c0_9 = arith.constant 0 : index
    %c0_10 = arith.constant 0 : index
    %17 = vector.load %arg3[%c0_9, %c0_10] : memref<1x32xf32, #tpu.memory_space<vmem>>, vector<1x32xf32>
    %18 = vector.broadcast %9 : vector<1x32xf32> to vector<2048x32xf32>
    %19 = arith.subf %5, %18 : vector<2048x32xf32>
    %20 = vector.broadcast %17 : vector<1x32xf32> to vector<2048x32xf32>
    %21 = arith.mulf %20, %19 : vector<2048x32xf32>
    %cst_11 = arith.constant 9.99999974E-6 : f32
    %22 = vector.broadcast %cst_11 : f32 to vector<1x32xf32>
    %23 = arith.addf %16, %22 : vector<1x32xf32>
    %24 = math.rsqrt %23 : vector<1x32xf32>
    %25 = vector.broadcast %24 : vector<1x32xf32> to vector<2048x32xf32>
    %26 = arith.mulf %21, %25 : vector<2048x32xf32>
    %c0_12 = arith.constant 0 : index
    %c0_13 = arith.constant 0 : index
    %27 = vector.load %arg4[%c0_12, %c0_13] : memref<1x32xf32, #tpu.memory_space<vmem>>, vector<1x32xf32>
    %28 = vector.broadcast %27 : vector<1x32xf32> to vector<2048x32xf32>
    %29 = arith.addf %26, %28 : vector<2048x32xf32>
    %cst_14 = arith.constant 0.000000e+00 : f32
    %30 = vector.broadcast %cst_14 : f32 to vector<2048x32xf32>
    %31 = arith.maximumf %29, %30 : vector<2048x32xf32>
    %c0_15 = arith.constant 0 : index
    %c0_16 = arith.constant 0 : index
    %32 = vector.load %arg5[%c0_15, %c0_16] : memref<2048x32xf32, #tpu.memory_space<vmem>>, vector<2048x32xf32>
    tpu.vector_store %arg5[%c0_15, %c0_16], %31 {strides = array<i32>} : memref<2048x32xf32, #tpu.memory_space<vmem>>, vector<2048x32xf32>,
    return
  }
}

module attributes {stable_mosaic.version = 11 : i64} {
  func.func @conv_bn_relu_kernel(%arg0: memref<450x800xf32, #tpu.memory_space<vmem>>, %arg1: memref<800x64xf32, #tpu.memory_space<vmem>>, %arg2: memref<1x64xf32, #tpu.memory_space<vmem>>, %arg3: memref<1x64xf32, #tpu.memory_space<vmem>>, %arg4: memref<1x64xf32, #tpu.memory_space<vmem>>, %arg5: memref<450x64xf32, #tpu.memory_space<vmem>>) attributes {dimension_semantics = [], scalar_prefetch = 0 : i64, scratch_operands = 0 : i64, tpu.core_type = #tpu.core_type<tc>} {
    %c0 = arith.constant 0 : index
    %c0_0 = arith.constant 0 : index
    %0 = vector.load %arg0[%c0, %c0_0] : memref<450x800xf32, #tpu.memory_space<vmem>>, vector<450x800xf32>
    %c0_1 = arith.constant 0 : index
    %c0_2 = arith.constant 0 : index
    %1 = vector.load %arg1[%c0_1, %c0_2] : memref<800x64xf32, #tpu.memory_space<vmem>>, vector<800x64xf32>
    %cst = arith.constant dense<0.000000e+00> : vector<450x64xf32>
    %2 = tpu.matmul %0, %1, %cst {dimension_numbers = #tpu.dot_dimension_numbers<[1], [0], [0], [1], [0, 0, 1, 1], [], []>} : vector<450x800xf32>, vector<800x64xf32>, vector<450x64xf32> -> vector<450x64xf32>
    %c0_3 = arith.constant 0 : index
    %c0_4 = arith.constant 0 : index
    %3 = vector.load %arg2[%c0_3, %c0_4] : memref<1x64xf32, #tpu.memory_space<vmem>>, vector<1x64xf32>
    %4 = vector.broadcast %3 : vector<1x64xf32> to vector<450x64xf32>
    %5 = arith.addf %2, %4 : vector<450x64xf32>
    %cst_5 = arith.constant dense<0.000000e+00> : vector<64xf32>
    %6 = vector.multi_reduction <add>, %5, %cst_5 [0] : vector<450x64xf32> to vector<64xf32>
    %7 = vector.shape_cast %6 : vector<64xf32> to vector<1x64xf32>
    %cst_6 = arith.constant 0.00222222228 : f32
    %8 = vector.broadcast %cst_6 : f32 to vector<1x64xf32>
    %9 = arith.mulf %7, %8 : vector<1x64xf32>
    %10 = arith.mulf %5, %5 : vector<450x64xf32>
    %cst_7 = arith.constant dense<0.000000e+00> : vector<64xf32>
    %11 = vector.multi_reduction <add>, %10, %cst_7 [0] : vector<450x64xf32> to vector<64xf32>
    %12 = vector.shape_cast %11 : vector<64xf32> to vector<1x64xf32>
    %cst_8 = arith.constant 0.00222222228 : f32
    %13 = vector.broadcast %cst_8 : f32 to vector<1x64xf32>
    %14 = arith.mulf %12, %13 : vector<1x64xf32>
    %15 = arith.mulf %9, %9 : vector<1x64xf32>
    %16 = arith.subf %14, %15 : vector<1x64xf32>
    %c0_9 = arith.constant 0 : index
    %c0_10 = arith.constant 0 : index
    %17 = vector.load %arg3[%c0_9, %c0_10] : memref<1x64xf32, #tpu.memory_space<vmem>>, vector<1x64xf32>
    %18 = vector.broadcast %9 : vector<1x64xf32> to vector<450x64xf32>
    %19 = arith.subf %5, %18 : vector<450x64xf32>
    %20 = vector.broadcast %17 : vector<1x64xf32> to vector<450x64xf32>
    %21 = arith.mulf %20, %19 : vector<450x64xf32>
    %cst_11 = arith.constant 9.99999974E-6 : f32
    %22 = vector.broadcast %cst_11 : f32 to vector<1x64xf32>
    %23 = arith.addf %16, %22 : vector<1x64xf32>
    %24 = math.rsqrt %23 : vector<1x64xf32>
    %25 = vector.broadcast %24 : vector<1x64xf32> to vector<450x64xf32>
    %26 = arith.mulf %21, %25 : vector<450x64xf32>
    %c0_12 = arith.constant 0 : index
    %c0_13 = arith.constant 0 : index
    %27 = vector.load %arg4[%c0_12, %c0_13] : memref<1x64xf32, #tpu.memory_space<vmem>>, vector<1x64xf32>
    %28 = vector.broadcast %27 : vector<1x64xf32> to vector<450x64xf32>
    %29 = arith.addf %26, %28 : vector<450x64xf32>
    %cst_14 = arith.constant 0.000000e+00 : f32
    %30 = vector.broadcast %cst_14 : f32 to vector<450x64xf32>
    %31 = arith.maximumf %29, %30 : vector<450x64xf32>
    %c0_15 = arith.constant 0 : index
    %c0_16 = arith.constant 0 : index
    %32 = vector.load %arg5[%c0_15, %c0_16] : memref<450x64xf32, #tpu.memory_space<vmem>>, vector<450x64xf32>
    tpu.vector_store %arg5[%c0_15, %c0_16], %31 {strides = array<i32>} : memref<450x64xf32, #tpu.memory_space<vmem>>, vector<450x64xf32>,
    return
  }
}

module attributes {stable_mosaic.version = 11 : i64} {
  func.func @conv_bn_relu_kernel(%arg0: memref<98x1600xf32, #tpu.memory_space<vmem>>, %arg1: memref<1600x128xf32, #tpu.memory_space<vmem>>, %arg2: memref<1x128xf32, #tpu.memory_space<vmem>>, %arg3: memref<1x128xf32, #tpu.memory_space<vmem>>, %arg4: memref<1x128xf32, #tpu.memory_space<vmem>>, %arg5: memref<98x128xf32, #tpu.memory_space<vmem>>) attributes {dimension_semantics = [], scalar_prefetch = 0 : i64, scratch_operands = 0 : i64, tpu.core_type = #tpu.core_type<tc>} {
    %c0 = arith.constant 0 : index
    %c0_0 = arith.constant 0 : index
    %0 = vector.load %arg0[%c0, %c0_0] : memref<98x1600xf32, #tpu.memory_space<vmem>>, vector<98x1600xf32>
    %c0_1 = arith.constant 0 : index
    %c0_2 = arith.constant 0 : index
    %1 = vector.load %arg1[%c0_1, %c0_2] : memref<1600x128xf32, #tpu.memory_space<vmem>>, vector<1600x128xf32>
    %cst = arith.constant dense<0.000000e+00> : vector<98x128xf32>
    %2 = tpu.matmul %0, %1, %cst {dimension_numbers = #tpu.dot_dimension_numbers<[1], [0], [0], [1], [0, 0, 1, 1], [], []>} : vector<98x1600xf32>, vector<1600x128xf32>, vector<98x128xf32> -> vector<98x128xf32>
    %c0_3 = arith.constant 0 : index
    %c0_4 = arith.constant 0 : index
    %3 = vector.load %arg2[%c0_3, %c0_4] : memref<1x128xf32, #tpu.memory_space<vmem>>, vector<1x128xf32>
    %4 = vector.broadcast %3 : vector<1x128xf32> to vector<98x128xf32>
    %5 = arith.addf %2, %4 : vector<98x128xf32>
    %cst_5 = arith.constant dense<0.000000e+00> : vector<128xf32>
    %6 = vector.multi_reduction <add>, %5, %cst_5 [0] : vector<98x128xf32> to vector<128xf32>
    %7 = vector.shape_cast %6 : vector<128xf32> to vector<1x128xf32>
    %cst_6 = arith.constant 0.0102040814 : f32
    %8 = vector.broadcast %cst_6 : f32 to vector<1x128xf32>
    %9 = arith.mulf %7, %8 : vector<1x128xf32>
    %10 = arith.mulf %5, %5 : vector<98x128xf32>
    %cst_7 = arith.constant dense<0.000000e+00> : vector<128xf32>
    %11 = vector.multi_reduction <add>, %10, %cst_7 [0] : vector<98x128xf32> to vector<128xf32>
    %12 = vector.shape_cast %11 : vector<128xf32> to vector<1x128xf32>
    %cst_8 = arith.constant 0.0102040814 : f32
    %13 = vector.broadcast %cst_8 : f32 to vector<1x128xf32>
    %14 = arith.mulf %12, %13 : vector<1x128xf32>
    %15 = arith.mulf %9, %9 : vector<1x128xf32>
    %16 = arith.subf %14, %15 : vector<1x128xf32>
    %c0_9 = arith.constant 0 : index
    %c0_10 = arith.constant 0 : index
    %17 = vector.load %arg3[%c0_9, %c0_10] : memref<1x128xf32, #tpu.memory_space<vmem>>, vector<1x128xf32>
    %18 = vector.broadcast %9 : vector<1x128xf32> to vector<98x128xf32>
    %19 = arith.subf %5, %18 : vector<98x128xf32>
    %20 = vector.broadcast %17 : vector<1x128xf32> to vector<98x128xf32>
    %21 = arith.mulf %20, %19 : vector<98x128xf32>
    %cst_11 = arith.constant 9.99999974E-6 : f32
    %22 = vector.broadcast %cst_11 : f32 to vector<1x128xf32>
    %23 = arith.addf %16, %22 : vector<1x128xf32>
    %24 = math.rsqrt %23 : vector<1x128xf32>
    %25 = vector.broadcast %24 : vector<1x128xf32> to vector<98x128xf32>
    %26 = arith.mulf %21, %25 : vector<98x128xf32>
    %c0_12 = arith.constant 0 : index
    %c0_13 = arith.constant 0 : index
    %27 = vector.load %arg4[%c0_12, %c0_13] : memref<1x128xf32, #tpu.memory_space<vmem>>, vector<1x128xf32>
    %28 = vector.broadcast %27 : vector<1x128xf32> to vector<98x128xf32>
    %29 = arith.addf %26, %28 : vector<98x128xf32>
    %cst_14 = arith.constant 0.000000e+00 : f32
    %30 = vector.broadcast %cst_14 : f32 to vector<98x128xf32>
    %31 = arith.maximumf %29, %30 : vector<98x128xf32>
    %c0_15 = arith.constant 0 : index
    %c0_16 = arith.constant 0 : index
    %32 = vector.load %arg5[%c0_15, %c0_16] : memref<98x128xf32, #tpu.memory_space<vmem>>, vector<98x128xf32>
    tpu.vector_store %arg5[%c0_15, %c0_16], %31 {strides = array<i32>} : memref<98x128xf32, #tpu.memory_space<vmem>>, vector<98x128xf32>,
    return
  }
}

module attributes {stable_mosaic.version = 11 : i64} {
  func.func @conv_bn_relu_fc_kernel(%arg0: memref<18x3200xf32, #tpu.memory_space<vmem>>, %arg1: memref<3200x256xf32, #tpu.memory_space<vmem>>, %arg2: memref<1x256xf32, #tpu.memory_space<vmem>>, %arg3: memref<1x256xf32, #tpu.memory_space<vmem>>, %arg4: memref<1x256xf32, #tpu.memory_space<vmem>>, %arg5: memref<18x256xf32, #tpu.memory_space<vmem>>, %arg6: memref<2x18xf32, #tpu.memory_space<vmem>>, %arg7: memref<1x1xf32, #tpu.memory_space<vmem>>, %arg8: memref<2x1xf32, #tpu.memory_space<vmem>>) attributes {dimension_semantics = [], scalar_prefetch = 0 : i64, scratch_operands = 0 : i64, tpu.core_type = #tpu.core_type<tc>} {
    %c0 = arith.constant 0 : index
    %c0_0 = arith.constant 0 : index
    %0 = vector.load %arg0[%c0, %c0_0] : memref<18x3200xf32, #tpu.memory_space<vmem>>, vector<18x3200xf32>
    %c0_1 = arith.constant 0 : index
    %c0_2 = arith.constant 0 : index
    %1 = vector.load %arg1[%c0_1, %c0_2] : memref<3200x256xf32, #tpu.memory_space<vmem>>, vector<3200x256xf32>
    %cst = arith.constant dense<0.000000e+00> : vector<18x256xf32>
    %2 = tpu.matmul %0, %1, %cst {dimension_numbers = #tpu.dot_dimension_numbers<[1], [0], [0], [1], [0, 0, 1, 1], [], []>} : vector<18x3200xf32>, vector<3200x256xf32>, vector<18x256xf32> -> vector<18x256xf32>
    %c0_3 = arith.constant 0 : index
    %c0_4 = arith.constant 0 : index
    %3 = vector.load %arg2[%c0_3, %c0_4] : memref<1x256xf32, #tpu.memory_space<vmem>>, vector<1x256xf32>
    %4 = vector.broadcast %3 : vector<1x256xf32> to vector<18x256xf32>
    %5 = arith.addf %2, %4 : vector<18x256xf32>
    %cst_5 = arith.constant dense<0.000000e+00> : vector<256xf32>
    %6 = vector.multi_reduction <add>, %5, %cst_5 [0] : vector<18x256xf32> to vector<256xf32>
    %7 = vector.shape_cast %6 : vector<256xf32> to vector<1x256xf32>
    %cst_6 = arith.constant 0.055555556 : f32
    %8 = vector.broadcast %cst_6 : f32 to vector<1x256xf32>
    %9 = arith.mulf %7, %8 : vector<1x256xf32>
    %10 = arith.mulf %5, %5 : vector<18x256xf32>
    %cst_7 = arith.constant dense<0.000000e+00> : vector<256xf32>
    %11 = vector.multi_reduction <add>, %10, %cst_7 [0] : vector<18x256xf32> to vector<256xf32>
    %12 = vector.shape_cast %11 : vector<256xf32> to vector<1x256xf32>
    %cst_8 = arith.constant 0.055555556 : f32
    %13 = vector.broadcast %cst_8 : f32 to vector<1x256xf32>
    %14 = arith.mulf %12, %13 : vector<1x256xf32>
    %15 = arith.mulf %9, %9 : vector<1x256xf32>
    %16 = arith.subf %14, %15 : vector<1x256xf32>
    %c0_9 = arith.constant 0 : index
    %c0_10 = arith.constant 0 : index
    %17 = vector.load %arg3[%c0_9, %c0_10] : memref<1x256xf32, #tpu.memory_space<vmem>>, vector<1x256xf32>
    %18 = vector.broadcast %9 : vector<1x256xf32> to vector<18x256xf32>
    %19 = arith.subf %5, %18 : vector<18x256xf32>
    %20 = vector.broadcast %17 : vector<1x256xf32> to vector<18x256xf32>
    %21 = arith.mulf %20, %19 : vector<18x256xf32>
    %cst_11 = arith.constant 9.99999974E-6 : f32
    %22 = vector.broadcast %cst_11 : f32 to vector<1x256xf32>
    %23 = arith.addf %16, %22 : vector<1x256xf32>
    %24 = math.rsqrt %23 : vector<1x256xf32>
    %25 = vector.broadcast %24 : vector<1x256xf32> to vector<18x256xf32>
    %26 = arith.mulf %21, %25 : vector<18x256xf32>
    %c0_12 = arith.constant 0 : index
    %c0_13 = arith.constant 0 : index
    %27 = vector.load %arg4[%c0_12, %c0_13] : memref<1x256xf32, #tpu.memory_space<vmem>>, vector<1x256xf32>
    %28 = vector.broadcast %27 : vector<1x256xf32> to vector<18x256xf32>
    %29 = arith.addf %26, %28 : vector<18x256xf32>
    %cst_14 = arith.constant 0.000000e+00 : f32
    %30 = vector.broadcast %cst_14 : f32 to vector<18x256xf32>
    %31 = arith.maximumf %29, %30 : vector<18x256xf32>
    %c0_15 = arith.constant 0 : index
    %c0_16 = arith.constant 0 : index
    %32 = vector.load %arg6[%c0_15, %c0_16] : memref<2x18xf32, #tpu.memory_space<vmem>>, vector<2x18xf32>
    %c0_17 = arith.constant 0 : index
    %c0_18 = arith.constant 0 : index
    %33 = vector.load %arg5[%c0_17, %c0_18] : memref<18x256xf32, #tpu.memory_space<vmem>>, vector<18x256xf32>
    %34 = arith.mulf %31, %33 : vector<18x256xf32>
    %cst_19 = arith.constant dense<0.000000e+00> : vector<2x256xf32>
    %35 = tpu.matmul %32, %34, %cst_19 {dimension_numbers = #tpu.dot_dimension_numbers<[1], [0], [0], [1], [0, 0, 1, 1], [], []>} : vector<2x18xf32>, vector<18x256xf32>, vector<2x256xf32> -> vector<2x256xf32>
    %cst_20 = arith.constant dense<0.000000e+00> : vector<2xf32>
    %36 = vector.multi_reduction <add>, %35, %cst_20 [1] : vector<2x256xf32> to vector<2xf32>
    %37 = vector.shape_cast %36 : vector<2xf32> to vector<2x1xf32>
    %c0_21 = arith.constant 0 : index
    %c0_22 = arith.constant 0 : index
    %38 = vector.load %arg7[%c0_21, %c0_22] : memref<1x1xf32, #tpu.memory_space<vmem>>, vector<1x1xf32>
    %39 = vector.broadcast %38 : vector<1x1xf32> to vector<2x1xf32>
    %40 = arith.addf %37, %39 : vector<2x1xf32>
    %c0_23 = arith.constant 0 : index
    %c0_24 = arith.constant 0 : index
    %41 = vector.load %arg8[%c0_23, %c0_24] : memref<2x1xf32, #tpu.memory_space<vmem>>, vector<2x1xf32>
    tpu.vector_store %arg8[%c0_23, %c0_24], %40 {strides = array<i32>} : memref<2x1xf32, #tpu.memory_space<vmem>>, vector<2x1xf32>,
    return
  }
}

</mosaic_0001>

<llo_original>
// kernel: discriminator_forward.4
$region0: #{discriminator_forward.4}
  #allocation0 [shape = 'u32[]', space=smem, size = 0x4, offset = 0x4, fixed_abs, tag = 'smem constant byte address 0x4 - core index']
  #allocation1 [shape = 'u32[144,128]{1,0:T(1,128)}', space=vmem, size = 0x12000, scoped, tag = 'internal scratch']
  %s0 = inlined_call_operand.vmem [shape: f32[2048,128], index: 0, kind: input, shape index: {}]
  %s1 = inlined_call_operand.vmem [shape: f32[128,32], index: 1, kind: input, shape index: {}]
  %s2 = inlined_call_operand.vmem [shape: f32[1,32], index: 2, kind: input, shape index: {}]
  %s3 = inlined_call_operand.vmem [shape: f32[1,32], index: 3, kind: input, shape index: {}]
  %s4 = inlined_call_operand.vmem [shape: f32[1,32], index: 4, kind: input, shape index: {}]
  %s5 = inlined_call_operand.vmem [shape: f32[2048,32], index: 5, kind: output, shape index: {}]
  %s6 = sld [smem:[#allocation0]]
  $region30: #{discriminator_forward.4} parent=0
    _
  %s8 = ssub.s32 1, %s6
  %s9 = scalar_select 0, %s8, %s6
  // Predicated region
  $region2: #{discriminator_forward.4} parent=0 // pred_check
    _
  $region3: #{discriminator_forward.4} parent=0 // pred_check_branch
    %11 = sbr.rel (0) target = $region5
  $region4: #{discriminator_forward.4} parent=0 // pred_region
    _
  $region5: #{discriminator_forward.4} parent=0 // pred_fallthru
    _
  // Predicated region
  $region6: #{discriminator_forward.4} parent=0 // pred_check
    _
  $region7: #{discriminator_forward.4} parent=0 // pred_check_branch
    %13 = sbr.rel (0) target = $region9
  $region8: #{discriminator_forward.4} parent=0 // pred_region
    _
  $region9: #{discriminator_forward.4} parent=0 // pred_fallthru
    _
  // Predicated region
  $region10: #{discriminator_forward.4} parent=0 // pred_check
    _
  $region11: #{discriminator_forward.4} parent=0 // pred_check_branch
    %15 = sbr.rel (0) target = $region13
  $region12: #{discriminator_forward.4} parent=0 // pred_region
    _
  $region13: #{discriminator_forward.4} parent=0 // pred_fallthru
    _
  // Predicated region
  $region14: #{discriminator_forward.4} parent=0 // pred_check
    _
  $region15: #{discriminator_forward.4} parent=0 // pred_check_branch
    %17 = sbr.rel (0) target = $region17
  $region16: #{discriminator_forward.4} parent=0 // pred_region
    _
  $region17: #{discriminator_forward.4} parent=0 // pred_fallthru
    _
  // Predicated region
  $region18: #{discriminator_forward.4} parent=0 // pred_check
    _
  $region19: #{discriminator_forward.4} parent=0 // pred_check_branch
    %19 = sbr.rel (0) target = $region21
  $region20: #{discriminator_forward.4} parent=0 // pred_region
    _
  $region21: #{discriminator_forward.4} parent=0 // pred_fallthru
    _
  %v20 = vld [vmem:[%s0] sm:$0xff]
  %v21 = vld [vmem:[%s0 + $0x8] sm:$0xff]
  %v22 = vld [vmem:[%s0 + $0x10] sm:$0xff]
  %v23 = vld [vmem:[%s0 + $0x18] sm:$0xff]
  %v24 = vld [vmem:[%s0 + $0x20] sm:$0xff]
  %v25 = vld [vmem:[%s0 + $0x28] sm:$0xff]
  %v26 = vld [vmem:[%s0 + $0x30] sm:$0xff]
  %v27 = vld [vmem:[%s0 + $0x38] sm:$0xff]
  %v28 = vld [vmem:[%s0 + $0x40] sm:$0xff]
  %v29 = vld [vmem:[%s0 + $0x48] sm:$0xff]
  %v30 = vld [vmem:[%s0 + $0x50] sm:$0xff]
  %v31 = vld [vmem:[%s0 + $0x58] sm:$0xff]
  %v32 = vld [vmem:[%s0 + $0x60] sm:$0xff]
  %v33 = vld [vmem:[%s0 + $0x68] sm:$0xff]
  %v34 = vld [vmem:[%s0 + $0x70] sm:$0xff]
  %v35 = vld [vmem:[%s0 + $0x78] sm:$0xff]
  %v36 = vld [vmem:[%s0 + $0x80] sm:$0xff]
  %v37 = vld [vmem:[%s0 + $0x88] sm:$0xff]
  %v38 = vld [vmem:[%s0 + $0x90] sm:$0xff]
  %v39 = vld [vmem:[%s0 + $0x98] sm:$0xff]
  %v40 = vld [vmem:[%s0 + $0xa0] sm:$0xff]
  %v41 = vld [vmem:[%s0 + $0xa8] sm:$0xff]
  %v42 = vld [vmem:[%s0 + $0xb0] sm:$0xff]
  %v43 = vld [vmem:[%s0 + $0xb8] sm:$0xff]
  %v44 = vld [vmem:[%s0 + $0xc0] sm:$0xff]
  %v45 = vld [vmem:[%s0 + $0xc8] sm:$0xff]
  %v46 = vld [vmem:[%s0 + $0xd0] sm:$0xff]
  %v47 = vld [vmem:[%s0 + $0xd8] sm:$0xff]
  %v48 = vld [vmem:[%s0 + $0xe0] sm:$0xff]
  %v49 = vld [vmem:[%s0 + $0xe8] sm:$0xff]
  %v50 = vld [vmem:[%s0 + $0xf0] sm:$0xff]
  %v51 = vld [vmem:[%s0 + $0xf8] sm:$0xff]
  %v52 = vld [vmem:[%s0 + $0x100] sm:$0xff]
  %v53 = vld [vmem:[%s0 + $0x108] sm:$0xff]
  %v54 = vld [vmem:[%s0 + $0x110] sm:$0xff]
  %v55 = vld [vmem:[%s0 + $0x118] sm:$0xff]
  %v56 = vld [vmem:[%s0 + $0x120] sm:$0xff]
  %v57 = vld [vmem:[%s0 + $0x128] sm:$0xff]
  %v58 = vld [vmem:[%s0 + $0x130] sm:$0xff]
  %v59 = vld [vmem:[%s0 + $0x138] sm:$0xff]
  %v60 = vld [vmem:[%s0 + $0x140] sm:$0xff]
  %v61 = vld [vmem:[%s0 + $0x148] sm:$0xff]
  %v62 = vld [vmem:[%s0 + $0x150] sm:$0xff]
  %v63 = vld [vmem:[%s0 + $0x158] sm:$0xff]
  %v64 = vld [vmem:[%s0 + $0x160] sm:$0xff]
  %v65 = vld [vmem:[%s0 + $0x168] sm:$0xff]
  %v66 = vld [vmem:[%s0 + $0x170] sm:$0xff]
  %v67 = vld [vmem:[%s0 + $0x178] sm:$0xff]
  %v68 = vld [vmem:[%s0 + $0x180] sm:$0xff]
  %v69 = vld [vmem:[%s0 + $0x188] sm:$0xff]
  %v70 = vld [vmem:[%s0 + $0x190] sm:$0xff]
  %v71 = vld [vmem:[%s0 + $0x198] sm:$0xff]
  %v72 = vld [vmem:[%s0 + $0x1a0] sm:$0xff]
  %v73 = vld [vmem:[%s0 + $0x1a8] sm:$0xff]
  %v74 = vld [vmem:[%s0 + $0x1b0] sm:$0xff]
  %v75 = vld [vmem:[%s0 + $0x1b8] sm:$0xff]
  %v76 = vld [vmem:[%s0 + $0x1c0] sm:$0xff]
  %v77 = vld [vmem:[%s0 + $0x1c8] sm:$0xff]
  %v78 = vld [vmem:[%s0 + $0x1d0] sm:$0xff]
  %v79 = vld [vmem:[%s0 + $0x1d8] sm:$0xff]
  %v80 = vld [vmem:[%s0 + $0x1e0] sm:$0xff]
  %v81 = vld [vmem:[%s0 + $0x1e8] sm:$0xff]
  %v82 = vld [vmem:[%s0 + $0x1f0] sm:$0xff]
  %v83 = vld [vmem:[%s0 + $0x1f8] sm:$0xff]
  %v84 = vld [vmem:[%s0 + $0x200] sm:$0xff]
  %v85 = vld [vmem:[%s0 + $0x208] sm:$0xff]
  %v86 = vld [vmem:[%s0 + $0x210] sm:$0xff]
  %v87 = vld [vmem:[%s0 + $0x218] sm:$0xff]
  %v88 = vld [vmem:[%s0 + $0x220] sm:$0xff]
  %v89 = vld [vmem:[%s0 + $0x228] sm:$0xff]
  %v90 = vld [vmem:[%s0 + $0x230] sm:$0xff]
  %v91 = vld [vmem:[%s0 + $0x238] sm:$0xff]
  %v92 = vld [vmem:[%s0 + $0x240] sm:$0xff]
  %v93 = vld [vmem:[%s0 + $0x248] sm:$0xff]
  %v94 = vld [vmem:[%s0 + $0x250] sm:$0xff]
  %v95 = vld [vmem:[%s0 + $0x258] sm:$0xff]
  %v96 = vld [vmem:[%s0 + $0x260] sm:$0xff]
  %v97 = vld [vmem:[%s0 + $0x268] sm:$0xff]
  %v98 = vld [vmem:[%s0 + $0x270] sm:$0xff]
  %v99 = vld [vmem:[%s0 + $0x278] sm:$0xff]
  %v100 = vld [vmem:[%s0 + $0x280] sm:$0xff]
  %v101 = vld [vmem:[%s0 + $0x288] sm:$0xff]
  %v102 = vld [vmem:[%s0 + $0x290] sm:$0xff]
  %v103 = vld [vmem:[%s0 + $0x298] sm:$0xff]
  %v104 = vld [vmem:[%s0 + $0x2a0] sm:$0xff]
  %v105 = vld [vmem:[%s0 + $0x2a8] sm:$0xff]
  %v106 = vld [vmem:[%s0 + $0x2b0] sm:$0xff]
  %v107 = vld [vmem:[%s0 + $0x2b8] sm:$0xff]
  %v108 = vld [vmem:[%s0 + $0x2c0] sm:$0xff]
  %v109 = vld [vmem:[%s0 + $0x2c8] sm:$0xff]
  %v110 = vld [vmem:[%s0 + $0x2d0] sm:$0xff]
  %v111 = vld [vmem:[%s0 + $0x2d8] sm:$0xff]
  %v112 = vld [vmem:[%s0 + $0x2e0] sm:$0xff]
  %v113 = vld [vmem:[%s0 + $0x2e8] sm:$0xff]
  %v114 = vld [vmem:[%s0 + $0x2f0] sm:$0xff]
  %v115 = vld [vmem:[%s0 + $0x2f8] sm:$0xff]
  %v116 = vld [vmem:[%s0 + $0x300] sm:$0xff]
  %v117 = vld [vmem:[%s0 + $0x308] sm:$0xff]
  %v118 = vld [vmem:[%s0 + $0x310] sm:$0xff]
  %v119 = vld [vmem:[%s0 + $0x318] sm:$0xff]
  %v120 = vld [vmem:[%s0 + $0x320] sm:$0xff]
  %v121 = vld [vmem:[%s0 + $0x328] sm:$0xff]
  %v122 = vld [vmem:[%s0 + $0x330] sm:$0xff]
  %v123 = vld [vmem:[%s0 + $0x338] sm:$0xff]
  %v124 = vld [vmem:[%s0 + $0x340] sm:$0xff]
  %v125 = vld [vmem:[%s0 + $0x348] sm:$0xff]
  %v126 = vld [vmem:[%s0 + $0x350] sm:$0xff]
  %v127 = vld [vmem:[%s0 + $0x358] sm:$0xff]
  %v128 = vld [vmem:[%s0 + $0x360] sm:$0xff]
  %v129 = vld [vmem:[%s0 + $0x368] sm:$0xff]
  %v130 = vld [vmem:[%s0 + $0x370] sm:$0xff]
  %v131 = vld [vmem:[%s0 + $0x378] sm:$0xff]
  %v132 = vld [vmem:[%s0 + $0x380] sm:$0xff]
  %v133 = vld [vmem:[%s0 + $0x388] sm:$0xff]
  %v134 = vld [vmem:[%s0 + $0x390] sm:$0xff]
  %v135 = vld [vmem:[%s0 + $0x398] sm:$0xff]
  %v136 = vld [vmem:[%s0 + $0x3a0] sm:$0xff]
  %v137 = vld [vmem:[%s0 + $0x3a8] sm:$0xff]
  %v138 = vld [vmem:[%s0 + $0x3b0] sm:$0xff]
  %v139 = vld [vmem:[%s0 + $0x3b8] sm:$0xff]
  %v140 = vld [vmem:[%s0 + $0x3c0] sm:$0xff]
  %v141 = vld [vmem:[%s0 + $0x3c8] sm:$0xff]
  %v142 = vld [vmem:[%s0 + $0x3d0] sm:$0xff]
  %v143 = vld [vmem:[%s0 + $0x3d8] sm:$0xff]
  %v144 = vld [vmem:[%s0 + $0x3e0] sm:$0xff]
  %v145 = vld [vmem:[%s0 + $0x3e8] sm:$0xff]
  %v146 = vld [vmem:[%s0 + $0x3f0] sm:$0xff]
  %v147 = vld [vmem:[%s0 + $0x3f8] sm:$0xff]
  %v148 = vld [vmem:[%s0 + $0x400] sm:$0xff]
  %v149 = vld [vmem:[%s0 + $0x408] sm:$0xff]
  %v150 = vld [vmem:[%s0 + $0x410] sm:$0xff]
  %v151 = vld [vmem:[%s0 + $0x418] sm:$0xff]
  %v152 = vld [vmem:[%s0 + $0x420] sm:$0xff]
  %v153 = vld [vmem:[%s0 + $0x428] sm:$0xff]
  %v154 = vld [vmem:[%s0 + $0x430] sm:$0xff]
  %v155 = vld [vmem:[%s0 + $0x438] sm:$0xff]
  %v156 = vld [vmem:[%s0 + $0x440] sm:$0xff]
  %v157 = vld [vmem:[%s0 + $0x448] sm:$0xff]
  %v158 = vld [vmem:[%s0 + $0x450] sm:$0xff]
  %v159 = vld [vmem:[%s0 + $0x458] sm:$0xff]
  %v160 = vld [vmem:[%s0 + $0x460] sm:$0xff]
  %v161 = vld [vmem:[%s0 + $0x468] sm:$0xff]
  %v162 = vld [vmem:[%s0 + $0x470] sm:$0xff]
  %v163 = vld [vmem:[%s0 + $0x478] sm:$0xff]
  %v164 = vld [vmem:[%s0 + $0x480] sm:$0xff]
  %v165 = vld [vmem:[%s0 + $0x488] sm:$0xff]
  %v166 = vld [vmem:[%s0 + $0x490] sm:$0xff]
  %v167 = vld [vmem:[%s0 + $0x498] sm:$0xff]
  %v168 = vld [vmem:[%s0 + $0x4a0] sm:$0xff]
  %v169 = vld [vmem:[%s0 + $0x4a8] sm:$0xff]
  %v170 = vld [vmem:[%s0 + $0x4b0] sm:$0xff]
  %v171 = vld [vmem:[%s0 + $0x4b8] sm:$0xff]
  %v172 = vld [vmem:[%s0 + $0x4c0] sm:$0xff]
  %v173 = vld [vmem:[%s0 + $0x4c8] sm:$0xff]
  %v174 = vld [vmem:[%s0 + $0x4d0] sm:$0xff]
  %v175 = vld [vmem:[%s0 + $0x4d8] sm:$0xff]
  %v176 = vld [vmem:[%s0 + $0x4e0] sm:$0xff]
  %v177 = vld [vmem:[%s0 + $0x4e8] sm:$0xff]
  %v178 = vld [vmem:[%s0 + $0x4f0] sm:$0xff]
  %v179 = vld [vmem:[%s0 + $0x4f8] sm:$0xff]
  %v180 = vld [vmem:[%s0 + $0x500] sm:$0xff]
  %v181 = vld [vmem:[%s0 + $0x508] sm:$0xff]
  %v182 = vld [vmem:[%s0 + $0x510] sm:$0xff]
  %v183 = vld [vmem:[%s0 + $0x518] sm:$0xff]
  %v184 = vld [vmem:[%s0 + $0x520] sm:$0xff]
  %v185 = vld [vmem:[%s0 + $0x528] sm:$0xff]
  %v186 = vld [vmem:[%s0 + $0x530] sm:$0xff]
  %v187 = vld [vmem:[%s0 + $0x538] sm:$0xff]
  %v188 = vld [vmem:[%s0 + $0x540] sm:$0xff]
  %v189 = vld [vmem:[%s0 + $0x548] sm:$0xff]
  %v190 = vld [vmem:[%s0 + $0x550] sm:$0xff]
  %v191 = vld [vmem:[%s0 + $0x558] sm:$0xff]
  %v192 = vld [vmem:[%s0 + $0x560] sm:$0xff]
  %v193 = vld [vmem:[%s0 + $0x568] sm:$0xff]
  %v194 = vld [vmem:[%s0 + $0x570] sm:$0xff]
  %v195 = vld [vmem:[%s0 + $0x578] sm:$0xff]
  %v196 = vld [vmem:[%s0 + $0x580] sm:$0xff]
  %v197 = vld [vmem:[%s0 + $0x588] sm:$0xff]
  %v198 = vld [vmem:[%s0 + $0x590] sm:$0xff]
  %v199 = vld [vmem:[%s0 + $0x598] sm:$0xff]
  %v200 = vld [vmem:[%s0 + $0x5a0] sm:$0xff]
  %v201 = vld [vmem:[%s0 + $0x5a8] sm:$0xff]
  %v202 = vld [vmem:[%s0 + $0x5b0] sm:$0xff]
  %v203 = vld [vmem:[%s0 + $0x5b8] sm:$0xff]
  %v204 = vld [vmem:[%s0 + $0x5c0] sm:$0xff]
  %v205 = vld [vmem:[%s0 + $0x5c8] sm:$0xff]
  %v206 = vld [vmem:[%s0 + $0x5d0] sm:$0xff]
  %v207 = vld [vmem:[%s0 + $0x5d8] sm:$0xff]
  %v208 = vld [vmem:[%s0 + $0x5e0] sm:$0xff]
  %v209 = vld [vmem:[%s0 + $0x5e8] sm:$0xff]
  %v210 = vld [vmem:[%s0 + $0x5f0] sm:$0xff]
  %v211 = vld [vmem:[%s0 + $0x5f8] sm:$0xff]
  %v212 = vld [vmem:[%s0 + $0x600] sm:$0xff]
  %v213 = vld [vmem:[%s0 + $0x608] sm:$0xff]
  %v214 = vld [vmem:[%s0 + $0x610] sm:$0xff]
  %v215 = vld [vmem:[%s0 + $0x618] sm:$0xff]
  %v216 = vld [vmem:[%s0 + $0x620] sm:$0xff]
  %v217 = vld [vmem:[%s0 + $0x628] sm:$0xff]
  %v218 = vld [vmem:[%s0 + $0x630] sm:$0xff]
  %v219 = vld [vmem:[%s0 + $0x638] sm:$0xff]
  %v220 = vld [vmem:[%s0 + $0x640] sm:$0xff]
  %v221 = vld [vmem:[%s0 + $0x648] sm:$0xff]
  %v222 = vld [vmem:[%s0 + $0x650] sm:$0xff]
  %v223 = vld [vmem:[%s0 + $0x658] sm:$0xff]
  %v224 = vld [vmem:[%s0 + $0x660] sm:$0xff]
  %v225 = vld [vmem:[%s0 + $0x668] sm:$0xff]
  %v226 = vld [vmem:[%s0 + $0x670] sm:$0xff]
  %v227 = vld [vmem:[%s0 + $0x678] sm:$0xff]
  %v228 = vld [vmem:[%s0 + $0x680] sm:$0xff]
  %v229 = vld [vmem:[%s0 + $0x688] sm:$0xff]
  %v230 = vld [vmem:[%s0 + $0x690] sm:$0xff]
  %v231 = vld [vmem:[%s0 + $0x698] sm:$0xff]
  %v232 = vld [vmem:[%s0 + $0x6a0] sm:$0xff]
  %v233 = vld [vmem:[%s0 + $0x6a8] sm:$0xff]
  %v234 = vld [vmem:[%s0 + $0x6b0] sm:$0xff]
  %v235 = vld [vmem:[%s0 + $0x6b8] sm:$0xff]
  %v236 = vld [vmem:[%s0 + $0x6c0] sm:$0xff]
  %v237 = vld [vmem:[%s0 + $0x6c8] sm:$0xff]
  %v238 = vld [vmem:[%s0 + $0x6d0] sm:$0xff]
  %v239 = vld [vmem:[%s0 + $0x6d8] sm:$0xff]
  %v240 = vld [vmem:[%s0 + $0x6e0] sm:$0xff]
  %v241 = vld [vmem:[%s0 + $0x6e8] sm:$0xff]
  %v242 = vld [vmem:[%s0 + $0x6f0] sm:$0xff]
  %v243 = vld [vmem:[%s0 + $0x6f8] sm:$0xff]
  %v244 = vld [vmem:[%s0 + $0x700] sm:$0xff]
  %v245 = vld [vmem:[%s0 + $0x708] sm:$0xff]
  %v246 = vld [vmem:[%s0 + $0x710] sm:$0xff]
  %v247 = vld [vmem:[%s0 + $0x718] sm:$0xff]
  %v248 = vld [vmem:[%s0 + $0x720] sm:$0xff]
  %v249 = vld [vmem:[%s0 + $0x728] sm:$0xff]
  %v250 = vld [vmem:[%s0 + $0x730] sm:$0xff]
  %v251 = vld [vmem:[%s0 + $0x738] sm:$0xff]
  %v252 = vld [vmem:[%s0 + $0x740] sm:$0xff]
  %v253 = vld [vmem:[%s0 + $0x748] sm:$0xff]
  %v254 = vld [vmem:[%s0 + $0x750] sm:$0xff]
  %v255 = vld [vmem:[%s0 + $0x758] sm:$0xff]
  %v256 = vld [vmem:[%s0 + $0x760] sm:$0xff]
  %v257 = vld [vmem:[%s0 + $0x768] sm:$0xff]
  %v258 = vld [vmem:[%s0 + $0x770] sm:$0xff]
  %v259 = vld [vmem:[%s0 + $0x778] sm:$0xff]
  %v260 = vld [vmem:[%s0 + $0x780] sm:$0xff]
  %v261 = vld [vmem:[%s0 + $0x788] sm:$0xff]
  %v262 = vld [vmem:[%s0 + $0x790] sm:$0xff]
  %v263 = vld [vmem:[%s0 + $0x798] sm:$0xff]
  %v264 = vld [vmem:[%s0 + $0x7a0] sm:$0xff]
  %v265 = vld [vmem:[%s0 + $0x7a8] sm:$0xff]
  %v266 = vld [vmem:[%s0 + $0x7b0] sm:$0xff]
  %v267 = vld [vmem:[%s0 + $0x7b8] sm:$0xff]
  %v268 = vld [vmem:[%s0 + $0x7c0] sm:$0xff]
  %v269 = vld [vmem:[%s0 + $0x7c8] sm:$0xff]
  %v270 = vld [vmem:[%s0 + $0x7d0] sm:$0xff]
  %v271 = vld [vmem:[%s0 + $0x7d8] sm:$0xff]
  %v272 = vld [vmem:[%s0 + $0x7e0] sm:$0xff]
  %v273 = vld [vmem:[%s0 + $0x7e8] sm:$0xff]
  %v274 = vld [vmem:[%s0 + $0x7f0] sm:$0xff]
  %v275 = vld [vmem:[%s0 + $0x7f8] sm:$0xff]
  %v276 = vld [vmem:[%s1] sm:$0xff]
  %v277 = vld [vmem:[%s1 + $0x8] sm:$0xff]
  %v278 = vld [vmem:[%s1 + $0x10] sm:$0xff]
  %v279 = vld [vmem:[%s1 + $0x18] sm:$0xff]
  %v280 = vld [vmem:[%s1 + $0x20] sm:$0xff]
  %v281 = vld [vmem:[%s1 + $0x28] sm:$0xff]
  %v282 = vld [vmem:[%s1 + $0x30] sm:$0xff]
  %v283 = vld [vmem:[%s1 + $0x38] sm:$0xff]
  %v284 = vld [vmem:[%s1 + $0x40] sm:$0xff]
  %v285 = vld [vmem:[%s1 + $0x48] sm:$0xff]
  %v286 = vld [vmem:[%s1 + $0x50] sm:$0xff]
  %v287 = vld [vmem:[%s1 + $0x58] sm:$0xff]
  %v288 = vld [vmem:[%s1 + $0x60] sm:$0xff]
  %v289 = vld [vmem:[%s1 + $0x68] sm:$0xff]
  %v290 = vld [vmem:[%s1 + $0x70] sm:$0xff]
  %v291 = vld [vmem:[%s1 + $0x78] sm:$0xff]
  %v292 = vld [vmem:[%s2] sm:$0x1]
  %v294 = vlaneseq
  %v295 = vshrl.u32 %v294, 7
  %v296 = vsub.s32 0, %v295
  %v297 = vrot.slane %v292, %v296
  %299 = vmatprep.subr.mxu0 0.0
  %300 = vmatpush1.msra.mxu0 %v276
  %301 = vmatprep.subr.mxu0 0.0
  %302 = vmatpush1.msra.mxu0 %v277
  %303 = vmatprep.subr.mxu0 0.0
  %304 = vmatpush1.msra.mxu0 %v278
  %305 = vmatprep.subr.mxu0 0.0
  %306 = vmatpush1.msra.mxu0 %v279
  %307 = vmatprep.subr.mxu0 0.0
  %308 = vmatpush1.msra.mxu0 %v280
  %309 = vmatprep.subr.mxu0 0.0
  %310 = vmatpush1.msra.mxu0 %v281
  %311 = vmatprep.subr.mxu0 0.0
  %312 = vmatpush1.msra.mxu0 %v282
  %313 = vmatprep.subr.mxu0 0.0
  %314 = vmatpush1.msra.mxu0 %v283
  %315 = vmatprep.subr.mxu0 0.0
  %316 = vmatpush1.msra.mxu0 %v284
  %317 = vmatprep.subr.mxu0 0.0
  %318 = vmatpush1.msra.mxu0 %v285
  %319 = vmatprep.subr.mxu0 0.0
  %320 = vmatpush1.msra.mxu0 %v286
  %321 = vmatprep.subr.mxu0 0.0
  %322 = vmatpush1.msra.mxu0 %v287
  %323 = vmatprep.subr.mxu0 0.0
  %324 = vmatpush1.msra.mxu0 %v288
  %325 = vmatprep.subr.mxu0 0.0
  %326 = vmatpush1.msra.mxu0 %v289
  %327 = vmatprep.subr.mxu0 0.0
  %328 = vmatpush1.msra.mxu0 %v290
  %329 = vmatprep.subr.mxu0 0.0
  %330 = vmatpush1.msra.mxu0 %v291
  %331 = vmatprep.subr.mxu0 0.0
  %332 = vmatpush1.msra.mxu0 0.0
  %333 = vmatprep.subr.mxu0 0.0
  %334 = vmatpush1.msra.mxu0 0.0
  %335 = vmatprep.subr.mxu0 0.0
  %336 = vmatpush1.msra.mxu0 0.0
  %337 = vmatprep.subr.mxu0 0.0
  %338 = vmatpush1.msra.mxu0 0.0
  %339 = vmatprep.subr.mxu0 0.0
  %340 = vmatpush1.msra.mxu0 0.0
  %341 = vmatprep.subr.mxu0 0.0
  %342 = vmatpush1.msra.mxu0 0.0
  %343 = vmatprep.subr.mxu0 0.0
  %344 = vmatpush1.msra.mxu0 0.0
  %345 = vmatprep.subr.mxu0 0.0
  %346 = vmatpush1.msra.mxu0 0.0
  %347 = vmatprep.subr.mxu0 0.0
  %348 = vmatpush1.msra.mxu0 0.0
  %349 = vmatprep.subr.mxu0 0.0
  %350 = vmatpush1.msra.mxu0 0.0
  %351 = vmatprep.subr.mxu0 0.0
  %352 = vmatpush1.msra.mxu0 0.0
  %353 = vmatprep.subr.mxu0 0.0
  %354 = vmatpush1.msra.mxu0 0.0
  %355 = vmatprep.subr.mxu0 0.0
  %356 = vmatpush1.msra.mxu0 0.0
  %357 = vmatprep.subr.mxu0 0.0
  %358 = vmatpush1.msra.mxu0 0.0
  %359 = vmatprep.subr.mxu0 0.0
  %360 = vmatpush1.msra.mxu0 0.0
  %361 = vmatprep.subr.mxu0 0.0
  %362 = vmatpush1.msra.mxu0 0.0
  %363 = vmatprep.mubr.f32.mxu0 0.0
  %364 = vmatmul.mubr.f32.gmra.mrb[0].mxu0 %v20
  %v365 = vpop.f32.mrb[0].mxu0
  %v366 = vadd.f32 %v297, %v365
  %v367 = vpop.f32.mrb[0].mxu0
  %368 = vmatprep.mubr.f32.mxu0 0.0
  %369 = vmatmul.mubr.f32.gmra.mrb[0].mxu0 %v21
  %v370 = vpop.f32.mrb[0].mxu0
  %v371 = vadd.f32 %v297, %v370
  %v372 = vpop.f32.mrb[0].mxu0
  %373 = vmatprep.mubr.f32.mxu0 0.0
  %374 = vmatmul.mubr.f32.gmra.mrb[0].mxu0 %v22
  %v375 = vpop.f32.mrb[0].mxu0
  %v376 = vadd.f32 %v297, %v375
  %v377 = vpop.f32.mrb[0].mxu0
  %378 = vmatprep.mubr.f32.mxu0 0.0
  %379 = vmatmul.mubr.f32.gmra.mrb[0].mxu0 %v23
  %v380 = vpop.f32.mrb[0].mxu0
  %v381 = vadd.f32 %v297, %v380
  %v382 = vpop.f32.mrb[0].mxu0
  %383 = vmatprep.mubr.f32.mxu0 0.0
  %384 = vmatmul.mubr.f32.gmra.mrb[0].mxu0 %v24
  %v385 = vpop.f32.mrb[0].mxu0
  %v386 = vadd.f32 %v297, %v385
  %v387 = vpop.f32.mrb[0].mxu0
  %388 = vmatprep.mubr.f32.mxu0 0.0
  %389 = vmatmul.mubr.f32.gmra.mrb[0].mxu0 %v25
  %v390 = vpop.f32.mrb[0].mxu0
  %v391 = vadd.f32 %v297, %v390
  %v392 = vpop.f32.mrb[0].mxu0
  %393 = vmatprep.mubr.f32.mxu0 0.0
  %394 = vmatmul.mubr.f32.gmra.mrb[0].mxu0 %v26
  %v395 = vpop.f32.mrb[0].mxu0
  %v396 = vadd.f32 %v297, %v395
  %v397 = vpop.f32.mrb[0].mxu0
  %398 = vmatprep.mubr.f32.mxu0 0.0
  %399 = vmatmul.mubr.f32.gmra.mrb[0].mxu0 %v27
  %v400 = vpop.f32.mrb[0].mxu0
  %v401 = vadd.f32 %v297, %v400
  %v402 = vpop.f32.mrb[0].mxu0
  %403 = vmatprep.mubr.f32.mxu0 0.0
  %404 = vmatmul.mubr.f32.gmra.mrb[0].mxu0 %v28
  %v405 = vpop.f32.mrb[0].mxu0
  %v406 = vadd.f32 %v297, %v405
  %v407 = vpop.f32.mrb[0].mxu0
  %408 = vmatprep.mubr.f32.mxu0 0.0
  %409 = vmatmul.mubr.f32.gmra.mrb[0].mxu0 %v29
  %v410 = vpop.f32.mrb[0].mxu0
  %v411 = vadd.f32 %v297, %v410
  %v412 = vpop.f32.mrb[0].mxu0
  %413 = vmatprep.mubr.f32.mxu0 0.0
  %414 = vmatmul.mubr.f32.gmra.mrb[0].mxu0 %v30
  %v415 = vpop.f32.mrb[0].mxu0
  %v416 = vadd.f32 %v297, %v415
  %v417 = vpop.f32.mrb[0].mxu0
  %418 = vmatprep.mubr.f32.mxu0 0.0
  %419 = vmatmul.mubr.f32.gmra.mrb[0].mxu0 %v31
  %v420 = vpop.f32.mrb[0].mxu0
  %v421 = vadd.f32 %v297, %v420
  %v422 = vpop.f32.mrb[0].mxu0
  %423 = vmatprep.mubr.f32.mxu0 0.0
  %424 = vmatmul.mubr.f32.gmra.mrb[0].mxu0 %v32
  %v425 = vpop.f32.mrb[0].mxu0
  %v426 = vadd.f32 %v297, %v425
  %v427 = vpop.f32.mrb[0].mxu0
  %428 = vmatprep.mubr.f32.mxu0 0.0
  %429 = vmatmul.mubr.f32.gmra.mrb[0].mxu0 %v33
  %v430 = vpop.f32.mrb[0].mxu0
  %v431 = vadd.f32 %v297, %v430
  %v432 = vpop.f32.mrb[0].mxu0
  %433 = vmatprep.mubr.f32.mxu0 0.0
  %434 = vmatmul.mubr.f32.gmra.mrb[0].mxu0 %v34
  %v435 = vpop.f32.mrb[0].mxu0
  %v436 = vadd.f32 %v297, %v435
  %v437 = vpop.f32.mrb[0].mxu0
  %438 = vmatprep.mubr.f32.mxu0 0.0
  %439 = vmatmul.mubr.f32.gmra.mrb[0].mxu0 %v35
  %v440 = vpop.f32.mrb[0].mxu0
  %v441 = vadd.f32 %v297, %v440
  %v442 = vpop.f32.mrb[0].mxu0
  %443 = vmatprep.mubr.f32.mxu0 0.0
  %444 = vmatmul.mubr.f32.gmra.mrb[0].mxu0 %v36
  %v445 = vpop.f32.mrb[0].mxu0
  %v446 = vadd.f32 %v297, %v445
  %v447 = vpop.f32.mrb[0].mxu0
  %448 = vmatprep.mubr.f32.mxu0 0.0
  %449 = vmatmul.mubr.f32.gmra.mrb[0].mxu0 %v37
  %v450 = vpop.f32.mrb[0].mxu0
  %v451 = vadd.f32 %v297, %v450
  %v452 = vpop.f32.mrb[0].mxu0
  %453 = vmatprep.mubr.f32.mxu0 0.0
  %454 = vmatmul.mubr.f32.gmra.mrb[0].mxu0 %v38
  %v455 = vpop.f32.mrb[0].mxu0
  %v456 = vadd.f32 %v297, %v455
  %v457 = vpop.f32.mrb[0].mxu0
  %458 = vmatprep.mubr.f32.mxu0 0.0
  %459 = vmatmul.mubr.f32.gmra.mrb[0].mxu0 %v39
  %v460 = vpop.f32.mrb[0].mxu0
  %v461 = vadd.f32 %v297, %v460
  %v462 = vpop.f32.mrb[0].mxu0
  %463 = vmatprep.mubr.f32.mxu0 0.0
  %464 = vmatmul.mubr.f32.gmra.mrb[0].mxu0 %v40
  %v465 = vpop.f32.mrb[0].mxu0
  %v466 = vadd.f32 %v297, %v465
  %v467 = vpop.f32.mrb[0].mxu0
  %468 = vmatprep.mubr.f32.mxu0 0.0
  %469 = vmatmul.mubr.f32.gmra.mrb[0].mxu0 %v41
  %v470 = vpop.f32.mrb[0].mxu0
  %v471 = vadd.f32 %v297, %v470
  %v472 = vpop.f32.mrb[0].mxu0
  %473 = vmatprep.mubr.f32.mxu0 0.0
  %474 = vmatmul.mubr.f32.gmra.mrb[0].mxu0 %v42
  %v475 = vpop.f32.mrb[0].mxu0
  %v476 = vadd.f32 %v297, %v475
  %v477 = vpop.f32.mrb[0].mxu0
  %478 = vmatprep.mubr.f32.mxu0 0.0
  %479 = vmatmul.mubr.f32.gmra.mrb[0].mxu0 %v43
  %v480 = vpop.f32.mrb[0].mxu0
  %v481 = vadd.f32 %v297, %v480
  %v482 = vpop.f32.mrb[0].mxu0
  %483 = vmatprep.mubr.f32.mxu0 0.0
  %484 = vmatmul.mubr.f32.gmra.mrb[0].mxu0 %v44
  %v485 = vpop.f32.mrb[0].mxu0
  %v486 = vadd.f32 %v297, %v485
  %v487 = vpop.f32.mrb[0].mxu0
  %488 = vmatprep.mubr.f32.mxu0 0.0
  %489 = vmatmul.mubr.f32.gmra.mrb[0].mxu0 %v45
  %v490 = vpop.f32.mrb[0].mxu0
  %v491 = vadd.f32 %v297, %v490
  %v492 = vpop.f32.mrb[0].mxu0
  %493 = vmatprep.mubr.f32.mxu0 0.0
  %494 = vmatmul.mubr.f32.gmra.mrb[0].mxu0 %v46
  %v495 = vpop.f32.mrb[0].mxu0
  %v496 = vadd.f32 %v297, %v495
  %v497 = vpop.f32.mrb[0].mxu0
  %498 = vmatprep.mubr.f32.mxu0 0.0
  %499 = vmatmul.mubr.f32.gmra.mrb[0].mxu0 %v47
  %v500 = vpop.f32.mrb[0].mxu0
  %v501 = vadd.f32 %v297, %v500
  %v502 = vpop.f32.mrb[0].mxu0
  %503 = vmatprep.mubr.f32.mxu0 0.0
  %504 = vmatmul.mubr.f32.gmra.mrb[0].mxu0 %v48
  %v505 = vpop.f32.mrb[0].mxu0
  %v506 = vadd.f32 %v297, %v505
  %v507 = vpop.f32.mrb[0].mxu0
  %508 = vmatprep.mubr.f32.mxu0 0.0
  %509 = vmatmul.mubr.f32.gmra.mrb[0].mxu0 %v49
  %v510 = vpop.f32.mrb[0].mxu0
  %v511 = vadd.f32 %v297, %v510
  %v512 = vpop.f32.mrb[0].mxu0
  %513 = vmatprep.mubr.f32.mxu0 0.0
  %514 = vmatmul.mubr.f32.gmra.mrb[0].mxu0 %v50
  %v515 = vpop.f32.mrb[0].mxu0
  %v516 = vadd.f32 %v297, %v515
  %v517 = vpop.f32.mrb[0].mxu0
  %518 = vmatprep.mubr.f32.mxu0 0.0
  %519 = vmatmul.mubr.f32.gmra.mrb[0].mxu0 %v51
  %v520 = vpop.f32.mrb[0].mxu0
  %v521 = vadd.f32 %v297, %v520
  %v522 = vpop.f32.mrb[0].mxu0
  %523 = vmatprep.mubr.f32.mxu0 0.0
  %524 = vmatmul.mubr.f32.gmra.mrb[0].mxu0 %v52
  %v525 = vpop.f32.mrb[0].mxu0
  %v526 = vadd.f32 %v297, %v525
  %v527 = vpop.f32.mrb[0].mxu0
  %528 = vmatprep.mubr.f32.mxu0 0.0
  %529 = vmatmul.mubr.f32.gmra.mrb[0].mxu0 %v53
  %v530 = vpop.f32.mrb[0].mxu0
  %v531 = vadd.f32 %v297, %v530
  %v532 = vpop.f32.mrb[0].mxu0
  %533 = vmatprep.mubr.f32.mxu0 0.0
  %534 = vmatmul.mubr.f32.gmra.mrb[0].mxu0 %v54
  %v535 = vpop.f32.mrb[0].mxu0
  %v536 = vadd.f32 %v297, %v535
  %v537 = vpop.f32.mrb[0].mxu0
  %538 = vmatprep.mubr.f32.mxu0 0.0
  %539 = vmatmul.mubr.f32.gmra.mrb[0].mxu0 %v55
  %v540 = vpop.f32.mrb[0].mxu0
  %v541 = vadd.f32 %v297, %v540
  %v542 = vpop.f32.mrb[0].mxu0
  %543 = vmatprep.mubr.f32.mxu0 0.0
  %544 = vmatmul.mubr.f32.gmra.mrb[0].mxu0 %v56
  %v545 = vpop.f32.mrb[0].mxu0
  %v546 = vadd.f32 %v297, %v545
  %v547 = vpop.f32.mrb[0].mxu0
  %548 = vmatprep.mubr.f32.mxu0 0.0
  %549 = vmatmul.mubr.f32.gmra.mrb[0].mxu0 %v57
  %v550 = vpop.f32.mrb[0].mxu0
  %v551 = vadd.f32 %v297, %v550
  %v552 = vpop.f32.mrb[0].mxu0
  %553 = vmatprep.mubr.f32.mxu0 0.0
  %554 = vmatmul.mubr.f32.gmra.mrb[0].mxu0 %v58
  %v555 = vpop.f32.mrb[0].mxu0
  %v556 = vadd.f32 %v297, %v555
  %v557 = vpop.f32.mrb[0].mxu0
  %558 = vmatprep.mubr.f32.mxu0 0.0
  %559 = vmatmul.mubr.f32.gmra.mrb[0].mxu0 %v59
  %v560 = vpop.f32.mrb[0].mxu0
  %v561 = vadd.f32 %v297, %v560
  %v562 = vpop.f32.mrb[0].mxu0
  %563 = vmatprep.mubr.f32.mxu0 0.0
  %564 = vmatmul.mubr.f32.gmra.mrb[0].mxu0 %v60
  %v565 = vpop.f32.mrb[0].mxu0
  %v566 = vadd.f32 %v297, %v565
  %v567 = vpop.f32.mrb[0].mxu0
  %568 = vmatprep.mubr.f32.mxu0 0.0
  %569 = vmatmul.mubr.f32.gmra.mrb[0].mxu0 %v61
  %v570 = vpop.f32.mrb[0].mxu0
  %v571 = vadd.f32 %v297, %v570
  %v572 = vpop.f32.mrb[0].mxu0
  %573 = vmatprep.mubr.f32.mxu0 0.0
  %574 = vmatmul.mubr.f32.gmra.mrb[0].mxu0 %v62
  %v575 = vpop.f32.mrb[0].mxu0
  %v576 = vadd.f32 %v297, %v575
  %v577 = vpop.f32.mrb[0].mxu0
  %578 = vmatprep.mubr.f32.mxu0 0.0
  %579 = vmatmul.mubr.f32.gmra.mrb[0].mxu0 %v63
  %v580 = vpop.f32.mrb[0].mxu0
  %v581 = vadd.f32 %v297, %v580
  %v582 = vpop.f32.mrb[0].mxu0
  %583 = vmatprep.mubr.f32.mxu0 0.0
  %584 = vmatmul.mubr.f32.gmra.mrb[0].mxu0 %v64
  %v585 = vpop.f32.mrb[0].mxu0
  %v586 = vadd.f32 %v297, %v585
  %v587 = vpop.f32.mrb[0].mxu0
  %588 = vmatprep.mubr.f32.mxu0 0.0
  %589 = vmatmul.mubr.f32.gmra.mrb[0].mxu0 %v65
  %v590 = vpop.f32.mrb[0].mxu0
  %v591 = vadd.f32 %v297, %v590
  %v592 = vpop.f32.mrb[0].mxu0
  %593 = vmatprep.mubr.f32.mxu0 0.0
  %594 = vmatmul.mubr.f32.gmra.mrb[0].mxu0 %v66
  %v595 = vpop.f32.mrb[0].mxu0
  %v596 = vadd.f32 %v297, %v595
  %v597 = vpop.f32.mrb[0].mxu0
  %598 = vmatprep.mubr.f32.mxu0 0.0
  %599 = vmatmul.mubr.f32.gmra.mrb[0].mxu0 %v67
  %v600 = vpop.f32.mrb[0].mxu0
  %v601 = vadd.f32 %v297, %v600
  %v602 = vpop.f32.mrb[0].mxu0
  %603 = vmatprep.mubr.f32.mxu0 0.0
  %604 = vmatmul.mubr.f32.gmra.mrb[0].mxu0 %v68
  %v605 = vpop.f32.mrb[0].mxu0
  %v606 = vadd.f32 %v297, %v605
  %v607 = vpop.f32.mrb[0].mxu0
  %608 = vmatprep.mubr.f32.mxu0 0.0
  %609 = vmatmul.mubr.f32.gmra.mrb[0].mxu0 %v69
  %v610 = vpop.f32.mrb[0].mxu0
  %v611 = vadd.f32 %v297, %v610
  %v612 = vpop.f32.mrb[0].mxu0
  %613 = vmatprep.mubr.f32.mxu0 0.0
  %614 = vmatmul.mubr.f32.gmra.mrb[0].mxu0 %v70
  %v615 = vpop.f32.mrb[0].mxu0
  %v616 = vadd.f32 %v297, %v615
  %v617 = vpop.f32.mrb[0].mxu0
  %618 = vmatprep.mubr.f32.mxu0 0.0
  %619 = vmatmul.mubr.f32.gmra.mrb[0].mxu0 %v71
  %v620 = vpop.f32.mrb[0].mxu0
  %v621 = vadd.f32 %v297, %v620
  %v622 = vpop.f32.mrb[0].mxu0
  %623 = vmatprep.mubr.f32.mxu0 0.0
  %624 = vmatmul.mubr.f32.gmra.mrb[0].mxu0 %v72
  %v625 = vpop.f32.mrb[0].mxu0
  %v626 = vadd.f32 %v297, %v625
  %v627 = vpop.f32.mrb[0].mxu0
  %628 = vmatprep.mubr.f32.mxu0 0.0
  %629 = vmatmul.mubr.f32.gmra.mrb[0].mxu0 %v73
  %v630 = vpop.f32.mrb[0].mxu0
  %v631 = vadd.f32 %v297, %v630
  %v632 = vpop.f32.mrb[0].mxu0
  %633 = vmatprep.mubr.f32.mxu0 0.0
  %634 = vmatmul.mubr.f32.gmra.mrb[0].mxu0 %v74
  %v635 = vpop.f32.mrb[0].mxu0
  %v636 = vadd.f32 %v297, %v635
  %v637 = vpop.f32.mrb[0].mxu0
  %638 = vmatprep.mubr.f32.mxu0 0.0
  %639 = vmatmul.mubr.f32.gmra.mrb[0].mxu0 %v75
  %v640 = vpop.f32.mrb[0].mxu0
  %v641 = vadd.f32 %v297, %v640
  %v642 = vpop.f32.mrb[0].mxu0
  %643 = vmatprep.mubr.f32.mxu0 0.0
  %644 = vmatmul.mubr.f32.gmra.mrb[0].mxu0 %v76
  %v645 = vpop.f32.mrb[0].mxu0
  %v646 = vadd.f32 %v297, %v645
  %v647 = vpop.f32.mrb[0].mxu0
  %648 = vmatprep.mubr.f32.mxu0 0.0
  %649 = vmatmul.mubr.f32.gmra.mrb[0].mxu0 %v77
  %v650 = vpop.f32.mrb[0].mxu0
  %v651 = vadd.f32 %v297, %v650
  %v652 = vpop.f32.mrb[0].mxu0
  %653 = vmatprep.mubr.f32.mxu0 0.0
  %654 = vmatmul.mubr.f32.gmra.mrb[0].mxu0 %v78
  %v655 = vpop.f32.mrb[0].mxu0
  %v656 = vadd.f32 %v297, %v655
  %v657 = vpop.f32.mrb[0].mxu0
  %658 = vmatprep.mubr.f32.mxu0 0.0
  %659 = vmatmul.mubr.f32.gmra.mrb[0].mxu0 %v79
  %v660 = vpop.f32.mrb[0].mxu0
  %v661 = vadd.f32 %v297, %v660
  %v662 = vpop.f32.mrb[0].mxu0
  %663 = vmatprep.mubr.f32.mxu0 0.0
  %664 = vmatmul.mubr.f32.gmra.mrb[0].mxu0 %v80
  %v665 = vpop.f32.mrb[0].mxu0
  %v666 = vadd.f32 %v297, %v665
  %v667 = vpop.f32.mrb[0].mxu0
  %668 = vmatprep.mubr.f32.mxu0 0.0
  %669 = vmatmul.mubr.f32.gmra.mrb[0].mxu0 %v81
  %v670 = vpop.f32.mrb[0].mxu0
  %v671 = vadd.f32 %v297, %v670
  %v672 = vpop.f32.mrb[0].mxu0
  %673 = vmatprep.mubr.f32.mxu0 0.0
  %674 = vmatmul.mubr.f32.gmra.mrb[0].mxu0 %v82
  %v675 = vpop.f32.mrb[0].mxu0
  %v676 = vadd.f32 %v297, %v675
  %v677 = vpop.f32.mrb[0].mxu0
  %678 = vmatprep.mubr.f32.mxu0 0.0
  %679 = vmatmul.mubr.f32.gmra.mrb[0].mxu0 %v83
  %v680 = vpop.f32.mrb[0].mxu0
  %v681 = vadd.f32 %v297, %v680
  %v682 = vpop.f32.mrb[0].mxu0
  %683 = vmatprep.mubr.f32.mxu0 0.0
  %684 = vmatmul.mubr.f32.gmra.mrb[0].mxu0 %v84
  %v685 = vpop.f32.mrb[0].mxu0
  %v686 = vadd.f32 %v297, %v685
  %v687 = vpop.f32.mrb[0].mxu0
  %688 = vmatprep.mubr.f32.mxu0 0.0
  %689 = vmatmul.mubr.f32.gmra.mrb[0].mxu0 %v85
  %v690 = vpop.f32.mrb[0].mxu0
  %v691 = vadd.f32 %v297, %v690
  %v692 = vpop.f32.mrb[0].mxu0
  %693 = vmatprep.mubr.f32.mxu0 0.0
  %694 = vmatmul.mubr.f32.gmra.mrb[0].mxu0 %v86
  %v695 = vpop.f32.mrb[0].mxu0
  %v696 = vadd.f32 %v297, %v695
  %v697 = vpop.f32.mrb[0].mxu0
  %698 = vmatprep.mubr.f32.mxu0 0.0
  %699 = vmatmul.mubr.f32.gmra.mrb[0].mxu0 %v87
  %v700 = vpop.f32.mrb[0].mxu0
  %v701 = vadd.f32 %v297, %v700
  %v702 = vpop.f32.mrb[0].mxu0
  %703 = vmatprep.mubr.f32.mxu0 0.0
  %704 = vmatmul.mubr.f32.gmra.mrb[0].mxu0 %v88
  %v705 = vpop.f32.mrb[0].mxu0
  %v706 = vadd.f32 %v297, %v705
  %v707 = vpop.f32.mrb[0].mxu0
  %708 = vmatprep.mubr.f32.mxu0 0.0
  %709 = vmatmul.mubr.f32.gmra.mrb[0].mxu0 %v89
  %v710 = vpop.f32.mrb[0].mxu0
  %v711 = vadd.f32 %v297, %v710
  %v712 = vpop.f32.mrb[0].mxu0
  %713 = vmatprep.mubr.f32.mxu0 0.0
  %714 = vmatmul.mubr.f32.gmra.mrb[0].mxu0 %v90
  %v715 = vpop.f32.mrb[0].mxu0
  %v716 = vadd.f32 %v297, %v715
  %v717 = vpop.f32.mrb[0].mxu0
  %718 = vmatprep.mubr.f32.mxu0 0.0
  %719 = vmatmul.mubr.f32.gmra.mrb[0].mxu0 %v91
  %v720 = vpop.f32.mrb[0].mxu0
  %v721 = vadd.f32 %v297, %v720
  %v722 = vpop.f32.mrb[0].mxu0
  %723 = vmatprep.mubr.f32.mxu0 0.0
  %724 = vmatmul.mubr.f32.gmra.mrb[0].mxu0 %v92
  %v725 = vpop.f32.mrb[0].mxu0
  %v726 = vadd.f32 %v297, %v725
  %v727 = vpop.f32.mrb[0].mxu0
  %728 = vmatprep.mubr.f32.mxu0 0.0
  %729 = vmatmul.mubr.f32.gmra.mrb[0].mxu0 %v93
  %v730 = vpop.f32.mrb[0].mxu0
  %v731 = vadd.f32 %v297, %v730
  %v732 = vpop.f32.mrb[0].mxu0
  %733 = vmatprep.mubr.f32.mxu0 0.0
  %734 = vmatmul.mubr.f32.gmra.mrb[0].mxu0 %v94
  %v735 = vpop.f32.mrb[0].mxu0
  %v736 = vadd.f32 %v297, %v735
  %v737 = vpop.f32.mrb[0].mxu0
  %738 = vmatprep.mubr.f32.mxu0 0.0
  %739 = vmatmul.mubr.f32.gmra.mrb[0].mxu0 %v95
  %v740 = vpop.f32.mrb[0].mxu0
  %v741 = vadd.f32 %v297, %v740
  %v742 = vpop.f32.mrb[0].mxu0
  %743 = vmatprep.mubr.f32.mxu0 0.0
  %744 = vmatmul.mubr.f32.gmra.mrb[0].mxu0 %v96
  %v745 = vpop.f32.mrb[0].mxu0
  %v746 = vadd.f32 %v297, %v745
  %v747 = vpop.f32.mrb[0].mxu0
  %748 = vmatprep.mubr.f32.mxu0 0.0
  %749 = vmatmul.mubr.f32.gmra.mrb[0].mxu0 %v97
  %v750 = vpop.f32.mrb[0].mxu0
  %v751 = vadd.f32 %v297, %v750
  %v752 = vpop.f32.mrb[0].mxu0
  %753 = vmatprep.mubr.f32.mxu0 0.0
  %754 = vmatmul.mubr.f32.gmra.mrb[0].mxu0 %v98
  %v755 = vpop.f32.mrb[0].mxu0
  %v756 = vadd.f32 %v297, %v755
  %v757 = vpop.f32.mrb[0].mxu0
  %758 = vmatprep.mubr.f32.mxu0 0.0
  %759 = vmatmul.mubr.f32.gmra.mrb[0].mxu0 %v99
  %v760 = vpop.f32.mrb[0].mxu0
  %v761 = vadd.f32 %v297, %v760
  %v762 = vpop.f32.mrb[0].mxu0
  %763 = vmatprep.mubr.f32.mxu0 0.0
  %764 = vmatmul.mubr.f32.gmra.mrb[0].mxu0 %v100
  %v765 = vpop.f32.mrb[0].mxu0
  %v766 = vadd.f32 %v297, %v765
  %v767 = vpop.f32.mrb[0].mxu0
  %768 = vmatprep.mubr.f32.mxu0 0.0
  %769 = vmatmul.mubr.f32.gmra.mrb[0].mxu0 %v101
  %v770 = vpop.f32.mrb[0].mxu0
  %v771 = vadd.f32 %v297, %v770
  %v772 = vpop.f32.mrb[0].mxu0
  %773 = vmatprep.mubr.f32.mxu0 0.0
  %774 = vmatmul.mubr.f32.gmra.mrb[0].mxu0 %v102
  %v775 = vpop.f32.mrb[0].mxu0
  %v776 = vadd.f32 %v297, %v775
  %v777 = vpop.f32.mrb[0].mxu0
  %778 = vmatprep.mubr.f32.mxu0 0.0
  %779 = vmatmul.mubr.f32.gmra.mrb[0].mxu0 %v103
  %v780 = vpop.f32.mrb[0].mxu0
  %v781 = vadd.f32 %v297, %v780
  %v782 = vpop.f32.mrb[0].mxu0
  %783 = vmatprep.mubr.f32.mxu0 0.0
  %784 = vmatmul.mubr.f32.gmra.mrb[0].mxu0 %v104
  %v785 = vpop.f32.mrb[0].mxu0
  %v786 = vadd.f32 %v297, %v785
  %v787 = vpop.f32.mrb[0].mxu0
  %788 = vmatprep.mubr.f32.mxu0 0.0
  %789 = vmatmul.mubr.f32.gmra.mrb[0].mxu0 %v105
  %v790 = vpop.f32.mrb[0].mxu0
  %v791 = vadd.f32 %v297, %v790
  %v792 = vpop.f32.mrb[0].mxu0
  %793 = vmatprep.mubr.f32.mxu0 0.0
  %794 = vmatmul.mubr.f32.gmra.mrb[0].mxu0 %v106
  %v795 = vpop.f32.mrb[0].mxu0
  %v796 = vadd.f32 %v297, %v795
  %v797 = vpop.f32.mrb[0].mxu0
  %798 = vmatprep.mubr.f32.mxu0 0.0
  %799 = vmatmul.mubr.f32.gmra.mrb[0].mxu0 %v107
  %v800 = vpop.f32.mrb[0].mxu0
  %v801 = vadd.f32 %v297, %v800
  %v802 = vpop.f32.mrb[0].mxu0
  %803 = vmatprep.mubr.f32.mxu0 0.0
  %804 = vmatmul.mubr.f32.gmra.mrb[0].mxu0 %v108
  %v805 = vpop.f32.mrb[0].mxu0
  %v806 = vadd.f32 %v297, %v805
  %v807 = vpop.f32.mrb[0].mxu0
  %808 = vmatprep.mubr.f32.mxu0 0.0
  %809 = vmatmul.mubr.f32.gmra.mrb[0].mxu0 %v109
  %v810 = vpop.f32.mrb[0].mxu0
  %v811 = vadd.f32 %v297, %v810
  %v812 = vpop.f32.mrb[0].mxu0
  %813 = vmatprep.mubr.f32.mxu0 0.0
  %814 = vmatmul.mubr.f32.gmra.mrb[0].mxu0 %v110
  %v815 = vpop.f32.mrb[0].mxu0
  %v816 = vadd.f32 %v297, %v815
  %v817 = vpop.f32.mrb[0].mxu0
  %818 = vmatprep.mubr.f32.mxu0 0.0
  %819 = vmatmul.mubr.f32.gmra.mrb[0].mxu0 %v111
  %v820 = vpop.f32.mrb[0].mxu0
  %v821 = vadd.f32 %v297, %v820
  %v822 = vpop.f32.mrb[0].mxu0
  %823 = vmatprep.mubr.f32.mxu0 0.0
  %824 = vmatmul.mubr.f32.gmra.mrb[0].mxu0 %v112
  %v825 = vpop.f32.mrb[0].mxu0
  %v826 = vadd.f32 %v297, %v825
  %v827 = vpop.f32.mrb[0].mxu0
  %828 = vmatprep.mubr.f32.mxu0 0.0
  %829 = vmatmul.mubr.f32.gmra.mrb[0].mxu0 %v113
  %v830 = vpop.f32.mrb[0].mxu0
  %v831 = vadd.f32 %v297, %v830
  %v832 = vpop.f32.mrb[0].mxu0
  %833 = vmatprep.mubr.f32.mxu0 0.0
  %834 = vmatmul.mubr.f32.gmra.mrb[0].mxu0 %v114
  %v835 = vpop.f32.mrb[0].mxu0
  %v836 = vadd.f32 %v297, %v835
  %v837 = vpop.f32.mrb[0].mxu0
  %838 = vmatprep.mubr.f32.mxu0 0.0
  %839 = vmatmul.mubr.f32.gmra.mrb[0].mxu0 %v115
  %v840 = vpop.f32.mrb[0].mxu0
  %v841 = vadd.f32 %v297, %v840
  %v842 = vpop.f32.mrb[0].mxu0
  %843 = vmatprep.mubr.f32.mxu0 0.0
  %844 = vmatmul.mubr.f32.gmra.mrb[0].mxu0 %v116
  %v845 = vpop.f32.mrb[0].mxu0
  %v846 = vadd.f32 %v297, %v845
  %v847 = vpop.f32.mrb[0].mxu0
  %848 = vmatprep.mubr.f32.mxu0 0.0
  %849 = vmatmul.mubr.f32.gmra.mrb[0].mxu0 %v117
  %v850 = vpop.f32.mrb[0].mxu0
  %v851 = vadd.f32 %v297, %v850
  %v852 = vpop.f32.mrb[0].mxu0
  %853 = vmatprep.mubr.f32.mxu0 0.0
  %854 = vmatmul.mubr.f32.gmra.mrb[0].mxu0 %v118
  %v855 = vpop.f32.mrb[0].mxu0
  %v856 = vadd.f32 %v297, %v855
  %v857 = vpop.f32.mrb[0].mxu0
  %858 = vmatprep.mubr.f32.mxu0 0.0
  %859 = vmatmul.mubr.f32.gmra.mrb[0].mxu0 %v119
  %v860 = vpop.f32.mrb[0].mxu0
  %v861 = vadd.f32 %v297, %v860
  %v862 = vpop.f32.mrb[0].mxu0
  %863 = vmatprep.mubr.f32.mxu0 0.0
  %864 = vmatmul.mubr.f32.gmra.mrb[0].mxu0 %v120
  %v865 = vpop.f32.mrb[0].mxu0
  %v866 = vadd.f32 %v297, %v865
  %v867 = vpop.f32.mrb[0].mxu0
  %868 = vmatprep.mubr.f32.mxu0 0.0
  %869 = vmatmul.mubr.f32.gmra.mrb[0].mxu0 %v121
  %v870 = vpop.f32.mrb[0].mxu0
  %v871 = vadd.f32 %v297, %v870
  %v872 = vpop.f32.mrb[0].mxu0
  %873 = vmatprep.mubr.f32.mxu0 0.0
  %874 = vmatmul.mubr.f32.gmra.mrb[0].mxu0 %v122
  %v875 = vpop.f32.mrb[0].mxu0
  %v876 = vadd.f32 %v297, %v875
  %v877 = vpop.f32.mrb[0].mxu0
  %878 = vmatprep.mubr.f32.mxu0 0.0
  %879 = vmatmul.mubr.f32.gmra.mrb[0].mxu0 %v123
  %v880 = vpop.f32.mrb[0].mxu0
  %v881 = vadd.f32 %v297, %v880
  %v882 = vpop.f32.mrb[0].mxu0
  %883 = vmatprep.mubr.f32.mxu0 0.0
  %884 = vmatmul.mubr.f32.gmra.mrb[0].mxu0 %v124
  %v885 = vpop.f32.mrb[0].mxu0
  %v886 = vadd.f32 %v297, %v885
  %v887 = vpop.f32.mrb[0].mxu0
  %888 = vmatprep.mubr.f32.mxu0 0.0
  %889 = vmatmul.mubr.f32.gmra.mrb[0].mxu0 %v125
  %v890 = vpop.f32.mrb[0].mxu0
  %v891 = vadd.f32 %v297, %v890
  %v892 = vpop.f32.mrb[0].mxu0
  %893 = vmatprep.mubr.f32.mxu0 0.0
  %894 = vmatmul.mubr.f32.gmra.mrb[0].mxu0 %v126
  %v895 = vpop.f32.mrb[0].mxu0
  %v896 = vadd.f32 %v297, %v895
  %v897 = vpop.f32.mrb[0].mxu0
  %898 = vmatprep.mubr.f32.mxu0 0.0
  %899 = vmatmul.mubr.f32.gmra.mrb[0].mxu0 %v127
  %v900 = vpop.f32.mrb[0].mxu0
  %v901 = vadd.f32 %v297, %v900
  %v902 = vpop.f32.mrb[0].mxu0
  %903 = vmatprep.mubr.f32.mxu0 0.0
  %904 = vmatmul.mubr.f32.gmra.mrb[0].mxu0 %v128
  %v905 = vpop.f32.mrb[0].mxu0
  %v906 = vadd.f32 %v297, %v905
  %v907 = vpop.f32.mrb[0].mxu0
  %908 = vmatprep.mubr.f32.mxu0 0.0
  %909 = vmatmul.mubr.f32.gmra.mrb[0].mxu0 %v129
  %v910 = vpop.f32.mrb[0].mxu0
  %v911 = vadd.f32 %v297, %v910
  %v912 = vpop.f32.mrb[0].mxu0
  %913 = vmatprep.mubr.f32.mxu0 0.0
  %914 = vmatmul.mubr.f32.gmra.mrb[0].mxu0 %v130
  %v915 = vpop.f32.mrb[0].mxu0
  %v916 = vadd.f32 %v297, %v915
  %v917 = vpop.f32.mrb[0].mxu0
  %918 = vmatprep.mubr.f32.mxu0 0.0
  %919 = vmatmul.mubr.f32.gmra.mrb[0].mxu0 %v131
  %v920 = vpop.f32.mrb[0].mxu0
  %v921 = vadd.f32 %v297, %v920
  %v922 = vpop.f32.mrb[0].mxu0
  %923 = vmatprep.mubr.f32.mxu0 0.0
  %924 = vmatmul.mubr.f32.gmra.mrb[0].mxu0 %v132
  %v925 = vpop.f32.mrb[0].mxu0
  %v926 = vadd.f32 %v297, %v925
  %v927 = vpop.f32.mrb[0].mxu0
  %928 = vmatprep.mubr.f32.mxu0 0.0
  %929 = vmatmul.mubr.f32.gmra.mrb[0].mxu0 %v133
  %v930 = vpop.f32.mrb[0].mxu0
  %v931 = vadd.f32 %v297, %v930
  %v932 = vpop.f32.mrb[0].mxu0
  %933 = vmatprep.mubr.f32.mxu0 0.0
  %934 = vmatmul.mubr.f32.gmra.mrb[0].mxu0 %v134
  %v935 = vpop.f32.mrb[0].mxu0
  %v936 = vadd.f32 %v297, %v935
  %v937 = vpop.f32.mrb[0].mxu0
  %938 = vmatprep.mubr.f32.mxu0 0.0
  %939 = vmatmul.mubr.f32.gmra.mrb[0].mxu0 %v135
  %v940 = vpop.f32.mrb[0].mxu0
  %v941 = vadd.f32 %v297, %v940
  %v942 = vpop.f32.mrb[0].mxu0
  %943 = vmatprep.mubr.f32.mxu0 0.0
  %944 = vmatmul.mubr.f32.gmra.mrb[0].mxu0 %v136
  %v945 = vpop.f32.mrb[0].mxu0
  %v946 = vadd.f32 %v297, %v945
  %v947 = vpop.f32.mrb[0].mxu0
  %948 = vmatprep.mubr.f32.mxu0 0.0
  %949 = vmatmul.mubr.f32.gmra.mrb[0].mxu0 %v137
  %v950 = vpop.f32.mrb[0].mxu0
  %v951 = vadd.f32 %v297, %v950
  %v952 = vpop.f32.mrb[0].mxu0
  %953 = vmatprep.mubr.f32.mxu0 0.0
  %954 = vmatmul.mubr.f32.gmra.mrb[0].mxu0 %v138
  %v955 = vpop.f32.mrb[0].mxu0
  %v956 = vadd.f32 %v297, %v955
  %v957 = vpop.f32.mrb[0].mxu0
  %958 = vmatprep.mubr.f32.mxu0 0.0
  %959 = vmatmul.mubr.f32.gmra.mrb[0].mxu0 %v139
  %v960 = vpop.f32.mrb[0].mxu0
  %v961 = vadd.f32 %v297, %v960
  %v962 = vpop.f32.mrb[0].mxu0
  %963 = vmatprep.mubr.f32.mxu0 0.0
  %964 = vmatmul.mubr.f32.gmra.mrb[0].mxu0 %v140
  %v965 = vpop.f32.mrb[0].mxu0
  %v966 = vadd.f32 %v297, %v965
  %v967 = vpop.f32.mrb[0].mxu0
  %968 = vmatprep.mubr.f32.mxu0 0.0
  %969 = vmatmul.mubr.f32.gmra.mrb[0].mxu0 %v141
  %v970 = vpop.f32.mrb[0].mxu0
  %v971 = vadd.f32 %v297, %v970
  %v972 = vpop.f32.mrb[0].mxu0
  %973 = vmatprep.mubr.f32.mxu0 0.0
  %974 = vmatmul.mubr.f32.gmra.mrb[0].mxu0 %v142
  %v975 = vpop.f32.mrb[0].mxu0
  %v976 = vadd.f32 %v297, %v975
  %v977 = vpop.f32.mrb[0].mxu0
  %978 = vmatprep.mubr.f32.mxu0 0.0
  %979 = vmatmul.mubr.f32.gmra.mrb[0].mxu0 %v143
  %v980 = vpop.f32.mrb[0].mxu0
  %v981 = vadd.f32 %v297, %v980
  %v982 = vpop.f32.mrb[0].mxu0
  %983 = vmatprep.mubr.f32.mxu0 0.0
  %984 = vmatmul.mubr.f32.gmra.mrb[0].mxu0 %v144
  %v985 = vpop.f32.mrb[0].mxu0
  %v986 = vadd.f32 %v297, %v985
  %v987 = vpop.f32.mrb[0].mxu0
  %988 = vmatprep.mubr.f32.mxu0 0.0
  %989 = vmatmul.mubr.f32.gmra.mrb[0].mxu0 %v145
  %v990 = vpop.f32.mrb[0].mxu0
  %v991 = vadd.f32 %v297, %v990
  %v992 = vpop.f32.mrb[0].mxu0
  %993 = vmatprep.mubr.f32.mxu0 0.0
  %994 = vmatmul.mubr.f32.gmra.mrb[0].mxu0 %v146
  %v995 = vpop.f32.mrb[0].mxu0
  %v996 = vadd.f32 %v297, %v995
  %v997 = vpop.f32.mrb[0].mxu0
  %998 = vmatprep.mubr.f32.mxu0 0.0
  %999 = vmatmul.mubr.f32.gmra.mrb[0].mxu0 %v147
  %v1000 = vpop.f32.mrb[0].mxu0
  %v1001 = vadd.f32 %v297, %v1000
  %v1002 = vpop.f32.mrb[0].mxu0
  %1003 = vmatprep.mubr.f32.mxu0 0.0
  %1004 = vmatmul.mubr.f32.gmra.mrb[0].mxu0 %v148
  %v1005 = vpop.f32.mrb[0].mxu0
  %v1006 = vadd.f32 %v297, %v1005
  %v1007 = vpop.f32.mrb[0].mxu0
  %1008 = vmatprep.mubr.f32.mxu0 0.0
  %1009 = vmatmul.mubr.f32.gmra.mrb[0].mxu0 %v149
  %v1010 = vpop.f32.mrb[0].mxu0
  %v1011 = vadd.f32 %v297, %v1010
  %v1012 = vpop.f32.mrb[0].mxu0
  %1013 = vmatprep.mubr.f32.mxu0 0.0
  %1014 = vmatmul.mubr.f32.gmra.mrb[0].mxu0 %v150
  %v1015 = vpop.f32.mrb[0].mxu0
  %v1016 = vadd.f32 %v297, %v1015
  %v1017 = vpop.f32.mrb[0].mxu0
  %1018 = vmatprep.mubr.f32.mxu0 0.0
  %1019 = vmatmul.mubr.f32.gmra.mrb[0].mxu0 %v151
  %v1020 = vpop.f32.mrb[0].mxu0
  %v1021 = vadd.f32 %v297, %v1020
  %v1022 = vpop.f32.mrb[0].mxu0
  %1023 = vmatprep.mubr.f32.mxu0 0.0
  %1024 = vmatmul.mubr.f32.gmra.mrb[0].mxu0 %v152
  %v1025 = vpop.f32.mrb[0].mxu0
  %v1026 = vadd.f32 %v297, %v1025
  %v1027 = vpop.f32.mrb[0].mxu0
  %1028 = vmatprep.mubr.f32.mxu0 0.0
  %1029 = vmatmul.mubr.f32.gmra.mrb[0].mxu0 %v153
  %v1030 = vpop.f32.mrb[0].mxu0
  %v1031 = vadd.f32 %v297, %v1030
  %v1032 = vpop.f32.mrb[0].mxu0
  %1033 = vmatprep.mubr.f32.mxu0 0.0
  %1034 = vmatmul.mubr.f32.gmra.mrb[0].mxu0 %v154
  %v1035 = vpop.f32.mrb[0].mxu0
  %v1036 = vadd.f32 %v297, %v1035
  %v1037 = vpop.f32.mrb[0].mxu0
  %1038 = vmatprep.mubr.f32.mxu0 0.0
  %1039 = vmatmul.mubr.f32.gmra.mrb[0].mxu0 %v155
  %v1040 = vpop.f32.mrb[0].mxu0
  %v1041 = vadd.f32 %v297, %v1040
  %v1042 = vpop.f32.mrb[0].mxu0
  %1043 = vmatprep.mubr.f32.mxu0 0.0
  %1044 = vmatmul.mubr.f32.gmra.mrb[0].mxu0 %v156
  %v1045 = vpop.f32.mrb[0].mxu0
  %v1046 = vadd.f32 %v297, %v1045
  %v1047 = vpop.f32.mrb[0].mxu0
  %1048 = vmatprep.mubr.f32.mxu0 0.0
  %1049 = vmatmul.mubr.f32.gmra.mrb[0].mxu0 %v157
  %v1050 = vpop.f32.mrb[0].mxu0
  %v1051 = vadd.f32 %v297, %v1050
  %v1052 = vpop.f32.mrb[0].mxu0
  %1053 = vmatprep.mubr.f32.mxu0 0.0
  %1054 = vmatmul.mubr.f32.gmra.mrb[0].mxu0 %v158
  %v1055 = vpop.f32.mrb[0].mxu0
  %v1056 = vadd.f32 %v297, %v1055
  %v1057 = vpop.f32.mrb[0].mxu0
  %1058 = vmatprep.mubr.f32.mxu0 0.0
  %1059 = vmatmul.mubr.f32.gmra.mrb[0].mxu0 %v159
  %v1060 = vpop.f32.mrb[0].mxu0
  %v1061 = vadd.f32 %v297, %v1060
  %v1062 = vpop.f32.mrb[0].mxu0
  %1063 = vmatprep.mubr.f32.mxu0 0.0
  %1064 = vmatmul.mubr.f32.gmra.mrb[0].mxu0 %v160
  %v1065 = vpop.f32.mrb[0].mxu0
  %v1066 = vadd.f32 %v297, %v1065
  %v1067 = vpop.f32.mrb[0].mxu0
  %1068 = vmatprep.mubr.f32.mxu0 0.0
  %1069 = vmatmul.mubr.f32.gmra.mrb[0].mxu0 %v161
  %v1070 = vpop.f32.mrb[0].mxu0
  %v1071 = vadd.f32 %v297, %v1070
  %v1072 = vpop.f32.mrb[0].mxu0
  %1073 = vmatprep.mubr.f32.mxu0 0.0
  %1074 = vmatmul.mubr.f32.gmra.mrb[0].mxu0 %v162
  %v1075 = vpop.f32.mrb[0].mxu0
  %v1076 = vadd.f32 %v297, %v1075
  %v1077 = vpop.f32.mrb[0].mxu0
  %1078 = vmatprep.mubr.f32.mxu0 0.0
  %1079 = vmatmul.mubr.f32.gmra.mrb[0].mxu0 %v163
  %v1080 = vpop.f32.mrb[0].mxu0
  %v1081 = vadd.f32 %v297, %v1080
  %v1082 = vpop.f32.mrb[0].mxu0
  %1083 = vmatprep.mubr.f32.mxu0 0.0
  %1084 = vmatmul.mubr.f32.gmra.mrb[0].mxu0 %v164
  %v1085 = vpop.f32.mrb[0].mxu0
  %v1086 = vadd.f32 %v297, %v1085
  %v1087 = vpop.f32.mrb[0].mxu0
  %1088 = vmatprep.mubr.f32.mxu0 0.0
  %1089 = vmatmul.mubr.f32.gmra.mrb[0].mxu0 %v165
  %v1090 = vpop.f32.mrb[0].mxu0
  %v1091 = vadd.f32 %v297, %v1090
  %v1092 = vpop.f32.mrb[0].mxu0
  %1093 = vmatprep.mubr.f32.mxu0 0.0
  %1094 = vmatmul.mubr.f32.gmra.mrb[0].mxu0 %v166
  %v1095 = vpop.f32.mrb[0].mxu0
  %v1096 = vadd.f32 %v297, %v1095
  %v1097 = vpop.f32.mrb[0].mxu0
  %1098 = vmatprep.mubr.f32.mxu0 0.0
  %1099 = vmatmul.mubr.f32.gmra.mrb[0].mxu0 %v167
  %v1100 = vpop.f32.mrb[0].mxu0
  %v1101 = vadd.f32 %v297, %v1100
  %v1102 = vpop.f32.mrb[0].mxu0
  %1103 = vmatprep.mubr.f32.mxu0 0.0
  %1104 = vmatmul.mubr.f32.gmra.mrb[0].mxu0 %v168
  %v1105 = vpop.f32.mrb[0].mxu0
  %v1106 = vadd.f32 %v297, %v1105
  %v1107 = vpop.f32.mrb[0].mxu0
  %1108 = vmatprep.mubr.f32.mxu0 0.0
  %1109 = vmatmul.mubr.f32.gmra.mrb[0].mxu0 %v169
  %v1110 = vpop.f32.mrb[0].mxu0
  %v1111 = vadd.f32 %v297, %v1110
  %v1112 = vpop.f32.mrb[0].mxu0
  %1113 = vmatprep.mubr.f32.mxu0 0.0
  %1114 = vmatmul.mubr.f32.gmra.mrb[0].mxu0 %v170
  %v1115 = vpop.f32.mrb[0].mxu0
  %v1116 = vadd.f32 %v297, %v1115
  %v1117 = vpop.f32.mrb[0].mxu0
  %1118 = vmatprep.mubr.f32.mxu0 0.0
  %1119 = vmatmul.mubr.f32.gmra.mrb[0].mxu0 %v171
  %v1120 = vpop.f32.mrb[0].mxu0
  %v1121 = vadd.f32 %v297, %v1120
  %v1122 = vpop.f32.mrb[0].mxu0
  %1123 = vmatprep.mubr.f32.mxu0 0.0
  %1124 = vmatmul.mubr.f32.gmra.mrb[0].mxu0 %v172
  %v1125 = vpop.f32.mrb[0].mxu0
  %v1126 = vadd.f32 %v297, %v1125
  %v1127 = vpop.f32.mrb[0].mxu0
  %1128 = vmatprep.mubr.f32.mxu0 0.0
  %1129 = vmatmul.mubr.f32.gmra.mrb[0].mxu0 %v173
  %v1130 = vpop.f32.mrb[0].mxu0
  %v1131 = vadd.f32 %v297, %v1130
  %v1132 = vpop.f32.mrb[0].mxu0
  %1133 = vmatprep.mubr.f32.mxu0 0.0
  %1134 = vmatmul.mubr.f32.gmra.mrb[0].mxu0 %v174
  %v1135 = vpop.f32.mrb[0].mxu0
  %v1136 = vadd.f32 %v297, %v1135
  %v1137 = vpop.f32.mrb[0].mxu0
  %1138 = vmatprep.mubr.f32.mxu0 0.0
  %1139 = vmatmul.mubr.f32.gmra.mrb[0].mxu0 %v175
  %v1140 = vpop.f32.mrb[0].mxu0
  %v1141 = vadd.f32 %v297, %v1140
  %v1142 = vpop.f32.mrb[0].mxu0
  %1143 = vmatprep.mubr.f32.mxu0 0.0
  %1144 = vmatmul.mubr.f32.gmra.mrb[0].mxu0 %v176
  %v1145 = vpop.f32.mrb[0].mxu0
  %v1146 = vadd.f32 %v297, %v1145
  %v1147 = vpop.f32.mrb[0].mxu0
  %1148 = vmatprep.mubr.f32.mxu0 0.0
  %1149 = vmatmul.mubr.f32.gmra.mrb[0].mxu0 %v177
  %v1150 = vpop.f32.mrb[0].mxu0
  %v1151 = vadd.f32 %v297, %v1150
  %v1152 = vpop.f32.mrb[0].mxu0
  %1153 = vmatprep.mubr.f32.mxu0 0.0
  %1154 = vmatmul.mubr.f32.gmra.mrb[0].mxu0 %v178
  %v1155 = vpop.f32.mrb[0].mxu0
  %v1156 = vadd.f32 %v297, %v1155
  %v1157 = vpop.f32.mrb[0].mxu0
  %1158 = vmatprep.mubr.f32.mxu0 0.0
  %1159 = vmatmul.mubr.f32.gmra.mrb[0].mxu0 %v179
  %v1160 = vpop.f32.mrb[0].mxu0
  %v1161 = vadd.f32 %v297, %v1160
  %v1162 = vpop.f32.mrb[0].mxu0
  %1163 = vmatprep.mubr.f32.mxu0 0.0
  %1164 = vmatmul.mubr.f32.gmra.mrb[0].mxu0 %v180
  %v1165 = vpop.f32.mrb[0].mxu0
  %v1166 = vadd.f32 %v297, %v1165
  %v1167 = vpop.f32.mrb[0].mxu0
  %1168 = vmatprep.mubr.f32.mxu0 0.0
  %1169 = vmatmul.mubr.f32.gmra.mrb[0].mxu0 %v181
  %v1170 = vpop.f32.mrb[0].mxu0
  %v1171 = vadd.f32 %v297, %v1170
  %v1172 = vpop.f32.mrb[0].mxu0
  %1173 = vmatprep.mubr.f32.mxu0 0.0
  %1174 = vmatmul.mubr.f32.gmra.mrb[0].mxu0 %v182
  %v1175 = vpop.f32.mrb[0].mxu0
  %v1176 = vadd.f32 %v297, %v1175
  %v1177 = vpop.f32.mrb[0].mxu0
  %1178 = vmatprep.mubr.f32.mxu0 0.0
  %1179 = vmatmul.mubr.f32.gmra.mrb[0].mxu0 %v183
  %v1180 = vpop.f32.mrb[0].mxu0
  %v1181 = vadd.f32 %v297, %v1180
  %v1182 = vpop.f32.mrb[0].mxu0
  %1183 = vmatprep.mubr.f32.mxu0 0.0
  %1184 = vmatmul.mubr.f32.gmra.mrb[0].mxu0 %v184
  %v1185 = vpop.f32.mrb[0].mxu0
  %v1186 = vadd.f32 %v297, %v1185
  %v1187 = vpop.f32.mrb[0].mxu0
  %1188 = vmatprep.mubr.f32.mxu0 0.0
  %1189 = vmatmul.mubr.f32.gmra.mrb[0].mxu0 %v185
  %v1190 = vpop.f32.mrb[0].mxu0
  %v1191 = vadd.f32 %v297, %v1190
  %v1192 = vpop.f32.mrb[0].mxu0
  %1193 = vmatprep.mubr.f32.mxu0 0.0
  %1194 = vmatmul.mubr.f32.gmra.mrb[0].mxu0 %v186
  %v1195 = vpop.f32.mrb[0].mxu0
  %v1196 = vadd.f32 %v297, %v1195
  %v1197 = vpop.f32.mrb[0].mxu0
  %1198 = vmatprep.mubr.f32.mxu0 0.0
  %1199 = vmatmul.mubr.f32.gmra.mrb[0].mxu0 %v187
  %v1200 = vpop.f32.mrb[0].mxu0
  %v1201 = vadd.f32 %v297, %v1200
  %v1202 = vpop.f32.mrb[0].mxu0
  %1203 = vmatprep.mubr.f32.mxu0 0.0
  %1204 = vmatmul.mubr.f32.gmra.mrb[0].mxu0 %v188
  %v1205 = vpop.f32.mrb[0].mxu0
  %v1206 = vadd.f32 %v297, %v1205
  %v1207 = vpop.f32.mrb[0].mxu0
  %1208 = vmatprep.mubr.f32.mxu0 0.0
  %1209 = vmatmul.mubr.f32.gmra.mrb[0].mxu0 %v189
  %v1210 = vpop.f32.mrb[0].mxu0
  %v1211 = vadd.f32 %v297, %v1210
  %v1212 = vpop.f32.mrb[0].mxu0
  %1213 = vmatprep.mubr.f32.mxu0 0.0
  %1214 = vmatmul.mubr.f32.gmra.mrb[0].mxu0 %v190
  %v1215 = vpop.f32.mrb[0].mxu0
  %v1216 = vadd.f32 %v297, %v1215
  %v1217 = vpop.f32.mrb[0].mxu0
  %1218 = vmatprep.mubr.f32.mxu0 0.0
  %1219 = vmatmul.mubr.f32.gmra.mrb[0].mxu0 %v191
  %v1220 = vpop.f32.mrb[0].mxu0
  %v1221 = vadd.f32 %v297, %v1220
  %v1222 = vpop.f32.mrb[0].mxu0
  %1223 = vmatprep.mubr.f32.mxu0 0.0
  %1224 = vmatmul.mubr.f32.gmra.mrb[0].mxu0 %v192
  %v1225 = vpop.f32.mrb[0].mxu0
  %v1226 = vadd.f32 %v297, %v1225
  %v1227 = vpop.f32.mrb[0].mxu0
  %1228 = vmatprep.mubr.f32.mxu0 0.0
  %1229 = vmatmul.mubr.f32.gmra.mrb[0].mxu0 %v193
  %v1230 = vpop.f32.mrb[0].mxu0
  %v1231 = vadd.f32 %v297, %v1230
  %v1232 = vpop.f32.mrb[0].mxu0
  %1233 = vmatprep.mubr.f32.mxu0 0.0
  %1234 = vmatmul.mubr.f32.gmra.mrb[0].mxu0 %v194
  %v1235 = vpop.f32.mrb[0].mxu0
  %v1236 = vadd.f32 %v297, %v1235
  %v1237 = vpop.f32.mrb[0].mxu0
  %1238 = vmatprep.mubr.f32.mxu0 0.0
  %1239 = vmatmul.mubr.f32.gmra.mrb[0].mxu0 %v195
  %v1240 = vpop.f32.mrb[0].mxu0
  %v1241 = vadd.f32 %v297, %v1240
  %v1242 = vpop.f32.mrb[0].mxu0
  %1243 = vmatprep.mubr.f32.mxu0 0.0
  %1244 = vmatmul.mubr.f32.gmra.mrb[0].mxu0 %v196
  %v1245 = vpop.f32.mrb[0].mxu0
  %v1246 = vadd.f32 %v297, %v1245
  %v1247 = vpop.f32.mrb[0].mxu0
  %1248 = vmatprep.mubr.f32.mxu0 0.0
  %1249 = vmatmul.mubr.f32.gmra.mrb[0].mxu0 %v197
  %v1250 = vpop.f32.mrb[0].mxu0
  %v1251 = vadd.f32 %v297, %v1250
  %v1252 = vpop.f32.mrb[0].mxu0
  %1253 = vmatprep.mubr.f32.mxu0 0.0
  %1254 = vmatmul.mubr.f32.gmra.mrb[0].mxu0 %v198
  %v1255 = vpop.f32.mrb[0].mxu0
  %v1256 = vadd.f32 %v297, %v1255
  %v1257 = vpop.f32.mrb[0].mxu0
  %1258 = vmatprep.mubr.f32.mxu0 0.0
  %1259 = vmatmul.mubr.f32.gmra.mrb[0].mxu0 %v199
  %v1260 = vpop.f32.mrb[0].mxu0
  %v1261 = vadd.f32 %v297, %v1260
  %v1262 = vpop.f32.mrb[0].mxu0
  %1263 = vmatprep.mubr.f32.mxu0 0.0
  %1264 = vmatmul.mubr.f32.gmra.mrb[0].mxu0 %v200
  %v1265 = vpop.f32.mrb[0].mxu0
  %v1266 = vadd.f32 %v297, %v1265
  %v1267 = vpop.f32.mrb[0].mxu0
  %1268 = vmatprep.mubr.f32.mxu0 0.0
  %1269 = vmatmul.mubr.f32.gmra.mrb[0].mxu0 %v201
  %v1270 = vpop.f32.mrb[0].mxu0
  %v1271 = vadd.f32 %v297, %v1270
  %v1272 = vpop.f32.mrb[0].mxu0
  %1273 = vmatprep.mubr.f32.mxu0 0.0
  %1274 = vmatmul.mubr.f32.gmra.mrb[0].mxu0 %v202
  %v1275 = vpop.f32.mrb[0].mxu0
  %v1276 = vadd.f32 %v297, %v1275
  %v1277 = vpop.f32.mrb[0].mxu0
  %1278 = vmatprep.mubr.f32.mxu0 0.0
  %1279 = vmatmul.mubr.f32.gmra.mrb[0].mxu0 %v203
  %v1280 = vpop.f32.mrb[0].mxu0
  %v1281 = vadd.f32 %v297, %v1280
  %v1282 = vpop.f32.mrb[0].mxu0
  %1283 = vmatprep.mubr.f32.mxu0 0.0
  %1284 = vmatmul.mubr.f32.gmra.mrb[0].mxu0 %v204
  %v1285 = vpop.f32.mrb[0].mxu0
  %v1286 = vadd.f32 %v297, %v1285
  %v1287 = vpop.f32.mrb[0].mxu0
  %1288 = vmatprep.mubr.f32.mxu0 0.0
  %1289 = vmatmul.mubr.f32.gmra.mrb[0].mxu0 %v205
  %v1290 = vpop.f32.mrb[0].mxu0
  %v1291 = vadd.f32 %v297, %v1290
  %v1292 = vpop.f32.mrb[0].mxu0
  %1293 = vmatprep.mubr.f32.mxu0 0.0
  %1294 = vmatmul.mubr.f32.gmra.mrb[0].mxu0 %v206
  %v1295 = vpop.f32.mrb[0].mxu0
  %v1296 = vadd.f32 %v297, %v1295
  %v1297 = vpop.f32.mrb[0].mxu0
  %1298 = vmatprep.mubr.f32.mxu0 0.0
  %1299 = vmatmul.mubr.f32.gmra.mrb[0].mxu0 %v207
  %v1300 = vpop.f32.mrb[0].mxu0
  %v1301 = vadd.f32 %v297, %v1300
  %v1302 = vpop.f32.mrb[0].mxu0
  %1303 = vmatprep.mubr.f32.mxu0 0.0
  %1304 = vmatmul.mubr.f32.gmra.mrb[0].mxu0 %v208
  %v1305 = vpop.f32.mrb[0].mxu0
  %v1306 = vadd.f32 %v297, %v1305
  %v1307 = vpop.f32.mrb[0].mxu0
  %1308 = vmatprep.mubr.f32.mxu0 0.0
  %1309 = vmatmul.mubr.f32.gmra.mrb[0].mxu0 %v209
  %v1310 = vpop.f32.mrb[0].mxu0
  %v1311 = vadd.f32 %v297, %v1310
  %v1312 = vpop.f32.mrb[0].mxu0
  %1313 = vmatprep.mubr.f32.mxu0 0.0
  %1314 = vmatmul.mubr.f32.gmra.mrb[0].mxu0 %v210
  %v1315 = vpop.f32.mrb[0].mxu0
  %v1316 = vadd.f32 %v297, %v1315
  %v1317 = vpop.f32.mrb[0].mxu0
  %1318 = vmatprep.mubr.f32.mxu0 0.0
  %1319 = vmatmul.mubr.f32.gmra.mrb[0].mxu0 %v211
  %v1320 = vpop.f32.mrb[0].mxu0
  %v1321 = vadd.f32 %v297, %v1320
  %v1322 = vpop.f32.mrb[0].mxu0
  %1323 = vmatprep.mubr.f32.mxu0 0.0
  %1324 = vmatmul.mubr.f32.gmra.mrb[0].mxu0 %v212
  %v1325 = vpop.f32.mrb[0].mxu0
  %v1326 = vadd.f32 %v297, %v1325
  %v1327 = vpop.f32.mrb[0].mxu0
  %1328 = vmatprep.mubr.f32.mxu0 0.0
  %1329 = vmatmul.mubr.f32.gmra.mrb[0].mxu0 %v213
  %v1330 = vpop.f32.mrb[0].mxu0
  %v1331 = vadd.f32 %v297, %v1330
  %v1332 = vpop.f32.mrb[0].mxu0
  %1333 = vmatprep.mubr.f32.mxu0 0.0
  %1334 = vmatmul.mubr.f32.gmra.mrb[0].mxu0 %v214
  %v1335 = vpop.f32.mrb[0].mxu0
  %v1336 = vadd.f32 %v297, %v1335
  %v1337 = vpop.f32.mrb[0].mxu0
  %1338 = vmatprep.mubr.f32.mxu0 0.0
  %1339 = vmatmul.mubr.f32.gmra.mrb[0].mxu0 %v215
  %v1340 = vpop.f32.mrb[0].mxu0
  %v1341 = vadd.f32 %v297, %v1340
  %v1342 = vpop.f32.mrb[0].mxu0
  %1343 = vmatprep.mubr.f32.mxu0 0.0
  %1344 = vmatmul.mubr.f32.gmra.mrb[0].mxu0 %v216
  %v1345 = vpop.f32.mrb[0].mxu0
  %v1346 = vadd.f32 %v297, %v1345
  %v1347 = vpop.f32.mrb[0].mxu0
  %1348 = vmatprep.mubr.f32.mxu0 0.0
  %1349 = vmatmul.mubr.f32.gmra.mrb[0].mxu0 %v217
  %v1350 = vpop.f32.mrb[0].mxu0
  %v1351 = vadd.f32 %v297, %v1350
  %v1352 = vpop.f32.mrb[0].mxu0
  %1353 = vmatprep.mubr.f32.mxu0 0.0
  %1354 = vmatmul.mubr.f32.gmra.mrb[0].mxu0 %v218
  %v1355 = vpop.f32.mrb[0].mxu0
  %v1356 = vadd.f32 %v297, %v1355
  %v1357 = vpop.f32.mrb[0].mxu0
  %1358 = vmatprep.mubr.f32.mxu0 0.0
  %1359 = vmatmul.mubr.f32.gmra.mrb[0].mxu0 %v219
  %v1360 = vpop.f32.mrb[0].mxu0
  %v1361 = vadd.f32 %v297, %v1360
  %v1362 = vpop.f32.mrb[0].mxu0
  %1363 = vmatprep.mubr.f32.mxu0 0.0
  %1364 = vmatmul.mubr.f32.gmra.mrb[0].mxu0 %v220
  %v1365 = vpop.f32.mrb[0].mxu0
  %v1366 = vadd.f32 %v297, %v1365
  %v1367 = vpop.f32.mrb[0].mxu0
  %1368 = vmatprep.mubr.f32.mxu0 0.0
  %1369 = vmatmul.mubr.f32.gmra.mrb[0].mxu0 %v221
  %v1370 = vpop.f32.mrb[0].mxu0
  %v1371 = vadd.f32 %v297, %v1370
  %v1372 = vpop.f32.mrb[0].mxu0
  %1373 = vmatprep.mubr.f32.mxu0 0.0
  %1374 = vmatmul.mubr.f32.gmra.mrb[0].mxu0 %v222
  %v1375 = vpop.f32.mrb[0].mxu0
  %v1376 = vadd.f32 %v297, %v1375
  %v1377 = vpop.f32.mrb[0].mxu0
  %1378 = vmatprep.mubr.f32.mxu0 0.0
  %1379 = vmatmul.mubr.f32.gmra.mrb[0].mxu0 %v223
  %v1380 = vpop.f32.mrb[0].mxu0
  %v1381 = vadd.f32 %v297, %v1380
  %v1382 = vpop.f32.mrb[0].mxu0
  %1383 = vmatprep.mubr.f32.mxu0 0.0
  %1384 = vmatmul.mubr.f32.gmra.mrb[0].mxu0 %v224
  %v1385 = vpop.f32.mrb[0].mxu0
  %v1386 = vadd.f32 %v297, %v1385
  %v1387 = vpop.f32.mrb[0].mxu0
  %1388 = vmatprep.mubr.f32.mxu0 0.0
  %1389 = vmatmul.mubr.f32.gmra.mrb[0].mxu0 %v225
  %v1390 = vpop.f32.mrb[0].mxu0
  %v1391 = vadd.f32 %v297, %v1390
  %v1392 = vpop.f32.mrb[0].mxu0
  %1393 = vmatprep.mubr.f32.mxu0 0.0
  %1394 = vmatmul.mubr.f32.gmra.mrb[0].mxu0 %v226
  %v1395 = vpop.f32.mrb[0].mxu0
  %v1396 = vadd.f32 %v297, %v1395
  %v1397 = vpop.f32.mrb[0].mxu0
  %1398 = vmatprep.mubr.f32.mxu0 0.0
  %1399 = vmatmul.mubr.f32.gmra.mrb[0].mxu0 %v227
  %v1400 = vpop.f32.mrb[0].mxu0
  %v1401 = vadd.f32 %v297, %v1400
  %v1402 = vpop.f32.mrb[0].mxu0
  %1403 = vmatprep.mubr.f32.mxu0 0.0
  %1404 = vmatmul.mubr.f32.gmra.mrb[0].mxu0 %v228
  %v1405 = vpop.f32.mrb[0].mxu0
  %v1406 = vadd.f32 %v297, %v1405
  %v1407 = vpop.f32.mrb[0].mxu0
  %1408 = vmatprep.mubr.f32.mxu0 0.0
  %1409 = vmatmul.mubr.f32.gmra.mrb[0].mxu0 %v229
  %v1410 = vpop.f32.mrb[0].mxu0
  %v1411 = vadd.f32 %v297, %v1410
  %v1412 = vpop.f32.mrb[0].mxu0
  %1413 = vmatprep.mubr.f32.mxu0 0.0
  %1414 = vmatmul.mubr.f32.gmra.mrb[0].mxu0 %v230
  %v1415 = vpop.f32.mrb[0].mxu0
  %v1416 = vadd.f32 %v297, %v1415
  %v1417 = vpop.f32.mrb[0].mxu0
  %1418 = vmatprep.mubr.f32.mxu0 0.0
  %1419 = vmatmul.mubr.f32.gmra.mrb[0].mxu0 %v231
  %v1420 = vpop.f32.mrb[0].mxu0
  %v1421 = vadd.f32 %v297, %v1420
  %v1422 = vpop.f32.mrb[0].mxu0
  %1423 = vmatprep.mubr.f32.mxu0 0.0
  %1424 = vmatmul.mubr.f32.gmra.mrb[0].mxu0 %v232
  %v1425 = vpop.f32.mrb[0].mxu0
  %v1426 = vadd.f32 %v297, %v1425
  %v1427 = vpop.f32.mrb[0].mxu0
  %1428 = vmatprep.mubr.f32.mxu0 0.0
  %1429 = vmatmul.mubr.f32.gmra.mrb[0].mxu0 %v233
  %v1430 = vpop.f32.mrb[0].mxu0
  %v1431 = vadd.f32 %v297, %v1430
  %v1432 = vpop.f32.mrb[0].mxu0
  %1433 = vmatprep.mubr.f32.mxu0 0.0
  %1434 = vmatmul.mubr.f32.gmra.mrb[0].mxu0 %v234
  %v1435 = vpop.f32.mrb[0].mxu0
  %v1436 = vadd.f32 %v297, %v1435
  %v1437 = vpop.f32.mrb[0].mxu0
  %1438 = vmatprep.mubr.f32.mxu0 0.0
  %1439 = vmatmul.mubr.f32.gmra.mrb[0].mxu0 %v235
  %v1440 = vpop.f32.mrb[0].mxu0
  %v1441 = vadd.f32 %v297, %v1440
  %v1442 = vpop.f32.mrb[0].mxu0
  %1443 = vmatprep.mubr.f32.mxu0 0.0
  %1444 = vmatmul.mubr.f32.gmra.mrb[0].mxu0 %v236
  %v1445 = vpop.f32.mrb[0].mxu0
  %v1446 = vadd.f32 %v297, %v1445
  %v1447 = vpop.f32.mrb[0].mxu0
  %1448 = vmatprep.mubr.f32.mxu0 0.0
  %1449 = vmatmul.mubr.f32.gmra.mrb[0].mxu0 %v237
  %v1450 = vpop.f32.mrb[0].mxu0
  %v1451 = vadd.f32 %v297, %v1450
  %v1452 = vpop.f32.mrb[0].mxu0
  %1453 = vmatprep.mubr.f32.mxu0 0.0
  %1454 = vmatmul.mubr.f32.gmra.mrb[0].mxu0 %v238
  %v1455 = vpop.f32.mrb[0].mxu0
  %v1456 = vadd.f32 %v297, %v1455
  %v1457 = vpop.f32.mrb[0].mxu0
  %1458 = vmatprep.mubr.f32.mxu0 0.0
  %1459 = vmatmul.mubr.f32.gmra.mrb[0].mxu0 %v239
  %v1460 = vpop.f32.mrb[0].mxu0
  %v1461 = vadd.f32 %v297, %v1460
  %v1462 = vpop.f32.mrb[0].mxu0
  %1463 = vmatprep.mubr.f32.mxu0 0.0
  %1464 = vmatmul.mubr.f32.gmra.mrb[0].mxu0 %v240
  %v1465 = vpop.f32.mrb[0].mxu0
  %v1466 = vadd.f32 %v297, %v1465
  %v1467 = vpop.f32.mrb[0].mxu0
  %1468 = vmatprep.mubr.f32.mxu0 0.0
  %1469 = vmatmul.mubr.f32.gmra.mrb[0].mxu0 %v241
  %v1470 = vpop.f32.mrb[0].mxu0
  %v1471 = vadd.f32 %v297, %v1470
  %v1472 = vpop.f32.mrb[0].mxu0
  %1473 = vmatprep.mubr.f32.mxu0 0.0
  %1474 = vmatmul.mubr.f32.gmra.mrb[0].mxu0 %v242
  %v1475 = vpop.f32.mrb[0].mxu0
  %v1476 = vadd.f32 %v297, %v1475
  %v1477 = vpop.f32.mrb[0].mxu0
  %1478 = vmatprep.mubr.f32.mxu0 0.0
  %1479 = vmatmul.mubr.f32.gmra.mrb[0].mxu0 %v243
  %v1480 = vpop.f32.mrb[0].mxu0
  %v1481 = vadd.f32 %v297, %v1480
  %v1482 = vpop.f32.mrb[0].mxu0
  %1483 = vmatprep.mubr.f32.mxu0 0.0
  %1484 = vmatmul.mubr.f32.gmra.mrb[0].mxu0 %v244
  %v1485 = vpop.f32.mrb[0].mxu0
  %v1486 = vadd.f32 %v297, %v1485
  %v1487 = vpop.f32.mrb[0].mxu0
  %1488 = vmatprep.mubr.f32.mxu0 0.0
  %1489 = vmatmul.mubr.f32.gmra.mrb[0].mxu0 %v245
  %v1490 = vpop.f32.mrb[0].mxu0
  %v1491 = vadd.f32 %v297, %v1490
  %v1492 = vpop.f32.mrb[0].mxu0
  %1493 = vmatprep.mubr.f32.mxu0 0.0
  %1494 = vmatmul.mubr.f32.gmra.mrb[0].mxu0 %v246
  %v1495 = vpop.f32.mrb[0].mxu0
  %v1496 = vadd.f32 %v297, %v1495
  %v1497 = vpop.f32.mrb[0].mxu0
  %1498 = vmatprep.mubr.f32.mxu0 0.0
  %1499 = vmatmul.mubr.f32.gmra.mrb[0].mxu0 %v247
  %v1500 = vpop.f32.mrb[0].mxu0
  %v1501 = vadd.f32 %v297, %v1500
  %v1502 = vpop.f32.mrb[0].mxu0
  %1503 = vmatprep.mubr.f32.mxu0 0.0
  %1504 = vmatmul.mubr.f32.gmra.mrb[0].mxu0 %v248
  %v1505 = vpop.f32.mrb[0].mxu0
  %v1506 = vadd.f32 %v297, %v1505
  %v1507 = vpop.f32.mrb[0].mxu0
  %1508 = vmatprep.mubr.f32.mxu0 0.0
  %1509 = vmatmul.mubr.f32.gmra.mrb[0].mxu0 %v249
  %v1510 = vpop.f32.mrb[0].mxu0
  %v1511 = vadd.f32 %v297, %v1510
  %v1512 = vpop.f32.mrb[0].mxu0
  %1513 = vmatprep.mubr.f32.mxu0 0.0
  %1514 = vmatmul.mubr.f32.gmra.mrb[0].mxu0 %v250
  %v1515 = vpop.f32.mrb[0].mxu0
  %v1516 = vadd.f32 %v297, %v1515
  %v1517 = vpop.f32.mrb[0].mxu0
  %1518 = vmatprep.mubr.f32.mxu0 0.0
  %1519 = vmatmul.mubr.f32.gmra.mrb[0].mxu0 %v251
  %v1520 = vpop.f32.mrb[0].mxu0
  %v1521 = vadd.f32 %v297, %v1520
  %v1522 = vpop.f32.mrb[0].mxu0
  %1523 = vmatprep.mubr.f32.mxu0 0.0
  %1524 = vmatmul.mubr.f32.gmra.mrb[0].mxu0 %v252
  %v1525 = vpop.f32.mrb[0].mxu0
  %v1526 = vadd.f32 %v297, %v1525
  %v1527 = vpop.f32.mrb[0].mxu0
  %1528 = vmatprep.mubr.f32.mxu0 0.0
  %1529 = vmatmul.mubr.f32.gmra.mrb[0].mxu0 %v253
  %v1530 = vpop.f32.mrb[0].mxu0
  %v1531 = vadd.f32 %v297, %v1530
  %v1532 = vpop.f32.mrb[0].mxu0
  %1533 = vmatprep.mubr.f32.mxu0 0.0
  %1534 = vmatmul.mubr.f32.gmra.mrb[0].mxu0 %v254
  %v1535 = vpop.f32.mrb[0].mxu0
  %v1536 = vadd.f32 %v297, %v1535
  %v1537 = vpop.f32.mrb[0].mxu0
  %1538 = vmatprep.mubr.f32.mxu0 0.0
  %1539 = vmatmul.mubr.f32.gmra.mrb[0].mxu0 %v255
  %v1540 = vpop.f32.mrb[0].mxu0
  %v1541 = vadd.f32 %v297, %v1540
  %v1542 = vpop.f32.mrb[0].mxu0
  %1543 = vmatprep.mubr.f32.mxu0 0.0
  %1544 = vmatmul.mubr.f32.gmra.mrb[0].mxu0 %v256
  %v1545 = vpop.f32.mrb[0].mxu0
  %v1546 = vadd.f32 %v297, %v1545
  %v1547 = vpop.f32.mrb[0].mxu0
  %1548 = vmatprep.mubr.f32.mxu0 0.0
  %1549 = vmatmul.mubr.f32.gmra.mrb[0].mxu0 %v257
  %v1550 = vpop.f32.mrb[0].mxu0
  %v1551 = vadd.f32 %v297, %v1550
  %v1552 = vpop.f32.mrb[0].mxu0
  %1553 = vmatprep.mubr.f32.mxu0 0.0
  %1554 = vmatmul.mubr.f32.gmra.mrb[0].mxu0 %v258
  %v1555 = vpop.f32.mrb[0].mxu0
  %v1556 = vadd.f32 %v297, %v1555
  %v1557 = vpop.f32.mrb[0].mxu0
  %1558 = vmatprep.mubr.f32.mxu0 0.0
  %1559 = vmatmul.mubr.f32.gmra.mrb[0].mxu0 %v259
  %v1560 = vpop.f32.mrb[0].mxu0
  %v1561 = vadd.f32 %v297, %v1560
  %v1562 = vpop.f32.mrb[0].mxu0
  %1563 = vmatprep.mubr.f32.mxu0 0.0
  %1564 = vmatmul.mubr.f32.gmra.mrb[0].mxu0 %v260
  %v1565 = vpop.f32.mrb[0].mxu0
  %v1566 = vadd.f32 %v297, %v1565
  %v1567 = vpop.f32.mrb[0].mxu0
  %1568 = vmatprep.mubr.f32.mxu0 0.0
  %1569 = vmatmul.mubr.f32.gmra.mrb[0].mxu0 %v261
  %v1570 = vpop.f32.mrb[0].mxu0
  %v1571 = vadd.f32 %v297, %v1570
  %v1572 = vpop.f32.mrb[0].mxu0
  %1573 = vmatprep.mubr.f32.mxu0 0.0
  %1574 = vmatmul.mubr.f32.gmra.mrb[0].mxu0 %v262
  %v1575 = vpop.f32.mrb[0].mxu0
  %v1576 = vadd.f32 %v297, %v1575
  %v1577 = vpop.f32.mrb[0].mxu0
  %1578 = vmatprep.mubr.f32.mxu0 0.0
  %1579 = vmatmul.mubr.f32.gmra.mrb[0].mxu0 %v263
  %v1580 = vpop.f32.mrb[0].mxu0
  %v1581 = vadd.f32 %v297, %v1580
  %v1582 = vpop.f32.mrb[0].mxu0
  %1583 = vmatprep.mubr.f32.mxu0 0.0
  %1584 = vmatmul.mubr.f32.gmra.mrb[0].mxu0 %v264
  %v1585 = vpop.f32.mrb[0].mxu0
  %v1586 = vadd.f32 %v297, %v1585
  %v1587 = vpop.f32.mrb[0].mxu0
  %1588 = vmatprep.mubr.f32.mxu0 0.0
  %1589 = vmatmul.mubr.f32.gmra.mrb[0].mxu0 %v265
  %v1590 = vpop.f32.mrb[0].mxu0
  %v1591 = vadd.f32 %v297, %v1590
  %v1592 = vpop.f32.mrb[0].mxu0
  %1593 = vmatprep.mubr.f32.mxu0 0.0
  %1594 = vmatmul.mubr.f32.gmra.mrb[0].mxu0 %v266
  %v1595 = vpop.f32.mrb[0].mxu0
  %v1596 = vadd.f32 %v297, %v1595
  %v1597 = vpop.f32.mrb[0].mxu0
  %1598 = vmatprep.mubr.f32.mxu0 0.0
  %1599 = vmatmul.mubr.f32.gmra.mrb[0].mxu0 %v267
  %v1600 = vpop.f32.mrb[0].mxu0
  %v1601 = vadd.f32 %v297, %v1600
  %v1602 = vpop.f32.mrb[0].mxu0
  %1603 = vmatprep.mubr.f32.mxu0 0.0
  %1604 = vmatmul.mubr.f32.gmra.mrb[0].mxu0 %v268
  %v1605 = vpop.f32.mrb[0].mxu0
  %v1606 = vadd.f32 %v297, %v1605
  %v1607 = vpop.f32.mrb[0].mxu0
  %1608 = vmatprep.mubr.f32.mxu0 0.0
  %1609 = vmatmul.mubr.f32.gmra.mrb[0].mxu0 %v269
  %v1610 = vpop.f32.mrb[0].mxu0
  %v1611 = vadd.f32 %v297, %v1610
  %v1612 = vpop.f32.mrb[0].mxu0
  %1613 = vmatprep.mubr.f32.mxu0 0.0
  %1614 = vmatmul.mubr.f32.gmra.mrb[0].mxu0 %v270
  %v1615 = vpop.f32.mrb[0].mxu0
  %v1616 = vadd.f32 %v297, %v1615
  %v1617 = vpop.f32.mrb[0].mxu0
  %1618 = vmatprep.mubr.f32.mxu0 0.0
  %1619 = vmatmul.mubr.f32.gmra.mrb[0].mxu0 %v271
  %v1620 = vpop.f32.mrb[0].mxu0
  %v1621 = vadd.f32 %v297, %v1620
  %v1622 = vpop.f32.mrb[0].mxu0
  %1623 = vmatprep.mubr.f32.mxu0 0.0
  %1624 = vmatmul.mubr.f32.gmra.mrb[0].mxu0 %v272
  %v1625 = vpop.f32.mrb[0].mxu0
  %v1626 = vadd.f32 %v297, %v1625
  %v1627 = vpop.f32.mrb[0].mxu0
  %1628 = vmatprep.mubr.f32.mxu0 0.0
  %1629 = vmatmul.mubr.f32.gmra.mrb[0].mxu0 %v273
  %v1630 = vpop.f32.mrb[0].mxu0
  %v1631 = vadd.f32 %v297, %v1630
  %v1632 = vpop.f32.mrb[0].mxu0
  %1633 = vmatprep.mubr.f32.mxu0 0.0
  %1634 = vmatmul.mubr.f32.gmra.mrb[0].mxu0 %v274
  %v1635 = vpop.f32.mrb[0].mxu0
  %v1636 = vadd.f32 %v297, %v1635
  %v1637 = vpop.f32.mrb[0].mxu0
  %1638 = vmatprep.mubr.f32.mxu0 0.0
  %1639 = vmatmul.mubr.f32.gmra.mrb[0].mxu0 %v275
  %v1640 = vpop.f32.mrb[0].mxu0
  %v1641 = vadd.f32 %v297, %v1640
  %v1642 = vpop.f32.mrb[0].mxu0
  %1643 = vdwg.mxu0
  %vm1644 = vcmask 261120
  %v1645 = vsel %vm1644, %v366, 0.0
  %v1646 = vsel %vm1644, %v371, 0.0
  %v1647 = vadd.f32 %v1645, %v1646
  %v1648 = vsel %vm1644, %v376, 0.0
  %v1649 = vadd.f32 %v1647, %v1648
  %v1650 = vsel %vm1644, %v381, 0.0
  %v1651 = vadd.f32 %v1649, %v1650
  %v1652 = vsel %vm1644, %v386, 0.0
  %v1653 = vadd.f32 %v1651, %v1652
  %v1654 = vsel %vm1644, %v391, 0.0
  %v1655 = vadd.f32 %v1653, %v1654
  %v1656 = vsel %vm1644, %v396, 0.0
  %v1657 = vadd.f32 %v1655, %v1656
  %v1658 = vsel %vm1644, %v401, 0.0
  %v1659 = vadd.f32 %v1657, %v1658
  %v1660 = vsel %vm1644, %v406, 0.0
  %v1661 = vadd.f32 %v1659, %v1660
  %v1662 = vsel %vm1644, %v411, 0.0
  %v1663 = vadd.f32 %v1661, %v1662
  %v1664 = vsel %vm1644, %v416, 0.0
  %v1665 = vadd.f32 %v1663, %v1664
  %v1666 = vsel %vm1644, %v421, 0.0
  %v1667 = vadd.f32 %v1665, %v1666
  %v1668 = vsel %vm1644, %v426, 0.0
  %v1669 = vadd.f32 %v1667, %v1668
  %v1670 = vsel %vm1644, %v431, 0.0
  %v1671 = vadd.f32 %v1669, %v1670
  %v1672 = vsel %vm1644, %v436, 0.0
  %v1673 = vadd.f32 %v1671, %v1672
  %v1674 = vsel %vm1644, %v441, 0.0
  %v1675 = vadd.f32 %v1673, %v1674
  %v1676 = vsel %vm1644, %v446, 0.0
  %v1677 = vadd.f32 %v1675, %v1676
  %v1678 = vsel %vm1644, %v451, 0.0
  %v1679 = vadd.f32 %v1677, %v1678
  %v1680 = vsel %vm1644, %v456, 0.0
  %v1681 = vadd.f32 %v1679, %v1680
  %v1682 = vsel %vm1644, %v461, 0.0
  %v1683 = vadd.f32 %v1681, %v1682
  %v1684 = vsel %vm1644, %v466, 0.0
  %v1685 = vadd.f32 %v1683, %v1684
  %v1686 = vsel %vm1644, %v471, 0.0
  %v1687 = vadd.f32 %v1685, %v1686
  %v1688 = vsel %vm1644, %v476, 0.0
  %v1689 = vadd.f32 %v1687, %v1688
  %v1690 = vsel %vm1644, %v481, 0.0
  %v1691 = vadd.f32 %v1689, %v1690
  %v1692 = vsel %vm1644, %v486, 0.0
  %v1693 = vadd.f32 %v1691, %v1692
  %v1694 = vsel %vm1644, %v491, 0.0
  %v1695 = vadd.f32 %v1693, %v1694
  %v1696 = vsel %vm1644, %v496, 0.0
  %v1697 = vadd.f32 %v1695, %v1696
  %v1698 = vsel %vm1644, %v501, 0.0
  %v1699 = vadd.f32 %v1697, %v1698
  %v1700 = vsel %vm1644, %v506, 0.0
  %v1701 = vadd.f32 %v1699, %v1700
  %v1702 = vsel %vm1644, %v511, 0.0
  %v1703 = vadd.f32 %v1701, %v1702
  %v1704 = vsel %vm1644, %v516, 0.0
  %v1705 = vadd.f32 %v1703, %v1704
  %v1706 = vsel %vm1644, %v521, 0.0
  %v1707 = vadd.f32 %v1705, %v1706
  %v1708 = vsel %vm1644, %v526, 0.0
  %v1709 = vadd.f32 %v1707, %v1708
  %v1710 = vsel %vm1644, %v531, 0.0
  %v1711 = vadd.f32 %v1709, %v1710
  %v1712 = vsel %vm1644, %v536, 0.0
  %v1713 = vadd.f32 %v1711, %v1712
  %v1714 = vsel %vm1644, %v541, 0.0
  %v1715 = vadd.f32 %v1713, %v1714
  %v1716 = vsel %vm1644, %v546, 0.0
  %v1717 = vadd.f32 %v1715, %v1716
  %v1718 = vsel %vm1644, %v551, 0.0
  %v1719 = vadd.f32 %v1717, %v1718
  %v1720 = vsel %vm1644, %v556, 0.0
  %v1721 = vadd.f32 %v1719, %v1720
  %v1722 = vsel %vm1644, %v561, 0.0
  %v1723 = vadd.f32 %v1721, %v1722
  %v1724 = vsel %vm1644, %v566, 0.0
  %v1725 = vadd.f32 %v1723, %v1724
  %v1726 = vsel %vm1644, %v571, 0.0
  %v1727 = vadd.f32 %v1725, %v1726
  %v1728 = vsel %vm1644, %v576, 0.0
  %v1729 = vadd.f32 %v1727, %v1728
  %v1730 = vsel %vm1644, %v581, 0.0
  %v1731 = vadd.f32 %v1729, %v1730
  %v1732 = vsel %vm1644, %v586, 0.0
  %v1733 = vadd.f32 %v1731, %v1732
  %v1734 = vsel %vm1644, %v591, 0.0
  %v1735 = vadd.f32 %v1733, %v1734
  %v1736 = vsel %vm1644, %v596, 0.0
  %v1737 = vadd.f32 %v1735, %v1736
  %v1738 = vsel %vm1644, %v601, 0.0
  %v1739 = vadd.f32 %v1737, %v1738
  %v1740 = vsel %vm1644, %v606, 0.0
  %v1741 = vadd.f32 %v1739, %v1740
  %v1742 = vsel %vm1644, %v611, 0.0
  %v1743 = vadd.f32 %v1741, %v1742
  %v1744 = vsel %vm1644, %v616, 0.0
  %v1745 = vadd.f32 %v1743, %v1744
  %v1746 = vsel %vm1644, %v621, 0.0
  %v1747 = vadd.f32 %v1745, %v1746
  %v1748 = vsel %vm1644, %v626, 0.0
  %v1749 = vadd.f32 %v1747, %v1748
  %v1750 = vsel %vm1644, %v631, 0.0
  %v1751 = vadd.f32 %v1749, %v1750
  %v1752 = vsel %vm1644, %v636, 0.0
  %v1753 = vadd.f32 %v1751, %v1752
  %v1754 = vsel %vm1644, %v641, 0.0
  %v1755 = vadd.f32 %v1753, %v1754
  %v1756 = vsel %vm1644, %v646, 0.0
  %v1757 = vadd.f32 %v1755, %v1756
  %v1758 = vsel %vm1644, %v651, 0.0
  %v1759 = vadd.f32 %v1757, %v1758
  %v1760 = vsel %vm1644, %v656, 0.0
  %v1761 = vadd.f32 %v1759, %v1760
  %v1762 = vsel %vm1644, %v661, 0.0
  %v1763 = vadd.f32 %v1761, %v1762
  %v1764 = vsel %vm1644, %v666, 0.0
  %v1765 = vadd.f32 %v1763, %v1764
  %v1766 = vsel %vm1644, %v671, 0.0
  %v1767 = vadd.f32 %v1765, %v1766
  %v1768 = vsel %vm1644, %v676, 0.0
  %v1769 = vadd.f32 %v1767, %v1768
  %v1770 = vsel %vm1644, %v681, 0.0
  %v1771 = vadd.f32 %v1769, %v1770
  %v1772 = vsel %vm1644, %v686, 0.0
  %v1773 = vadd.f32 %v1771, %v1772
  %v1774 = vsel %vm1644, %v691, 0.0
  %v1775 = vadd.f32 %v1773, %v1774
  %v1776 = vsel %vm1644, %v696, 0.0
  %v1777 = vadd.f32 %v1775, %v1776
  %v1778 = vsel %vm1644, %v701, 0.0
  %v1779 = vadd.f32 %v1777, %v1778
  %v1780 = vsel %vm1644, %v706, 0.0
  %v1781 = vadd.f32 %v1779, %v1780
  %v1782 = vsel %vm1644, %v711, 0.0
  %v1783 = vadd.f32 %v1781, %v1782
  %v1784 = vsel %vm1644, %v716, 0.0
  %v1785 = vadd.f32 %v1783, %v1784
  %v1786 = vsel %vm1644, %v721, 0.0
  %v1787 = vadd.f32 %v1785, %v1786
  %v1788 = vsel %vm1644, %v726, 0.0
  %v1789 = vadd.f32 %v1787, %v1788
  %v1790 = vsel %vm1644, %v731, 0.0
  %v1791 = vadd.f32 %v1789, %v1790
  %v1792 = vsel %vm1644, %v736, 0.0
  %v1793 = vadd.f32 %v1791, %v1792
  %v1794 = vsel %vm1644, %v741, 0.0
  %v1795 = vadd.f32 %v1793, %v1794
  %v1796 = vsel %vm1644, %v746, 0.0
  %v1797 = vadd.f32 %v1795, %v1796
  %v1798 = vsel %vm1644, %v751, 0.0
  %v1799 = vadd.f32 %v1797, %v1798
  %v1800 = vsel %vm1644, %v756, 0.0
  %v1801 = vadd.f32 %v1799, %v1800
  %v1802 = vsel %vm1644, %v761, 0.0
  %v1803 = vadd.f32 %v1801, %v1802
  %v1804 = vsel %vm1644, %v766, 0.0
  %v1805 = vadd.f32 %v1803, %v1804
  %v1806 = vsel %vm1644, %v771, 0.0
  %v1807 = vadd.f32 %v1805, %v1806
  %v1808 = vsel %vm1644, %v776, 0.0
  %v1809 = vadd.f32 %v1807, %v1808
  %v1810 = vsel %vm1644, %v781, 0.0
  %v1811 = vadd.f32 %v1809, %v1810
  %v1812 = vsel %vm1644, %v786, 0.0
  %v1813 = vadd.f32 %v1811, %v1812
  %v1814 = vsel %vm1644, %v791, 0.0
  %v1815 = vadd.f32 %v1813, %v1814
  %v1816 = vsel %vm1644, %v796, 0.0
  %v1817 = vadd.f32 %v1815, %v1816
  %v1818 = vsel %vm1644, %v801, 0.0
  %v1819 = vadd.f32 %v1817, %v1818
  %v1820 = vsel %vm1644, %v806, 0.0
  %v1821 = vadd.f32 %v1819, %v1820
  %v1822 = vsel %vm1644, %v811, 0.0
  %v1823 = vadd.f32 %v1821, %v1822
  %v1824 = vsel %vm1644, %v816, 0.0
  %v1825 = vadd.f32 %v1823, %v1824
  %v1826 = vsel %vm1644, %v821, 0.0
  %v1827 = vadd.f32 %v1825, %v1826
  %v1828 = vsel %vm1644, %v826, 0.0
  %v1829 = vadd.f32 %v1827, %v1828
  %v1830 = vsel %vm1644, %v831, 0.0
  %v1831 = vadd.f32 %v1829, %v1830
  %v1832 = vsel %vm1644, %v836, 0.0
  %v1833 = vadd.f32 %v1831, %v1832
  %v1834 = vsel %vm1644, %v841, 0.0
  %v1835 = vadd.f32 %v1833, %v1834
  %v1836 = vsel %vm1644, %v846, 0.0
  %v1837 = vadd.f32 %v1835, %v1836
  %v1838 = vsel %vm1644, %v851, 0.0
  %v1839 = vadd.f32 %v1837, %v1838
  %v1840 = vsel %vm1644, %v856, 0.0
  %v1841 = vadd.f32 %v1839, %v1840
  %v1842 = vsel %vm1644, %v861, 0.0
  %v1843 = vadd.f32 %v1841, %v1842
  %v1844 = vsel %vm1644, %v866, 0.0
  %v1845 = vadd.f32 %v1843, %v1844
  %v1846 = vsel %vm1644, %v871, 0.0
  %v1847 = vadd.f32 %v1845, %v1846
  %v1848 = vsel %vm1644, %v876, 0.0
  %v1849 = vadd.f32 %v1847, %v1848
  %v1850 = vsel %vm1644, %v881, 0.0
  %v1851 = vadd.f32 %v1849, %v1850
  %v1852 = vsel %vm1644, %v886, 0.0
  %v1853 = vadd.f32 %v1851, %v1852
  %v1854 = vsel %vm1644, %v891, 0.0
  %v1855 = vadd.f32 %v1853, %v1854
  %v1856 = vsel %vm1644, %v896, 0.0
  %v1857 = vadd.f32 %v1855, %v1856
  %v1858 = vsel %vm1644, %v901, 0.0
  %v1859 = vadd.f32 %v1857, %v1858
  %v1860 = vsel %vm1644, %v906, 0.0
  %v1861 = vadd.f32 %v1859, %v1860
  %v1862 = vsel %vm1644, %v911, 0.0
  %v1863 = vadd.f32 %v1861, %v1862
  %v1864 = vsel %vm1644, %v916, 0.0
  %v1865 = vadd.f32 %v1863, %v1864
  %v1866 = vsel %vm1644, %v921, 0.0
  %v1867 = vadd.f32 %v1865, %v1866
  %v1868 = vsel %vm1644, %v926, 0.0
  %v1869 = vadd.f32 %v1867, %v1868
  %v1870 = vsel %vm1644, %v931, 0.0
  %v1871 = vadd.f32 %v1869, %v1870
  %v1872 = vsel %vm1644, %v936, 0.0
  %v1873 = vadd.f32 %v1871, %v1872
  %v1874 = vsel %vm1644, %v941, 0.0
  %v1875 = vadd.f32 %v1873, %v1874
  %v1876 = vsel %vm1644, %v946, 0.0
  %v1877 = vadd.f32 %v1875, %v1876
  %v1878 = vsel %vm1644, %v951, 0.0
  %v1879 = vadd.f32 %v1877, %v1878
  %v1880 = vsel %vm1644, %v956, 0.0
  %v1881 = vadd.f32 %v1879, %v1880
  %v1882 = vsel %vm1644, %v961, 0.0
  %v1883 = vadd.f32 %v1881, %v1882
  %v1884 = vsel %vm1644, %v966, 0.0
  %v1885 = vadd.f32 %v1883, %v1884
  %v1886 = vsel %vm1644, %v971, 0.0
  %v1887 = vadd.f32 %v1885, %v1886
  %v1888 = vsel %vm1644, %v976, 0.0
  %v1889 = vadd.f32 %v1887, %v1888
  %v1890 = vsel %vm1644, %v981, 0.0
  %v1891 = vadd.f32 %v1889, %v1890
  %v1892 = vsel %vm1644, %v986, 0.0
  %v1893 = vadd.f32 %v1891, %v1892
  %v1894 = vsel %vm1644, %v991, 0.0
  %v1895 = vadd.f32 %v1893, %v1894
  %v1896 = vsel %vm1644, %v996, 0.0
  %v1897 = vadd.f32 %v1895, %v1896
  %v1898 = vsel %vm1644, %v1001, 0.0
  %v1899 = vadd.f32 %v1897, %v1898
  %v1900 = vsel %vm1644, %v1006, 0.0
  %v1901 = vadd.f32 %v1899, %v1900
  %v1902 = vsel %vm1644, %v1011, 0.0
  %v1903 = vadd.f32 %v1901, %v1902
  %v1904 = vsel %vm1644, %v1016, 0.0
  %v1905 = vadd.f32 %v1903, %v1904
  %v1906 = vsel %vm1644, %v1021, 0.0
  %v1907 = vadd.f32 %v1905, %v1906
  %v1908 = vsel %vm1644, %v1026, 0.0
  %v1909 = vadd.f32 %v1907, %v1908
  %v1910 = vsel %vm1644, %v1031, 0.0
  %v1911 = vadd.f32 %v1909, %v1910
  %v1912 = vsel %vm1644, %v1036, 0.0
  %v1913 = vadd.f32 %v1911, %v1912
  %v1914 = vsel %vm1644, %v1041, 0.0
  %v1915 = vadd.f32 %v1913, %v1914
  %v1916 = vsel %vm1644, %v1046, 0.0
  %v1917 = vadd.f32 %v1915, %v1916
  %v1918 = vsel %vm1644, %v1051, 0.0
  %v1919 = vadd.f32 %v1917, %v1918
  %v1920 = vsel %vm1644, %v1056, 0.0
  %v1921 = vadd.f32 %v1919, %v1920
  %v1922 = vsel %vm1644, %v1061, 0.0
  %v1923 = vadd.f32 %v1921, %v1922
  %v1924 = vsel %vm1644, %v1066, 0.0
  %v1925 = vadd.f32 %v1923, %v1924
  %v1926 = vsel %vm1644, %v1071, 0.0
  %v1927 = vadd.f32 %v1925, %v1926
  %v1928 = vsel %vm1644, %v1076, 0.0
  %v1929 = vadd.f32 %v1927, %v1928
  %v1930 = vsel %vm1644, %v1081, 0.0
  %v1931 = vadd.f32 %v1929, %v1930
  %v1932 = vsel %vm1644, %v1086, 0.0
  %v1933 = vadd.f32 %v1931, %v1932
  %v1934 = vsel %vm1644, %v1091, 0.0
  %v1935 = vadd.f32 %v1933, %v1934
  %v1936 = vsel %vm1644, %v1096, 0.0
  %v1937 = vadd.f32 %v1935, %v1936
  %v1938 = vsel %vm1644, %v1101, 0.0
  %v1939 = vadd.f32 %v1937, %v1938
  %v1940 = vsel %vm1644, %v1106, 0.0
  %v1941 = vadd.f32 %v1939, %v1940
  %v1942 = vsel %vm1644, %v1111, 0.0
  %v1943 = vadd.f32 %v1941, %v1942
  %v1944 = vsel %vm1644, %v1116, 0.0
  %v1945 = vadd.f32 %v1943, %v1944
  %v1946 = vsel %vm1644, %v1121, 0.0
  %v1947 = vadd.f32 %v1945, %v1946
  %v1948 = vsel %vm1644, %v1126, 0.0
  %v1949 = vadd.f32 %v1947, %v1948
  %v1950 = vsel %vm1644, %v1131, 0.0
  %v1951 = vadd.f32 %v1949, %v1950
  %v1952 = vsel %vm1644, %v1136, 0.0
  %v1953 = vadd.f32 %v1951, %v1952
  %v1954 = vsel %vm1644, %v1141, 0.0
  %v1955 = vadd.f32 %v1953, %v1954
  %v1956 = vsel %vm1644, %v1146, 0.0
  %v1957 = vadd.f32 %v1955, %v1956
  %v1958 = vsel %vm1644, %v1151, 0.0
  %v1959 = vadd.f32 %v1957, %v1958
  %v1960 = vsel %vm1644, %v1156, 0.0
  %v1961 = vadd.f32 %v1959, %v1960
  %v1962 = vsel %vm1644, %v1161, 0.0
  %v1963 = vadd.f32 %v1961, %v1962
  %v1964 = vsel %vm1644, %v1166, 0.0
  %v1965 = vadd.f32 %v1963, %v1964
  %v1966 = vsel %vm1644, %v1171, 0.0
  %v1967 = vadd.f32 %v1965, %v1966
  %v1968 = vsel %vm1644, %v1176, 0.0
  %v1969 = vadd.f32 %v1967, %v1968
  %v1970 = vsel %vm1644, %v1181, 0.0
  %v1971 = vadd.f32 %v1969, %v1970
  %v1972 = vsel %vm1644, %v1186, 0.0
  %v1973 = vadd.f32 %v1971, %v1972
  %v1974 = vsel %vm1644, %v1191, 0.0
  %v1975 = vadd.f32 %v1973, %v1974
  %v1976 = vsel %vm1644, %v1196, 0.0
  %v1977 = vadd.f32 %v1975, %v1976
  %v1978 = vsel %vm1644, %v1201, 0.0
  %v1979 = vadd.f32 %v1977, %v1978
  %v1980 = vsel %vm1644, %v1206, 0.0
  %v1981 = vadd.f32 %v1979, %v1980
  %v1982 = vsel %vm1644, %v1211, 0.0
  %v1983 = vadd.f32 %v1981, %v1982
  %v1984 = vsel %vm1644, %v1216, 0.0
  %v1985 = vadd.f32 %v1983, %v1984
  %v1986 = vsel %vm1644, %v1221, 0.0
  %v1987 = vadd.f32 %v1985, %v1986
  %v1988 = vsel %vm1644, %v1226, 0.0
  %v1989 = vadd.f32 %v1987, %v1988
  %v1990 = vsel %vm1644, %v1231, 0.0
  %v1991 = vadd.f32 %v1989, %v1990
  %v1992 = vsel %vm1644, %v1236, 0.0
  %v1993 = vadd.f32 %v1991, %v1992
  %v1994 = vsel %vm1644, %v1241, 0.0
  %v1995 = vadd.f32 %v1993, %v1994
  %v1996 = vsel %vm1644, %v1246, 0.0
  %v1997 = vadd.f32 %v1995, %v1996
  %v1998 = vsel %vm1644, %v1251, 0.0
  %v1999 = vadd.f32 %v1997, %v1998
  %v2000 = vsel %vm1644, %v1256, 0.0
  %v2001 = vadd.f32 %v1999, %v2000
  %v2002 = vsel %vm1644, %v1261, 0.0
  %v2003 = vadd.f32 %v2001, %v2002
  %v2004 = vsel %vm1644, %v1266, 0.0
  %v2005 = vadd.f32 %v2003, %v2004
  %v2006 = vsel %vm1644, %v1271, 0.0
  %v2007 = vadd.f32 %v2005, %v2006
  %v2008 = vsel %vm1644, %v1276, 0.0
  %v2009 = vadd.f32 %v2007, %v2008
  %v2010 = vsel %vm1644, %v1281, 0.0
  %v2011 = vadd.f32 %v2009, %v2010
  %v2012 = vsel %vm1644, %v1286, 0.0
  %v2013 = vadd.f32 %v2011, %v2012
  %v2014 = vsel %vm1644, %v1291, 0.0
  %v2015 = vadd.f32 %v2013, %v2014
  %v2016 = vsel %vm1644, %v1296, 0.0
  %v2017 = vadd.f32 %v2015, %v2016
  %v2018 = vsel %vm1644, %v1301, 0.0
  %v2019 = vadd.f32 %v2017, %v2018
  %v2020 = vsel %vm1644, %v1306, 0.0
  %v2021 = vadd.f32 %v2019, %v2020
  %v2022 = vsel %vm1644, %v1311, 0.0
  %v2023 = vadd.f32 %v2021, %v2022
  %v2024 = vsel %vm1644, %v1316, 0.0
  %v2025 = vadd.f32 %v2023, %v2024
  %v2026 = vsel %vm1644, %v1321, 0.0
  %v2027 = vadd.f32 %v2025, %v2026
  %v2028 = vsel %vm1644, %v1326, 0.0
  %v2029 = vadd.f32 %v2027, %v2028
  %v2030 = vsel %vm1644, %v1331, 0.0
  %v2031 = vadd.f32 %v2029, %v2030
  %v2032 = vsel %vm1644, %v1336, 0.0
  %v2033 = vadd.f32 %v2031, %v2032
  %v2034 = vsel %vm1644, %v1341, 0.0
  %v2035 = vadd.f32 %v2033, %v2034
  %v2036 = vsel %vm1644, %v1346, 0.0
  %v2037 = vadd.f32 %v2035, %v2036
  %v2038 = vsel %vm1644, %v1351, 0.0
  %v2039 = vadd.f32 %v2037, %v2038
  %v2040 = vsel %vm1644, %v1356, 0.0
  %v2041 = vadd.f32 %v2039, %v2040
  %v2042 = vsel %vm1644, %v1361, 0.0
  %v2043 = vadd.f32 %v2041, %v2042
  %v2044 = vsel %vm1644, %v1366, 0.0
  %v2045 = vadd.f32 %v2043, %v2044
  %v2046 = vsel %vm1644, %v1371, 0.0
  %v2047 = vadd.f32 %v2045, %v2046
  %v2048 = vsel %vm1644, %v1376, 0.0
  %v2049 = vadd.f32 %v2047, %v2048
  %v2050 = vsel %vm1644, %v1381, 0.0
  %v2051 = vadd.f32 %v2049, %v2050
  %v2052 = vsel %vm1644, %v1386, 0.0
  %v2053 = vadd.f32 %v2051, %v2052
  %v2054 = vsel %vm1644, %v1391, 0.0
  %v2055 = vadd.f32 %v2053, %v2054
  %v2056 = vsel %vm1644, %v1396, 0.0
  %v2057 = vadd.f32 %v2055, %v2056
  %v2058 = vsel %vm1644, %v1401, 0.0
  %v2059 = vadd.f32 %v2057, %v2058
  %v2060 = vsel %vm1644, %v1406, 0.0
  %v2061 = vadd.f32 %v2059, %v2060
  %v2062 = vsel %vm1644, %v1411, 0.0
  %v2063 = vadd.f32 %v2061, %v2062
  %v2064 = vsel %vm1644, %v1416, 0.0
  %v2065 = vadd.f32 %v2063, %v2064
  %v2066 = vsel %vm1644, %v1421, 0.0
  %v2067 = vadd.f32 %v2065, %v2066
  %v2068 = vsel %vm1644, %v1426, 0.0
  %v2069 = vadd.f32 %v2067, %v2068
  %v2070 = vsel %vm1644, %v1431, 0.0
  %v2071 = vadd.f32 %v2069, %v2070
  %v2072 = vsel %vm1644, %v1436, 0.0
  %v2073 = vadd.f32 %v2071, %v2072
  %v2074 = vsel %vm1644, %v1441, 0.0
  %v2075 = vadd.f32 %v2073, %v2074
  %v2076 = vsel %vm1644, %v1446, 0.0
  %v2077 = vadd.f32 %v2075, %v2076
  %v2078 = vsel %vm1644, %v1451, 0.0
  %v2079 = vadd.f32 %v2077, %v2078
  %v2080 = vsel %vm1644, %v1456, 0.0
  %v2081 = vadd.f32 %v2079, %v2080
  %v2082 = vsel %vm1644, %v1461, 0.0
  %v2083 = vadd.f32 %v2081, %v2082
  %v2084 = vsel %vm1644, %v1466, 0.0
  %v2085 = vadd.f32 %v2083, %v2084
  %v2086 = vsel %vm1644, %v1471, 0.0
  %v2087 = vadd.f32 %v2085, %v2086
  %v2088 = vsel %vm1644, %v1476, 0.0
  %v2089 = vadd.f32 %v2087, %v2088
  %v2090 = vsel %vm1644, %v1481, 0.0
  %v2091 = vadd.f32 %v2089, %v2090
  %v2092 = vsel %vm1644, %v1486, 0.0
  %v2093 = vadd.f32 %v2091, %v2092
  %v2094 = vsel %vm1644, %v1491, 0.0
  %v2095 = vadd.f32 %v2093, %v2094
  %v2096 = vsel %vm1644, %v1496, 0.0
  %v2097 = vadd.f32 %v2095, %v2096
  %v2098 = vsel %vm1644, %v1501, 0.0
  %v2099 = vadd.f32 %v2097, %v2098
  %v2100 = vsel %vm1644, %v1506, 0.0
  %v2101 = vadd.f32 %v2099, %v2100
  %v2102 = vsel %vm1644, %v1511, 0.0
  %v2103 = vadd.f32 %v2101, %v2102
  %v2104 = vsel %vm1644, %v1516, 0.0
  %v2105 = vadd.f32 %v2103, %v2104
  %v2106 = vsel %vm1644, %v1521, 0.0
  %v2107 = vadd.f32 %v2105, %v2106
  %v2108 = vsel %vm1644, %v1526, 0.0
  %v2109 = vadd.f32 %v2107, %v2108
  %v2110 = vsel %vm1644, %v1531, 0.0
  %v2111 = vadd.f32 %v2109, %v2110
  %v2112 = vsel %vm1644, %v1536, 0.0
  %v2113 = vadd.f32 %v2111, %v2112
  %v2114 = vsel %vm1644, %v1541, 0.0
  %v2115 = vadd.f32 %v2113, %v2114
  %v2116 = vsel %vm1644, %v1546, 0.0
  %v2117 = vadd.f32 %v2115, %v2116
  %v2118 = vsel %vm1644, %v1551, 0.0
  %v2119 = vadd.f32 %v2117, %v2118
  %v2120 = vsel %vm1644, %v1556, 0.0
  %v2121 = vadd.f32 %v2119, %v2120
  %v2122 = vsel %vm1644, %v1561, 0.0
  %v2123 = vadd.f32 %v2121, %v2122
  %v2124 = vsel %vm1644, %v1566, 0.0
  %v2125 = vadd.f32 %v2123, %v2124
  %v2126 = vsel %vm1644, %v1571, 0.0
  %v2127 = vadd.f32 %v2125, %v2126
  %v2128 = vsel %vm1644, %v1576, 0.0
  %v2129 = vadd.f32 %v2127, %v2128
  %v2130 = vsel %vm1644, %v1581, 0.0
  %v2131 = vadd.f32 %v2129, %v2130
  %v2132 = vsel %vm1644, %v1586, 0.0
  %v2133 = vadd.f32 %v2131, %v2132
  %v2134 = vsel %vm1644, %v1591, 0.0
  %v2135 = vadd.f32 %v2133, %v2134
  %v2136 = vsel %vm1644, %v1596, 0.0
  %v2137 = vadd.f32 %v2135, %v2136
  %v2138 = vsel %vm1644, %v1601, 0.0
  %v2139 = vadd.f32 %v2137, %v2138
  %v2140 = vsel %vm1644, %v1606, 0.0
  %v2141 = vadd.f32 %v2139, %v2140
  %v2142 = vsel %vm1644, %v1611, 0.0
  %v2143 = vadd.f32 %v2141, %v2142
  %v2144 = vsel %vm1644, %v1616, 0.0
  %v2145 = vadd.f32 %v2143, %v2144
  %v2146 = vsel %vm1644, %v1621, 0.0
  %v2147 = vadd.f32 %v2145, %v2146
  %v2148 = vsel %vm1644, %v1626, 0.0
  %v2149 = vadd.f32 %v2147, %v2148
  %v2150 = vsel %vm1644, %v1631, 0.0
  %v2151 = vadd.f32 %v2149, %v2150
  %v2152 = vsel %vm1644, %v1636, 0.0
  %v2153 = vadd.f32 %v2151, %v2152
  %v2154 = vsel %vm1644, %v1641, 0.0
  %v2155 = vadd.f32 %v2153, %v2154
  %v2156 = vrot.slane %v2155, 4
  %v2157 = vadd.f32 %v2155, %v2156
  %v2158 = vrot.slane %v2157, 2
  %v2159 = vadd.f32 %v2157, %v2158
  %v2160 = vrot.slane %v2159, 1
  %v2161 = vadd.f32 %v2159, %v2160
  %v2162 = vmul.f32 %v2161, 0.00048828125
  %v2163 = vmul.f32 %v366, %v366
  %v2164 = vmul.f32 %v371, %v371
  %v2165 = vmul.f32 %v376, %v376
  %v2166 = vmul.f32 %v381, %v381
  %v2167 = vmul.f32 %v386, %v386
  %v2168 = vmul.f32 %v391, %v391
  %v2169 = vmul.f32 %v396, %v396
  %v2170 = vmul.f32 %v401, %v401
  %v2171 = vmul.f32 %v406, %v406
  %v2172 = vmul.f32 %v411, %v411
  %v2173 = vmul.f32 %v416, %v416
  %v2174 = vmul.f32 %v421, %v421
  %v2175 = vmul.f32 %v426, %v426
  %v2176 = vmul.f32 %v431, %v431
  %v2177 = vmul.f32 %v436, %v436
  %v2178 = vmul.f32 %v441, %v441
  %v2179 = vmul.f32 %v446, %v446
  %v2180 = vmul.f32 %v451, %v451
  %v2181 = vmul.f32 %v456, %v456
  %v2182 = vmul.f32 %v461, %v461
  %v2183 = vmul.f32 %v466, %v466
  %v2184 = vmul.f32 %v471, %v471
  %v2185 = vmul.f32 %v476, %v476
  %v2186 = vmul.f32 %v481, %v481
  %v2187 = vmul.f32 %v486, %v486
  %v2188 = vmul.f32 %v491, %v491
  %v2189 = vmul.f32 %v496, %v496
  %v2190 = vmul.f32 %v501, %v501
  %v2191 = vmul.f32 %v506, %v506
  %v2192 = vmul.f32 %v511, %v511
  %v2193 = vmul.f32 %v516, %v516
  %v2194 = vmul.f32 %v521, %v521
  %v2195 = vmul.f32 %v526, %v526
  %v2196 = vmul.f32 %v531, %v531
  %v2197 = vmul.f32 %v536, %v536
  %v2198 = vmul.f32 %v541, %v541
  %v2199 = vmul.f32 %v546, %v546
  %v2200 = vmul.f32 %v551, %v551
  %v2201 = vmul.f32 %v556, %v556
  %v2202 = vmul.f32 %v561, %v561
  %v2203 = vmul.f32 %v566, %v566
  %v2204 = vmul.f32 %v571, %v571
  %v2205 = vmul.f32 %v576, %v576
  %v2206 = vmul.f32 %v581, %v581
  %v2207 = vmul.f32 %v586, %v586
  %v2208 = vmul.f32 %v591, %v591
  %v2209 = vmul.f32 %v596, %v596
  %v2210 = vmul.f32 %v601, %v601
  %v2211 = vmul.f32 %v606, %v606
  %v2212 = vmul.f32 %v611, %v611
  %v2213 = vmul.f32 %v616, %v616
  %v2214 = vmul.f32 %v621, %v621
  %v2215 = vmul.f32 %v626, %v626
  %v2216 = vmul.f32 %v631, %v631
  %v2217 = vmul.f32 %v636, %v636
  %v2218 = vmul.f32 %v641, %v641
  %v2219 = vmul.f32 %v646, %v646
  %v2220 = vmul.f32 %v651, %v651
  %v2221 = vmul.f32 %v656, %v656
  %v2222 = vmul.f32 %v661, %v661
  %v2223 = vmul.f32 %v666, %v666
  %v2224 = vmul.f32 %v671, %v671
  %v2225 = vmul.f32 %v676, %v676
  %v2226 = vmul.f32 %v681, %v681
  %v2227 = vmul.f32 %v686, %v686
  %v2228 = vmul.f32 %v691, %v691
  %v2229 = vmul.f32 %v696, %v696
  %v2230 = vmul.f32 %v701, %v701
  %v2231 = vmul.f32 %v706, %v706
  %v2232 = vmul.f32 %v711, %v711
  %v2233 = vmul.f32 %v716, %v716
  %v2234 = vmul.f32 %v721, %v721
  %v2235 = vmul.f32 %v726, %v726
  %v2236 = vmul.f32 %v731, %v731
  %v2237 = vmul.f32 %v736, %v736
  %v2238 = vmul.f32 %v741, %v741
  %v2239 = vmul.f32 %v746, %v746
  %v2240 = vmul.f32 %v751, %v751
  %v2241 = vmul.f32 %v756, %v756
  %v2242 = vmul.f32 %v761, %v761
  %v2243 = vmul.f32 %v766, %v766
  %v2244 = vmul.f32 %v771, %v771
  %v2245 = vmul.f32 %v776, %v776
  %v2246 = vmul.f32 %v781, %v781
  %v2247 = vmul.f32 %v786, %v786
  %v2248 = vmul.f32 %v791, %v791
  %v2249 = vmul.f32 %v796, %v796
  %v2250 = vmul.f32 %v801, %v801
  %v2251 = vmul.f32 %v806, %v806
  %v2252 = vmul.f32 %v811, %v811
  %v2253 = vmul.f32 %v816, %v816
  %v2254 = vmul.f32 %v821, %v821
  %v2255 = vmul.f32 %v826, %v826
  %v2256 = vmul.f32 %v831, %v831
  %v2257 = vmul.f32 %v836, %v836
  %v2258 = vmul.f32 %v841, %v841
  %v2259 = vmul.f32 %v846, %v846
  %v2260 = vmul.f32 %v851, %v851
  %v2261 = vmul.f32 %v856, %v856
  %v2262 = vmul.f32 %v861, %v861
  %v2263 = vmul.f32 %v866, %v866
  %v2264 = vmul.f32 %v871, %v871
  %v2265 = vmul.f32 %v876, %v876
  %v2266 = vmul.f32 %v881, %v881
  %v2267 = vmul.f32 %v886, %v886
  %v2268 = vmul.f32 %v891, %v891
  %v2269 = vmul.f32 %v896, %v896
  %v2270 = vmul.f32 %v901, %v901
  %v2271 = vmul.f32 %v906, %v906
  %v2272 = vmul.f32 %v911, %v911
  %v2273 = vmul.f32 %v916, %v916
  %v2274 = vmul.f32 %v921, %v921
  %v2275 = vmul.f32 %v926, %v926
  %v2276 = vmul.f32 %v931, %v931
  %v2277 = vmul.f32 %v936, %v936
  %v2278 = vmul.f32 %v941, %v941
  %v2279 = vmul.f32 %v946, %v946
  %v2280 = vmul.f32 %v951, %v951
  %v2281 = vmul.f32 %v956, %v956
  %v2282 = vmul.f32 %v961, %v961
  %v2283 = vmul.f32 %v966, %v966
  %v2284 = vmul.f32 %v971, %v971
  %v2285 = vmul.f32 %v976, %v976
  %v2286 = vmul.f32 %v981, %v981
  %v2287 = vmul.f32 %v986, %v986
  %v2288 = vmul.f32 %v991, %v991
  %v2289 = vmul.f32 %v996, %v996
  %v2290 = vmul.f32 %v1001, %v1001
  %v2291 = vmul.f32 %v1006, %v1006
  %v2292 = vmul.f32 %v1011, %v1011
  %v2293 = vmul.f32 %v1016, %v1016
  %v2294 = vmul.f32 %v1021, %v1021
  %v2295 = vmul.f32 %v1026, %v1026
  %v2296 = vmul.f32 %v1031, %v1031
  %v2297 = vmul.f32 %v1036, %v1036
  %v2298 = vmul.f32 %v1041, %v1041
  %v2299 = vmul.f32 %v1046, %v1046
  %v2300 = vmul.f32 %v1051, %v1051
  %v2301 = vmul.f32 %v1056, %v1056
  %v2302 = vmul.f32 %v1061, %v1061
  %v2303 = vmul.f32 %v1066, %v1066
  %v2304 = vmul.f32 %v1071, %v1071
  %v2305 = vmul.f32 %v1076, %v1076
  %v2306 = vmul.f32 %v1081, %v1081
  %v2307 = vmul.f32 %v1086, %v1086
  %v2308 = vmul.f32 %v1091, %v1091
  %v2309 = vmul.f32 %v1096, %v1096
  %v2310 = vmul.f32 %v1101, %v1101
  %v2311 = vmul.f32 %v1106, %v1106
  %v2312 = vmul.f32 %v1111, %v1111
  %v2313 = vmul.f32 %v1116, %v1116
  %v2314 = vmul.f32 %v1121, %v1121
  %v2315 = vmul.f32 %v1126, %v1126
  %v2316 = vmul.f32 %v1131, %v1131
  %v2317 = vmul.f32 %v1136, %v1136
  %v2318 = vmul.f32 %v1141, %v1141
  %v2319 = vmul.f32 %v1146, %v1146
  %v2320 = vmul.f32 %v1151, %v1151
  %v2321 = vmul.f32 %v1156, %v1156
  %v2322 = vmul.f32 %v1161, %v1161
  %v2323 = vmul.f32 %v1166, %v1166
  %v2324 = vmul.f32 %v1171, %v1171
  %v2325 = vmul.f32 %v1176, %v1176
  %v2326 = vmul.f32 %v1181, %v1181
  %v2327 = vmul.f32 %v1186, %v1186
  %v2328 = vmul.f32 %v1191, %v1191
  %v2329 = vmul.f32 %v1196, %v1196
  %v2330 = vmul.f32 %v1201, %v1201
  %v2331 = vmul.f32 %v1206, %v1206
  %v2332 = vmul.f32 %v1211, %v1211
  %v2333 = vmul.f32 %v1216, %v1216
  %v2334 = vmul.f32 %v1221, %v1221
  %v2335 = vmul.f32 %v1226, %v1226
  %v2336 = vmul.f32 %v1231, %v1231
  %v2337 = vmul.f32 %v1236, %v1236
  %v2338 = vmul.f32 %v1241, %v1241
  %v2339 = vmul.f32 %v1246, %v1246
  %v2340 = vmul.f32 %v1251, %v1251
  %v2341 = vmul.f32 %v1256, %v1256
  %v2342 = vmul.f32 %v1261, %v1261
  %v2343 = vmul.f32 %v1266, %v1266
  %v2344 = vmul.f32 %v1271, %v1271
  %v2345 = vmul.f32 %v1276, %v1276
  %v2346 = vmul.f32 %v1281, %v1281
  %v2347 = vmul.f32 %v1286, %v1286
  %v2348 = vmul.f32 %v1291, %v1291
  %v2349 = vmul.f32 %v1296, %v1296
  %v2350 = vmul.f32 %v1301, %v1301
  %v2351 = vmul.f32 %v1306, %v1306
  %v2352 = vmul.f32 %v1311, %v1311
  %v2353 = vmul.f32 %v1316, %v1316
  %v2354 = vmul.f32 %v1321, %v1321
  %v2355 = vmul.f32 %v1326, %v1326
  %v2356 = vmul.f32 %v1331, %v1331
  %v2357 = vmul.f32 %v1336, %v1336
  %v2358 = vmul.f32 %v1341, %v1341
  %v2359 = vmul.f32 %v1346, %v1346
  %v2360 = vmul.f32 %v1351, %v1351
  %v2361 = vmul.f32 %v1356, %v1356
  %v2362 = vmul.f32 %v1361, %v1361
  %v2363 = vmul.f32 %v1366, %v1366
  %v2364 = vmul.f32 %v1371, %v1371
  %v2365 = vmul.f32 %v1376, %v1376
  %v2366 = vmul.f32 %v1381, %v1381
  %v2367 = vmul.f32 %v1386, %v1386
  %v2368 = vmul.f32 %v1391, %v1391
  %v2369 = vmul.f32 %v1396, %v1396
  %v2370 = vmul.f32 %v1401, %v1401
  %v2371 = vmul.f32 %v1406, %v1406
  %v2372 = vmul.f32 %v1411, %v1411
  %v2373 = vmul.f32 %v1416, %v1416
  %v2374 = vmul.f32 %v1421, %v1421
  %v2375 = vmul.f32 %v1426, %v1426
  %v2376 = vmul.f32 %v1431, %v1431
  %v2377 = vmul.f32 %v1436, %v1436
  %v2378 = vmul.f32 %v1441, %v1441
  %v2379 = vmul.f32 %v1446, %v1446
  %v2380 = vmul.f32 %v1451, %v1451
  %v2381 = vmul.f32 %v1456, %v1456
  %v2382 = vmul.f32 %v1461, %v1461
  %v2383 = vmul.f32 %v1466, %v1466
  %v2384 = vmul.f32 %v1471, %v1471
  %v2385 = vmul.f32 %v1476, %v1476
  %v2386 = vmul.f32 %v1481, %v1481
  %v2387 = vmul.f32 %v1486, %v1486
  %v2388 = vmul.f32 %v1491, %v1491
  %v2389 = vmul.f32 %v1496, %v1496
  %v2390 = vmul.f32 %v1501, %v1501
  %v2391 = vmul.f32 %v1506, %v1506
  %v2392 = vmul.f32 %v1511, %v1511
  %v2393 = vmul.f32 %v1516, %v1516
  %v2394 = vmul.f32 %v1521, %v1521
  %v2395 = vmul.f32 %v1526, %v1526
  %v2396 = vmul.f32 %v1531, %v1531
  %v2397 = vmul.f32 %v1536, %v1536
  %v2398 = vmul.f32 %v1541, %v1541
  %v2399 = vmul.f32 %v1546, %v1546
  %v2400 = vmul.f32 %v1551, %v1551
  %v2401 = vmul.f32 %v1556, %v1556
  %v2402 = vmul.f32 %v1561, %v1561
  %v2403 = vmul.f32 %v1566, %v1566
  %v2404 = vmul.f32 %v1571, %v1571
  %v2405 = vmul.f32 %v1576, %v1576
  %v2406 = vmul.f32 %v1581, %v1581
  %v2407 = vmul.f32 %v1586, %v1586
  %v2408 = vmul.f32 %v1591, %v1591
  %v2409 = vmul.f32 %v1596, %v1596
  %v2410 = vmul.f32 %v1601, %v1601
  %v2411 = vmul.f32 %v1606, %v1606
  %v2412 = vmul.f32 %v1611, %v1611
  %v2413 = vmul.f32 %v1616, %v1616
  %v2414 = vmul.f32 %v1621, %v1621
  %v2415 = vmul.f32 %v1626, %v1626
  %v2416 = vmul.f32 %v1631, %v1631
  %v2417 = vmul.f32 %v1636, %v1636
  %v2418 = vmul.f32 %v1641, %v1641
  %v2419 = vsel %vm1644, %v2163, 0.0
  %v2420 = vsel %vm1644, %v2164, 0.0
  %v2421 = vadd.f32 %v2419, %v2420
  %v2422 = vsel %vm1644, %v2165, 0.0
  %v2423 = vadd.f32 %v2421, %v2422
  %v2424 = vsel %vm1644, %v2166, 0.0
  %v2425 = vadd.f32 %v2423, %v2424
  %v2426 = vsel %vm1644, %v2167, 0.0
  %v2427 = vadd.f32 %v2425, %v2426
  %v2428 = vsel %vm1644, %v2168, 0.0
  %v2429 = vadd.f32 %v2427, %v2428
  %v2430 = vsel %vm1644, %v2169, 0.0
  %v2431 = vadd.f32 %v2429, %v2430
  %v2432 = vsel %vm1644, %v2170, 0.0
  %v2433 = vadd.f32 %v2431, %v2432
  %v2434 = vsel %vm1644, %v2171, 0.0
  %v2435 = vadd.f32 %v2433, %v2434
  %v2436 = vsel %vm1644, %v2172, 0.0
  %v2437 = vadd.f32 %v2435, %v2436
  %v2438 = vsel %vm1644, %v2173, 0.0
  %v2439 = vadd.f32 %v2437, %v2438
  %v2440 = vsel %vm1644, %v2174, 0.0
  %v2441 = vadd.f32 %v2439, %v2440
  %v2442 = vsel %vm1644, %v2175, 0.0
  %v2443 = vadd.f32 %v2441, %v2442
  %v2444 = vsel %vm1644, %v2176, 0.0
  %v2445 = vadd.f32 %v2443, %v2444
  %v2446 = vsel %vm1644, %v2177, 0.0
  %v2447 = vadd.f32 %v2445, %v2446
  %v2448 = vsel %vm1644, %v2178, 0.0
  %v2449 = vadd.f32 %v2447, %v2448
  %v2450 = vsel %vm1644, %v2179, 0.0
  %v2451 = vadd.f32 %v2449, %v2450
  %v2452 = vsel %vm1644, %v2180, 0.0
  %v2453 = vadd.f32 %v2451, %v2452
  %v2454 = vsel %vm1644, %v2181, 0.0
  %v2455 = vadd.f32 %v2453, %v2454
  %v2456 = vsel %vm1644, %v2182, 0.0
  %v2457 = vadd.f32 %v2455, %v2456
  %v2458 = vsel %vm1644, %v2183, 0.0
  %v2459 = vadd.f32 %v2457, %v2458
  %v2460 = vsel %vm1644, %v2184, 0.0
  %v2461 = vadd.f32 %v2459, %v2460
  %v2462 = vsel %vm1644, %v2185, 0.0
  %v2463 = vadd.f32 %v2461, %v2462
  %v2464 = vsel %vm1644, %v2186, 0.0
  %v2465 = vadd.f32 %v2463, %v2464
  %v2466 = vsel %vm1644, %v2187, 0.0
  %v2467 = vadd.f32 %v2465, %v2466
  %v2468 = vsel %vm1644, %v2188, 0.0
  %v2469 = vadd.f32 %v2467, %v2468
  %v2470 = vsel %vm1644, %v2189, 0.0
  %v2471 = vadd.f32 %v2469, %v2470
  %v2472 = vsel %vm1644, %v2190, 0.0
  %v2473 = vadd.f32 %v2471, %v2472
  %v2474 = vsel %vm1644, %v2191, 0.0
  %v2475 = vadd.f32 %v2473, %v2474
  %v2476 = vsel %vm1644, %v2192, 0.0
  %v2477 = vadd.f32 %v2475, %v2476
  %v2478 = vsel %vm1644, %v2193, 0.0
  %v2479 = vadd.f32 %v2477, %v2478
  %v2480 = vsel %vm1644, %v2194, 0.0
  %v2481 = vadd.f32 %v2479, %v2480
  %v2482 = vsel %vm1644, %v2195, 0.0
  %v2483 = vadd.f32 %v2481, %v2482
  %v2484 = vsel %vm1644, %v2196, 0.0
  %v2485 = vadd.f32 %v2483, %v2484
  %v2486 = vsel %vm1644, %v2197, 0.0
  %v2487 = vadd.f32 %v2485, %v2486
  %v2488 = vsel %vm1644, %v2198, 0.0
  %v2489 = vadd.f32 %v2487, %v2488
  %v2490 = vsel %vm1644, %v2199, 0.0
  %v2491 = vadd.f32 %v2489, %v2490
  %v2492 = vsel %vm1644, %v2200, 0.0
  %v2493 = vadd.f32 %v2491, %v2492
  %v2494 = vsel %vm1644, %v2201, 0.0
  %v2495 = vadd.f32 %v2493, %v2494
  %v2496 = vsel %vm1644, %v2202, 0.0
  %v2497 = vadd.f32 %v2495, %v2496
  %v2498 = vsel %vm1644, %v2203, 0.0
  %v2499 = vadd.f32 %v2497, %v2498
  %v2500 = vsel %vm1644, %v2204, 0.0
  %v2501 = vadd.f32 %v2499, %v2500
  %v2502 = vsel %vm1644, %v2205, 0.0
  %v2503 = vadd.f32 %v2501, %v2502
  %v2504 = vsel %vm1644, %v2206, 0.0
  %v2505 = vadd.f32 %v2503, %v2504
  %v2506 = vsel %vm1644, %v2207, 0.0
  %v2507 = vadd.f32 %v2505, %v2506
  %v2508 = vsel %vm1644, %v2208, 0.0
  %v2509 = vadd.f32 %v2507, %v2508
  %v2510 = vsel %vm1644, %v2209, 0.0
  %v2511 = vadd.f32 %v2509, %v2510
  %v2512 = vsel %vm1644, %v2210, 0.0
  %v2513 = vadd.f32 %v2511, %v2512
  %v2514 = vsel %vm1644, %v2211, 0.0
  %v2515 = vadd.f32 %v2513, %v2514
  %v2516 = vsel %vm1644, %v2212, 0.0
  %v2517 = vadd.f32 %v2515, %v2516
  %v2518 = vsel %vm1644, %v2213, 0.0
  %v2519 = vadd.f32 %v2517, %v2518
  %v2520 = vsel %vm1644, %v2214, 0.0
  %v2521 = vadd.f32 %v2519, %v2520
  %v2522 = vsel %vm1644, %v2215, 0.0
  %v2523 = vadd.f32 %v2521, %v2522
  %v2524 = vsel %vm1644, %v2216, 0.0
  %v2525 = vadd.f32 %v2523, %v2524
  %v2526 = vsel %vm1644, %v2217, 0.0
  %v2527 = vadd.f32 %v2525, %v2526
  %v2528 = vsel %vm1644, %v2218, 0.0
  %v2529 = vadd.f32 %v2527, %v2528
  %v2530 = vsel %vm1644, %v2219, 0.0
  %v2531 = vadd.f32 %v2529, %v2530
  %v2532 = vsel %vm1644, %v2220, 0.0
  %v2533 = vadd.f32 %v2531, %v2532
  %v2534 = vsel %vm1644, %v2221, 0.0
  %v2535 = vadd.f32 %v2533, %v2534
  %v2536 = vsel %vm1644, %v2222, 0.0
  %v2537 = vadd.f32 %v2535, %v2536
  %v2538 = vsel %vm1644, %v2223, 0.0
  %v2539 = vadd.f32 %v2537, %v2538
  %v2540 = vsel %vm1644, %v2224, 0.0
  %v2541 = vadd.f32 %v2539, %v2540
  %v2542 = vsel %vm1644, %v2225, 0.0
  %v2543 = vadd.f32 %v2541, %v2542
  %v2544 = vsel %vm1644, %v2226, 0.0
  %v2545 = vadd.f32 %v2543, %v2544
  %v2546 = vsel %vm1644, %v2227, 0.0
  %v2547 = vadd.f32 %v2545, %v2546
  %v2548 = vsel %vm1644, %v2228, 0.0
  %v2549 = vadd.f32 %v2547, %v2548
  %v2550 = vsel %vm1644, %v2229, 0.0
  %v2551 = vadd.f32 %v2549, %v2550
  %v2552 = vsel %vm1644, %v2230, 0.0
  %v2553 = vadd.f32 %v2551, %v2552
  %v2554 = vsel %vm1644, %v2231, 0.0
  %v2555 = vadd.f32 %v2553, %v2554
  %v2556 = vsel %vm1644, %v2232, 0.0
  %v2557 = vadd.f32 %v2555, %v2556
  %v2558 = vsel %vm1644, %v2233, 0.0
  %v2559 = vadd.f32 %v2557, %v2558
  %v2560 = vsel %vm1644, %v2234, 0.0
  %v2561 = vadd.f32 %v2559, %v2560
  %v2562 = vsel %vm1644, %v2235, 0.0
  %v2563 = vadd.f32 %v2561, %v2562
  %v2564 = vsel %vm1644, %v2236, 0.0
  %v2565 = vadd.f32 %v2563, %v2564
  %v2566 = vsel %vm1644, %v2237, 0.0
  %v2567 = vadd.f32 %v2565, %v2566
  %v2568 = vsel %vm1644, %v2238, 0.0
  %v2569 = vadd.f32 %v2567, %v2568
  %v2570 = vsel %vm1644, %v2239, 0.0
  %v2571 = vadd.f32 %v2569, %v2570
  %v2572 = vsel %vm1644, %v2240, 0.0
  %v2573 = vadd.f32 %v2571, %v2572
  %v2574 = vsel %vm1644, %v2241, 0.0
  %v2575 = vadd.f32 %v2573, %v2574
  %v2576 = vsel %vm1644, %v2242, 0.0
  %v2577 = vadd.f32 %v2575, %v2576
  %v2578 = vsel %vm1644, %v2243, 0.0
  %v2579 = vadd.f32 %v2577, %v2578
  %v2580 = vsel %vm1644, %v2244, 0.0
  %v2581 = vadd.f32 %v2579, %v2580
  %v2582 = vsel %vm1644, %v2245, 0.0
  %v2583 = vadd.f32 %v2581, %v2582
  %v2584 = vsel %vm1644, %v2246, 0.0
  %v2585 = vadd.f32 %v2583, %v2584
  %v2586 = vsel %vm1644, %v2247, 0.0
  %v2587 = vadd.f32 %v2585, %v2586
  %v2588 = vsel %vm1644, %v2248, 0.0
  %v2589 = vadd.f32 %v2587, %v2588
  %v2590 = vsel %vm1644, %v2249, 0.0
  %v2591 = vadd.f32 %v2589, %v2590
  %v2592 = vsel %vm1644, %v2250, 0.0
  %v2593 = vadd.f32 %v2591, %v2592
  %v2594 = vsel %vm1644, %v2251, 0.0
  %v2595 = vadd.f32 %v2593, %v2594
  %v2596 = vsel %vm1644, %v2252, 0.0
  %v2597 = vadd.f32 %v2595, %v2596
  %v2598 = vsel %vm1644, %v2253, 0.0
  %v2599 = vadd.f32 %v2597, %v2598
  %v2600 = vsel %vm1644, %v2254, 0.0
  %v2601 = vadd.f32 %v2599, %v2600
  %v2602 = vsel %vm1644, %v2255, 0.0
  %v2603 = vadd.f32 %v2601, %v2602
  %v2604 = vsel %vm1644, %v2256, 0.0
  %v2605 = vadd.f32 %v2603, %v2604
  %v2606 = vsel %vm1644, %v2257, 0.0
  %v2607 = vadd.f32 %v2605, %v2606
  %v2608 = vsel %vm1644, %v2258, 0.0
  %v2609 = vadd.f32 %v2607, %v2608
  %v2610 = vsel %vm1644, %v2259, 0.0
  %v2611 = vadd.f32 %v2609, %v2610
  %v2612 = vsel %vm1644, %v2260, 0.0
  %v2613 = vadd.f32 %v2611, %v2612
  %v2614 = vsel %vm1644, %v2261, 0.0
  %v2615 = vadd.f32 %v2613, %v2614
  %v2616 = vsel %vm1644, %v2262, 0.0
  %v2617 = vadd.f32 %v2615, %v2616
  %v2618 = vsel %vm1644, %v2263, 0.0
  %v2619 = vadd.f32 %v2617, %v2618
  %v2620 = vsel %vm1644, %v2264, 0.0
  %v2621 = vadd.f32 %v2619, %v2620
  %v2622 = vsel %vm1644, %v2265, 0.0
  %v2623 = vadd.f32 %v2621, %v2622
  %v2624 = vsel %vm1644, %v2266, 0.0
  %v2625 = vadd.f32 %v2623, %v2624
  %v2626 = vsel %vm1644, %v2267, 0.0
  %v2627 = vadd.f32 %v2625, %v2626
  %v2628 = vsel %vm1644, %v2268, 0.0
  %v2629 = vadd.f32 %v2627, %v2628
  %v2630 = vsel %vm1644, %v2269, 0.0
  %v2631 = vadd.f32 %v2629, %v2630
  %v2632 = vsel %vm1644, %v2270, 0.0
  %v2633 = vadd.f32 %v2631, %v2632
  %v2634 = vsel %vm1644, %v2271, 0.0
  %v2635 = vadd.f32 %v2633, %v2634
  %v2636 = vsel %vm1644, %v2272, 0.0
  %v2637 = vadd.f32 %v2635, %v2636
  %v2638 = vsel %vm1644, %v2273, 0.0
  %v2639 = vadd.f32 %v2637, %v2638
  %v2640 = vsel %vm1644, %v2274, 0.0
  %v2641 = vadd.f32 %v2639, %v2640
  %v2642 = vsel %vm1644, %v2275, 0.0
  %v2643 = vadd.f32 %v2641, %v2642
  %v2644 = vsel %vm1644, %v2276, 0.0
  %v2645 = vadd.f32 %v2643, %v2644
  %v2646 = vsel %vm1644, %v2277, 0.0
  %v2647 = vadd.f32 %v2645, %v2646
  %v2648 = vsel %vm1644, %v2278, 0.0
  %v2649 = vadd.f32 %v2647, %v2648
  %v2650 = vsel %vm1644, %v2279, 0.0
  %v2651 = vadd.f32 %v2649, %v2650
  %v2652 = vsel %vm1644, %v2280, 0.0
  %v2653 = vadd.f32 %v2651, %v2652
  %v2654 = vsel %vm1644, %v2281, 0.0
  %v2655 = vadd.f32 %v2653, %v2654
  %v2656 = vsel %vm1644, %v2282, 0.0
  %v2657 = vadd.f32 %v2655, %v2656
  %v2658 = vsel %vm1644, %v2283, 0.0
  %v2659 = vadd.f32 %v2657, %v2658
  %v2660 = vsel %vm1644, %v2284, 0.0
  %v2661 = vadd.f32 %v2659, %v2660
  %v2662 = vsel %vm1644, %v2285, 0.0
  %v2663 = vadd.f32 %v2661, %v2662
  %v2664 = vsel %vm1644, %v2286, 0.0
  %v2665 = vadd.f32 %v2663, %v2664
  %v2666 = vsel %vm1644, %v2287, 0.0
  %v2667 = vadd.f32 %v2665, %v2666
  %v2668 = vsel %vm1644, %v2288, 0.0
  %v2669 = vadd.f32 %v2667, %v2668
  %v2670 = vsel %vm1644, %v2289, 0.0
  %v2671 = vadd.f32 %v2669, %v2670
  %v2672 = vsel %vm1644, %v2290, 0.0
  %v2673 = vadd.f32 %v2671, %v2672
  %v2674 = vsel %vm1644, %v2291, 0.0
  %v2675 = vadd.f32 %v2673, %v2674
  %v2676 = vsel %vm1644, %v2292, 0.0
  %v2677 = vadd.f32 %v2675, %v2676
  %v2678 = vsel %vm1644, %v2293, 0.0
  %v2679 = vadd.f32 %v2677, %v2678
  %v2680 = vsel %vm1644, %v2294, 0.0
  %v2681 = vadd.f32 %v2679, %v2680
  %v2682 = vsel %vm1644, %v2295, 0.0
  %v2683 = vadd.f32 %v2681, %v2682
  %v2684 = vsel %vm1644, %v2296, 0.0
  %v2685 = vadd.f32 %v2683, %v2684
  %v2686 = vsel %vm1644, %v2297, 0.0
  %v2687 = vadd.f32 %v2685, %v2686
  %v2688 = vsel %vm1644, %v2298, 0.0
  %v2689 = vadd.f32 %v2687, %v2688
  %v2690 = vsel %vm1644, %v2299, 0.0
  %v2691 = vadd.f32 %v2689, %v2690
  %v2692 = vsel %vm1644, %v2300, 0.0
  %v2693 = vadd.f32 %v2691, %v2692
  %v2694 = vsel %vm1644, %v2301, 0.0
  %v2695 = vadd.f32 %v2693, %v2694
  %v2696 = vsel %vm1644, %v2302, 0.0
  %v2697 = vadd.f32 %v2695, %v2696
  %v2698 = vsel %vm1644, %v2303, 0.0
  %v2699 = vadd.f32 %v2697, %v2698
  %v2700 = vsel %vm1644, %v2304, 0.0
  %v2701 = vadd.f32 %v2699, %v2700
  %v2702 = vsel %vm1644, %v2305, 0.0
  %v2703 = vadd.f32 %v2701, %v2702
  %v2704 = vsel %vm1644, %v2306, 0.0
  %v2705 = vadd.f32 %v2703, %v2704
  %v2706 = vsel %vm1644, %v2307, 0.0
  %v2707 = vadd.f32 %v2705, %v2706
  %v2708 = vsel %vm1644, %v2308, 0.0
  %v2709 = vadd.f32 %v2707, %v2708
  %v2710 = vsel %vm1644, %v2309, 0.0
  %v2711 = vadd.f32 %v2709, %v2710
  %v2712 = vsel %vm1644, %v2310, 0.0
  %v2713 = vadd.f32 %v2711, %v2712
  %v2714 = vsel %vm1644, %v2311, 0.0
  %v2715 = vadd.f32 %v2713, %v2714
  %v2716 = vsel %vm1644, %v2312, 0.0
  %v2717 = vadd.f32 %v2715, %v2716
  %v2718 = vsel %vm1644, %v2313, 0.0
  %v2719 = vadd.f32 %v2717, %v2718
  %v2720 = vsel %vm1644, %v2314, 0.0
  %v2721 = vadd.f32 %v2719, %v2720
  %v2722 = vsel %vm1644, %v2315, 0.0
  %v2723 = vadd.f32 %v2721, %v2722
  %v2724 = vsel %vm1644, %v2316, 0.0
  %v2725 = vadd.f32 %v2723, %v2724
  %v2726 = vsel %vm1644, %v2317, 0.0
  %v2727 = vadd.f32 %v2725, %v2726
  %v2728 = vsel %vm1644, %v2318, 0.0
  %v2729 = vadd.f32 %v2727, %v2728
  %v2730 = vsel %vm1644, %v2319, 0.0
  %v2731 = vadd.f32 %v2729, %v2730
  %v2732 = vsel %vm1644, %v2320, 0.0
  %v2733 = vadd.f32 %v2731, %v2732
  %v2734 = vsel %vm1644, %v2321, 0.0
  %v2735 = vadd.f32 %v2733, %v2734
  %v2736 = vsel %vm1644, %v2322, 0.0
  %v2737 = vadd.f32 %v2735, %v2736
  %v2738 = vsel %vm1644, %v2323, 0.0
  %v2739 = vadd.f32 %v2737, %v2738
  %v2740 = vsel %vm1644, %v2324, 0.0
  %v2741 = vadd.f32 %v2739, %v2740
  %v2742 = vsel %vm1644, %v2325, 0.0
  %v2743 = vadd.f32 %v2741, %v2742
  %v2744 = vsel %vm1644, %v2326, 0.0
  %v2745 = vadd.f32 %v2743, %v2744
  %v2746 = vsel %vm1644, %v2327, 0.0
  %v2747 = vadd.f32 %v2745, %v2746
  %v2748 = vsel %vm1644, %v2328, 0.0
  %v2749 = vadd.f32 %v2747, %v2748
  %v2750 = vsel %vm1644, %v2329, 0.0
  %v2751 = vadd.f32 %v2749, %v2750
  %v2752 = vsel %vm1644, %v2330, 0.0
  %v2753 = vadd.f32 %v2751, %v2752
  %v2754 = vsel %vm1644, %v2331, 0.0
  %v2755 = vadd.f32 %v2753, %v2754
  %v2756 = vsel %vm1644, %v2332, 0.0
  %v2757 = vadd.f32 %v2755, %v2756
  %v2758 = vsel %vm1644, %v2333, 0.0
  %v2759 = vadd.f32 %v2757, %v2758
  %v2760 = vsel %vm1644, %v2334, 0.0
  %v2761 = vadd.f32 %v2759, %v2760
  %v2762 = vsel %vm1644, %v2335, 0.0
  %v2763 = vadd.f32 %v2761, %v2762
  %v2764 = vsel %vm1644, %v2336, 0.0
  %v2765 = vadd.f32 %v2763, %v2764
  %v2766 = vsel %vm1644, %v2337, 0.0
  %v2767 = vadd.f32 %v2765, %v2766
  %v2768 = vsel %vm1644, %v2338, 0.0
  %v2769 = vadd.f32 %v2767, %v2768
  %v2770 = vsel %vm1644, %v2339, 0.0
  %v2771 = vadd.f32 %v2769, %v2770
  %v2772 = vsel %vm1644, %v2340, 0.0
  %v2773 = vadd.f32 %v2771, %v2772
  %v2774 = vsel %vm1644, %v2341, 0.0
  %v2775 = vadd.f32 %v2773, %v2774
  %v2776 = vsel %vm1644, %v2342, 0.0
  %v2777 = vadd.f32 %v2775, %v2776
  %v2778 = vsel %vm1644, %v2343, 0.0
  %v2779 = vadd.f32 %v2777, %v2778
  %v2780 = vsel %vm1644, %v2344, 0.0
  %v2781 = vadd.f32 %v2779, %v2780
  %v2782 = vsel %vm1644, %v2345, 0.0
  %v2783 = vadd.f32 %v2781, %v2782
  %v2784 = vsel %vm1644, %v2346, 0.0
  %v2785 = vadd.f32 %v2783, %v2784
  %v2786 = vsel %vm1644, %v2347, 0.0
  %v2787 = vadd.f32 %v2785, %v2786
  %v2788 = vsel %vm1644, %v2348, 0.0
  %v2789 = vadd.f32 %v2787, %v2788
  %v2790 = vsel %vm1644, %v2349, 0.0
  %v2791 = vadd.f32 %v2789, %v2790
  %v2792 = vsel %vm1644, %v2350, 0.0
  %v2793 = vadd.f32 %v2791, %v2792
  %v2794 = vsel %vm1644, %v2351, 0.0
  %v2795 = vadd.f32 %v2793, %v2794
  %v2796 = vsel %vm1644, %v2352, 0.0
  %v2797 = vadd.f32 %v2795, %v2796
  %v2798 = vsel %vm1644, %v2353, 0.0
  %v2799 = vadd.f32 %v2797, %v2798
  %v2800 = vsel %vm1644, %v2354, 0.0
  %v2801 = vadd.f32 %v2799, %v2800
  %v2802 = vsel %vm1644, %v2355, 0.0
  %v2803 = vadd.f32 %v2801, %v2802
  %v2804 = vsel %vm1644, %v2356, 0.0
  %v2805 = vadd.f32 %v2803, %v2804
  %v2806 = vsel %vm1644, %v2357, 0.0
  %v2807 = vadd.f32 %v2805, %v2806
  %v2808 = vsel %vm1644, %v2358, 0.0
  %v2809 = vadd.f32 %v2807, %v2808
  %v2810 = vsel %vm1644, %v2359, 0.0
  %v2811 = vadd.f32 %v2809, %v2810
  %v2812 = vsel %vm1644, %v2360, 0.0
  %v2813 = vadd.f32 %v2811, %v2812
  %v2814 = vsel %vm1644, %v2361, 0.0
  %v2815 = vadd.f32 %v2813, %v2814
  %v2816 = vsel %vm1644, %v2362, 0.0
  %v2817 = vadd.f32 %v2815, %v2816
  %v2818 = vsel %vm1644, %v2363, 0.0
  %v2819 = vadd.f32 %v2817, %v2818
  %v2820 = vsel %vm1644, %v2364, 0.0
  %v2821 = vadd.f32 %v2819, %v2820
  %v2822 = vsel %vm1644, %v2365, 0.0
  %v2823 = vadd.f32 %v2821, %v2822
  %v2824 = vsel %vm1644, %v2366, 0.0
  %v2825 = vadd.f32 %v2823, %v2824
  %v2826 = vsel %vm1644, %v2367, 0.0
  %v2827 = vadd.f32 %v2825, %v2826
  %v2828 = vsel %vm1644, %v2368, 0.0
  %v2829 = vadd.f32 %v2827, %v2828
  %v2830 = vsel %vm1644, %v2369, 0.0
  %v2831 = vadd.f32 %v2829, %v2830
  %v2832 = vsel %vm1644, %v2370, 0.0
  %v2833 = vadd.f32 %v2831, %v2832
  %v2834 = vsel %vm1644, %v2371, 0.0
  %v2835 = vadd.f32 %v2833, %v2834
  %v2836 = vsel %vm1644, %v2372, 0.0
  %v2837 = vadd.f32 %v2835, %v2836
  %v2838 = vsel %vm1644, %v2373, 0.0
  %v2839 = vadd.f32 %v2837, %v2838
  %v2840 = vsel %vm1644, %v2374, 0.0
  %v2841 = vadd.f32 %v2839, %v2840
  %v2842 = vsel %vm1644, %v2375, 0.0
  %v2843 = vadd.f32 %v2841, %v2842
  %v2844 = vsel %vm1644, %v2376, 0.0
  %v2845 = vadd.f32 %v2843, %v2844
  %v2846 = vsel %vm1644, %v2377, 0.0
  %v2847 = vadd.f32 %v2845, %v2846
  %v2848 = vsel %vm1644, %v2378, 0.0
  %v2849 = vadd.f32 %v2847, %v2848
  %v2850 = vsel %vm1644, %v2379, 0.0
  %v2851 = vadd.f32 %v2849, %v2850
  %v2852 = vsel %vm1644, %v2380, 0.0
  %v2853 = vadd.f32 %v2851, %v2852
  %v2854 = vsel %vm1644, %v2381, 0.0
  %v2855 = vadd.f32 %v2853, %v2854
  %v2856 = vsel %vm1644, %v2382, 0.0
  %v2857 = vadd.f32 %v2855, %v2856
  %v2858 = vsel %vm1644, %v2383, 0.0
  %v2859 = vadd.f32 %v2857, %v2858
  %v2860 = vsel %vm1644, %v2384, 0.0
  %v2861 = vadd.f32 %v2859, %v2860
  %v2862 = vsel %vm1644, %v2385, 0.0
  %v2863 = vadd.f32 %v2861, %v2862
  %v2864 = vsel %vm1644, %v2386, 0.0
  %v2865 = vadd.f32 %v2863, %v2864
  %v2866 = vsel %vm1644, %v2387, 0.0
  %v2867 = vadd.f32 %v2865, %v2866
  %v2868 = vsel %vm1644, %v2388, 0.0
  %v2869 = vadd.f32 %v2867, %v2868
  %v2870 = vsel %vm1644, %v2389, 0.0
  %v2871 = vadd.f32 %v2869, %v2870
  %v2872 = vsel %vm1644, %v2390, 0.0
  %v2873 = vadd.f32 %v2871, %v2872
  %v2874 = vsel %vm1644, %v2391, 0.0
  %v2875 = vadd.f32 %v2873, %v2874
  %v2876 = vsel %vm1644, %v2392, 0.0
  %v2877 = vadd.f32 %v2875, %v2876
  %v2878 = vsel %vm1644, %v2393, 0.0
  %v2879 = vadd.f32 %v2877, %v2878
  %v2880 = vsel %vm1644, %v2394, 0.0
  %v2881 = vadd.f32 %v2879, %v2880
  %v2882 = vsel %vm1644, %v2395, 0.0
  %v2883 = vadd.f32 %v2881, %v2882
  %v2884 = vsel %vm1644, %v2396, 0.0
  %v2885 = vadd.f32 %v2883, %v2884
  %v2886 = vsel %vm1644, %v2397, 0.0
  %v2887 = vadd.f32 %v2885, %v2886
  %v2888 = vsel %vm1644, %v2398, 0.0
  %v2889 = vadd.f32 %v2887, %v2888
  %v2890 = vsel %vm1644, %v2399, 0.0
  %v2891 = vadd.f32 %v2889, %v2890
  %v2892 = vsel %vm1644, %v2400, 0.0
  %v2893 = vadd.f32 %v2891, %v2892
  %v2894 = vsel %vm1644, %v2401, 0.0
  %v2895 = vadd.f32 %v2893, %v2894
  %v2896 = vsel %vm1644, %v2402, 0.0
  %v2897 = vadd.f32 %v2895, %v2896
  %v2898 = vsel %vm1644, %v2403, 0.0
  %v2899 = vadd.f32 %v2897, %v2898
  %v2900 = vsel %vm1644, %v2404, 0.0
  %v2901 = vadd.f32 %v2899, %v2900
  %v2902 = vsel %vm1644, %v2405, 0.0
  %v2903 = vadd.f32 %v2901, %v2902
  %v2904 = vsel %vm1644, %v2406, 0.0
  %v2905 = vadd.f32 %v2903, %v2904
  %v2906 = vsel %vm1644, %v2407, 0.0
  %v2907 = vadd.f32 %v2905, %v2906
  %v2908 = vsel %vm1644, %v2408, 0.0
  %v2909 = vadd.f32 %v2907, %v2908
  %v2910 = vsel %vm1644, %v2409, 0.0
  %v2911 = vadd.f32 %v2909, %v2910
  %v2912 = vsel %vm1644, %v2410, 0.0
  %v2913 = vadd.f32 %v2911, %v2912
  %v2914 = vsel %vm1644, %v2411, 0.0
  %v2915 = vadd.f32 %v2913, %v2914
  %v2916 = vsel %vm1644, %v2412, 0.0
  %v2917 = vadd.f32 %v2915, %v2916
  %v2918 = vsel %vm1644, %v2413, 0.0
  %v2919 = vadd.f32 %v2917, %v2918
  %v2920 = vsel %vm1644, %v2414, 0.0
  %v2921 = vadd.f32 %v2919, %v2920
  %v2922 = vsel %vm1644, %v2415, 0.0
  %v2923 = vadd.f32 %v2921, %v2922
  %v2924 = vsel %vm1644, %v2416, 0.0
  %v2925 = vadd.f32 %v2923, %v2924
  %v2926 = vsel %vm1644, %v2417, 0.0
  %v2927 = vadd.f32 %v2925, %v2926
  %v2928 = vsel %vm1644, %v2418, 0.0
  %v2929 = vadd.f32 %v2927, %v2928
  %v2930 = vrot.slane %v2929, 4
  %v2931 = vadd.f32 %v2929, %v2930
  %v2932 = vrot.slane %v2931, 2
  %v2933 = vadd.f32 %v2931, %v2932
  %v2934 = vrot.slane %v2933, 1
  %v2935 = vadd.f32 %v2933, %v2934
  %v2936 = vmul.f32 %v2935, 0.00048828125
  %v2937 = vmul.f32 %v2162, %v2162
  %v2938 = vsub.f32 %v2936, %v2937
  %v2939 = vld [vmem:[%s3] sm:$0x1]
  %v2940 = vsub.f32 %v366, %v2162
  %v2941 = vsub.f32 %v371, %v2162
  %v2942 = vsub.f32 %v376, %v2162
  %v2943 = vsub.f32 %v381, %v2162
  %v2944 = vsub.f32 %v386, %v2162
  %v2945 = vsub.f32 %v391, %v2162
  %v2946 = vsub.f32 %v396, %v2162
  %v2947 = vsub.f32 %v401, %v2162
  %v2948 = vsub.f32 %v406, %v2162
  %v2949 = vsub.f32 %v411, %v2162
  %v2950 = vsub.f32 %v416, %v2162
  %v2951 = vsub.f32 %v421, %v2162
  %v2952 = vsub.f32 %v426, %v2162
  %v2953 = vsub.f32 %v431, %v2162
  %v2954 = vsub.f32 %v436, %v2162
  %v2955 = vsub.f32 %v441, %v2162
  %v2956 = vsub.f32 %v446, %v2162
  %v2957 = vsub.f32 %v451, %v2162
  %v2958 = vsub.f32 %v456, %v2162
  %v2959 = vsub.f32 %v461, %v2162
  %v2960 = vsub.f32 %v466, %v2162
  %v2961 = vsub.f32 %v471, %v2162
  %v2962 = vsub.f32 %v476, %v2162
  %v2963 = vsub.f32 %v481, %v2162
  %v2964 = vsub.f32 %v486, %v2162
  %v2965 = vsub.f32 %v491, %v2162
  %v2966 = vsub.f32 %v496, %v2162
  %v2967 = vsub.f32 %v501, %v2162
  %v2968 = vsub.f32 %v506, %v2162
  %v2969 = vsub.f32 %v511, %v2162
  %v2970 = vsub.f32 %v516, %v2162
  %v2971 = vsub.f32 %v521, %v2162
  %v2972 = vsub.f32 %v526, %v2162
  %v2973 = vsub.f32 %v531, %v2162
  %v2974 = vsub.f32 %v536, %v2162
  %v2975 = vsub.f32 %v541, %v2162
  %v2976 = vsub.f32 %v546, %v2162
  %v2977 = vsub.f32 %v551, %v2162
  %v2978 = vsub.f32 %v556, %v2162
  %v2979 = vsub.f32 %v561, %v2162
  %v2980 = vsub.f32 %v566, %v2162
  %v2981 = vsub.f32 %v571, %v2162
  %v2982 = vsub.f32 %v576, %v2162
  %v2983 = vsub.f32 %v581, %v2162
  %v2984 = vsub.f32 %v586, %v2162
  %v2985 = vsub.f32 %v591, %v2162
  %v2986 = vsub.f32 %v596, %v2162
  %v2987 = vsub.f32 %v601, %v2162
  %v2988 = vsub.f32 %v606, %v2162
  %v2989 = vsub.f32 %v611, %v2162
  %v2990 = vsub.f32 %v616, %v2162
  %v2991 = vsub.f32 %v621, %v2162
  %v2992 = vsub.f32 %v626, %v2162
  %v2993 = vsub.f32 %v631, %v2162
  %v2994 = vsub.f32 %v636, %v2162
  %v2995 = vsub.f32 %v641, %v2162
  %v2996 = vsub.f32 %v646, %v2162
  %v2997 = vsub.f32 %v651, %v2162
  %v2998 = vsub.f32 %v656, %v2162
  %v2999 = vsub.f32 %v661, %v2162
  %v3000 = vsub.f32 %v666, %v2162
  %v3001 = vsub.f32 %v671, %v2162
  %v3002 = vsub.f32 %v676, %v2162
  %v3003 = vsub.f32 %v681, %v2162
  %v3004 = vsub.f32 %v686, %v2162
  %v3005 = vsub.f32 %v691, %v2162
  %v3006 = vsub.f32 %v696, %v2162
  %v3007 = vsub.f32 %v701, %v2162
  %v3008 = vsub.f32 %v706, %v2162
  %v3009 = vsub.f32 %v711, %v2162
  %v3010 = vsub.f32 %v716, %v2162
  %v3011 = vsub.f32 %v721, %v2162
  %v3012 = vsub.f32 %v726, %v2162
  %v3013 = vsub.f32 %v731, %v2162
  %v3014 = vsub.f32 %v736, %v2162
  %v3015 = vsub.f32 %v741, %v2162
  %v3016 = vsub.f32 %v746, %v2162
  %v3017 = vsub.f32 %v751, %v2162
  %v3018 = vsub.f32 %v756, %v2162
  %v3019 = vsub.f32 %v761, %v2162
  %v3020 = vsub.f32 %v766, %v2162
  %v3021 = vsub.f32 %v771, %v2162
  %v3022 = vsub.f32 %v776, %v2162
  %v3023 = vsub.f32 %v781, %v2162
  %v3024 = vsub.f32 %v786, %v2162
  %v3025 = vsub.f32 %v791, %v2162
  %v3026 = vsub.f32 %v796, %v2162
  %v3027 = vsub.f32 %v801, %v2162
  %v3028 = vsub.f32 %v806, %v2162
  %v3029 = vsub.f32 %v811, %v2162
  %v3030 = vsub.f32 %v816, %v2162
  %v3031 = vsub.f32 %v821, %v2162
  %v3032 = vsub.f32 %v826, %v2162
  %v3033 = vsub.f32 %v831, %v2162
  %v3034 = vsub.f32 %v836, %v2162
  %v3035 = vsub.f32 %v841, %v2162
  %v3036 = vsub.f32 %v846, %v2162
  %v3037 = vsub.f32 %v851, %v2162
  %v3038 = vsub.f32 %v856, %v2162
  %v3039 = vsub.f32 %v861, %v2162
  %v3040 = vsub.f32 %v866, %v2162
  %v3041 = vsub.f32 %v871, %v2162
  %v3042 = vsub.f32 %v876, %v2162
  %v3043 = vsub.f32 %v881, %v2162
  %v3044 = vsub.f32 %v886, %v2162
  %v3045 = vsub.f32 %v891, %v2162
  %v3046 = vsub.f32 %v896, %v2162
  %v3047 = vsub.f32 %v901, %v2162
  %v3048 = vsub.f32 %v906, %v2162
  %v3049 = vsub.f32 %v911, %v2162
  %v3050 = vsub.f32 %v916, %v2162
  %v3051 = vsub.f32 %v921, %v2162
  %v3052 = vsub.f32 %v926, %v2162
  %v3053 = vsub.f32 %v931, %v2162
  %v3054 = vsub.f32 %v936, %v2162
  %v3055 = vsub.f32 %v941, %v2162
  %v3056 = vsub.f32 %v946, %v2162
  %v3057 = vsub.f32 %v951, %v2162
  %v3058 = vsub.f32 %v956, %v2162
  %v3059 = vsub.f32 %v961, %v2162
  %v3060 = vsub.f32 %v966, %v2162
  %v3061 = vsub.f32 %v971, %v2162
  %v3062 = vsub.f32 %v976, %v2162
  %v3063 = vsub.f32 %v981, %v2162
  %v3064 = vsub.f32 %v986, %v2162
  %v3065 = vsub.f32 %v991, %v2162
  %v3066 = vsub.f32 %v996, %v2162
  %v3067 = vsub.f32 %v1001, %v2162
  %v3068 = vsub.f32 %v1006, %v2162
  %v3069 = vsub.f32 %v1011, %v2162
  %v3070 = vsub.f32 %v1016, %v2162
  %v3071 = vsub.f32 %v1021, %v2162
  %v3072 = vsub.f32 %v1026, %v2162
  %v3073 = vsub.f32 %v1031, %v2162
  %v3074 = vsub.f32 %v1036, %v2162
  %v3075 = vsub.f32 %v1041, %v2162
  %v3076 = vsub.f32 %v1046, %v2162
  %v3077 = vsub.f32 %v1051, %v2162
  %v3078 = vsub.f32 %v1056, %v2162
  %v3079 = vsub.f32 %v1061, %v2162
  %v3080 = vsub.f32 %v1066, %v2162
  %v3081 = vsub.f32 %v1071, %v2162
  %v3082 = vsub.f32 %v1076, %v2162
  %v3083 = vsub.f32 %v1081, %v2162
  %v3084 = vsub.f32 %v1086, %v2162
  %v3085 = vsub.f32 %v1091, %v2162
  %v3086 = vsub.f32 %v1096, %v2162
  %v3087 = vsub.f32 %v1101, %v2162
  %v3088 = vsub.f32 %v1106, %v2162
  %v3089 = vsub.f32 %v1111, %v2162
  %v3090 = vsub.f32 %v1116, %v2162
  %v3091 = vsub.f32 %v1121, %v2162
  %v3092 = vsub.f32 %v1126, %v2162
  %v3093 = vsub.f32 %v1131, %v2162
  %v3094 = vsub.f32 %v1136, %v2162
  %v3095 = vsub.f32 %v1141, %v2162
  %v3096 = vsub.f32 %v1146, %v2162
  %v3097 = vsub.f32 %v1151, %v2162
  %v3098 = vsub.f32 %v1156, %v2162
  %v3099 = vsub.f32 %v1161, %v2162
  %v3100 = vsub.f32 %v1166, %v2162
  %v3101 = vsub.f32 %v1171, %v2162
  %v3102 = vsub.f32 %v1176, %v2162
  %v3103 = vsub.f32 %v1181, %v2162
  %v3104 = vsub.f32 %v1186, %v2162
  %v3105 = vsub.f32 %v1191, %v2162
  %v3106 = vsub.f32 %v1196, %v2162
  %v3107 = vsub.f32 %v1201, %v2162
  %v3108 = vsub.f32 %v1206, %v2162
  %v3109 = vsub.f32 %v1211, %v2162
  %v3110 = vsub.f32 %v1216, %v2162
  %v3111 = vsub.f32 %v1221, %v2162
  %v3112 = vsub.f32 %v1226, %v2162
  %v3113 = vsub.f32 %v1231, %v2162
  %v3114 = vsub.f32 %v1236, %v2162
  %v3115 = vsub.f32 %v1241, %v2162
  %v3116 = vsub.f32 %v1246, %v2162
  %v3117 = vsub.f32 %v1251, %v2162
  %v3118 = vsub.f32 %v1256, %v2162
  %v3119 = vsub.f32 %v1261, %v2162
  %v3120 = vsub.f32 %v1266, %v2162
  %v3121 = vsub.f32 %v1271, %v2162
  %v3122 = vsub.f32 %v1276, %v2162
  %v3123 = vsub.f32 %v1281, %v2162
  %v3124 = vsub.f32 %v1286, %v2162
  %v3125 = vsub.f32 %v1291, %v2162
  %v3126 = vsub.f32 %v1296, %v2162
  %v3127 = vsub.f32 %v1301, %v2162
  %v3128 = vsub.f32 %v1306, %v2162
  %v3129 = vsub.f32 %v1311, %v2162
  %v3130 = vsub.f32 %v1316, %v2162
  %v3131 = vsub.f32 %v1321, %v2162
  %v3132 = vsub.f32 %v1326, %v2162
  %v3133 = vsub.f32 %v1331, %v2162
  %v3134 = vsub.f32 %v1336, %v2162
  %v3135 = vsub.f32 %v1341, %v2162
  %v3136 = vsub.f32 %v1346, %v2162
  %v3137 = vsub.f32 %v1351, %v2162
  %v3138 = vsub.f32 %v1356, %v2162
  %v3139 = vsub.f32 %v1361, %v2162
  %v3140 = vsub.f32 %v1366, %v2162
  %v3141 = vsub.f32 %v1371, %v2162
  %v3142 = vsub.f32 %v1376, %v2162
  %v3143 = vsub.f32 %v1381, %v2162
  %v3144 = vsub.f32 %v1386, %v2162
  %v3145 = vsub.f32 %v1391, %v2162
  %v3146 = vsub.f32 %v1396, %v2162
  %v3147 = vsub.f32 %v1401, %v2162
  %v3148 = vsub.f32 %v1406, %v2162
  %v3149 = vsub.f32 %v1411, %v2162
  %v3150 = vsub.f32 %v1416, %v2162
  %v3151 = vsub.f32 %v1421, %v2162
  %v3152 = vsub.f32 %v1426, %v2162
  %v3153 = vsub.f32 %v1431, %v2162
  %v3154 = vsub.f32 %v1436, %v2162
  %v3155 = vsub.f32 %v1441, %v2162
  %v3156 = vsub.f32 %v1446, %v2162
  %v3157 = vsub.f32 %v1451, %v2162
  %v3158 = vsub.f32 %v1456, %v2162
  %v3159 = vsub.f32 %v1461, %v2162
  %v3160 = vsub.f32 %v1466, %v2162
  %v3161 = vsub.f32 %v1471, %v2162
  %v3162 = vsub.f32 %v1476, %v2162
  %v3163 = vsub.f32 %v1481, %v2162
  %v3164 = vsub.f32 %v1486, %v2162
  %v3165 = vsub.f32 %v1491, %v2162
  %v3166 = vsub.f32 %v1496, %v2162
  %v3167 = vsub.f32 %v1501, %v2162
  %v3168 = vsub.f32 %v1506, %v2162
  %v3169 = vsub.f32 %v1511, %v2162
  %v3170 = vsub.f32 %v1516, %v2162
  %v3171 = vsub.f32 %v1521, %v2162
  %v3172 = vsub.f32 %v1526, %v2162
  %v3173 = vsub.f32 %v1531, %v2162
  %v3174 = vsub.f32 %v1536, %v2162
  %v3175 = vsub.f32 %v1541, %v2162
  %v3176 = vsub.f32 %v1546, %v2162
  %v3177 = vsub.f32 %v1551, %v2162
  %v3178 = vsub.f32 %v1556, %v2162
  %v3179 = vsub.f32 %v1561, %v2162
  %v3180 = vsub.f32 %v1566, %v2162
  %v3181 = vsub.f32 %v1571, %v2162
  %v3182 = vsub.f32 %v1576, %v2162
  %v3183 = vsub.f32 %v1581, %v2162
  %v3184 = vsub.f32 %v1586, %v2162
  %v3185 = vsub.f32 %v1591, %v2162
  %v3186 = vsub.f32 %v1596, %v2162
  %v3187 = vsub.f32 %v1601, %v2162
  %v3188 = vsub.f32 %v1606, %v2162
  %v3189 = vsub.f32 %v1611, %v2162
  %v3190 = vsub.f32 %v1616, %v2162
  %v3191 = vsub.f32 %v1621, %v2162
  %v3192 = vsub.f32 %v1626, %v2162
  %v3193 = vsub.f32 %v1631, %v2162
  %v3194 = vsub.f32 %v1636, %v2162
  %v3195 = vsub.f32 %v1641, %v2162
  %v3197 = vlaneseq
  %v3198 = vshrl.u32 %v3197, 7
  %v3199 = vsub.s32 0, %v3198
  %v3200 = vrot.slane %v2939, %v3199
  %v3202 = vmul.f32 %v3200, %v2940
  %v3203 = vmul.f32 %v3200, %v2941
  %v3204 = vmul.f32 %v3200, %v2942
  %v3205 = vmul.f32 %v3200, %v2943
  %v3206 = vmul.f32 %v3200, %v2944
  %v3207 = vmul.f32 %v3200, %v2945
  %v3208 = vmul.f32 %v3200, %v2946
  %v3209 = vmul.f32 %v3200, %v2947
  %v3210 = vmul.f32 %v3200, %v2948
  %v3211 = vmul.f32 %v3200, %v2949
  %v3212 = vmul.f32 %v3200, %v2950
  %v3213 = vmul.f32 %v3200, %v2951
  %v3214 = vmul.f32 %v3200, %v2952
  %v3215 = vmul.f32 %v3200, %v2953
  %v3216 = vmul.f32 %v3200, %v2954
  %v3217 = vmul.f32 %v3200, %v2955
  %v3218 = vmul.f32 %v3200, %v2956
  %v3219 = vmul.f32 %v3200, %v2957
  %v3220 = vmul.f32 %v3200, %v2958
  %v3221 = vmul.f32 %v3200, %v2959
  %v3222 = vmul.f32 %v3200, %v2960
  %v3223 = vmul.f32 %v3200, %v2961
  %v3224 = vmul.f32 %v3200, %v2962
  %v3225 = vmul.f32 %v3200, %v2963
  %v3226 = vmul.f32 %v3200, %v2964
  %v3227 = vmul.f32 %v3200, %v2965
  %v3228 = vmul.f32 %v3200, %v2966
  %v3229 = vmul.f32 %v3200, %v2967
  %v3230 = vmul.f32 %v3200, %v2968
  %v3231 = vmul.f32 %v3200, %v2969
  %v3232 = vmul.f32 %v3200, %v2970
  %v3233 = vmul.f32 %v3200, %v2971
  %v3234 = vmul.f32 %v3200, %v2972
  %v3235 = vmul.f32 %v3200, %v2973
  %v3236 = vmul.f32 %v3200, %v2974
  %v3237 = vmul.f32 %v3200, %v2975
  %v3238 = vmul.f32 %v3200, %v2976
  %v3239 = vmul.f32 %v3200, %v2977
  %v3240 = vmul.f32 %v3200, %v2978
  %v3241 = vmul.f32 %v3200, %v2979
  %v3242 = vmul.f32 %v3200, %v2980
  %v3243 = vmul.f32 %v3200, %v2981
  %v3244 = vmul.f32 %v3200, %v2982
  %v3245 = vmul.f32 %v3200, %v2983
  %v3246 = vmul.f32 %v3200, %v2984
  %v3247 = vmul.f32 %v3200, %v2985
  %v3248 = vmul.f32 %v3200, %v2986
  %v3249 = vmul.f32 %v3200, %v2987
  %v3250 = vmul.f32 %v3200, %v2988
  %v3251 = vmul.f32 %v3200, %v2989
  %v3252 = vmul.f32 %v3200, %v2990
  %v3253 = vmul.f32 %v3200, %v2991
  %v3254 = vmul.f32 %v3200, %v2992
  %v3255 = vmul.f32 %v3200, %v2993
  %v3256 = vmul.f32 %v3200, %v2994
  %v3257 = vmul.f32 %v3200, %v2995
  %v3258 = vmul.f32 %v3200, %v2996
  %v3259 = vmul.f32 %v3200, %v2997
  %v3260 = vmul.f32 %v3200, %v2998
  %v3261 = vmul.f32 %v3200, %v2999
  %v3262 = vmul.f32 %v3200, %v3000
  %v3263 = vmul.f32 %v3200, %v3001
  %v3264 = vmul.f32 %v3200, %v3002
  %v3265 = vmul.f32 %v3200, %v3003
  %v3266 = vmul.f32 %v3200, %v3004
  %v3267 = vmul.f32 %v3200, %v3005
  %v3268 = vmul.f32 %v3200, %v3006
  %v3269 = vmul.f32 %v3200, %v3007
  %v3270 = vmul.f32 %v3200, %v3008
  %v3271 = vmul.f32 %v3200, %v3009
  %v3272 = vmul.f32 %v3200, %v3010
  %v3273 = vmul.f32 %v3200, %v3011
  %v3274 = vmul.f32 %v3200, %v3012
  %v3275 = vmul.f32 %v3200, %v3013
  %v3276 = vmul.f32 %v3200, %v3014
  %v3277 = vmul.f32 %v3200, %v3015
  %v3278 = vmul.f32 %v3200, %v3016
  %v3279 = vmul.f32 %v3200, %v3017
  %v3280 = vmul.f32 %v3200, %v3018
  %v3281 = vmul.f32 %v3200, %v3019
  %v3282 = vmul.f32 %v3200, %v3020
  %v3283 = vmul.f32 %v3200, %v3021
  %v3284 = vmul.f32 %v3200, %v3022
  %v3285 = vmul.f32 %v3200, %v3023
  %v3286 = vmul.f32 %v3200, %v3024
  %v3287 = vmul.f32 %v3200, %v3025
  %v3288 = vmul.f32 %v3200, %v3026
  %v3289 = vmul.f32 %v3200, %v3027
  %v3290 = vmul.f32 %v3200, %v3028
  %v3291 = vmul.f32 %v3200, %v3029
  %v3292 = vmul.f32 %v3200, %v3030
  %v3293 = vmul.f32 %v3200, %v3031
  %v3294 = vmul.f32 %v3200, %v3032
  %v3295 = vmul.f32 %v3200, %v3033
  %v3296 = vmul.f32 %v3200, %v3034
  %v3297 = vmul.f32 %v3200, %v3035
  %v3298 = vmul.f32 %v3200, %v3036
  %v3299 = vmul.f32 %v3200, %v3037
  %v3300 = vmul.f32 %v3200, %v3038
  %v3301 = vmul.f32 %v3200, %v3039
  %v3302 = vmul.f32 %v3200, %v3040
  %v3303 = vmul.f32 %v3200, %v3041
  %v3304 = vmul.f32 %v3200, %v3042
  %v3305 = vmul.f32 %v3200, %v3043
  %v3306 = vmul.f32 %v3200, %v3044
  %v3307 = vmul.f32 %v3200, %v3045
  %v3308 = vmul.f32 %v3200, %v3046
  %v3309 = vmul.f32 %v3200, %v3047
  %v3310 = vmul.f32 %v3200, %v3048
  %v3311 = vmul.f32 %v3200, %v3049
  %v3312 = vmul.f32 %v3200, %v3050
  %v3313 = vmul.f32 %v3200, %v3051
  %v3314 = vmul.f32 %v3200, %v3052
  %v3315 = vmul.f32 %v3200, %v3053
  %v3316 = vmul.f32 %v3200, %v3054
  %v3317 = vmul.f32 %v3200, %v3055
  %v3318 = vmul.f32 %v3200, %v3056
  %v3319 = vmul.f32 %v3200, %v3057
  %v3320 = vmul.f32 %v3200, %v3058
  %v3321 = vmul.f32 %v3200, %v3059
  %v3322 = vmul.f32 %v3200, %v3060
  %v3323 = vmul.f32 %v3200, %v3061
  %v3324 = vmul.f32 %v3200, %v3062
  %v3325 = vmul.f32 %v3200, %v3063
  %v3326 = vmul.f32 %v3200, %v3064
  %v3327 = vmul.f32 %v3200, %v3065
  %v3328 = vmul.f32 %v3200, %v3066
  %v3329 = vmul.f32 %v3200, %v3067
  %v3330 = vmul.f32 %v3200, %v3068
  %v3331 = vmul.f32 %v3200, %v3069
  %v3332 = vmul.f32 %v3200, %v3070
  %v3333 = vmul.f32 %v3200, %v3071
  %v3334 = vmul.f32 %v3200, %v3072
  %v3335 = vmul.f32 %v3200, %v3073
  %v3336 = vmul.f32 %v3200, %v3074
  %v3337 = vmul.f32 %v3200, %v3075
  %v3338 = vmul.f32 %v3200, %v3076
  %v3339 = vmul.f32 %v3200, %v3077
  %v3340 = vmul.f32 %v3200, %v3078
  %v3341 = vmul.f32 %v3200, %v3079
  %v3342 = vmul.f32 %v3200, %v3080
  %v3343 = vmul.f32 %v3200, %v3081
  %v3344 = vmul.f32 %v3200, %v3082
  %v3345 = vmul.f32 %v3200, %v3083
  %v3346 = vmul.f32 %v3200, %v3084
  %v3347 = vmul.f32 %v3200, %v3085
  %v3348 = vmul.f32 %v3200, %v3086
  %v3349 = vmul.f32 %v3200, %v3087
  %v3350 = vmul.f32 %v3200, %v3088
  %v3351 = vmul.f32 %v3200, %v3089
  %v3352 = vmul.f32 %v3200, %v3090
  %v3353 = vmul.f32 %v3200, %v3091
  %v3354 = vmul.f32 %v3200, %v3092
  %v3355 = vmul.f32 %v3200, %v3093
  %v3356 = vmul.f32 %v3200, %v3094
  %v3357 = vmul.f32 %v3200, %v3095
  %v3358 = vmul.f32 %v3200, %v3096
  %v3359 = vmul.f32 %v3200, %v3097
  %v3360 = vmul.f32 %v3200, %v3098
  %v3361 = vmul.f32 %v3200, %v3099
  %v3362 = vmul.f32 %v3200, %v3100
  %v3363 = vmul.f32 %v3200, %v3101
  %v3364 = vmul.f32 %v3200, %v3102
  %v3365 = vmul.f32 %v3200, %v3103
  %v3366 = vmul.f32 %v3200, %v3104
  %v3367 = vmul.f32 %v3200, %v3105
  %v3368 = vmul.f32 %v3200, %v3106
  %v3369 = vmul.f32 %v3200, %v3107
  %v3370 = vmul.f32 %v3200, %v3108
  %v3371 = vmul.f32 %v3200, %v3109
  %v3372 = vmul.f32 %v3200, %v3110
  %v3373 = vmul.f32 %v3200, %v3111
  %v3374 = vmul.f32 %v3200, %v3112
  %v3375 = vmul.f32 %v3200, %v3113
  %v3376 = vmul.f32 %v3200, %v3114
  %v3377 = vmul.f32 %v3200, %v3115
  %v3378 = vmul.f32 %v3200, %v3116
  %v3379 = vmul.f32 %v3200, %v3117
  %v3380 = vmul.f32 %v3200, %v3118
  %v3381 = vmul.f32 %v3200, %v3119
  %v3382 = vmul.f32 %v3200, %v3120
  %v3383 = vmul.f32 %v3200, %v3121
  %v3384 = vmul.f32 %v3200, %v3122
  %v3385 = vmul.f32 %v3200, %v3123
  %v3386 = vmul.f32 %v3200, %v3124
  %v3387 = vmul.f32 %v3200, %v3125
  %v3388 = vmul.f32 %v3200, %v3126
  %v3389 = vmul.f32 %v3200, %v3127
  %v3390 = vmul.f32 %v3200, %v3128
  %v3391 = vmul.f32 %v3200, %v3129
  %v3392 = vmul.f32 %v3200, %v3130
  %v3393 = vmul.f32 %v3200, %v3131
  %v3394 = vmul.f32 %v3200, %v3132
  %v3395 = vmul.f32 %v3200, %v3133
  %v3396 = vmul.f32 %v3200, %v3134
  %v3397 = vmul.f32 %v3200, %v3135
  %v3398 = vmul.f32 %v3200, %v3136
  %v3399 = vmul.f32 %v3200, %v3137
  %v3400 = vmul.f32 %v3200, %v3138
  %v3401 = vmul.f32 %v3200, %v3139
  %v3402 = vmul.f32 %v3200, %v3140
  %v3403 = vmul.f32 %v3200, %v3141
  %v3404 = vmul.f32 %v3200, %v3142
  %v3405 = vmul.f32 %v3200, %v3143
  %v3406 = vmul.f32 %v3200, %v3144
  %v3407 = vmul.f32 %v3200, %v3145
  %v3408 = vmul.f32 %v3200, %v3146
  %v3409 = vmul.f32 %v3200, %v3147
  %v3410 = vmul.f32 %v3200, %v3148
  %v3411 = vmul.f32 %v3200, %v3149
  %v3412 = vmul.f32 %v3200, %v3150
  %v3413 = vmul.f32 %v3200, %v3151
  %v3414 = vmul.f32 %v3200, %v3152
  %v3415 = vmul.f32 %v3200, %v3153
  %v3416 = vmul.f32 %v3200, %v3154
  %v3417 = vmul.f32 %v3200, %v3155
  %v3418 = vmul.f32 %v3200, %v3156
  %v3419 = vmul.f32 %v3200, %v3157
  %v3420 = vmul.f32 %v3200, %v3158
  %v3421 = vmul.f32 %v3200, %v3159
  %v3422 = vmul.f32 %v3200, %v3160
  %v3423 = vmul.f32 %v3200, %v3161
  %v3424 = vmul.f32 %v3200, %v3162
  %v3425 = vmul.f32 %v3200, %v3163
  %v3426 = vmul.f32 %v3200, %v3164
  %v3427 = vmul.f32 %v3200, %v3165
  %v3428 = vmul.f32 %v3200, %v3166
  %v3429 = vmul.f32 %v3200, %v3167
  %v3430 = vmul.f32 %v3200, %v3168
  %v3431 = vmul.f32 %v3200, %v3169
  %v3432 = vmul.f32 %v3200, %v3170
  %v3433 = vmul.f32 %v3200, %v3171
  %v3434 = vmul.f32 %v3200, %v3172
  %v3435 = vmul.f32 %v3200, %v3173
  %v3436 = vmul.f32 %v3200, %v3174
  %v3437 = vmul.f32 %v3200, %v3175
  %v3438 = vmul.f32 %v3200, %v3176
  %v3439 = vmul.f32 %v3200, %v3177
  %v3440 = vmul.f32 %v3200, %v3178
  %v3441 = vmul.f32 %v3200, %v3179
  %v3442 = vmul.f32 %v3200, %v3180
  %v3443 = vmul.f32 %v3200, %v3181
  %v3444 = vmul.f32 %v3200, %v3182
  %v3445 = vmul.f32 %v3200, %v3183
  %v3446 = vmul.f32 %v3200, %v3184
  %v3447 = vmul.f32 %v3200, %v3185
  %v3448 = vmul.f32 %v3200, %v3186
  %v3449 = vmul.f32 %v3200, %v3187
  %v3450 = vmul.f32 %v3200, %v3188
  %v3451 = vmul.f32 %v3200, %v3189
  %v3452 = vmul.f32 %v3200, %v3190
  %v3453 = vmul.f32 %v3200, %v3191
  %v3454 = vmul.f32 %v3200, %v3192
  %v3455 = vmul.f32 %v3200, %v3193
  %v3456 = vmul.f32 %v3200, %v3194
  %v3457 = vmul.f32 %v3200, %v3195
  %v3458 = vadd.f32 %v2938, 1e-05
  %v3459 = vrsqrt.pop %v3458
  %v3460 = vmul.f32 %v3202, %v3459
  %v3461 = vmul.f32 %v3203, %v3459
  %v3462 = vmul.f32 %v3204, %v3459
  %v3463 = vmul.f32 %v3205, %v3459
  %v3464 = vmul.f32 %v3206, %v3459
  %v3465 = vmul.f32 %v3207, %v3459
  %v3466 = vmul.f32 %v3208, %v3459
  %v3467 = vmul.f32 %v3209, %v3459
  %v3468 = vmul.f32 %v3210, %v3459
  %v3469 = vmul.f32 %v3211, %v3459
  %v3470 = vmul.f32 %v3212, %v3459
  %v3471 = vmul.f32 %v3213, %v3459
  %v3472 = vmul.f32 %v3214, %v3459
  %v3473 = vmul.f32 %v3215, %v3459
  %v3474 = vmul.f32 %v3216, %v3459
  %v3475 = vmul.f32 %v3217, %v3459
  %v3476 = vmul.f32 %v3218, %v3459
  %v3477 = vmul.f32 %v3219, %v3459
  %v3478 = vmul.f32 %v3220, %v3459
  %v3479 = vmul.f32 %v3221, %v3459
  %v3480 = vmul.f32 %v3222, %v3459
  %v3481 = vmul.f32 %v3223, %v3459
  %v3482 = vmul.f32 %v3224, %v3459
  %v3483 = vmul.f32 %v3225, %v3459
  %v3484 = vmul.f32 %v3226, %v3459
  %v3485 = vmul.f32 %v3227, %v3459
  %v3486 = vmul.f32 %v3228, %v3459
  %v3487 = vmul.f32 %v3229, %v3459
  %v3488 = vmul.f32 %v3230, %v3459
  %v3489 = vmul.f32 %v3231, %v3459
  %v3490 = vmul.f32 %v3232, %v3459
  %v3491 = vmul.f32 %v3233, %v3459
  %v3492 = vmul.f32 %v3234, %v3459
  %v3493 = vmul.f32 %v3235, %v3459
  %v3494 = vmul.f32 %v3236, %v3459
  %v3495 = vmul.f32 %v3237, %v3459
  %v3496 = vmul.f32 %v3238, %v3459
  %v3497 = vmul.f32 %v3239, %v3459
  %v3498 = vmul.f32 %v3240, %v3459
  %v3499 = vmul.f32 %v3241, %v3459
  %v3500 = vmul.f32 %v3242, %v3459
  %v3501 = vmul.f32 %v3243, %v3459
  %v3502 = vmul.f32 %v3244, %v3459
  %v3503 = vmul.f32 %v3245, %v3459
  %v3504 = vmul.f32 %v3246, %v3459
  %v3505 = vmul.f32 %v3247, %v3459
  %v3506 = vmul.f32 %v3248, %v3459
  %v3507 = vmul.f32 %v3249, %v3459
  %v3508 = vmul.f32 %v3250, %v3459
  %v3509 = vmul.f32 %v3251, %v3459
  %v3510 = vmul.f32 %v3252, %v3459
  %v3511 = vmul.f32 %v3253, %v3459
  %v3512 = vmul.f32 %v3254, %v3459
  %v3513 = vmul.f32 %v3255, %v3459
  %v3514 = vmul.f32 %v3256, %v3459
  %v3515 = vmul.f32 %v3257, %v3459
  %v3516 = vmul.f32 %v3258, %v3459
  %v3517 = vmul.f32 %v3259, %v3459
  %v3518 = vmul.f32 %v3260, %v3459
  %v3519 = vmul.f32 %v3261, %v3459
  %v3520 = vmul.f32 %v3262, %v3459
  %v3521 = vmul.f32 %v3263, %v3459
  %v3522 = vmul.f32 %v3264, %v3459
  %v3523 = vmul.f32 %v3265, %v3459
  %v3524 = vmul.f32 %v3266, %v3459
  %v3525 = vmul.f32 %v3267, %v3459
  %v3526 = vmul.f32 %v3268, %v3459
  %v3527 = vmul.f32 %v3269, %v3459
  %v3528 = vmul.f32 %v3270, %v3459
  %v3529 = vmul.f32 %v3271, %v3459
  %v3530 = vmul.f32 %v3272, %v3459
  %v3531 = vmul.f32 %v3273, %v3459
  %v3532 = vmul.f32 %v3274, %v3459
  %v3533 = vmul.f32 %v3275, %v3459
  %v3534 = vmul.f32 %v3276, %v3459
  %v3535 = vmul.f32 %v3277, %v3459
  %v3536 = vmul.f32 %v3278, %v3459
  %v3537 = vmul.f32 %v3279, %v3459
  %v3538 = vmul.f32 %v3280, %v3459
  %v3539 = vmul.f32 %v3281, %v3459
  %v3540 = vmul.f32 %v3282, %v3459
  %v3541 = vmul.f32 %v3283, %v3459
  %v3542 = vmul.f32 %v3284, %v3459
  %v3543 = vmul.f32 %v3285, %v3459
  %v3544 = vmul.f32 %v3286, %v3459
  %v3545 = vmul.f32 %v3287, %v3459
  %v3546 = vmul.f32 %v3288, %v3459
  %v3547 = vmul.f32 %v3289, %v3459
  %v3548 = vmul.f32 %v3290, %v3459
  %v3549 = vmul.f32 %v3291, %v3459
  %v3550 = vmul.f32 %v3292, %v3459
  %v3551 = vmul.f32 %v3293, %v3459
  %v3552 = vmul.f32 %v3294, %v3459
  %v3553 = vmul.f32 %v3295, %v3459
  %v3554 = vmul.f32 %v3296, %v3459
  %v3555 = vmul.f32 %v3297, %v3459
  %v3556 = vmul.f32 %v3298, %v3459
  %v3557 = vmul.f32 %v3299, %v3459
  %v3558 = vmul.f32 %v3300, %v3459
  %v3559 = vmul.f32 %v3301, %v3459
  %v3560 = vmul.f32 %v3302, %v3459
  %v3561 = vmul.f32 %v3303, %v3459
  %v3562 = vmul.f32 %v3304, %v3459
  %v3563 = vmul.f32 %v3305, %v3459
  %v3564 = vmul.f32 %v3306, %v3459
  %v3565 = vmul.f32 %v3307, %v3459
  %v3566 = vmul.f32 %v3308, %v3459
  %v3567 = vmul.f32 %v3309, %v3459
  %v3568 = vmul.f32 %v3310, %v3459
  %v3569 = vmul.f32 %v3311, %v3459
  %v3570 = vmul.f32 %v3312, %v3459
  %v3571 = vmul.f32 %v3313, %v3459
  %v3572 = vmul.f32 %v3314, %v3459
  %v3573 = vmul.f32 %v3315, %v3459
  %v3574 = vmul.f32 %v3316, %v3459
  %v3575 = vmul.f32 %v3317, %v3459
  %v3576 = vmul.f32 %v3318, %v3459
  %v3577 = vmul.f32 %v3319, %v3459
  %v3578 = vmul.f32 %v3320, %v3459
  %v3579 = vmul.f32 %v3321, %v3459
  %v3580 = vmul.f32 %v3322, %v3459
  %v3581 = vmul.f32 %v3323, %v3459
  %v3582 = vmul.f32 %v3324, %v3459
  %v3583 = vmul.f32 %v3325, %v3459
  %v3584 = vmul.f32 %v3326, %v3459
  %v3585 = vmul.f32 %v3327, %v3459
  %v3586 = vmul.f32 %v3328, %v3459
  %v3587 = vmul.f32 %v3329, %v3459
  %v3588 = vmul.f32 %v3330, %v3459
  %v3589 = vmul.f32 %v3331, %v3459
  %v3590 = vmul.f32 %v3332, %v3459
  %v3591 = vmul.f32 %v3333, %v3459
  %v3592 = vmul.f32 %v3334, %v3459
  %v3593 = vmul.f32 %v3335, %v3459
  %v3594 = vmul.f32 %v3336, %v3459
  %v3595 = vmul.f32 %v3337, %v3459
  %v3596 = vmul.f32 %v3338, %v3459
  %v3597 = vmul.f32 %v3339, %v3459
  %v3598 = vmul.f32 %v3340, %v3459
  %v3599 = vmul.f32 %v3341, %v3459
  %v3600 = vmul.f32 %v3342, %v3459
  %v3601 = vmul.f32 %v3343, %v3459
  %v3602 = vmul.f32 %v3344, %v3459
  %v3603 = vmul.f32 %v3345, %v3459
  %v3604 = vmul.f32 %v3346, %v3459
  %v3605 = vmul.f32 %v3347, %v3459
  %v3606 = vmul.f32 %v3348, %v3459
  %v3607 = vmul.f32 %v3349, %v3459
  %v3608 = vmul.f32 %v3350, %v3459
  %v3609 = vmul.f32 %v3351, %v3459
  %v3610 = vmul.f32 %v3352, %v3459
  %v3611 = vmul.f32 %v3353, %v3459
  %v3612 = vmul.f32 %v3354, %v3459
  %v3613 = vmul.f32 %v3355, %v3459
  %v3614 = vmul.f32 %v3356, %v3459
  %v3615 = vmul.f32 %v3357, %v3459
  %v3616 = vmul.f32 %v3358, %v3459
  %v3617 = vmul.f32 %v3359, %v3459
  %v3618 = vmul.f32 %v3360, %v3459
  %v3619 = vmul.f32 %v3361, %v3459
  %v3620 = vmul.f32 %v3362, %v3459
  %v3621 = vmul.f32 %v3363, %v3459
  %v3622 = vmul.f32 %v3364, %v3459
  %v3623 = vmul.f32 %v3365, %v3459
  %v3624 = vmul.f32 %v3366, %v3459
  %v3625 = vmul.f32 %v3367, %v3459
  %v3626 = vmul.f32 %v3368, %v3459
  %v3627 = vmul.f32 %v3369, %v3459
  %v3628 = vmul.f32 %v3370, %v3459
  %v3629 = vmul.f32 %v3371, %v3459
  %v3630 = vmul.f32 %v3372, %v3459
  %v3631 = vmul.f32 %v3373, %v3459
  %v3632 = vmul.f32 %v3374, %v3459
  %v3633 = vmul.f32 %v3375, %v3459
  %v3634 = vmul.f32 %v3376, %v3459
  %v3635 = vmul.f32 %v3377, %v3459
  %v3636 = vmul.f32 %v3378, %v3459
  %v3637 = vmul.f32 %v3379, %v3459
  %v3638 = vmul.f32 %v3380, %v3459
  %v3639 = vmul.f32 %v3381, %v3459
  %v3640 = vmul.f32 %v3382, %v3459
  %v3641 = vmul.f32 %v3383, %v3459
  %v3642 = vmul.f32 %v3384, %v3459
  %v3643 = vmul.f32 %v3385, %v3459
  %v3644 = vmul.f32 %v3386, %v3459
  %v3645 = vmul.f32 %v3387, %v3459
  %v3646 = vmul.f32 %v3388, %v3459
  %v3647 = vmul.f32 %v3389, %v3459
  %v3648 = vmul.f32 %v3390, %v3459
  %v3649 = vmul.f32 %v3391, %v3459
  %v3650 = vmul.f32 %v3392, %v3459
  %v3651 = vmul.f32 %v3393, %v3459
  %v3652 = vmul.f32 %v3394, %v3459
  %v3653 = vmul.f32 %v3395, %v3459
  %v3654 = vmul.f32 %v3396, %v3459
  %v3655 = vmul.f32 %v3397, %v3459
  %v3656 = vmul.f32 %v3398, %v3459
  %v3657 = vmul.f32 %v3399, %v3459
  %v3658 = vmul.f32 %v3400, %v3459
  %v3659 = vmul.f32 %v3401, %v3459
  %v3660 = vmul.f32 %v3402, %v3459
  %v3661 = vmul.f32 %v3403, %v3459
  %v3662 = vmul.f32 %v3404, %v3459
  %v3663 = vmul.f32 %v3405, %v3459
  %v3664 = vmul.f32 %v3406, %v3459
  %v3665 = vmul.f32 %v3407, %v3459
  %v3666 = vmul.f32 %v3408, %v3459
  %v3667 = vmul.f32 %v3409, %v3459
  %v3668 = vmul.f32 %v3410, %v3459
  %v3669 = vmul.f32 %v3411, %v3459
  %v3670 = vmul.f32 %v3412, %v3459
  %v3671 = vmul.f32 %v3413, %v3459
  %v3672 = vmul.f32 %v3414, %v3459
  %v3673 = vmul.f32 %v3415, %v3459
  %v3674 = vmul.f32 %v3416, %v3459
  %v3675 = vmul.f32 %v3417, %v3459
  %v3676 = vmul.f32 %v3418, %v3459
  %v3677 = vmul.f32 %v3419, %v3459
  %v3678 = vmul.f32 %v3420, %v3459
  %v3679 = vmul.f32 %v3421, %v3459
  %v3680 = vmul.f32 %v3422, %v3459
  %v3681 = vmul.f32 %v3423, %v3459
  %v3682 = vmul.f32 %v3424, %v3459
  %v3683 = vmul.f32 %v3425, %v3459
  %v3684 = vmul.f32 %v3426, %v3459
  %v3685 = vmul.f32 %v3427, %v3459
  %v3686 = vmul.f32 %v3428, %v3459
  %v3687 = vmul.f32 %v3429, %v3459
  %v3688 = vmul.f32 %v3430, %v3459
  %v3689 = vmul.f32 %v3431, %v3459
  %v3690 = vmul.f32 %v3432, %v3459
  %v3691 = vmul.f32 %v3433, %v3459
  %v3692 = vmul.f32 %v3434, %v3459
  %v3693 = vmul.f32 %v3435, %v3459
  %v3694 = vmul.f32 %v3436, %v3459
  %v3695 = vmul.f32 %v3437, %v3459
  %v3696 = vmul.f32 %v3438, %v3459
  %v3697 = vmul.f32 %v3439, %v3459
  %v3698 = vmul.f32 %v3440, %v3459
  %v3699 = vmul.f32 %v3441, %v3459
  %v3700 = vmul.f32 %v3442, %v3459
  %v3701 = vmul.f32 %v3443, %v3459
  %v3702 = vmul.f32 %v3444, %v3459
  %v3703 = vmul.f32 %v3445, %v3459
  %v3704 = vmul.f32 %v3446, %v3459
  %v3705 = vmul.f32 %v3447, %v3459
  %v3706 = vmul.f32 %v3448, %v3459
  %v3707 = vmul.f32 %v3449, %v3459
  %v3708 = vmul.f32 %v3450, %v3459
  %v3709 = vmul.f32 %v3451, %v3459
  %v3710 = vmul.f32 %v3452, %v3459
  %v3711 = vmul.f32 %v3453, %v3459
  %v3712 = vmul.f32 %v3454, %v3459
  %v3713 = vmul.f32 %v3455, %v3459
  %v3714 = vmul.f32 %v3456, %v3459
  %v3715 = vmul.f32 %v3457, %v3459
  %v3716 = vld [vmem:[%s4] sm:$0x1]
  %v3718 = vlaneseq
  %v3719 = vshrl.u32 %v3718, 7
  %v3720 = vsub.s32 0, %v3719
  %v3721 = vrot.slane %v3716, %v3720
  %v3723 = vadd.f32 %v3460, %v3721
  %v3724 = vadd.f32 %v3461, %v3721
  %v3725 = vadd.f32 %v3462, %v3721
  %v3726 = vadd.f32 %v3463, %v3721
  %v3727 = vadd.f32 %v3464, %v3721
  %v3728 = vadd.f32 %v3465, %v3721
  %v3729 = vadd.f32 %v3466, %v3721
  %v3730 = vadd.f32 %v3467, %v3721
  %v3731 = vadd.f32 %v3468, %v3721
  %v3732 = vadd.f32 %v3469, %v3721
  %v3733 = vadd.f32 %v3470, %v3721
  %v3734 = vadd.f32 %v3471, %v3721
  %v3735 = vadd.f32 %v3472, %v3721
  %v3736 = vadd.f32 %v3473, %v3721
  %v3737 = vadd.f32 %v3474, %v3721
  %v3738 = vadd.f32 %v3475, %v3721
  %v3739 = vadd.f32 %v3476, %v3721
  %v3740 = vadd.f32 %v3477, %v3721
  %v3741 = vadd.f32 %v3478, %v3721
  %v3742 = vadd.f32 %v3479, %v3721
  %v3743 = vadd.f32 %v3480, %v3721
  %v3744 = vadd.f32 %v3481, %v3721
  %v3745 = vadd.f32 %v3482, %v3721
  %v3746 = vadd.f32 %v3483, %v3721
  %v3747 = vadd.f32 %v3484, %v3721
  %v3748 = vadd.f32 %v3485, %v3721
  %v3749 = vadd.f32 %v3486, %v3721
  %v3750 = vadd.f32 %v3487, %v3721
  %v3751 = vadd.f32 %v3488, %v3721
  %v3752 = vadd.f32 %v3489, %v3721
  %v3753 = vadd.f32 %v3490, %v3721
  %v3754 = vadd.f32 %v3491, %v3721
  %v3755 = vadd.f32 %v3492, %v3721
  %v3756 = vadd.f32 %v3493, %v3721
  %v3757 = vadd.f32 %v3494, %v3721
  %v3758 = vadd.f32 %v3495, %v3721
  %v3759 = vadd.f32 %v3496, %v3721
  %v3760 = vadd.f32 %v3497, %v3721
  %v3761 = vadd.f32 %v3498, %v3721
  %v3762 = vadd.f32 %v3499, %v3721
  %v3763 = vadd.f32 %v3500, %v3721
  %v3764 = vadd.f32 %v3501, %v3721
  %v3765 = vadd.f32 %v3502, %v3721
  %v3766 = vadd.f32 %v3503, %v3721
  %v3767 = vadd.f32 %v3504, %v3721
  %v3768 = vadd.f32 %v3505, %v3721
  %v3769 = vadd.f32 %v3506, %v3721
  %v3770 = vadd.f32 %v3507, %v3721
  %v3771 = vadd.f32 %v3508, %v3721
  %v3772 = vadd.f32 %v3509, %v3721
  %v3773 = vadd.f32 %v3510, %v3721
  %v3774 = vadd.f32 %v3511, %v3721
  %v3775 = vadd.f32 %v3512, %v3721
  %v3776 = vadd.f32 %v3513, %v3721
  %v3777 = vadd.f32 %v3514, %v3721
  %v3778 = vadd.f32 %v3515, %v3721
  %v3779 = vadd.f32 %v3516, %v3721
  %v3780 = vadd.f32 %v3517, %v3721
  %v3781 = vadd.f32 %v3518, %v3721
  %v3782 = vadd.f32 %v3519, %v3721
  %v3783 = vadd.f32 %v3520, %v3721
  %v3784 = vadd.f32 %v3521, %v3721
  %v3785 = vadd.f32 %v3522, %v3721
  %v3786 = vadd.f32 %v3523, %v3721
  %v3787 = vadd.f32 %v3524, %v3721
  %v3788 = vadd.f32 %v3525, %v3721
  %v3789 = vadd.f32 %v3526, %v3721
  %v3790 = vadd.f32 %v3527, %v3721
  %v3791 = vadd.f32 %v3528, %v3721
  %v3792 = vadd.f32 %v3529, %v3721
  %v3793 = vadd.f32 %v3530, %v3721
  %v3794 = vadd.f32 %v3531, %v3721
  %v3795 = vadd.f32 %v3532, %v3721
  %v3796 = vadd.f32 %v3533, %v3721
  %v3797 = vadd.f32 %v3534, %v3721
  %v3798 = vadd.f32 %v3535, %v3721
  %v3799 = vadd.f32 %v3536, %v3721
  %v3800 = vadd.f32 %v3537, %v3721
  %v3801 = vadd.f32 %v3538, %v3721
  %v3802 = vadd.f32 %v3539, %v3721
  %v3803 = vadd.f32 %v3540, %v3721
  %v3804 = vadd.f32 %v3541, %v3721
  %v3805 = vadd.f32 %v3542, %v3721
  %v3806 = vadd.f32 %v3543, %v3721
  %v3807 = vadd.f32 %v3544, %v3721
  %v3808 = vadd.f32 %v3545, %v3721
  %v3809 = vadd.f32 %v3546, %v3721
  %v3810 = vadd.f32 %v3547, %v3721
  %v3811 = vadd.f32 %v3548, %v3721
  %v3812 = vadd.f32 %v3549, %v3721
  %v3813 = vadd.f32 %v3550, %v3721
  %v3814 = vadd.f32 %v3551, %v3721
  %v3815 = vadd.f32 %v3552, %v3721
  %v3816 = vadd.f32 %v3553, %v3721
  %v3817 = vadd.f32 %v3554, %v3721
  %v3818 = vadd.f32 %v3555, %v3721
  %v3819 = vadd.f32 %v3556, %v3721
  %v3820 = vadd.f32 %v3557, %v3721
  %v3821 = vadd.f32 %v3558, %v3721
  %v3822 = vadd.f32 %v3559, %v3721
  %v3823 = vadd.f32 %v3560, %v3721
  %v3824 = vadd.f32 %v3561, %v3721
  %v3825 = vadd.f32 %v3562, %v3721
  %v3826 = vadd.f32 %v3563, %v3721
  %v3827 = vadd.f32 %v3564, %v3721
  %v3828 = vadd.f32 %v3565, %v3721
  %v3829 = vadd.f32 %v3566, %v3721
  %v3830 = vadd.f32 %v3567, %v3721
  %v3831 = vadd.f32 %v3568, %v3721
  %v3832 = vadd.f32 %v3569, %v3721
  %v3833 = vadd.f32 %v3570, %v3721
  %v3834 = vadd.f32 %v3571, %v3721
  %v3835 = vadd.f32 %v3572, %v3721
  %v3836 = vadd.f32 %v3573, %v3721
  %v3837 = vadd.f32 %v3574, %v3721
  %v3838 = vadd.f32 %v3575, %v3721
  %v3839 = vadd.f32 %v3576, %v3721
  %v3840 = vadd.f32 %v3577, %v3721
  %v3841 = vadd.f32 %v3578, %v3721
  %v3842 = vadd.f32 %v3579, %v3721
  %v3843 = vadd.f32 %v3580, %v3721
  %v3844 = vadd.f32 %v3581, %v3721
  %v3845 = vadd.f32 %v3582, %v3721
  %v3846 = vadd.f32 %v3583, %v3721
  %v3847 = vadd.f32 %v3584, %v3721
  %v3848 = vadd.f32 %v3585, %v3721
  %v3849 = vadd.f32 %v3586, %v3721
  %v3850 = vadd.f32 %v3587, %v3721
  %v3851 = vadd.f32 %v3588, %v3721
  %v3852 = vadd.f32 %v3589, %v3721
  %v3853 = vadd.f32 %v3590, %v3721
  %v3854 = vadd.f32 %v3591, %v3721
  %v3855 = vadd.f32 %v3592, %v3721
  %v3856 = vadd.f32 %v3593, %v3721
  %v3857 = vadd.f32 %v3594, %v3721
  %v3858 = vadd.f32 %v3595, %v3721
  %v3859 = vadd.f32 %v3596, %v3721
  %v3860 = vadd.f32 %v3597, %v3721
  %v3861 = vadd.f32 %v3598, %v3721
  %v3862 = vadd.f32 %v3599, %v3721
  %v3863 = vadd.f32 %v3600, %v3721
  %v3864 = vadd.f32 %v3601, %v3721
  %v3865 = vadd.f32 %v3602, %v3721
  %v3866 = vadd.f32 %v3603, %v3721
  %v3867 = vadd.f32 %v3604, %v3721
  %v3868 = vadd.f32 %v3605, %v3721
  %v3869 = vadd.f32 %v3606, %v3721
  %v3870 = vadd.f32 %v3607, %v3721
  %v3871 = vadd.f32 %v3608, %v3721
  %v3872 = vadd.f32 %v3609, %v3721
  %v3873 = vadd.f32 %v3610, %v3721
  %v3874 = vadd.f32 %v3611, %v3721
  %v3875 = vadd.f32 %v3612, %v3721
  %v3876 = vadd.f32 %v3613, %v3721
  %v3877 = vadd.f32 %v3614, %v3721
  %v3878 = vadd.f32 %v3615, %v3721
  %v3879 = vadd.f32 %v3616, %v3721
  %v3880 = vadd.f32 %v3617, %v3721
  %v3881 = vadd.f32 %v3618, %v3721
  %v3882 = vadd.f32 %v3619, %v3721
  %v3883 = vadd.f32 %v3620, %v3721
  %v3884 = vadd.f32 %v3621, %v3721
  %v3885 = vadd.f32 %v3622, %v3721
  %v3886 = vadd.f32 %v3623, %v3721
  %v3887 = vadd.f32 %v3624, %v3721
  %v3888 = vadd.f32 %v3625, %v3721
  %v3889 = vadd.f32 %v3626, %v3721
  %v3890 = vadd.f32 %v3627, %v3721
  %v3891 = vadd.f32 %v3628, %v3721
  %v3892 = vadd.f32 %v3629, %v3721
  %v3893 = vadd.f32 %v3630, %v3721
  %v3894 = vadd.f32 %v3631, %v3721
  %v3895 = vadd.f32 %v3632, %v3721
  %v3896 = vadd.f32 %v3633, %v3721
  %v3897 = vadd.f32 %v3634, %v3721
  %v3898 = vadd.f32 %v3635, %v3721
  %v3899 = vadd.f32 %v3636, %v3721
  %v3900 = vadd.f32 %v3637, %v3721
  %v3901 = vadd.f32 %v3638, %v3721
  %v3902 = vadd.f32 %v3639, %v3721
  %v3903 = vadd.f32 %v3640, %v3721
  %v3904 = vadd.f32 %v3641, %v3721
  %v3905 = vadd.f32 %v3642, %v3721
  %v3906 = vadd.f32 %v3643, %v3721
  %v3907 = vadd.f32 %v3644, %v3721
  %v3908 = vadd.f32 %v3645, %v3721
  %v3909 = vadd.f32 %v3646, %v3721
  %v3910 = vadd.f32 %v3647, %v3721
  %v3911 = vadd.f32 %v3648, %v3721
  %v3912 = vadd.f32 %v3649, %v3721
  %v3913 = vadd.f32 %v3650, %v3721
  %v3914 = vadd.f32 %v3651, %v3721
  %v3915 = vadd.f32 %v3652, %v3721
  %v3916 = vadd.f32 %v3653, %v3721
  %v3917 = vadd.f32 %v3654, %v3721
  %v3918 = vadd.f32 %v3655, %v3721
  %v3919 = vadd.f32 %v3656, %v3721
  %v3920 = vadd.f32 %v3657, %v3721
  %v3921 = vadd.f32 %v3658, %v3721
  %v3922 = vadd.f32 %v3659, %v3721
  %v3923 = vadd.f32 %v3660, %v3721
  %v3924 = vadd.f32 %v3661, %v3721
  %v3925 = vadd.f32 %v3662, %v3721
  %v3926 = vadd.f32 %v3663, %v3721
  %v3927 = vadd.f32 %v3664, %v3721
  %v3928 = vadd.f32 %v3665, %v3721
  %v3929 = vadd.f32 %v3666, %v3721
  %v3930 = vadd.f32 %v3667, %v3721
  %v3931 = vadd.f32 %v3668, %v3721
  %v3932 = vadd.f32 %v3669, %v3721
  %v3933 = vadd.f32 %v3670, %v3721
  %v3934 = vadd.f32 %v3671, %v3721
  %v3935 = vadd.f32 %v3672, %v3721
  %v3936 = vadd.f32 %v3673, %v3721
  %v3937 = vadd.f32 %v3674, %v3721
  %v3938 = vadd.f32 %v3675, %v3721
  %v3939 = vadd.f32 %v3676, %v3721
  %v3940 = vadd.f32 %v3677, %v3721
  %v3941 = vadd.f32 %v3678, %v3721
  %v3942 = vadd.f32 %v3679, %v3721
  %v3943 = vadd.f32 %v3680, %v3721
  %v3944 = vadd.f32 %v3681, %v3721
  %v3945 = vadd.f32 %v3682, %v3721
  %v3946 = vadd.f32 %v3683, %v3721
  %v3947 = vadd.f32 %v3684, %v3721
  %v3948 = vadd.f32 %v3685, %v3721
  %v3949 = vadd.f32 %v3686, %v3721
  %v3950 = vadd.f32 %v3687, %v3721
  %v3951 = vadd.f32 %v3688, %v3721
  %v3952 = vadd.f32 %v3689, %v3721
  %v3953 = vadd.f32 %v3690, %v3721
  %v3954 = vadd.f32 %v3691, %v3721
  %v3955 = vadd.f32 %v3692, %v3721
  %v3956 = vadd.f32 %v3693, %v3721
  %v3957 = vadd.f32 %v3694, %v3721
  %v3958 = vadd.f32 %v3695, %v3721
  %v3959 = vadd.f32 %v3696, %v3721
  %v3960 = vadd.f32 %v3697, %v3721
  %v3961 = vadd.f32 %v3698, %v3721
  %v3962 = vadd.f32 %v3699, %v3721
  %v3963 = vadd.f32 %v3700, %v3721
  %v3964 = vadd.f32 %v3701, %v3721
  %v3965 = vadd.f32 %v3702, %v3721
  %v3966 = vadd.f32 %v3703, %v3721
  %v3967 = vadd.f32 %v3704, %v3721
  %v3968 = vadd.f32 %v3705, %v3721
  %v3969 = vadd.f32 %v3706, %v3721
  %v3970 = vadd.f32 %v3707, %v3721
  %v3971 = vadd.f32 %v3708, %v3721
  %v3972 = vadd.f32 %v3709, %v3721
  %v3973 = vadd.f32 %v3710, %v3721
  %v3974 = vadd.f32 %v3711, %v3721
  %v3975 = vadd.f32 %v3712, %v3721
  %v3976 = vadd.f32 %v3713, %v3721
  %v3977 = vadd.f32 %v3714, %v3721
  %v3978 = vadd.f32 %v3715, %v3721
  %v3979 = vmax.f32 %v3723, 0.0
  %v3980 = vmax.f32 %v3724, 0.0
  %v3981 = vmax.f32 %v3725, 0.0
  %v3982 = vmax.f32 %v3726, 0.0
  %v3983 = vmax.f32 %v3727, 0.0
  %v3984 = vmax.f32 %v3728, 0.0
  %v3985 = vmax.f32 %v3729, 0.0
  %v3986 = vmax.f32 %v3730, 0.0
  %v3987 = vmax.f32 %v3731, 0.0
  %v3988 = vmax.f32 %v3732, 0.0
  %v3989 = vmax.f32 %v3733, 0.0
  %v3990 = vmax.f32 %v3734, 0.0
  %v3991 = vmax.f32 %v3735, 0.0
  %v3992 = vmax.f32 %v3736, 0.0
  %v3993 = vmax.f32 %v3737, 0.0
  %v3994 = vmax.f32 %v3738, 0.0
  %v3995 = vmax.f32 %v3739, 0.0
  %v3996 = vmax.f32 %v3740, 0.0
  %v3997 = vmax.f32 %v3741, 0.0
  %v3998 = vmax.f32 %v3742, 0.0
  %v3999 = vmax.f32 %v3743, 0.0
  %v4000 = vmax.f32 %v3744, 0.0
  %v4001 = vmax.f32 %v3745, 0.0
  %v4002 = vmax.f32 %v3746, 0.0
  %v4003 = vmax.f32 %v3747, 0.0
  %v4004 = vmax.f32 %v3748, 0.0
  %v4005 = vmax.f32 %v3749, 0.0
  %v4006 = vmax.f32 %v3750, 0.0
  %v4007 = vmax.f32 %v3751, 0.0
  %v4008 = vmax.f32 %v3752, 0.0
  %v4009 = vmax.f32 %v3753, 0.0
  %v4010 = vmax.f32 %v3754, 0.0
  %v4011 = vmax.f32 %v3755, 0.0
  %v4012 = vmax.f32 %v3756, 0.0
  %v4013 = vmax.f32 %v3757, 0.0
  %v4014 = vmax.f32 %v3758, 0.0
  %v4015 = vmax.f32 %v3759, 0.0
  %v4016 = vmax.f32 %v3760, 0.0
  %v4017 = vmax.f32 %v3761, 0.0
  %v4018 = vmax.f32 %v3762, 0.0
  %v4019 = vmax.f32 %v3763, 0.0
  %v4020 = vmax.f32 %v3764, 0.0
  %v4021 = vmax.f32 %v3765, 0.0
  %v4022 = vmax.f32 %v3766, 0.0
  %v4023 = vmax.f32 %v3767, 0.0
  %v4024 = vmax.f32 %v3768, 0.0
  %v4025 = vmax.f32 %v3769, 0.0
  %v4026 = vmax.f32 %v3770, 0.0
  %v4027 = vmax.f32 %v3771, 0.0
  %v4028 = vmax.f32 %v3772, 0.0
  %v4029 = vmax.f32 %v3773, 0.0
  %v4030 = vmax.f32 %v3774, 0.0
  %v4031 = vmax.f32 %v3775, 0.0
  %v4032 = vmax.f32 %v3776, 0.0
  %v4033 = vmax.f32 %v3777, 0.0
  %v4034 = vmax.f32 %v3778, 0.0
  %v4035 = vmax.f32 %v3779, 0.0
  %v4036 = vmax.f32 %v3780, 0.0
  %v4037 = vmax.f32 %v3781, 0.0
  %v4038 = vmax.f32 %v3782, 0.0
  %v4039 = vmax.f32 %v3783, 0.0
  %v4040 = vmax.f32 %v3784, 0.0
  %v4041 = vmax.f32 %v3785, 0.0
  %v4042 = vmax.f32 %v3786, 0.0
  %v4043 = vmax.f32 %v3787, 0.0
  %v4044 = vmax.f32 %v3788, 0.0
  %v4045 = vmax.f32 %v3789, 0.0
  %v4046 = vmax.f32 %v3790, 0.0
  %v4047 = vmax.f32 %v3791, 0.0
  %v4048 = vmax.f32 %v3792, 0.0
  %v4049 = vmax.f32 %v3793, 0.0
  %v4050 = vmax.f32 %v3794, 0.0
  %v4051 = vmax.f32 %v3795, 0.0
  %v4052 = vmax.f32 %v3796, 0.0
  %v4053 = vmax.f32 %v3797, 0.0
  %v4054 = vmax.f32 %v3798, 0.0
  %v4055 = vmax.f32 %v3799, 0.0
  %v4056 = vmax.f32 %v3800, 0.0
  %v4057 = vmax.f32 %v3801, 0.0
  %v4058 = vmax.f32 %v3802, 0.0
  %v4059 = vmax.f32 %v3803, 0.0
  %v4060 = vmax.f32 %v3804, 0.0
  %v4061 = vmax.f32 %v3805, 0.0
  %v4062 = vmax.f32 %v3806, 0.0
  %v4063 = vmax.f32 %v3807, 0.0
  %v4064 = vmax.f32 %v3808, 0.0
  %v4065 = vmax.f32 %v3809, 0.0
  %v4066 = vmax.f32 %v3810, 0.0
  %v4067 = vmax.f32 %v3811, 0.0
  %v4068 = vmax.f32 %v3812, 0.0
  %v4069 = vmax.f32 %v3813, 0.0
  %v4070 = vmax.f32 %v3814, 0.0
  %v4071 = vmax.f32 %v3815, 0.0
  %v4072 = vmax.f32 %v3816, 0.0
  %v4073 = vmax.f32 %v3817, 0.0
  %v4074 = vmax.f32 %v3818, 0.0
  %v4075 = vmax.f32 %v3819, 0.0
  %v4076 = vmax.f32 %v3820, 0.0
  %v4077 = vmax.f32 %v3821, 0.0
  %v4078 = vmax.f32 %v3822, 0.0
  %v4079 = vmax.f32 %v3823, 0.0
  %v4080 = vmax.f32 %v3824, 0.0
  %v4081 = vmax.f32 %v3825, 0.0
  %v4082 = vmax.f32 %v3826, 0.0
  %v4083 = vmax.f32 %v3827, 0.0
  %v4084 = vmax.f32 %v3828, 0.0
  %v4085 = vmax.f32 %v3829, 0.0
  %v4086 = vmax.f32 %v3830, 0.0
  %v4087 = vmax.f32 %v3831, 0.0
  %v4088 = vmax.f32 %v3832, 0.0
  %v4089 = vmax.f32 %v3833, 0.0
  %v4090 = vmax.f32 %v3834, 0.0
  %v4091 = vmax.f32 %v3835, 0.0
  %v4092 = vmax.f32 %v3836, 0.0
  %v4093 = vmax.f32 %v3837, 0.0
  %v4094 = vmax.f32 %v3838, 0.0
  %v4095 = vmax.f32 %v3839, 0.0
  %v4096 = vmax.f32 %v3840, 0.0
  %v4097 = vmax.f32 %v3841, 0.0
  %v4098 = vmax.f32 %v3842, 0.0
  %v4099 = vmax.f32 %v3843, 0.0
  %v4100 = vmax.f32 %v3844, 0.0
  %v4101 = vmax.f32 %v3845, 0.0
  %v4102 = vmax.f32 %v3846, 0.0
  %v4103 = vmax.f32 %v3847, 0.0
  %v4104 = vmax.f32 %v3848, 0.0
  %v4105 = vmax.f32 %v3849, 0.0
  %v4106 = vmax.f32 %v3850, 0.0
  %v4107 = vmax.f32 %v3851, 0.0
  %v4108 = vmax.f32 %v3852, 0.0
  %v4109 = vmax.f32 %v3853, 0.0
  %v4110 = vmax.f32 %v3854, 0.0
  %v4111 = vmax.f32 %v3855, 0.0
  %v4112 = vmax.f32 %v3856, 0.0
  %v4113 = vmax.f32 %v3857, 0.0
  %v4114 = vmax.f32 %v3858, 0.0
  %v4115 = vmax.f32 %v3859, 0.0
  %v4116 = vmax.f32 %v3860, 0.0
  %v4117 = vmax.f32 %v3861, 0.0
  %v4118 = vmax.f32 %v3862, 0.0
  %v4119 = vmax.f32 %v3863, 0.0
  %v4120 = vmax.f32 %v3864, 0.0
  %v4121 = vmax.f32 %v3865, 0.0
  %v4122 = vmax.f32 %v3866, 0.0
  %v4123 = vmax.f32 %v3867, 0.0
  %v4124 = vmax.f32 %v3868, 0.0
  %v4125 = vmax.f32 %v3869, 0.0
  %v4126 = vmax.f32 %v3870, 0.0
  %v4127 = vmax.f32 %v3871, 0.0
  %v4128 = vmax.f32 %v3872, 0.0
  %v4129 = vmax.f32 %v3873, 0.0
  %v4130 = vmax.f32 %v3874, 0.0
  %v4131 = vmax.f32 %v3875, 0.0
  %v4132 = vmax.f32 %v3876, 0.0
  %v4133 = vmax.f32 %v3877, 0.0
  %v4134 = vmax.f32 %v3878, 0.0
  %v4135 = vmax.f32 %v3879, 0.0
  %v4136 = vmax.f32 %v3880, 0.0
  %v4137 = vmax.f32 %v3881, 0.0
  %v4138 = vmax.f32 %v3882, 0.0
  %v4139 = vmax.f32 %v3883, 0.0
  %v4140 = vmax.f32 %v3884, 0.0
  %v4141 = vmax.f32 %v3885, 0.0
  %v4142 = vmax.f32 %v3886, 0.0
  %v4143 = vmax.f32 %v3887, 0.0
  %v4144 = vmax.f32 %v3888, 0.0
  %v4145 = vmax.f32 %v3889, 0.0
  %v4146 = vmax.f32 %v3890, 0.0
  %v4147 = vmax.f32 %v3891, 0.0
  %v4148 = vmax.f32 %v3892, 0.0
  %v4149 = vmax.f32 %v3893, 0.0
  %v4150 = vmax.f32 %v3894, 0.0
  %v4151 = vmax.f32 %v3895, 0.0
  %v4152 = vmax.f32 %v3896, 0.0
  %v4153 = vmax.f32 %v3897, 0.0
  %v4154 = vmax.f32 %v3898, 0.0
  %v4155 = vmax.f32 %v3899, 0.0
  %v4156 = vmax.f32 %v3900, 0.0
  %v4157 = vmax.f32 %v3901, 0.0
  %v4158 = vmax.f32 %v3902, 0.0
  %v4159 = vmax.f32 %v3903, 0.0
  %v4160 = vmax.f32 %v3904, 0.0
  %v4161 = vmax.f32 %v3905, 0.0
  %v4162 = vmax.f32 %v3906, 0.0
  %v4163 = vmax.f32 %v3907, 0.0
  %v4164 = vmax.f32 %v3908, 0.0
  %v4165 = vmax.f32 %v3909, 0.0
  %v4166 = vmax.f32 %v3910, 0.0
  %v4167 = vmax.f32 %v3911, 0.0
  %v4168 = vmax.f32 %v3912, 0.0
  %v4169 = vmax.f32 %v3913, 0.0
  %v4170 = vmax.f32 %v3914, 0.0
  %v4171 = vmax.f32 %v3915, 0.0
  %v4172 = vmax.f32 %v3916, 0.0
  %v4173 = vmax.f32 %v3917, 0.0
  %v4174 = vmax.f32 %v3918, 0.0
  %v4175 = vmax.f32 %v3919, 0.0
  %v4176 = vmax.f32 %v3920, 0.0
  %v4177 = vmax.f32 %v3921, 0.0
  %v4178 = vmax.f32 %v3922, 0.0
  %v4179 = vmax.f32 %v3923, 0.0
  %v4180 = vmax.f32 %v3924, 0.0
  %v4181 = vmax.f32 %v3925, 0.0
  %v4182 = vmax.f32 %v3926, 0.0
  %v4183 = vmax.f32 %v3927, 0.0
  %v4184 = vmax.f32 %v3928, 0.0
  %v4185 = vmax.f32 %v3929, 0.0
  %v4186 = vmax.f32 %v3930, 0.0
  %v4187 = vmax.f32 %v3931, 0.0
  %v4188 = vmax.f32 %v3932, 0.0
  %v4189 = vmax.f32 %v3933, 0.0
  %v4190 = vmax.f32 %v3934, 0.0
  %v4191 = vmax.f32 %v3935, 0.0
  %v4192 = vmax.f32 %v3936, 0.0
  %v4193 = vmax.f32 %v3937, 0.0
  %v4194 = vmax.f32 %v3938, 0.0
  %v4195 = vmax.f32 %v3939, 0.0
  %v4196 = vmax.f32 %v3940, 0.0
  %v4197 = vmax.f32 %v3941, 0.0
  %v4198 = vmax.f32 %v3942, 0.0
  %v4199 = vmax.f32 %v3943, 0.0
  %v4200 = vmax.f32 %v3944, 0.0
  %v4201 = vmax.f32 %v3945, 0.0
  %v4202 = vmax.f32 %v3946, 0.0
  %v4203 = vmax.f32 %v3947, 0.0
  %v4204 = vmax.f32 %v3948, 0.0
  %v4205 = vmax.f32 %v3949, 0.0
  %v4206 = vmax.f32 %v3950, 0.0
  %v4207 = vmax.f32 %v3951, 0.0
  %v4208 = vmax.f32 %v3952, 0.0
  %v4209 = vmax.f32 %v3953, 0.0
  %v4210 = vmax.f32 %v3954, 0.0
  %v4211 = vmax.f32 %v3955, 0.0
  %v4212 = vmax.f32 %v3956, 0.0
  %v4213 = vmax.f32 %v3957, 0.0
  %v4214 = vmax.f32 %v3958, 0.0
  %v4215 = vmax.f32 %v3959, 0.0
  %v4216 = vmax.f32 %v3960, 0.0
  %v4217 = vmax.f32 %v3961, 0.0
  %v4218 = vmax.f32 %v3962, 0.0
  %v4219 = vmax.f32 %v3963, 0.0
  %v4220 = vmax.f32 %v3964, 0.0
  %v4221 = vmax.f32 %v3965, 0.0
  %v4222 = vmax.f32 %v3966, 0.0
  %v4223 = vmax.f32 %v3967, 0.0
  %v4224 = vmax.f32 %v3968, 0.0
  %v4225 = vmax.f32 %v3969, 0.0
  %v4226 = vmax.f32 %v3970, 0.0
  %v4227 = vmax.f32 %v3971, 0.0
  %v4228 = vmax.f32 %v3972, 0.0
  %v4229 = vmax.f32 %v3973, 0.0
  %v4230 = vmax.f32 %v3974, 0.0
  %v4231 = vmax.f32 %v3975, 0.0
  %v4232 = vmax.f32 %v3976, 0.0
  %v4233 = vmax.f32 %v3977, 0.0
  %v4234 = vmax.f32 %v3978, 0.0
  %4235 = vst.msk [vmem:[%s5] sm:$0xff] %vm1644, %v3979
  %4236 = vst.msk [vmem:[%s5 + $0x8] sm:$0xff] %vm1644, %v3980
  %4237 = vst.msk [vmem:[%s5 + $0x10] sm:$0xff] %vm1644, %v3981
  %4238 = vst.msk [vmem:[%s5 + $0x18] sm:$0xff] %vm1644, %v3982
  %4239 = vst.msk [vmem:[%s5 + $0x20] sm:$0xff] %vm1644, %v3983
  %4240 = vst.msk [vmem:[%s5 + $0x28] sm:$0xff] %vm1644, %v3984
  %4241 = vst.msk [vmem:[%s5 + $0x30] sm:$0xff] %vm1644, %v3985
  %4242 = vst.msk [vmem:[%s5 + $0x38] sm:$0xff] %vm1644, %v3986
  %4243 = vst.msk [vmem:[%s5 + $0x40] sm:$0xff] %vm1644, %v3987
  %4244 = vst.msk [vmem:[%s5 + $0x48] sm:$0xff] %vm1644, %v3988
  %4245 = vst.msk [vmem:[%s5 + $0x50] sm:$0xff] %vm1644, %v3989
  %4246 = vst.msk [vmem:[%s5 + $0x58] sm:$0xff] %vm1644, %v3990
  %4247 = vst.msk [vmem:[%s5 + $0x60] sm:$0xff] %vm1644, %v3991
  %4248 = vst.msk [vmem:[%s5 + $0x68] sm:$0xff] %vm1644, %v3992
  %4249 = vst.msk [vmem:[%s5 + $0x70] sm:$0xff] %vm1644, %v3993
  %4250 = vst.msk [vmem:[%s5 + $0x78] sm:$0xff] %vm1644, %v3994
  %4251 = vst.msk [vmem:[%s5 + $0x80] sm:$0xff] %vm1644, %v3995
  %4252 = vst.msk [vmem:[%s5 + $0x88] sm:$0xff] %vm1644, %v3996
  %4253 = vst.msk [vmem:[%s5 + $0x90] sm:$0xff] %vm1644, %v3997
  %4254 = vst.msk [vmem:[%s5 + $0x98] sm:$0xff] %vm1644, %v3998
  %4255 = vst.msk [vmem:[%s5 + $0xa0] sm:$0xff] %vm1644, %v3999
  %4256 = vst.msk [vmem:[%s5 + $0xa8] sm:$0xff] %vm1644, %v4000
  %4257 = vst.msk [vmem:[%s5 + $0xb0] sm:$0xff] %vm1644, %v4001
  %4258 = vst.msk [vmem:[%s5 + $0xb8] sm:$0xff] %vm1644, %v4002
  %4259 = vst.msk [vmem:[%s5 + $0xc0] sm:$0xff] %vm1644, %v4003
  %4260 = vst.msk [vmem:[%s5 + $0xc8] sm:$0xff] %vm1644, %v4004
  %4261 = vst.msk [vmem:[%s5 + $0xd0] sm:$0xff] %vm1644, %v4005
  %4262 = vst.msk [vmem:[%s5 + $0xd8] sm:$0xff] %vm1644, %v4006
  %4263 = vst.msk [vmem:[%s5 + $0xe0] sm:$0xff] %vm1644, %v4007
  %4264 = vst.msk [vmem:[%s5 + $0xe8] sm:$0xff] %vm1644, %v4008
  %4265 = vst.msk [vmem:[%s5 + $0xf0] sm:$0xff] %vm1644, %v4009
  %4266 = vst.msk [vmem:[%s5 + $0xf8] sm:$0xff] %vm1644, %v4010
  %4267 = vst.msk [vmem:[%s5 + $0x100] sm:$0xff] %vm1644, %v4011
  %4268 = vst.msk [vmem:[%s5 + $0x108] sm:$0xff] %vm1644, %v4012
  %4269 = vst.msk [vmem:[%s5 + $0x110] sm:$0xff] %vm1644, %v4013
  %4270 = vst.msk [vmem:[%s5 + $0x118] sm:$0xff] %vm1644, %v4014
  %4271 = vst.msk [vmem:[%s5 + $0x120] sm:$0xff] %vm1644, %v4015
  %4272 = vst.msk [vmem:[%s5 + $0x128] sm:$0xff] %vm1644, %v4016
  %4273 = vst.msk [vmem:[%s5 + $0x130] sm:$0xff] %vm1644, %v4017
  %4274 = vst.msk [vmem:[%s5 + $0x138] sm:$0xff] %vm1644, %v4018
  %4275 = vst.msk [vmem:[%s5 + $0x140] sm:$0xff] %vm1644, %v4019
  %4276 = vst.msk [vmem:[%s5 + $0x148] sm:$0xff] %vm1644, %v4020
  %4277 = vst.msk [vmem:[%s5 + $0x150] sm:$0xff] %vm1644, %v4021
  %4278 = vst.msk [vmem:[%s5 + $0x158] sm:$0xff] %vm1644, %v4022
  %4279 = vst.msk [vmem:[%s5 + $0x160] sm:$0xff] %vm1644, %v4023
  %4280 = vst.msk [vmem:[%s5 + $0x168] sm:$0xff] %vm1644, %v4024
  %4281 = vst.msk [vmem:[%s5 + $0x170] sm:$0xff] %vm1644, %v4025
  %4282 = vst.msk [vmem:[%s5 + $0x178] sm:$0xff] %vm1644, %v4026
  %4283 = vst.msk [vmem:[%s5 + $0x180] sm:$0xff] %vm1644, %v4027
  %4284 = vst.msk [vmem:[%s5 + $0x188] sm:$0xff] %vm1644, %v4028
  %4285 = vst.msk [vmem:[%s5 + $0x190] sm:$0xff] %vm1644, %v4029
  %4286 = vst.msk [vmem:[%s5 + $0x198] sm:$0xff] %vm1644, %v4030
  %4287 = vst.msk [vmem:[%s5 + $0x1a0] sm:$0xff] %vm1644, %v4031
  %4288 = vst.msk [vmem:[%s5 + $0x1a8] sm:$0xff] %vm1644, %v4032
  %4289 = vst.msk [vmem:[%s5 + $0x1b0] sm:$0xff] %vm1644, %v4033
  %4290 = vst.msk [vmem:[%s5 + $0x1b8] sm:$0xff] %vm1644, %v4034
  %4291 = vst.msk [vmem:[%s5 + $0x1c0] sm:$0xff] %vm1644, %v4035
  %4292 = vst.msk [vmem:[%s5 + $0x1c8] sm:$0xff] %vm1644, %v4036
  %4293 = vst.msk [vmem:[%s5 + $0x1d0] sm:$0xff] %vm1644, %v4037
  %4294 = vst.msk [vmem:[%s5 + $0x1d8] sm:$0xff] %vm1644, %v4038
  %4295 = vst.msk [vmem:[%s5 + $0x1e0] sm:$0xff] %vm1644, %v4039
  %4296 = vst.msk [vmem:[%s5 + $0x1e8] sm:$0xff] %vm1644, %v4040
  %4297 = vst.msk [vmem:[%s5 + $0x1f0] sm:$0xff] %vm1644, %v4041
  %4298 = vst.msk [vmem:[%s5 + $0x1f8] sm:$0xff] %vm1644, %v4042
  %4299 = vst.msk [vmem:[%s5 + $0x200] sm:$0xff] %vm1644, %v4043
  %4300 = vst.msk [vmem:[%s5 + $0x208] sm:$0xff] %vm1644, %v4044
  %4301 = vst.msk [vmem:[%s5 + $0x210] sm:$0xff] %vm1644, %v4045
  %4302 = vst.msk [vmem:[%s5 + $0x218] sm:$0xff] %vm1644, %v4046
  %4303 = vst.msk [vmem:[%s5 + $0x220] sm:$0xff] %vm1644, %v4047
  %4304 = vst.msk [vmem:[%s5 + $0x228] sm:$0xff] %vm1644, %v4048
  %4305 = vst.msk [vmem:[%s5 + $0x230] sm:$0xff] %vm1644, %v4049
  %4306 = vst.msk [vmem:[%s5 + $0x238] sm:$0xff] %vm1644, %v4050
  %4307 = vst.msk [vmem:[%s5 + $0x240] sm:$0xff] %vm1644, %v4051
  %4308 = vst.msk [vmem:[%s5 + $0x248] sm:$0xff] %vm1644, %v4052
  %4309 = vst.msk [vmem:[%s5 + $0x250] sm:$0xff] %vm1644, %v4053
  %4310 = vst.msk [vmem:[%s5 + $0x258] sm:$0xff] %vm1644, %v4054
  %4311 = vst.msk [vmem:[%s5 + $0x260] sm:$0xff] %vm1644, %v4055
  %4312 = vst.msk [vmem:[%s5 + $0x268] sm:$0xff] %vm1644, %v4056
  %4313 = vst.msk [vmem:[%s5 + $0x270] sm:$0xff] %vm1644, %v4057
  %4314 = vst.msk [vmem:[%s5 + $0x278] sm:$0xff] %vm1644, %v4058
  %4315 = vst.msk [vmem:[%s5 + $0x280] sm:$0xff] %vm1644, %v4059
  %4316 = vst.msk [vmem:[%s5 + $0x288] sm:$0xff] %vm1644, %v4060
  %4317 = vst.msk [vmem:[%s5 + $0x290] sm:$0xff] %vm1644, %v4061
  %4318 = vst.msk [vmem:[%s5 + $0x298] sm:$0xff] %vm1644, %v4062
  %4319 = vst.msk [vmem:[%s5 + $0x2a0] sm:$0xff] %vm1644, %v4063
  %4320 = vst.msk [vmem:[%s5 + $0x2a8] sm:$0xff] %vm1644, %v4064
  %4321 = vst.msk [vmem:[%s5 + $0x2b0] sm:$0xff] %vm1644, %v4065
  %4322 = vst.msk [vmem:[%s5 + $0x2b8] sm:$0xff] %vm1644, %v4066
  %4323 = vst.msk [vmem:[%s5 + $0x2c0] sm:$0xff] %vm1644, %v4067
  %4324 = vst.msk [vmem:[%s5 + $0x2c8] sm:$0xff] %vm1644, %v4068
  %4325 = vst.msk [vmem:[%s5 + $0x2d0] sm:$0xff] %vm1644, %v4069
  %4326 = vst.msk [vmem:[%s5 + $0x2d8] sm:$0xff] %vm1644, %v4070
  %4327 = vst.msk [vmem:[%s5 + $0x2e0] sm:$0xff] %vm1644, %v4071
  %4328 = vst.msk [vmem:[%s5 + $0x2e8] sm:$0xff] %vm1644, %v4072
  %4329 = vst.msk [vmem:[%s5 + $0x2f0] sm:$0xff] %vm1644, %v4073
  %4330 = vst.msk [vmem:[%s5 + $0x2f8] sm:$0xff] %vm1644, %v4074
  %4331 = vst.msk [vmem:[%s5 + $0x300] sm:$0xff] %vm1644, %v4075
  %4332 = vst.msk [vmem:[%s5 + $0x308] sm:$0xff] %vm1644, %v4076
  %4333 = vst.msk [vmem:[%s5 + $0x310] sm:$0xff] %vm1644, %v4077
  %4334 = vst.msk [vmem:[%s5 + $0x318] sm:$0xff] %vm1644, %v4078
  %4335 = vst.msk [vmem:[%s5 + $0x320] sm:$0xff] %vm1644, %v4079
  %4336 = vst.msk [vmem:[%s5 + $0x328] sm:$0xff] %vm1644, %v4080
  %4337 = vst.msk [vmem:[%s5 + $0x330] sm:$0xff] %vm1644, %v4081
  %4338 = vst.msk [vmem:[%s5 + $0x338] sm:$0xff] %vm1644, %v4082
  %4339 = vst.msk [vmem:[%s5 + $0x340] sm:$0xff] %vm1644, %v4083
  %4340 = vst.msk [vmem:[%s5 + $0x348] sm:$0xff] %vm1644, %v4084
  %4341 = vst.msk [vmem:[%s5 + $0x350] sm:$0xff] %vm1644, %v4085
  %4342 = vst.msk [vmem:[%s5 + $0x358] sm:$0xff] %vm1644, %v4086
  %4343 = vst.msk [vmem:[%s5 + $0x360] sm:$0xff] %vm1644, %v4087
  %4344 = vst.msk [vmem:[%s5 + $0x368] sm:$0xff] %vm1644, %v4088
  %4345 = vst.msk [vmem:[%s5 + $0x370] sm:$0xff] %vm1644, %v4089
  %4346 = vst.msk [vmem:[%s5 + $0x378] sm:$0xff] %vm1644, %v4090
  %4347 = vst.msk [vmem:[%s5 + $0x380] sm:$0xff] %vm1644, %v4091
  %4348 = vst.msk [vmem:[%s5 + $0x388] sm:$0xff] %vm1644, %v4092
  %4349 = vst.msk [vmem:[%s5 + $0x390] sm:$0xff] %vm1644, %v4093
  %4350 = vst.msk [vmem:[%s5 + $0x398] sm:$0xff] %vm1644, %v4094
  %4351 = vst.msk [vmem:[%s5 + $0x3a0] sm:$0xff] %vm1644, %v4095
  %4352 = vst.msk [vmem:[%s5 + $0x3a8] sm:$0xff] %vm1644, %v4096
  %4353 = vst.msk [vmem:[%s5 + $0x3b0] sm:$0xff] %vm1644, %v4097
  %4354 = vst.msk [vmem:[%s5 + $0x3b8] sm:$0xff] %vm1644, %v4098
  %4355 = vst.msk [vmem:[%s5 + $0x3c0] sm:$0xff] %vm1644, %v4099
  %4356 = vst.msk [vmem:[%s5 + $0x3c8] sm:$0xff] %vm1644, %v4100
  %4357 = vst.msk [vmem:[%s5 + $0x3d0] sm:$0xff] %vm1644, %v4101
  %4358 = vst.msk [vmem:[%s5 + $0x3d8] sm:$0xff] %vm1644, %v4102
  %4359 = vst.msk [vmem:[%s5 + $0x3e0] sm:$0xff] %vm1644, %v4103
  %4360 = vst.msk [vmem:[%s5 + $0x3e8] sm:$0xff] %vm1644, %v4104
  %4361 = vst.msk [vmem:[%s5 + $0x3f0] sm:$0xff] %vm1644, %v4105
  %4362 = vst.msk [vmem:[%s5 + $0x3f8] sm:$0xff] %vm1644, %v4106
  %4363 = vst.msk [vmem:[%s5 + $0x400] sm:$0xff] %vm1644, %v4107
  %4364 = vst.msk [vmem:[%s5 + $0x408] sm:$0xff] %vm1644, %v4108
  %4365 = vst.msk [vmem:[%s5 + $0x410] sm:$0xff] %vm1644, %v4109
  %4366 = vst.msk [vmem:[%s5 + $0x418] sm:$0xff] %vm1644, %v4110
  %4367 = vst.msk [vmem:[%s5 + $0x420] sm:$0xff] %vm1644, %v4111
  %4368 = vst.msk [vmem:[%s5 + $0x428] sm:$0xff] %vm1644, %v4112
  %4369 = vst.msk [vmem:[%s5 + $0x430] sm:$0xff] %vm1644, %v4113
  %4370 = vst.msk [vmem:[%s5 + $0x438] sm:$0xff] %vm1644, %v4114
  %4371 = vst.msk [vmem:[%s5 + $0x440] sm:$0xff] %vm1644, %v4115
  %4372 = vst.msk [vmem:[%s5 + $0x448] sm:$0xff] %vm1644, %v4116
  %4373 = vst.msk [vmem:[%s5 + $0x450] sm:$0xff] %vm1644, %v4117
  %4374 = vst.msk [vmem:[%s5 + $0x458] sm:$0xff] %vm1644, %v4118
  %4375 = vst.msk [vmem:[%s5 + $0x460] sm:$0xff] %vm1644, %v4119
  %4376 = vst.msk [vmem:[%s5 + $0x468] sm:$0xff] %vm1644, %v4120
  %4377 = vst.msk [vmem:[%s5 + $0x470] sm:$0xff] %vm1644, %v4121
  %4378 = vst.msk [vmem:[%s5 + $0x478] sm:$0xff] %vm1644, %v4122
  %4379 = vst.msk [vmem:[%s5 + $0x480] sm:$0xff] %vm1644, %v4123
  %4380 = vst.msk [vmem:[%s5 + $0x488] sm:$0xff] %vm1644, %v4124
  %4381 = vst.msk [vmem:[%s5 + $0x490] sm:$0xff] %vm1644, %v4125
  %4382 = vst.msk [vmem:[%s5 + $0x498] sm:$0xff] %vm1644, %v4126
  %4383 = vst.msk [vmem:[%s5 + $0x4a0] sm:$0xff] %vm1644, %v4127
  %4384 = vst.msk [vmem:[%s5 + $0x4a8] sm:$0xff] %vm1644, %v4128
  %4385 = vst.msk [vmem:[%s5 + $0x4b0] sm:$0xff] %vm1644, %v4129
  %4386 = vst.msk [vmem:[%s5 + $0x4b8] sm:$0xff] %vm1644, %v4130
  %4387 = vst.msk [vmem:[%s5 + $0x4c0] sm:$0xff] %vm1644, %v4131
  %4388 = vst.msk [vmem:[%s5 + $0x4c8] sm:$0xff] %vm1644, %v4132
  %4389 = vst.msk [vmem:[%s5 + $0x4d0] sm:$0xff] %vm1644, %v4133
  %4390 = vst.msk [vmem:[%s5 + $0x4d8] sm:$0xff] %vm1644, %v4134
  %4391 = vst.msk [vmem:[%s5 + $0x4e0] sm:$0xff] %vm1644, %v4135
  %4392 = vst.msk [vmem:[%s5 + $0x4e8] sm:$0xff] %vm1644, %v4136
  %4393 = vst.msk [vmem:[%s5 + $0x4f0] sm:$0xff] %vm1644, %v4137
  %4394 = vst.msk [vmem:[%s5 + $0x4f8] sm:$0xff] %vm1644, %v4138
  %4395 = vst.msk [vmem:[%s5 + $0x500] sm:$0xff] %vm1644, %v4139
  %4396 = vst.msk [vmem:[%s5 + $0x508] sm:$0xff] %vm1644, %v4140
  %4397 = vst.msk [vmem:[%s5 + $0x510] sm:$0xff] %vm1644, %v4141
  %4398 = vst.msk [vmem:[%s5 + $0x518] sm:$0xff] %vm1644, %v4142
  %4399 = vst.msk [vmem:[%s5 + $0x520] sm:$0xff] %vm1644, %v4143
  %4400 = vst.msk [vmem:[%s5 + $0x528] sm:$0xff] %vm1644, %v4144
  %4401 = vst.msk [vmem:[%s5 + $0x530] sm:$0xff] %vm1644, %v4145
  %4402 = vst.msk [vmem:[%s5 + $0x538] sm:$0xff] %vm1644, %v4146
  %4403 = vst.msk [vmem:[%s5 + $0x540] sm:$0xff] %vm1644, %v4147
  %4404 = vst.msk [vmem:[%s5 + $0x548] sm:$0xff] %vm1644, %v4148
  %4405 = vst.msk [vmem:[%s5 + $0x550] sm:$0xff] %vm1644, %v4149
  %4406 = vst.msk [vmem:[%s5 + $0x558] sm:$0xff] %vm1644, %v4150
  %4407 = vst.msk [vmem:[%s5 + $0x560] sm:$0xff] %vm1644, %v4151
  %4408 = vst.msk [vmem:[%s5 + $0x568] sm:$0xff] %vm1644, %v4152
  %4409 = vst.msk [vmem:[%s5 + $0x570] sm:$0xff] %vm1644, %v4153
  %4410 = vst.msk [vmem:[%s5 + $0x578] sm:$0xff] %vm1644, %v4154
  %4411 = vst.msk [vmem:[%s5 + $0x580] sm:$0xff] %vm1644, %v4155
  %4412 = vst.msk [vmem:[%s5 + $0x588] sm:$0xff] %vm1644, %v4156
  %4413 = vst.msk [vmem:[%s5 + $0x590] sm:$0xff] %vm1644, %v4157
  %4414 = vst.msk [vmem:[%s5 + $0x598] sm:$0xff] %vm1644, %v4158
  %4415 = vst.msk [vmem:[%s5 + $0x5a0] sm:$0xff] %vm1644, %v4159
  %4416 = vst.msk [vmem:[%s5 + $0x5a8] sm:$0xff] %vm1644, %v4160
  %4417 = vst.msk [vmem:[%s5 + $0x5b0] sm:$0xff] %vm1644, %v4161
  %4418 = vst.msk [vmem:[%s5 + $0x5b8] sm:$0xff] %vm1644, %v4162
  %4419 = vst.msk [vmem:[%s5 + $0x5c0] sm:$0xff] %vm1644, %v4163
  %4420 = vst.msk [vmem:[%s5 + $0x5c8] sm:$0xff] %vm1644, %v4164
  %4421 = vst.msk [vmem:[%s5 + $0x5d0] sm:$0xff] %vm1644, %v4165
  %4422 = vst.msk [vmem:[%s5 + $0x5d8] sm:$0xff] %vm1644, %v4166
  %4423 = vst.msk [vmem:[%s5 + $0x5e0] sm:$0xff] %vm1644, %v4167
  %4424 = vst.msk [vmem:[%s5 + $0x5e8] sm:$0xff] %vm1644, %v4168
  %4425 = vst.msk [vmem:[%s5 + $0x5f0] sm:$0xff] %vm1644, %v4169
  %4426 = vst.msk [vmem:[%s5 + $0x5f8] sm:$0xff] %vm1644, %v4170
  %4427 = vst.msk [vmem:[%s5 + $0x600] sm:$0xff] %vm1644, %v4171
  %4428 = vst.msk [vmem:[%s5 + $0x608] sm:$0xff] %vm1644, %v4172
  %4429 = vst.msk [vmem:[%s5 + $0x610] sm:$0xff] %vm1644, %v4173
  %4430 = vst.msk [vmem:[%s5 + $0x618] sm:$0xff] %vm1644, %v4174
  %4431 = vst.msk [vmem:[%s5 + $0x620] sm:$0xff] %vm1644, %v4175
  %4432 = vst.msk [vmem:[%s5 + $0x628] sm:$0xff] %vm1644, %v4176
  %4433 = vst.msk [vmem:[%s5 + $0x630] sm:$0xff] %vm1644, %v4177
  %4434 = vst.msk [vmem:[%s5 + $0x638] sm:$0xff] %vm1644, %v4178
  %4435 = vst.msk [vmem:[%s5 + $0x640] sm:$0xff] %vm1644, %v4179
  %4436 = vst.msk [vmem:[%s5 + $0x648] sm:$0xff] %vm1644, %v4180
  %4437 = vst.msk [vmem:[%s5 + $0x650] sm:$0xff] %vm1644, %v4181
  %4438 = vst.msk [vmem:[%s5 + $0x658] sm:$0xff] %vm1644, %v4182
  %4439 = vst.msk [vmem:[%s5 + $0x660] sm:$0xff] %vm1644, %v4183
  %4440 = vst.msk [vmem:[%s5 + $0x668] sm:$0xff] %vm1644, %v4184
  %4441 = vst.msk [vmem:[%s5 + $0x670] sm:$0xff] %vm1644, %v4185
  %4442 = vst.msk [vmem:[%s5 + $0x678] sm:$0xff] %vm1644, %v4186
  %4443 = vst.msk [vmem:[%s5 + $0x680] sm:$0xff] %vm1644, %v4187
  %4444 = vst.msk [vmem:[%s5 + $0x688] sm:$0xff] %vm1644, %v4188
  %4445 = vst.msk [vmem:[%s5 + $0x690] sm:$0xff] %vm1644, %v4189
  %4446 = vst.msk [vmem:[%s5 + $0x698] sm:$0xff] %vm1644, %v4190
  %4447 = vst.msk [vmem:[%s5 + $0x6a0] sm:$0xff] %vm1644, %v4191
  %4448 = vst.msk [vmem:[%s5 + $0x6a8] sm:$0xff] %vm1644, %v4192
  %4449 = vst.msk [vmem:[%s5 + $0x6b0] sm:$0xff] %vm1644, %v4193
  %4450 = vst.msk [vmem:[%s5 + $0x6b8] sm:$0xff] %vm1644, %v4194
  %4451 = vst.msk [vmem:[%s5 + $0x6c0] sm:$0xff] %vm1644, %v4195
  %4452 = vst.msk [vmem:[%s5 + $0x6c8] sm:$0xff] %vm1644, %v4196
  %4453 = vst.msk [vmem:[%s5 + $0x6d0] sm:$0xff] %vm1644, %v4197
  %4454 = vst.msk [vmem:[%s5 + $0x6d8] sm:$0xff] %vm1644, %v4198
  %4455 = vst.msk [vmem:[%s5 + $0x6e0] sm:$0xff] %vm1644, %v4199
  %4456 = vst.msk [vmem:[%s5 + $0x6e8] sm:$0xff] %vm1644, %v4200
  %4457 = vst.msk [vmem:[%s5 + $0x6f0] sm:$0xff] %vm1644, %v4201
  %4458 = vst.msk [vmem:[%s5 + $0x6f8] sm:$0xff] %vm1644, %v4202
  %4459 = vst.msk [vmem:[%s5 + $0x700] sm:$0xff] %vm1644, %v4203
  %4460 = vst.msk [vmem:[%s5 + $0x708] sm:$0xff] %vm1644, %v4204
  %4461 = vst.msk [vmem:[%s5 + $0x710] sm:$0xff] %vm1644, %v4205
  %4462 = vst.msk [vmem:[%s5 + $0x718] sm:$0xff] %vm1644, %v4206
  %4463 = vst.msk [vmem:[%s5 + $0x720] sm:$0xff] %vm1644, %v4207
  %4464 = vst.msk [vmem:[%s5 + $0x728] sm:$0xff] %vm1644, %v4208
  %4465 = vst.msk [vmem:[%s5 + $0x730] sm:$0xff] %vm1644, %v4209
  %4466 = vst.msk [vmem:[%s5 + $0x738] sm:$0xff] %vm1644, %v4210
  %4467 = vst.msk [vmem:[%s5 + $0x740] sm:$0xff] %vm1644, %v4211
  %4468 = vst.msk [vmem:[%s5 + $0x748] sm:$0xff] %vm1644, %v4212
  %4469 = vst.msk [vmem:[%s5 + $0x750] sm:$0xff] %vm1644, %v4213
  %4470 = vst.msk [vmem:[%s5 + $0x758] sm:$0xff] %vm1644, %v4214
  %4471 = vst.msk [vmem:[%s5 + $0x760] sm:$0xff] %vm1644, %v4215
  %4472 = vst.msk [vmem:[%s5 + $0x768] sm:$0xff] %vm1644, %v4216
  %4473 = vst.msk [vmem:[%s5 + $0x770] sm:$0xff] %vm1644, %v4217
  %4474 = vst.msk [vmem:[%s5 + $0x778] sm:$0xff] %vm1644, %v4218
  %4475 = vst.msk [vmem:[%s5 + $0x780] sm:$0xff] %vm1644, %v4219
  %4476 = vst.msk [vmem:[%s5 + $0x788] sm:$0xff] %vm1644, %v4220
  %4477 = vst.msk [vmem:[%s5 + $0x790] sm:$0xff] %vm1644, %v4221
  %4478 = vst.msk [vmem:[%s5 + $0x798] sm:$0xff] %vm1644, %v4222
  %4479 = vst.msk [vmem:[%s5 + $0x7a0] sm:$0xff] %vm1644, %v4223
  %4480 = vst.msk [vmem:[%s5 + $0x7a8] sm:$0xff] %vm1644, %v4224
  %4481 = vst.msk [vmem:[%s5 + $0x7b0] sm:$0xff] %vm1644, %v4225
  %4482 = vst.msk [vmem:[%s5 + $0x7b8] sm:$0xff] %vm1644, %v4226
  %4483 = vst.msk [vmem:[%s5 + $0x7c0] sm:$0xff] %vm1644, %v4227
  %4484 = vst.msk [vmem:[%s5 + $0x7c8] sm:$0xff] %vm1644, %v4228
  %4485 = vst.msk [vmem:[%s5 + $0x7d0] sm:$0xff] %vm1644, %v4229
  %4486 = vst.msk [vmem:[%s5 + $0x7d8] sm:$0xff] %vm1644, %v4230
  %4487 = vst.msk [vmem:[%s5 + $0x7e0] sm:$0xff] %vm1644, %v4231
  %4488 = vst.msk [vmem:[%s5 + $0x7e8] sm:$0xff] %vm1644, %v4232
  %4489 = vst.msk [vmem:[%s5 + $0x7f0] sm:$0xff] %vm1644, %v4233
  %4490 = vst.msk [vmem:[%s5 + $0x7f8] sm:$0xff] %vm1644, %v4234
  // Predicated region
  $region22: #{discriminator_forward.4} parent=0 // pred_check
    _
  $region23: #{discriminator_forward.4} parent=0 // pred_check_branch
    %4492 = sbr.rel (0) target = $region25
  $region24: #{discriminator_forward.4} parent=0 // pred_region
    _
  $region25: #{discriminator_forward.4} parent=0 // pred_fallthru
    _
  // Predicated region
  $region26: #{discriminator_forward.4} parent=0 // pred_check
    _
  $region27: #{discriminator_forward.4} parent=0 // pred_check_branch
    %4494 = sbr.rel (0) target = $region29
  $region28: #{discriminator_forward.4} parent=0 // pred_region
    _
  $region29: #{discriminator_forward.4} parent=0 // pred_fallthru
    _

// kernel: discriminator_forward.5
$region0: #{discriminator_forward.5}
  #allocation0 [shape = 'u32[]', space=smem, size = 0x4, offset = 0x4, fixed_abs, tag = 'smem constant byte address 0x4 - core index']
  #allocation1 [shape = 'u32[144,128]{1,0:T(1,128)}', space=vmem, size = 0x12000, scoped, tag = 'internal scratch']
  %s0 = inlined_call_operand.vmem [shape: f32[450,800], index: 0, kind: input, shape index: {}]
  %s1 = inlined_call_operand.vmem [shape: f32[800,64], index: 1, kind: input, shape index: {}]
  %s2 = inlined_call_operand.vmem [shape: f32[1,64], index: 2, kind: input, shape index: {}]
  %s3 = inlined_call_operand.vmem [shape: f32[1,64], index: 3, kind: input, shape index: {}]
  %s4 = inlined_call_operand.vmem [shape: f32[1,64], index: 4, kind: input, shape index: {}]
  %s5 = inlined_call_operand.vmem [shape: f32[450,64], index: 5, kind: output, shape index: {}]
  %s6 = sld [smem:[#allocation0]]
  $region30: #{discriminator_forward.5} parent=0
    _
  %s8 = ssub.s32 1, %s6
  %s9 = scalar_select 0, %s8, %s6
  // Predicated region
  $region2: #{discriminator_forward.5} parent=0 // pred_check
    _
  $region3: #{discriminator_forward.5} parent=0 // pred_check_branch
    %11 = sbr.rel (0) target = $region5
  $region4: #{discriminator_forward.5} parent=0 // pred_region
    _
  $region5: #{discriminator_forward.5} parent=0 // pred_fallthru
    _
  // Predicated region
  $region6: #{discriminator_forward.5} parent=0 // pred_check
    _
  $region7: #{discriminator_forward.5} parent=0 // pred_check_branch
    %13 = sbr.rel (0) target = $region9
  $region8: #{discriminator_forward.5} parent=0 // pred_region
    _
  $region9: #{discriminator_forward.5} parent=0 // pred_fallthru
    _
  // Predicated region
  $region10: #{discriminator_forward.5} parent=0 // pred_check
    _
  $region11: #{discriminator_forward.5} parent=0 // pred_check_branch
    %15 = sbr.rel (0) target = $region13
  $region12: #{discriminator_forward.5} parent=0 // pred_region
    _
  $region13: #{discriminator_forward.5} parent=0 // pred_fallthru
    _
  // Predicated region
  $region14: #{discriminator_forward.5} parent=0 // pred_check
    _
  $region15: #{discriminator_forward.5} parent=0 // pred_check_branch
    %17 = sbr.rel (0) target = $region17
  $region16: #{discriminator_forward.5} parent=0 // pred_region
    _
  $region17: #{discriminator_forward.5} parent=0 // pred_fallthru
    _
  // Predicated region
  $region18: #{discriminator_forward.5} parent=0 // pred_check
    _
  $region19: #{discriminator_forward.5} parent=0 // pred_check_branch
    %19 = sbr.rel (0) target = $region21
  $region20: #{discriminator_forward.5} parent=0 // pred_region
    _
  $region21: #{discriminator_forward.5} parent=0 // pred_fallthru
    _
  %v20 = vld [vmem:[%s0] sm:$0xff]
  %v21 = vld [vmem:[%s0 + $0x8] sm:$0xff]
  %v22 = vld [vmem:[%s0 + $0x10] sm:$0xff]
  %v23 = vld [vmem:[%s0 + $0x18] sm:$0xff]
  %v24 = vld [vmem:[%s0 + $0x20] sm:$0xff]
  %v25 = vld [vmem:[%s0 + $0x28] sm:$0xff]
  %v26 = vld [vmem:[%s0 + $0x30] sm:$0xff]
  %v27 = vld [vmem:[%s0 + $0x38] sm:$0xff]
  %v28 = vld [vmem:[%s0 + $0x40] sm:$0xff]
  %v29 = vld [vmem:[%s0 + $0x48] sm:$0xff]
  %v30 = vld [vmem:[%s0 + $0x50] sm:$0xff]
  %v31 = vld [vmem:[%s0 + $0x58] sm:$0xff]
  %v32 = vld [vmem:[%s0 + $0x60] sm:$0xff]
  %v33 = vld [vmem:[%s0 + $0x68] sm:$0xff]
  %v34 = vld [vmem:[%s0 + $0x70] sm:$0xff]
  %v35 = vld [vmem:[%s0 + $0x78] sm:$0xff]
  %v36 = vld [vmem:[%s0 + $0x80] sm:$0xff]
  %v37 = vld [vmem:[%s0 + $0x88] sm:$0xff]
  %v38 = vld [vmem:[%s0 + $0x90] sm:$0xff]
  %v39 = vld [vmem:[%s0 + $0x98] sm:$0xff]
  %v40 = vld [vmem:[%s0 + $0xa0] sm:$0xff]
  %v41 = vld [vmem:[%s0 + $0xa8] sm:$0xff]
  %v42 = vld [vmem:[%s0 + $0xb0] sm:$0xff]
  %v43 = vld [vmem:[%s0 + $0xb8] sm:$0xff]
  %v44 = vld [vmem:[%s0 + $0xc0] sm:$0xff]
  %v45 = vld [vmem:[%s0 + $0xc8] sm:$0xff]
  %v46 = vld [vmem:[%s0 + $0xd0] sm:$0xff]
  %v47 = vld [vmem:[%s0 + $0xd8] sm:$0xff]
  %v48 = vld [vmem:[%s0 + $0xe0] sm:$0xff]
  %v49 = vld [vmem:[%s0 + $0xe8] sm:$0xff]
  %v50 = vld [vmem:[%s0 + $0xf0] sm:$0xff]
  %v51 = vld [vmem:[%s0 + $0xf8] sm:$0xff]
  %v52 = vld [vmem:[%s0 + $0x100] sm:$0xff]
  %v53 = vld [vmem:[%s0 + $0x108] sm:$0xff]
  %v54 = vld [vmem:[%s0 + $0x110] sm:$0xff]
  %v55 = vld [vmem:[%s0 + $0x118] sm:$0xff]
  %v56 = vld [vmem:[%s0 + $0x120] sm:$0xff]
  %v57 = vld [vmem:[%s0 + $0x128] sm:$0xff]
  %v58 = vld [vmem:[%s0 + $0x130] sm:$0xff]
  %v59 = vld [vmem:[%s0 + $0x138] sm:$0xff]
  %v60 = vld [vmem:[%s0 + $0x140] sm:$0xff]
  %v61 = vld [vmem:[%s0 + $0x148] sm:$0xff]
  %v62 = vld [vmem:[%s0 + $0x150] sm:$0xff]
  %v63 = vld [vmem:[%s0 + $0x158] sm:$0xff]
  %v64 = vld [vmem:[%s0 + $0x160] sm:$0xff]
  %v65 = vld [vmem:[%s0 + $0x168] sm:$0xff]
  %v66 = vld [vmem:[%s0 + $0x170] sm:$0xff]
  %v67 = vld [vmem:[%s0 + $0x178] sm:$0xff]
  %v68 = vld [vmem:[%s0 + $0x180] sm:$0xff]
  %v69 = vld [vmem:[%s0 + $0x188] sm:$0xff]
  %v70 = vld [vmem:[%s0 + $0x190] sm:$0xff]
  %v71 = vld [vmem:[%s0 + $0x198] sm:$0xff]
  %v72 = vld [vmem:[%s0 + $0x1a0] sm:$0xff]
  %v73 = vld [vmem:[%s0 + $0x1a8] sm:$0xff]
  %v74 = vld [vmem:[%s0 + $0x1b0] sm:$0xff]
  %v75 = vld [vmem:[%s0 + $0x1b8] sm:$0xff]
  %v76 = vld [vmem:[%s0 + $0x1c0] sm:$0xff]
  %v77 = vld [vmem:[%s0 + $0x1c8] sm:$0xff]
  %v78 = vld [vmem:[%s0 + $0x1d0] sm:$0xff]
  %v79 = vld [vmem:[%s0 + $0x1d8] sm:$0xff]
  %v80 = vld [vmem:[%s0 + $0x1e0] sm:$0xff]
  %v81 = vld [vmem:[%s0 + $0x1e8] sm:$0xff]
  %v82 = vld [vmem:[%s0 + $0x1f0] sm:$0xff]
  %v83 = vld [vmem:[%s0 + $0x1f8] sm:$0xff]
  %v84 = vld [vmem:[%s0 + $0x200] sm:$0xff]
  %v85 = vld [vmem:[%s0 + $0x208] sm:$0xff]
  %v86 = vld [vmem:[%s0 + $0x210] sm:$0xff]
  %v87 = vld [vmem:[%s0 + $0x218] sm:$0xff]
  %v88 = vld [vmem:[%s0 + $0x220] sm:$0xff]
  %v89 = vld [vmem:[%s0 + $0x228] sm:$0xff]
  %v90 = vld [vmem:[%s0 + $0x230] sm:$0xff]
  %v91 = vld [vmem:[%s0 + $0x238] sm:$0xff]
  %v92 = vld [vmem:[%s0 + $0x240] sm:$0xff]
  %v93 = vld [vmem:[%s0 + $0x248] sm:$0xff]
  %v94 = vld [vmem:[%s0 + $0x250] sm:$0xff]
  %v95 = vld [vmem:[%s0 + $0x258] sm:$0xff]
  %v96 = vld [vmem:[%s0 + $0x260] sm:$0xff]
  %v97 = vld [vmem:[%s0 + $0x268] sm:$0xff]
  %v98 = vld [vmem:[%s0 + $0x270] sm:$0xff]
  %v99 = vld [vmem:[%s0 + $0x278] sm:$0xff]
  %v100 = vld [vmem:[%s0 + $0x280] sm:$0xff]
  %v101 = vld [vmem:[%s0 + $0x288] sm:$0xff]
  %v102 = vld [vmem:[%s0 + $0x290] sm:$0xff]
  %v103 = vld [vmem:[%s0 + $0x298] sm:$0xff]
  %v104 = vld [vmem:[%s0 + $0x2a0] sm:$0xff]
  %v105 = vld [vmem:[%s0 + $0x2a8] sm:$0xff]
  %v106 = vld [vmem:[%s0 + $0x2b0] sm:$0xff]
  %v107 = vld [vmem:[%s0 + $0x2b8] sm:$0xff]
  %v108 = vld [vmem:[%s0 + $0x2c0] sm:$0xff]
  %v109 = vld [vmem:[%s0 + $0x2c8] sm:$0xff]
  %v110 = vld [vmem:[%s0 + $0x2d0] sm:$0xff]
  %v111 = vld [vmem:[%s0 + $0x2d8] sm:$0xff]
  %v112 = vld [vmem:[%s0 + $0x2e0] sm:$0xff]
  %v113 = vld [vmem:[%s0 + $0x2e8] sm:$0xff]
  %v114 = vld [vmem:[%s0 + $0x2f0] sm:$0xff]
  %v115 = vld [vmem:[%s0 + $0x2f8] sm:$0xff]
  %v116 = vld [vmem:[%s0 + $0x300] sm:$0xff]
  %v117 = vld [vmem:[%s0 + $0x308] sm:$0xff]
  %v118 = vld [vmem:[%s0 + $0x310] sm:$0xff]
  %v119 = vld [vmem:[%s0 + $0x318] sm:$0xff]
  %v120 = vld [vmem:[%s0 + $0x320] sm:$0xff]
  %v121 = vld [vmem:[%s0 + $0x328] sm:$0xff]
  %v122 = vld [vmem:[%s0 + $0x330] sm:$0xff]
  %v123 = vld [vmem:[%s0 + $0x338] sm:$0xff]
  %v124 = vld [vmem:[%s0 + $0x340] sm:$0xff]
  %v125 = vld [vmem:[%s0 + $0x348] sm:$0xff]
  %v126 = vld [vmem:[%s0 + $0x350] sm:$0xff]
  %v127 = vld [vmem:[%s0 + $0x358] sm:$0xff]
  %v128 = vld [vmem:[%s0 + $0x360] sm:$0xff]
  %v129 = vld [vmem:[%s0 + $0x368] sm:$0xff]
  %v130 = vld [vmem:[%s0 + $0x370] sm:$0xff]
  %v131 = vld [vmem:[%s0 + $0x378] sm:$0xff]
  %v132 = vld [vmem:[%s0 + $0x380] sm:$0xff]
  %v133 = vld [vmem:[%s0 + $0x388] sm:$0xff]
  %v134 = vld [vmem:[%s0 + $0x390] sm:$0xff]
  %v135 = vld [vmem:[%s0 + $0x398] sm:$0xff]
  %v136 = vld [vmem:[%s0 + $0x3a0] sm:$0xff]
  %v137 = vld [vmem:[%s0 + $0x3a8] sm:$0xff]
  %v138 = vld [vmem:[%s0 + $0x3b0] sm:$0xff]
  %v139 = vld [vmem:[%s0 + $0x3b8] sm:$0xff]
  %v140 = vld [vmem:[%s0 + $0x3c0] sm:$0xff]
  %v141 = vld [vmem:[%s0 + $0x3c8] sm:$0xff]
  %v142 = vld [vmem:[%s0 + $0x3d0] sm:$0xff]
  %v143 = vld [vmem:[%s0 + $0x3d8] sm:$0xff]
  %v144 = vld [vmem:[%s0 + $0x3e0] sm:$0xff]
  %v145 = vld [vmem:[%s0 + $0x3e8] sm:$0xff]
  %v146 = vld [vmem:[%s0 + $0x3f0] sm:$0xff]
  %v147 = vld [vmem:[%s0 + $0x3f8] sm:$0xff]
  %v148 = vld [vmem:[%s0 + $0x400] sm:$0xff]
  %v149 = vld [vmem:[%s0 + $0x408] sm:$0xff]
  %v150 = vld [vmem:[%s0 + $0x410] sm:$0xff]
  %v151 = vld [vmem:[%s0 + $0x418] sm:$0xff]
  %v152 = vld [vmem:[%s0 + $0x420] sm:$0xff]
  %v153 = vld [vmem:[%s0 + $0x428] sm:$0xff]
  %v154 = vld [vmem:[%s0 + $0x430] sm:$0xff]
  %v155 = vld [vmem:[%s0 + $0x438] sm:$0xff]
  %v156 = vld [vmem:[%s0 + $0x440] sm:$0xff]
  %v157 = vld [vmem:[%s0 + $0x448] sm:$0xff]
  %v158 = vld [vmem:[%s0 + $0x450] sm:$0xff]
  %v159 = vld [vmem:[%s0 + $0x458] sm:$0xff]
  %v160 = vld [vmem:[%s0 + $0x460] sm:$0xff]
  %v161 = vld [vmem:[%s0 + $0x468] sm:$0xff]
  %v162 = vld [vmem:[%s0 + $0x470] sm:$0xff]
  %v163 = vld [vmem:[%s0 + $0x478] sm:$0xff]
  %v164 = vld [vmem:[%s0 + $0x480] sm:$0xff]
  %v165 = vld [vmem:[%s0 + $0x488] sm:$0xff]
  %v166 = vld [vmem:[%s0 + $0x490] sm:$0xff]
  %v167 = vld [vmem:[%s0 + $0x498] sm:$0xff]
  %v168 = vld [vmem:[%s0 + $0x4a0] sm:$0xff]
  %v169 = vld [vmem:[%s0 + $0x4a8] sm:$0xff]
  %v170 = vld [vmem:[%s0 + $0x4b0] sm:$0xff]
  %v171 = vld [vmem:[%s0 + $0x4b8] sm:$0xff]
  %v172 = vld [vmem:[%s0 + $0x4c0] sm:$0xff]
  %v173 = vld [vmem:[%s0 + $0x4c8] sm:$0xff]
  %v174 = vld [vmem:[%s0 + $0x4d0] sm:$0xff]
  %v175 = vld [vmem:[%s0 + $0x4d8] sm:$0xff]
  %v176 = vld [vmem:[%s0 + $0x4e0] sm:$0xff]
  %v177 = vld [vmem:[%s0 + $0x4e8] sm:$0xff]
  %v178 = vld [vmem:[%s0 + $0x4f0] sm:$0xff]
  %v179 = vld [vmem:[%s0 + $0x4f8] sm:$0xff]
  %v180 = vld [vmem:[%s0 + $0x500] sm:$0xff]
  %v181 = vld [vmem:[%s0 + $0x508] sm:$0xff]
  %v182 = vld [vmem:[%s0 + $0x510] sm:$0xff]
  %v183 = vld [vmem:[%s0 + $0x518] sm:$0xff]
  %v184 = vld [vmem:[%s0 + $0x520] sm:$0xff]
  %v185 = vld [vmem:[%s0 + $0x528] sm:$0xff]
  %v186 = vld [vmem:[%s0 + $0x530] sm:$0xff]
  %v187 = vld [vmem:[%s0 + $0x538] sm:$0xff]
  %v188 = vld [vmem:[%s0 + $0x540] sm:$0xff]
  %v189 = vld [vmem:[%s0 + $0x548] sm:$0xff]
  %v190 = vld [vmem:[%s0 + $0x550] sm:$0xff]
  %v191 = vld [vmem:[%s0 + $0x558] sm:$0xff]
  %v192 = vld [vmem:[%s0 + $0x560] sm:$0xff]
  %v193 = vld [vmem:[%s0 + $0x568] sm:$0xff]
  %v194 = vld [vmem:[%s0 + $0x570] sm:$0xff]
  %v195 = vld [vmem:[%s0 + $0x578] sm:$0xff]
  %v196 = vld [vmem:[%s0 + $0x580] sm:$0xff]
  %v197 = vld [vmem:[%s0 + $0x588] sm:$0xff]
  %v198 = vld [vmem:[%s0 + $0x590] sm:$0xff]
  %v199 = vld [vmem:[%s0 + $0x598] sm:$0xff]
  %v200 = vld [vmem:[%s0 + $0x5a0] sm:$0xff]
  %v201 = vld [vmem:[%s0 + $0x5a8] sm:$0xff]
  %v202 = vld [vmem:[%s0 + $0x5b0] sm:$0xff]
  %v203 = vld [vmem:[%s0 + $0x5b8] sm:$0xff]
  %v204 = vld [vmem:[%s0 + $0x5c0] sm:$0xff]
  %v205 = vld [vmem:[%s0 + $0x5c8] sm:$0xff]
  %v206 = vld [vmem:[%s0 + $0x5d0] sm:$0xff]
  %v207 = vld [vmem:[%s0 + $0x5d8] sm:$0xff]
  %v208 = vld [vmem:[%s0 + $0x5e0] sm:$0xff]
  %v209 = vld [vmem:[%s0 + $0x5e8] sm:$0xff]
  %v210 = vld [vmem:[%s0 + $0x5f0] sm:$0xff]
  %v211 = vld [vmem:[%s0 + $0x5f8] sm:$0xff]
  %v212 = vld [vmem:[%s0 + $0x600] sm:$0xff]
  %v213 = vld [vmem:[%s0 + $0x608] sm:$0xff]
  %v214 = vld [vmem:[%s0 + $0x610] sm:$0xff]
  %v215 = vld [vmem:[%s0 + $0x618] sm:$0xff]
  %v216 = vld [vmem:[%s0 + $0x620] sm:$0xff]
  %v217 = vld [vmem:[%s0 + $0x628] sm:$0xff]
  %v218 = vld [vmem:[%s0 + $0x630] sm:$0xff]
  %v219 = vld [vmem:[%s0 + $0x638] sm:$0xff]
  %v220 = vld [vmem:[%s0 + $0x640] sm:$0xff]
  %v221 = vld [vmem:[%s0 + $0x648] sm:$0xff]
  %v222 = vld [vmem:[%s0 + $0x650] sm:$0xff]
  %v223 = vld [vmem:[%s0 + $0x658] sm:$0xff]
  %v224 = vld [vmem:[%s0 + $0x660] sm:$0xff]
  %v225 = vld [vmem:[%s0 + $0x668] sm:$0xff]
  %v226 = vld [vmem:[%s0 + $0x670] sm:$0xff]
  %v227 = vld [vmem:[%s0 + $0x678] sm:$0xff]
  %v228 = vld [vmem:[%s0 + $0x680] sm:$0xff]
  %v229 = vld [vmem:[%s0 + $0x688] sm:$0xff]
  %v230 = vld [vmem:[%s0 + $0x690] sm:$0xff]
  %v231 = vld [vmem:[%s0 + $0x698] sm:$0xff]
  %v232 = vld [vmem:[%s0 + $0x6a0] sm:$0xff]
  %v233 = vld [vmem:[%s0 + $0x6a8] sm:$0xff]
  %v234 = vld [vmem:[%s0 + $0x6b0] sm:$0xff]
  %v235 = vld [vmem:[%s0 + $0x6b8] sm:$0xff]
  %v236 = vld [vmem:[%s0 + $0x6c0] sm:$0xff]
  %v237 = vld [vmem:[%s0 + $0x6c8] sm:$0xff]
  %v238 = vld [vmem:[%s0 + $0x6d0] sm:$0xff]
  %v239 = vld [vmem:[%s0 + $0x6d8] sm:$0xff]
  %v240 = vld [vmem:[%s0 + $0x6e0] sm:$0xff]
  %v241 = vld [vmem:[%s0 + $0x6e8] sm:$0xff]
  %v242 = vld [vmem:[%s0 + $0x6f0] sm:$0xff]
  %v243 = vld [vmem:[%s0 + $0x6f8] sm:$0xff]
  %v244 = vld [vmem:[%s0 + $0x700] sm:$0xff]
  %v245 = vld [vmem:[%s0 + $0x708] sm:$0xff]
  %v246 = vld [vmem:[%s0 + $0x710] sm:$0xff]
  %v247 = vld [vmem:[%s0 + $0x718] sm:$0xff]
  %v248 = vld [vmem:[%s0 + $0x720] sm:$0xff]
  %v249 = vld [vmem:[%s0 + $0x728] sm:$0xff]
  %v250 = vld [vmem:[%s0 + $0x730] sm:$0xff]
  %v251 = vld [vmem:[%s0 + $0x738] sm:$0xff]
  %v252 = vld [vmem:[%s0 + $0x740] sm:$0xff]
  %v253 = vld [vmem:[%s0 + $0x748] sm:$0xff]
  %v254 = vld [vmem:[%s0 + $0x750] sm:$0xff]
  %v255 = vld [vmem:[%s0 + $0x758] sm:$0xff]
  %v256 = vld [vmem:[%s0 + $0x760] sm:$0xff]
  %v257 = vld [vmem:[%s0 + $0x768] sm:$0xff]
  %v258 = vld [vmem:[%s0 + $0x770] sm:$0xff]
  %v259 = vld [vmem:[%s0 + $0x778] sm:$0xff]
  %v260 = vld [vmem:[%s0 + $0x780] sm:$0xff]
  %v261 = vld [vmem:[%s0 + $0x788] sm:$0xff]
  %v262 = vld [vmem:[%s0 + $0x790] sm:$0xff]
  %v263 = vld [vmem:[%s0 + $0x798] sm:$0xff]
  %v264 = vld [vmem:[%s0 + $0x7a0] sm:$0xff]
  %v265 = vld [vmem:[%s0 + $0x7a8] sm:$0xff]
  %v266 = vld [vmem:[%s0 + $0x7b0] sm:$0xff]
  %v267 = vld [vmem:[%s0 + $0x7b8] sm:$0xff]
  %v268 = vld [vmem:[%s0 + $0x7c0] sm:$0xff]
  %v269 = vld [vmem:[%s0 + $0x7c8] sm:$0xff]
  %v270 = vld [vmem:[%s0 + $0x7d0] sm:$0xff]
  %v271 = vld [vmem:[%s0 + $0x7d8] sm:$0xff]
  %v272 = vld [vmem:[%s0 + $0x7e0] sm:$0xff]
  %v273 = vld [vmem:[%s0 + $0x7e8] sm:$0xff]
  %v274 = vld [vmem:[%s0 + $0x7f0] sm:$0xff]
  %v275 = vld [vmem:[%s0 + $0x7f8] sm:$0xff]
  %v276 = vld [vmem:[%s0 + $0x800] sm:$0xff]
  %v277 = vld [vmem:[%s0 + $0x808] sm:$0xff]
  %v278 = vld [vmem:[%s0 + $0x810] sm:$0xff]
  %v279 = vld [vmem:[%s0 + $0x818] sm:$0xff]
  %v280 = vld [vmem:[%s0 + $0x820] sm:$0xff]
  %v281 = vld [vmem:[%s0 + $0x828] sm:$0xff]
  %v282 = vld [vmem:[%s0 + $0x830] sm:$0xff]
  %v283 = vld [vmem:[%s0 + $0x838] sm:$0xff]
  %v284 = vld [vmem:[%s0 + $0x840] sm:$0xff]
  %v285 = vld [vmem:[%s0 + $0x848] sm:$0xff]
  %v286 = vld [vmem:[%s0 + $0x850] sm:$0xff]
  %v287 = vld [vmem:[%s0 + $0x858] sm:$0xff]
  %v288 = vld [vmem:[%s0 + $0x860] sm:$0xff]
  %v289 = vld [vmem:[%s0 + $0x868] sm:$0xff]
  %v290 = vld [vmem:[%s0 + $0x870] sm:$0xff]
  %v291 = vld [vmem:[%s0 + $0x878] sm:$0xff]
  %v292 = vld [vmem:[%s0 + $0x880] sm:$0xff]
  %v293 = vld [vmem:[%s0 + $0x888] sm:$0xff]
  %v294 = vld [vmem:[%s0 + $0x890] sm:$0xff]
  %v295 = vld [vmem:[%s0 + $0x898] sm:$0xff]
  %v296 = vld [vmem:[%s0 + $0x8a0] sm:$0xff]
  %v297 = vld [vmem:[%s0 + $0x8a8] sm:$0xff]
  %v298 = vld [vmem:[%s0 + $0x8b0] sm:$0xff]
  %v299 = vld [vmem:[%s0 + $0x8b8] sm:$0xff]
  %v300 = vld [vmem:[%s0 + $0x8c0] sm:$0xff]
  %v301 = vld [vmem:[%s0 + $0x8c8] sm:$0xff]
  %v302 = vld [vmem:[%s0 + $0x8d0] sm:$0xff]
  %v303 = vld [vmem:[%s0 + $0x8d8] sm:$0xff]
  %v304 = vld [vmem:[%s0 + $0x8e0] sm:$0xff]
  %v305 = vld [vmem:[%s0 + $0x8e8] sm:$0xff]
  %v306 = vld [vmem:[%s0 + $0x8f0] sm:$0xff]
  %v307 = vld [vmem:[%s0 + $0x8f8] sm:$0xff]
  %v308 = vld [vmem:[%s0 + $0x900] sm:$0xff]
  %v309 = vld [vmem:[%s0 + $0x908] sm:$0xff]
  %v310 = vld [vmem:[%s0 + $0x910] sm:$0xff]
  %v311 = vld [vmem:[%s0 + $0x918] sm:$0xff]
  %v312 = vld [vmem:[%s0 + $0x920] sm:$0xff]
  %v313 = vld [vmem:[%s0 + $0x928] sm:$0xff]
  %v314 = vld [vmem:[%s0 + $0x930] sm:$0xff]
  %v315 = vld [vmem:[%s0 + $0x938] sm:$0xff]
  %v316 = vld [vmem:[%s0 + $0x940] sm:$0xff]
  %v317 = vld [vmem:[%s0 + $0x948] sm:$0xff]
  %v318 = vld [vmem:[%s0 + $0x950] sm:$0xff]
  %v319 = vld [vmem:[%s0 + $0x958] sm:$0xff]
  %v320 = vld [vmem:[%s0 + $0x960] sm:$0xff]
  %v321 = vld [vmem:[%s0 + $0x968] sm:$0xff]
  %v322 = vld [vmem:[%s0 + $0x970] sm:$0xff]
  %v323 = vld [vmem:[%s0 + $0x978] sm:$0xff]
  %v324 = vld [vmem:[%s0 + $0x980] sm:$0xff]
  %v325 = vld [vmem:[%s0 + $0x988] sm:$0xff]
  %v326 = vld [vmem:[%s0 + $0x990] sm:$0xff]
  %v327 = vld [vmem:[%s0 + $0x998] sm:$0xff]
  %v328 = vld [vmem:[%s0 + $0x9a0] sm:$0xff]
  %v329 = vld [vmem:[%s0 + $0x9a8] sm:$0xff]
  %v330 = vld [vmem:[%s0 + $0x9b0] sm:$0xff]
  %v331 = vld [vmem:[%s0 + $0x9b8] sm:$0xff]
  %v332 = vld [vmem:[%s0 + $0x9c0] sm:$0xff]
  %v333 = vld [vmem:[%s0 + $0x9c8] sm:$0xff]
  %v334 = vld [vmem:[%s0 + $0x9d0] sm:$0xff]
  %v335 = vld [vmem:[%s0 + $0x9d8] sm:$0xff]
  %v336 = vld [vmem:[%s0 + $0x9e0] sm:$0xff]
  %v337 = vld [vmem:[%s0 + $0x9e8] sm:$0xff]
  %v338 = vld [vmem:[%s0 + $0x9f0] sm:$0xff]
  %v339 = vld [vmem:[%s0 + $0x9f8] sm:$0xff]
  %v340 = vld [vmem:[%s0 + $0xa00] sm:$0xff]
  %v341 = vld [vmem:[%s0 + $0xa08] sm:$0xff]
  %v342 = vld [vmem:[%s0 + $0xa10] sm:$0xff]
  %v343 = vld [vmem:[%s0 + $0xa18] sm:$0xff]
  %v344 = vld [vmem:[%s0 + $0xa20] sm:$0xff]
  %v345 = vld [vmem:[%s0 + $0xa28] sm:$0xff]
  %v346 = vld [vmem:[%s0 + $0xa30] sm:$0xff]
  %v347 = vld [vmem:[%s0 + $0xa38] sm:$0xff]
  %v348 = vld [vmem:[%s0 + $0xa40] sm:$0xff]
  %v349 = vld [vmem:[%s0 + $0xa48] sm:$0xff]
  %v350 = vld [vmem:[%s0 + $0xa50] sm:$0xff]
  %v351 = vld [vmem:[%s0 + $0xa58] sm:$0xff]
  %v352 = vld [vmem:[%s0 + $0xa60] sm:$0xff]
  %v353 = vld [vmem:[%s0 + $0xa68] sm:$0xff]
  %v354 = vld [vmem:[%s0 + $0xa70] sm:$0xff]
  %v355 = vld [vmem:[%s0 + $0xa78] sm:$0xff]
  %v356 = vld [vmem:[%s0 + $0xa80] sm:$0xff]
  %v357 = vld [vmem:[%s0 + $0xa88] sm:$0xff]
  %v358 = vld [vmem:[%s0 + $0xa90] sm:$0xff]
  %v359 = vld [vmem:[%s0 + $0xa98] sm:$0xff]
  %v360 = vld [vmem:[%s0 + $0xaa0] sm:$0xff]
  %v361 = vld [vmem:[%s0 + $0xaa8] sm:$0xff]
  %v362 = vld [vmem:[%s0 + $0xab0] sm:$0xff]
  %v363 = vld [vmem:[%s0 + $0xab8] sm:$0xff]
  %v364 = vld [vmem:[%s0 + $0xac0] sm:$0xff]
  %v365 = vld [vmem:[%s0 + $0xac8] sm:$0xff]
  %v366 = vld [vmem:[%s0 + $0xad0] sm:$0xff]
  %v367 = vld [vmem:[%s0 + $0xad8] sm:$0xff]
  %v368 = vld [vmem:[%s0 + $0xae0] sm:$0xff]
  %v369 = vld [vmem:[%s0 + $0xae8] sm:$0xff]
  %v370 = vld [vmem:[%s0 + $0xaf0] sm:$0xff]
  %v371 = vld [vmem:[%s0 + $0xaf8] sm:$0xff]
  %v372 = vld [vmem:[%s0 + $0xb00] sm:$0xff]
  %v373 = vld [vmem:[%s0 + $0xb08] sm:$0xff]
  %v374 = vld [vmem:[%s0 + $0xb10] sm:$0xff]
  %v375 = vld [vmem:[%s0 + $0xb18] sm:$0xff]
  %v376 = vld [vmem:[%s0 + $0xb20] sm:$0xff]
  %v377 = vld [vmem:[%s0 + $0xb28] sm:$0xff]
  %v378 = vld [vmem:[%s0 + $0xb30] sm:$0xff]
  %v379 = vld [vmem:[%s0 + $0xb38] sm:$0xff]
  %v380 = vld [vmem:[%s0 + $0xb40] sm:$0xff]
  %v381 = vld [vmem:[%s0 + $0xb48] sm:$0xff]
  %v382 = vld [vmem:[%s0 + $0xb50] sm:$0xff]
  %v383 = vld [vmem:[%s0 + $0xb58] sm:$0xff]
  %v384 = vld [vmem:[%s0 + $0xb60] sm:$0xff]
  %v385 = vld [vmem:[%s0 + $0xb68] sm:$0xff]
  %v386 = vld [vmem:[%s0 + $0xb70] sm:$0xff]
  %v387 = vld [vmem:[%s0 + $0xb78] sm:$0xff]
  %v388 = vld [vmem:[%s0 + $0xb80] sm:$0xff]
  %v389 = vld [vmem:[%s0 + $0xb88] sm:$0xff]
  %v390 = vld [vmem:[%s0 + $0xb90] sm:$0xff]
  %v391 = vld [vmem:[%s0 + $0xb98] sm:$0xff]
  %v392 = vld [vmem:[%s0 + $0xba0] sm:$0xff]
  %v393 = vld [vmem:[%s0 + $0xba8] sm:$0xff]
  %v394 = vld [vmem:[%s0 + $0xbb0] sm:$0xff]
  %v395 = vld [vmem:[%s0 + $0xbb8] sm:$0xff]
  %v396 = vld [vmem:[%s0 + $0xbc0] sm:$0xff]
  %v397 = vld [vmem:[%s0 + $0xbc8] sm:$0xff]
  %v398 = vld [vmem:[%s0 + $0xbd0] sm:$0xff]
  %v399 = vld [vmem:[%s0 + $0xbd8] sm:$0xff]
  %v400 = vld [vmem:[%s0 + $0xbe0] sm:$0xff]
  %v401 = vld [vmem:[%s0 + $0xbe8] sm:$0xff]
  %v402 = vld [vmem:[%s0 + $0xbf0] sm:$0xff]
  %v403 = vld [vmem:[%s0 + $0xbf8] sm:$0xff]
  %v404 = vld [vmem:[%s0 + $0xc00] sm:$0xff]
  %v405 = vld [vmem:[%s0 + $0xc08] sm:$0xff]
  %v406 = vld [vmem:[%s0 + $0xc10] sm:$0xff]
  %v407 = vld [vmem:[%s0 + $0xc18] sm:$0xff]
  %v408 = vld [vmem:[%s0 + $0xc20] sm:$0xff]
  %v409 = vld [vmem:[%s0 + $0xc28] sm:$0xff]
  %v410 = vld [vmem:[%s0 + $0xc30] sm:$0xff]
  %v411 = vld [vmem:[%s0 + $0xc38] sm:$0xff]
  %v412 = vld [vmem:[%s0 + $0xc40] sm:$0x3]
  %v413 = vld [vmem:[%s0 + $0xc48] sm:$0x3]
  %v414 = vld [vmem:[%s0 + $0xc50] sm:$0x3]
  %v415 = vld [vmem:[%s0 + $0xc58] sm:$0x3]
  %v416 = vld [vmem:[%s0 + $0xc60] sm:$0x3]
  %v417 = vld [vmem:[%s0 + $0xc68] sm:$0x3]
  %v418 = vld [vmem:[%s0 + $0xc70] sm:$0x3]
  %v419 = vld [vmem:[%s1] sm:$0xff]
  %v420 = vld [vmem:[%s1 + $0x8] sm:$0xff]
  %v421 = vld [vmem:[%s1 + $0x10] sm:$0xff]
  %v422 = vld [vmem:[%s1 + $0x18] sm:$0xff]
  %v423 = vld [vmem:[%s1 + $0x20] sm:$0xff]
  %v424 = vld [vmem:[%s1 + $0x28] sm:$0xff]
  %v425 = vld [vmem:[%s1 + $0x30] sm:$0xff]
  %v426 = vld [vmem:[%s1 + $0x38] sm:$0xff]
  %v427 = vld [vmem:[%s1 + $0x40] sm:$0xff]
  %v428 = vld [vmem:[%s1 + $0x48] sm:$0xff]
  %v429 = vld [vmem:[%s1 + $0x50] sm:$0xff]
  %v430 = vld [vmem:[%s1 + $0x58] sm:$0xff]
  %v431 = vld [vmem:[%s1 + $0x60] sm:$0xff]
  %v432 = vld [vmem:[%s1 + $0x68] sm:$0xff]
  %v433 = vld [vmem:[%s1 + $0x70] sm:$0xff]
  %v434 = vld [vmem:[%s1 + $0x78] sm:$0xff]
  %v435 = vld [vmem:[%s1 + $0x80] sm:$0xff]
  %v436 = vld [vmem:[%s1 + $0x88] sm:$0xff]
  %v437 = vld [vmem:[%s1 + $0x90] sm:$0xff]
  %v438 = vld [vmem:[%s1 + $0x98] sm:$0xff]
  %v439 = vld [vmem:[%s1 + $0xa0] sm:$0xff]
  %v440 = vld [vmem:[%s1 + $0xa8] sm:$0xff]
  %v441 = vld [vmem:[%s1 + $0xb0] sm:$0xff]
  %v442 = vld [vmem:[%s1 + $0xb8] sm:$0xff]
  %v443 = vld [vmem:[%s1 + $0xc0] sm:$0xff]
  %v444 = vld [vmem:[%s1 + $0xc8] sm:$0xff]
  %v445 = vld [vmem:[%s1 + $0xd0] sm:$0xff]
  %v446 = vld [vmem:[%s1 + $0xd8] sm:$0xff]
  %v447 = vld [vmem:[%s1 + $0xe0] sm:$0xff]
  %v448 = vld [vmem:[%s1 + $0xe8] sm:$0xff]
  %v449 = vld [vmem:[%s1 + $0xf0] sm:$0xff]
  %v450 = vld [vmem:[%s1 + $0xf8] sm:$0xff]
  %v451 = vld [vmem:[%s1 + $0x100] sm:$0xff]
  %v452 = vld [vmem:[%s1 + $0x108] sm:$0xff]
  %v453 = vld [vmem:[%s1 + $0x110] sm:$0xff]
  %v454 = vld [vmem:[%s1 + $0x118] sm:$0xff]
  %v455 = vld [vmem:[%s1 + $0x120] sm:$0xff]
  %v456 = vld [vmem:[%s1 + $0x128] sm:$0xff]
  %v457 = vld [vmem:[%s1 + $0x130] sm:$0xff]
  %v458 = vld [vmem:[%s1 + $0x138] sm:$0xff]
  %v459 = vld [vmem:[%s1 + $0x140] sm:$0xff]
  %v460 = vld [vmem:[%s1 + $0x148] sm:$0xff]
  %v461 = vld [vmem:[%s1 + $0x150] sm:$0xff]
  %v462 = vld [vmem:[%s1 + $0x158] sm:$0xff]
  %v463 = vld [vmem:[%s1 + $0x160] sm:$0xff]
  %v464 = vld [vmem:[%s1 + $0x168] sm:$0xff]
  %v465 = vld [vmem:[%s1 + $0x170] sm:$0xff]
  %v466 = vld [vmem:[%s1 + $0x178] sm:$0xff]
  %v467 = vld [vmem:[%s1 + $0x180] sm:$0xff]
  %v468 = vld [vmem:[%s1 + $0x188] sm:$0xff]
  %v469 = vld [vmem:[%s1 + $0x190] sm:$0xff]
  %v470 = vld [vmem:[%s1 + $0x198] sm:$0xff]
  %v471 = vld [vmem:[%s1 + $0x1a0] sm:$0xff]
  %v472 = vld [vmem:[%s1 + $0x1a8] sm:$0xff]
  %v473 = vld [vmem:[%s1 + $0x1b0] sm:$0xff]
  %v474 = vld [vmem:[%s1 + $0x1b8] sm:$0xff]
  %v475 = vld [vmem:[%s1 + $0x1c0] sm:$0xff]
  %v476 = vld [vmem:[%s1 + $0x1c8] sm:$0xff]
  %v477 = vld [vmem:[%s1 + $0x1d0] sm:$0xff]
  %v478 = vld [vmem:[%s1 + $0x1d8] sm:$0xff]
  %v479 = vld [vmem:[%s1 + $0x1e0] sm:$0xff]
  %v480 = vld [vmem:[%s1 + $0x1e8] sm:$0xff]
  %v481 = vld [vmem:[%s1 + $0x1f0] sm:$0xff]
  %v482 = vld [vmem:[%s1 + $0x1f8] sm:$0xff]
  %v483 = vld [vmem:[%s1 + $0x200] sm:$0xff]
  %v484 = vld [vmem:[%s1 + $0x208] sm:$0xff]
  %v485 = vld [vmem:[%s1 + $0x210] sm:$0xff]
  %v486 = vld [vmem:[%s1 + $0x218] sm:$0xff]
  %v487 = vld [vmem:[%s1 + $0x220] sm:$0xff]
  %v488 = vld [vmem:[%s1 + $0x228] sm:$0xff]
  %v489 = vld [vmem:[%s1 + $0x230] sm:$0xff]
  %v490 = vld [vmem:[%s1 + $0x238] sm:$0xff]
  %v491 = vld [vmem:[%s1 + $0x240] sm:$0xff]
  %v492 = vld [vmem:[%s1 + $0x248] sm:$0xff]
  %v493 = vld [vmem:[%s1 + $0x250] sm:$0xff]
  %v494 = vld [vmem:[%s1 + $0x258] sm:$0xff]
  %v495 = vld [vmem:[%s1 + $0x260] sm:$0xff]
  %v496 = vld [vmem:[%s1 + $0x268] sm:$0xff]
  %v497 = vld [vmem:[%s1 + $0x270] sm:$0xff]
  %v498 = vld [vmem:[%s1 + $0x278] sm:$0xff]
  %v499 = vld [vmem:[%s1 + $0x280] sm:$0xff]
  %v500 = vld [vmem:[%s1 + $0x288] sm:$0xff]
  %v501 = vld [vmem:[%s1 + $0x290] sm:$0xff]
  %v502 = vld [vmem:[%s1 + $0x298] sm:$0xff]
  %v503 = vld [vmem:[%s1 + $0x2a0] sm:$0xff]
  %v504 = vld [vmem:[%s1 + $0x2a8] sm:$0xff]
  %v505 = vld [vmem:[%s1 + $0x2b0] sm:$0xff]
  %v506 = vld [vmem:[%s1 + $0x2b8] sm:$0xff]
  %v507 = vld [vmem:[%s1 + $0x2c0] sm:$0xff]
  %v508 = vld [vmem:[%s1 + $0x2c8] sm:$0xff]
  %v509 = vld [vmem:[%s1 + $0x2d0] sm:$0xff]
  %v510 = vld [vmem:[%s1 + $0x2d8] sm:$0xff]
  %v511 = vld [vmem:[%s1 + $0x2e0] sm:$0xff]
  %v512 = vld [vmem:[%s1 + $0x2e8] sm:$0xff]
  %v513 = vld [vmem:[%s1 + $0x2f0] sm:$0xff]
  %v514 = vld [vmem:[%s1 + $0x2f8] sm:$0xff]
  %v515 = vld [vmem:[%s1 + $0x300] sm:$0xff]
  %v516 = vld [vmem:[%s1 + $0x308] sm:$0xff]
  %v517 = vld [vmem:[%s1 + $0x310] sm:$0xff]
  %v518 = vld [vmem:[%s1 + $0x318] sm:$0xff]
  %v519 = vld [vmem:[%s2] sm:$0x1]
  %v521 = vlaneseq
  %v522 = vshrl.u32 %v521, 7
  %v523 = vsub.s32 0, %v522
  %v524 = vrot.slane %v519, %v523
  %vm526 = vcmask 261120
  %v528 = vsel %vm526, %v26, 0
  %v531 = vsel %vm526, %v33, 0
  %v534 = vsel %vm526, %v40, 0
  %v537 = vsel %vm526, %v47, 0
  %v540 = vsel %vm526, %v54, 0
  %v543 = vsel %vm526, %v61, 0
  %v546 = vsel %vm526, %v68, 0
  %v549 = vsel %vm526, %v75, 0
  %v552 = vsel %vm526, %v82, 0
  %v555 = vsel %vm526, %v89, 0
  %v558 = vsel %vm526, %v96, 0
  %v561 = vsel %vm526, %v103, 0
  %v564 = vsel %vm526, %v110, 0
  %v567 = vsel %vm526, %v117, 0
  %v570 = vsel %vm526, %v124, 0
  %v573 = vsel %vm526, %v131, 0
  %v576 = vsel %vm526, %v138, 0
  %v579 = vsel %vm526, %v145, 0
  %v582 = vsel %vm526, %v152, 0
  %v585 = vsel %vm526, %v159, 0
  %v588 = vsel %vm526, %v166, 0
  %v591 = vsel %vm526, %v173, 0
  %v594 = vsel %vm526, %v180, 0
  %v597 = vsel %vm526, %v187, 0
  %v600 = vsel %vm526, %v194, 0
  %v603 = vsel %vm526, %v201, 0
  %v606 = vsel %vm526, %v208, 0
  %v609 = vsel %vm526, %v215, 0
  %v612 = vsel %vm526, %v222, 0
  %v615 = vsel %vm526, %v229, 0
  %v618 = vsel %vm526, %v236, 0
  %v621 = vsel %vm526, %v243, 0
  %v624 = vsel %vm526, %v250, 0
  %v627 = vsel %vm526, %v257, 0
  %v630 = vsel %vm526, %v264, 0
  %v633 = vsel %vm526, %v271, 0
  %v636 = vsel %vm526, %v278, 0
  %v639 = vsel %vm526, %v285, 0
  %v642 = vsel %vm526, %v292, 0
  %v645 = vsel %vm526, %v299, 0
  %v648 = vsel %vm526, %v306, 0
  %v651 = vsel %vm526, %v313, 0
  %v654 = vsel %vm526, %v320, 0
  %v657 = vsel %vm526, %v327, 0
  %v660 = vsel %vm526, %v334, 0
  %v663 = vsel %vm526, %v341, 0
  %v666 = vsel %vm526, %v348, 0
  %v669 = vsel %vm526, %v355, 0
  %v672 = vsel %vm526, %v362, 0
  %v675 = vsel %vm526, %v369, 0
  %v678 = vsel %vm526, %v376, 0
  %v681 = vsel %vm526, %v383, 0
  %v684 = vsel %vm526, %v390, 0
  %v687 = vsel %vm526, %v397, 0
  %v690 = vsel %vm526, %v404, 0
  %v693 = vsel %vm526, %v411, 0
  %v696 = vsel %vm526, %v418, 0
  %698 = vmatprep.subr.mxu0 0.0
  %699 = vmatpush1.msra.mxu0 %v419
  %700 = vmatprep.subr.mxu0 0.0
  %701 = vmatpush1.msra.mxu0 %v420
  %702 = vmatprep.subr.mxu0 0.0
  %703 = vmatpush1.msra.mxu0 %v421
  %704 = vmatprep.subr.mxu0 0.0
  %705 = vmatpush1.msra.mxu0 %v422
  %706 = vmatprep.subr.mxu0 0.0
  %707 = vmatpush1.msra.mxu0 %v423
  %708 = vmatprep.subr.mxu0 0.0
  %709 = vmatpush1.msra.mxu0 %v424
  %710 = vmatprep.subr.mxu0 0.0
  %711 = vmatpush1.msra.mxu0 %v425
  %712 = vmatprep.subr.mxu0 0.0
  %713 = vmatpush1.msra.mxu0 %v426
  %714 = vmatprep.subr.mxu0 0.0
  %715 = vmatpush1.msra.mxu0 %v427
  %716 = vmatprep.subr.mxu0 0.0
  %717 = vmatpush1.msra.mxu0 %v428
  %718 = vmatprep.subr.mxu0 0.0
  %719 = vmatpush1.msra.mxu0 %v429
  %720 = vmatprep.subr.mxu0 0.0
  %721 = vmatpush1.msra.mxu0 %v430
  %722 = vmatprep.subr.mxu0 0.0
  %723 = vmatpush1.msra.mxu0 %v431
  %724 = vmatprep.subr.mxu0 0.0
  %725 = vmatpush1.msra.mxu0 %v432
  %726 = vmatprep.subr.mxu0 0.0
  %727 = vmatpush1.msra.mxu0 %v433
  %728 = vmatprep.subr.mxu0 0.0
  %729 = vmatpush1.msra.mxu0 %v434
  %730 = vmatprep.subr.mxu0 0.0
  %731 = vmatpush1.msra.mxu0 %v435
  %732 = vmatprep.subr.mxu0 0.0
  %733 = vmatpush1.msra.mxu0 %v436
  %734 = vmatprep.subr.mxu0 0.0
  %735 = vmatpush1.msra.mxu0 %v437
  %736 = vmatprep.subr.mxu0 0.0
  %737 = vmatpush1.msra.mxu0 %v438
  %738 = vmatprep.subr.mxu0 0.0
  %739 = vmatpush1.msra.mxu0 %v439
  %740 = vmatprep.subr.mxu0 0.0
  %741 = vmatpush1.msra.mxu0 %v440
  %742 = vmatprep.subr.mxu0 0.0
  %743 = vmatpush1.msra.mxu0 %v441
  %744 = vmatprep.subr.mxu0 0.0
  %745 = vmatpush1.msra.mxu0 %v442
  %746 = vmatprep.subr.mxu0 0.0
  %747 = vmatpush1.msra.mxu0 %v443
  %748 = vmatprep.subr.mxu0 0.0
  %749 = vmatpush1.msra.mxu0 %v444
  %750 = vmatprep.subr.mxu0 0.0
  %751 = vmatpush1.msra.mxu0 %v445
  %752 = vmatprep.subr.mxu0 0.0
  %753 = vmatpush1.msra.mxu0 %v446
  %754 = vmatprep.subr.mxu0 0.0
  %755 = vmatpush1.msra.mxu0 %v447
  %756 = vmatprep.subr.mxu0 0.0
  %757 = vmatpush1.msra.mxu0 %v448
  %758 = vmatprep.subr.mxu0 0.0
  %759 = vmatpush1.msra.mxu0 %v449
  %760 = vmatprep.subr.mxu0 0.0
  %761 = vmatpush1.msra.mxu0 %v450
  %762 = vmatprep.mubr.f32.mxu0 %v21
  %763 = vmatmul.mubr.f32.gmra.mrb[0].mxu0 %v20
  %v764 = vpop.f32.mrb[0].mxu0
  %v765 = vadd.f32 %v524, %v764
  %v766 = vpop.f32.mrb[0].mxu0
  %767 = vmatprep.mubr.f32.mxu0 %v28
  %768 = vmatmul.mubr.f32.gmra.mrb[0].mxu0 %v27
  %v769 = vpop.f32.mrb[0].mxu0
  %v770 = vadd.f32 %v524, %v769
  %v771 = vpop.f32.mrb[0].mxu0
  %772 = vmatprep.mubr.f32.mxu0 %v35
  %773 = vmatmul.mubr.f32.gmra.mrb[0].mxu0 %v34
  %v774 = vpop.f32.mrb[0].mxu0
  %v775 = vadd.f32 %v524, %v774
  %v776 = vpop.f32.mrb[0].mxu0
  %777 = vmatprep.mubr.f32.mxu0 %v42
  %778 = vmatmul.mubr.f32.gmra.mrb[0].mxu0 %v41
  %v779 = vpop.f32.mrb[0].mxu0
  %v780 = vadd.f32 %v524, %v779
  %v781 = vpop.f32.mrb[0].mxu0
  %782 = vmatprep.mubr.f32.mxu0 %v49
  %783 = vmatmul.mubr.f32.gmra.mrb[0].mxu0 %v48
  %v784 = vpop.f32.mrb[0].mxu0
  %v785 = vadd.f32 %v524, %v784
  %v786 = vpop.f32.mrb[0].mxu0
  %787 = vmatprep.mubr.f32.mxu0 %v56
  %788 = vmatmul.mubr.f32.gmra.mrb[0].mxu0 %v55
  %v789 = vpop.f32.mrb[0].mxu0
  %v790 = vadd.f32 %v524, %v789
  %v791 = vpop.f32.mrb[0].mxu0
  %792 = vmatprep.mubr.f32.mxu0 %v63
  %793 = vmatmul.mubr.f32.gmra.mrb[0].mxu0 %v62
  %v794 = vpop.f32.mrb[0].mxu0
  %v795 = vadd.f32 %v524, %v794
  %v796 = vpop.f32.mrb[0].mxu0
  %797 = vmatprep.mubr.f32.mxu0 %v70
  %798 = vmatmul.mubr.f32.gmra.mrb[0].mxu0 %v69
  %v799 = vpop.f32.mrb[0].mxu0
  %v800 = vadd.f32 %v524, %v799
  %v801 = vpop.f32.mrb[0].mxu0
  %802 = vmatprep.mubr.f32.mxu0 %v77
  %803 = vmatmul.mubr.f32.gmra.mrb[0].mxu0 %v76
  %v804 = vpop.f32.mrb[0].mxu0
  %v805 = vadd.f32 %v524, %v804
  %v806 = vpop.f32.mrb[0].mxu0
  %807 = vmatprep.mubr.f32.mxu0 %v84
  %808 = vmatmul.mubr.f32.gmra.mrb[0].mxu0 %v83
  %v809 = vpop.f32.mrb[0].mxu0
  %v810 = vadd.f32 %v524, %v809
  %v811 = vpop.f32.mrb[0].mxu0
  %812 = vmatprep.mubr.f32.mxu0 %v91
  %813 = vmatmul.mubr.f32.gmra.mrb[0].mxu0 %v90
  %v814 = vpop.f32.mrb[0].mxu0
  %v815 = vadd.f32 %v524, %v814
  %v816 = vpop.f32.mrb[0].mxu0
  %817 = vmatprep.mubr.f32.mxu0 %v98
  %818 = vmatmul.mubr.f32.gmra.mrb[0].mxu0 %v97
  %v819 = vpop.f32.mrb[0].mxu0
  %v820 = vadd.f32 %v524, %v819
  %v821 = vpop.f32.mrb[0].mxu0
  %822 = vmatprep.mubr.f32.mxu0 %v105
  %823 = vmatmul.mubr.f32.gmra.mrb[0].mxu0 %v104
  %v824 = vpop.f32.mrb[0].mxu0
  %v825 = vadd.f32 %v524, %v824
  %v826 = vpop.f32.mrb[0].mxu0
  %827 = vmatprep.mubr.f32.mxu0 %v112
  %828 = vmatmul.mubr.f32.gmra.mrb[0].mxu0 %v111
  %v829 = vpop.f32.mrb[0].mxu0
  %v830 = vadd.f32 %v524, %v829
  %v831 = vpop.f32.mrb[0].mxu0
  %832 = vmatprep.mubr.f32.mxu0 %v119
  %833 = vmatmul.mubr.f32.gmra.mrb[0].mxu0 %v118
  %v834 = vpop.f32.mrb[0].mxu0
  %v835 = vadd.f32 %v524, %v834
  %v836 = vpop.f32.mrb[0].mxu0
  %837 = vmatprep.mubr.f32.mxu0 %v126
  %838 = vmatmul.mubr.f32.gmra.mrb[0].mxu0 %v125
  %v839 = vpop.f32.mrb[0].mxu0
  %v840 = vadd.f32 %v524, %v839
  %v841 = vpop.f32.mrb[0].mxu0
  %842 = vmatprep.mubr.f32.mxu0 %v133
  %843 = vmatmul.mubr.f32.gmra.mrb[0].mxu0 %v132
  %v844 = vpop.f32.mrb[0].mxu0
  %v845 = vadd.f32 %v524, %v844
  %v846 = vpop.f32.mrb[0].mxu0
  %847 = vmatprep.mubr.f32.mxu0 %v140
  %848 = vmatmul.mubr.f32.gmra.mrb[0].mxu0 %v139
  %v849 = vpop.f32.mrb[0].mxu0
  %v850 = vadd.f32 %v524, %v849
  %v851 = vpop.f32.mrb[0].mxu0
  %852 = vmatprep.mubr.f32.mxu0 %v147
  %853 = vmatmul.mubr.f32.gmra.mrb[0].mxu0 %v146
  %v854 = vpop.f32.mrb[0].mxu0
  %v855 = vadd.f32 %v524, %v854
  %v856 = vpop.f32.mrb[0].mxu0
  %857 = vmatprep.mubr.f32.mxu0 %v154
  %858 = vmatmul.mubr.f32.gmra.mrb[0].mxu0 %v153
  %v859 = vpop.f32.mrb[0].mxu0
  %v860 = vadd.f32 %v524, %v859
  %v861 = vpop.f32.mrb[0].mxu0
  %862 = vmatprep.mubr.f32.mxu0 %v161
  %863 = vmatmul.mubr.f32.gmra.mrb[0].mxu0 %v160
  %v864 = vpop.f32.mrb[0].mxu0
  %v865 = vadd.f32 %v524, %v864
  %v866 = vpop.f32.mrb[0].mxu0
  %867 = vmatprep.mubr.f32.mxu0 %v168
  %868 = vmatmul.mubr.f32.gmra.mrb[0].mxu0 %v167
  %v869 = vpop.f32.mrb[0].mxu0
  %v870 = vadd.f32 %v524, %v869
  %v871 = vpop.f32.mrb[0].mxu0
  %872 = vmatprep.mubr.f32.mxu0 %v175
  %873 = vmatmul.mubr.f32.gmra.mrb[0].mxu0 %v174
  %v874 = vpop.f32.mrb[0].mxu0
  %v875 = vadd.f32 %v524, %v874
  %v876 = vpop.f32.mrb[0].mxu0
  %877 = vmatprep.mubr.f32.mxu0 %v182
  %878 = vmatmul.mubr.f32.gmra.mrb[0].mxu0 %v181
  %v879 = vpop.f32.mrb[0].mxu0
  %v880 = vadd.f32 %v524, %v879
  %v881 = vpop.f32.mrb[0].mxu0
  %882 = vmatprep.mubr.f32.mxu0 %v189
  %883 = vmatmul.mubr.f32.gmra.mrb[0].mxu0 %v188
  %v884 = vpop.f32.mrb[0].mxu0
  %v885 = vadd.f32 %v524, %v884
  %v886 = vpop.f32.mrb[0].mxu0
  %887 = vmatprep.mubr.f32.mxu0 %v196
  %888 = vmatmul.mubr.f32.gmra.mrb[0].mxu0 %v195
  %v889 = vpop.f32.mrb[0].mxu0
  %v890 = vadd.f32 %v524, %v889
  %v891 = vpop.f32.mrb[0].mxu0
  %892 = vmatprep.mubr.f32.mxu0 %v203
  %893 = vmatmul.mubr.f32.gmra.mrb[0].mxu0 %v202
  %v894 = vpop.f32.mrb[0].mxu0
  %v895 = vadd.f32 %v524, %v894
  %v896 = vpop.f32.mrb[0].mxu0
  %897 = vmatprep.mubr.f32.mxu0 %v210
  %898 = vmatmul.mubr.f32.gmra.mrb[0].mxu0 %v209
  %v899 = vpop.f32.mrb[0].mxu0
  %v900 = vadd.f32 %v524, %v899
  %v901 = vpop.f32.mrb[0].mxu0
  %902 = vmatprep.mubr.f32.mxu0 %v217
  %903 = vmatmul.mubr.f32.gmra.mrb[0].mxu0 %v216
  %v904 = vpop.f32.mrb[0].mxu0
  %v905 = vadd.f32 %v524, %v904
  %v906 = vpop.f32.mrb[0].mxu0
  %907 = vmatprep.mubr.f32.mxu0 %v224
  %908 = vmatmul.mubr.f32.gmra.mrb[0].mxu0 %v223
  %v909 = vpop.f32.mrb[0].mxu0
  %v910 = vadd.f32 %v524, %v909
  %v911 = vpop.f32.mrb[0].mxu0
  %912 = vmatprep.mubr.f32.mxu0 %v231
  %913 = vmatmul.mubr.f32.gmra.mrb[0].mxu0 %v230
  %v914 = vpop.f32.mrb[0].mxu0
  %v915 = vadd.f32 %v524, %v914
  %v916 = vpop.f32.mrb[0].mxu0
  %917 = vmatprep.mubr.f32.mxu0 %v238
  %918 = vmatmul.mubr.f32.gmra.mrb[0].mxu0 %v237
  %v919 = vpop.f32.mrb[0].mxu0
  %v920 = vadd.f32 %v524, %v919
  %v921 = vpop.f32.mrb[0].mxu0
  %922 = vmatprep.mubr.f32.mxu0 %v245
  %923 = vmatmul.mubr.f32.gmra.mrb[0].mxu0 %v244
  %v924 = vpop.f32.mrb[0].mxu0
  %v925 = vadd.f32 %v524, %v924
  %v926 = vpop.f32.mrb[0].mxu0
  %927 = vmatprep.mubr.f32.mxu0 %v252
  %928 = vmatmul.mubr.f32.gmra.mrb[0].mxu0 %v251
  %v929 = vpop.f32.mrb[0].mxu0
  %v930 = vadd.f32 %v524, %v929
  %v931 = vpop.f32.mrb[0].mxu0
  %932 = vmatprep.mubr.f32.mxu0 %v259
  %933 = vmatmul.mubr.f32.gmra.mrb[0].mxu0 %v258
  %v934 = vpop.f32.mrb[0].mxu0
  %v935 = vadd.f32 %v524, %v934
  %v936 = vpop.f32.mrb[0].mxu0
  %937 = vmatprep.mubr.f32.mxu0 %v266
  %938 = vmatmul.mubr.f32.gmra.mrb[0].mxu0 %v265
  %v939 = vpop.f32.mrb[0].mxu0
  %v940 = vadd.f32 %v524, %v939
  %v941 = vpop.f32.mrb[0].mxu0
  %942 = vmatprep.mubr.f32.mxu0 %v273
  %943 = vmatmul.mubr.f32.gmra.mrb[0].mxu0 %v272
  %v944 = vpop.f32.mrb[0].mxu0
  %v945 = vadd.f32 %v524, %v944
  %v946 = vpop.f32.mrb[0].mxu0
  %947 = vmatprep.mubr.f32.mxu0 %v280
  %948 = vmatmul.mubr.f32.gmra.mrb[0].mxu0 %v279
  %v949 = vpop.f32.mrb[0].mxu0
  %v950 = vadd.f32 %v524, %v949
  %v951 = vpop.f32.mrb[0].mxu0
  %952 = vmatprep.mubr.f32.mxu0 %v287
  %953 = vmatmul.mubr.f32.gmra.mrb[0].mxu0 %v286
  %v954 = vpop.f32.mrb[0].mxu0
  %v955 = vadd.f32 %v524, %v954
  %v956 = vpop.f32.mrb[0].mxu0
  %957 = vmatprep.mubr.f32.mxu0 %v294
  %958 = vmatmul.mubr.f32.gmra.mrb[0].mxu0 %v293
  %v959 = vpop.f32.mrb[0].mxu0
  %v960 = vadd.f32 %v524, %v959
  %v961 = vpop.f32.mrb[0].mxu0
  %962 = vmatprep.mubr.f32.mxu0 %v301
  %963 = vmatmul.mubr.f32.gmra.mrb[0].mxu0 %v300
  %v964 = vpop.f32.mrb[0].mxu0
  %v965 = vadd.f32 %v524, %v964
  %v966 = vpop.f32.mrb[0].mxu0
  %967 = vmatprep.mubr.f32.mxu0 %v308
  %968 = vmatmul.mubr.f32.gmra.mrb[0].mxu0 %v307
  %v969 = vpop.f32.mrb[0].mxu0
  %v970 = vadd.f32 %v524, %v969
  %v971 = vpop.f32.mrb[0].mxu0
  %972 = vmatprep.mubr.f32.mxu0 %v315
  %973 = vmatmul.mubr.f32.gmra.mrb[0].mxu0 %v314
  %v974 = vpop.f32.mrb[0].mxu0
  %v975 = vadd.f32 %v524, %v974
  %v976 = vpop.f32.mrb[0].mxu0
  %977 = vmatprep.mubr.f32.mxu0 %v322
  %978 = vmatmul.mubr.f32.gmra.mrb[0].mxu0 %v321
  %v979 = vpop.f32.mrb[0].mxu0
  %v980 = vadd.f32 %v524, %v979
  %v981 = vpop.f32.mrb[0].mxu0
  %982 = vmatprep.mubr.f32.mxu0 %v329
  %983 = vmatmul.mubr.f32.gmra.mrb[0].mxu0 %v328
  %v984 = vpop.f32.mrb[0].mxu0
  %v985 = vadd.f32 %v524, %v984
  %v986 = vpop.f32.mrb[0].mxu0
  %987 = vmatprep.mubr.f32.mxu0 %v336
  %988 = vmatmul.mubr.f32.gmra.mrb[0].mxu0 %v335
  %v989 = vpop.f32.mrb[0].mxu0
  %v990 = vadd.f32 %v524, %v989
  %v991 = vpop.f32.mrb[0].mxu0
  %992 = vmatprep.mubr.f32.mxu0 %v343
  %993 = vmatmul.mubr.f32.gmra.mrb[0].mxu0 %v342
  %v994 = vpop.f32.mrb[0].mxu0
  %v995 = vadd.f32 %v524, %v994
  %v996 = vpop.f32.mrb[0].mxu0
  %997 = vmatprep.mubr.f32.mxu0 %v350
  %998 = vmatmul.mubr.f32.gmra.mrb[0].mxu0 %v349
  %v999 = vpop.f32.mrb[0].mxu0
  %v1000 = vadd.f32 %v524, %v999
  %v1001 = vpop.f32.mrb[0].mxu0
  %1002 = vmatprep.mubr.f32.mxu0 %v357
  %1003 = vmatmul.mubr.f32.gmra.mrb[0].mxu0 %v356
  %v1004 = vpop.f32.mrb[0].mxu0
  %v1005 = vadd.f32 %v524, %v1004
  %v1006 = vpop.f32.mrb[0].mxu0
  %1007 = vmatprep.mubr.f32.mxu0 %v364
  %1008 = vmatmul.mubr.f32.gmra.mrb[0].mxu0 %v363
  %v1009 = vpop.f32.mrb[0].mxu0
  %v1010 = vadd.f32 %v524, %v1009
  %v1011 = vpop.f32.mrb[0].mxu0
  %1012 = vmatprep.mubr.f32.mxu0 %v371
  %1013 = vmatmul.mubr.f32.gmra.mrb[0].mxu0 %v370
  %v1014 = vpop.f32.mrb[0].mxu0
  %v1015 = vadd.f32 %v524, %v1014
  %v1016 = vpop.f32.mrb[0].mxu0
  %1017 = vmatprep.mubr.f32.mxu0 %v378
  %1018 = vmatmul.mubr.f32.gmra.mrb[0].mxu0 %v377
  %v1019 = vpop.f32.mrb[0].mxu0
  %v1020 = vadd.f32 %v524, %v1019
  %v1021 = vpop.f32.mrb[0].mxu0
  %1022 = vmatprep.mubr.f32.mxu0 %v385
  %1023 = vmatmul.mubr.f32.gmra.mrb[0].mxu0 %v384
  %v1024 = vpop.f32.mrb[0].mxu0
  %v1025 = vadd.f32 %v524, %v1024
  %v1026 = vpop.f32.mrb[0].mxu0
  %1027 = vmatprep.mubr.f32.mxu0 %v392
  %1028 = vmatmul.mubr.f32.gmra.mrb[0].mxu0 %v391
  %v1029 = vpop.f32.mrb[0].mxu0
  %v1030 = vadd.f32 %v524, %v1029
  %v1031 = vpop.f32.mrb[0].mxu0
  %1032 = vmatprep.mubr.f32.mxu0 %v399
  %1033 = vmatmul.mubr.f32.gmra.mrb[0].mxu0 %v398
  %v1034 = vpop.f32.mrb[0].mxu0
  %v1035 = vadd.f32 %v524, %v1034
  %v1036 = vpop.f32.mrb[0].mxu0
  %1037 = vmatprep.mubr.f32.mxu0 %v406
  %1038 = vmatmul.mubr.f32.gmra.mrb[0].mxu0 %v405
  %v1039 = vpop.f32.mrb[0].mxu0
  %v1040 = vadd.f32 %v524, %v1039
  %v1041 = vpop.f32.mrb[0].mxu0
  %1042 = vmatprep.mubr.f32.mxu0 %v413
  %1043 = vmatmul.mubr.f32.gmra.mrb[0].mxu0 %v412
  %v1044 = vpop.f32.mrb[0].mxu0
  %v1045 = vadd.f32 %v524, %v1044
  %v1046 = vpop.f32.mrb[0].mxu0
  %1047 = vdwg.mxu0
  %1048 = vmatprep.subr.mxu0 0.0
  %1049 = vmatpush1.msra.mxu0 %v451
  %1050 = vmatprep.subr.mxu0 0.0
  %1051 = vmatpush1.msra.mxu0 %v452
  %1052 = vmatprep.subr.mxu0 0.0
  %1053 = vmatpush1.msra.mxu0 %v453
  %1054 = vmatprep.subr.mxu0 0.0
  %1055 = vmatpush1.msra.mxu0 %v454
  %1056 = vmatprep.subr.mxu0 0.0
  %1057 = vmatpush1.msra.mxu0 %v455
  %1058 = vmatprep.subr.mxu0 0.0
  %1059 = vmatpush1.msra.mxu0 %v456
  %1060 = vmatprep.subr.mxu0 0.0
  %1061 = vmatpush1.msra.mxu0 %v457
  %1062 = vmatprep.subr.mxu0 0.0
  %1063 = vmatpush1.msra.mxu0 %v458
  %1064 = vmatprep.subr.mxu0 0.0
  %1065 = vmatpush1.msra.mxu0 %v459
  %1066 = vmatprep.subr.mxu0 0.0
  %1067 = vmatpush1.msra.mxu0 %v460
  %1068 = vmatprep.subr.mxu0 0.0
  %1069 = vmatpush1.msra.mxu0 %v461
  %1070 = vmatprep.subr.mxu0 0.0
  %1071 = vmatpush1.msra.mxu0 %v462
  %1072 = vmatprep.subr.mxu0 0.0
  %1073 = vmatpush1.msra.mxu0 %v463
  %1074 = vmatprep.subr.mxu0 0.0
  %1075 = vmatpush1.msra.mxu0 %v464
  %1076 = vmatprep.subr.mxu0 0.0
  %1077 = vmatpush1.msra.mxu0 %v465
  %1078 = vmatprep.subr.mxu0 0.0
  %1079 = vmatpush1.msra.mxu0 %v466
  %1080 = vmatprep.subr.mxu0 0.0
  %1081 = vmatpush1.msra.mxu0 %v467
  %1082 = vmatprep.subr.mxu0 0.0
  %1083 = vmatpush1.msra.mxu0 %v468
  %1084 = vmatprep.subr.mxu0 0.0
  %1085 = vmatpush1.msra.mxu0 %v469
  %1086 = vmatprep.subr.mxu0 0.0
  %1087 = vmatpush1.msra.mxu0 %v470
  %1088 = vmatprep.subr.mxu0 0.0
  %1089 = vmatpush1.msra.mxu0 %v471
  %1090 = vmatprep.subr.mxu0 0.0
  %1091 = vmatpush1.msra.mxu0 %v472
  %1092 = vmatprep.subr.mxu0 0.0
  %1093 = vmatpush1.msra.mxu0 %v473
  %1094 = vmatprep.subr.mxu0 0.0
  %1095 = vmatpush1.msra.mxu0 %v474
  %1096 = vmatprep.subr.mxu0 0.0
  %1097 = vmatpush1.msra.mxu0 %v475
  %1098 = vmatprep.subr.mxu0 0.0
  %1099 = vmatpush1.msra.mxu0 %v476
  %1100 = vmatprep.subr.mxu0 0.0
  %1101 = vmatpush1.msra.mxu0 %v477
  %1102 = vmatprep.subr.mxu0 0.0
  %1103 = vmatpush1.msra.mxu0 %v478
  %1104 = vmatprep.subr.mxu0 0.0
  %1105 = vmatpush1.msra.mxu0 %v479
  %1106 = vmatprep.subr.mxu0 0.0
  %1107 = vmatpush1.msra.mxu0 %v480
  %1108 = vmatprep.subr.mxu0 0.0
  %1109 = vmatpush1.msra.mxu0 %v481
  %1110 = vmatprep.subr.mxu0 0.0
  %1111 = vmatpush1.msra.mxu0 %v482
  %1112 = vmatprep.mubr.f32.mxu0 %v23
  %1113 = vmatmul.mubr.f32.gmra.mrb[0].mxu0 %v22
  %v1114 = vpop.f32.mrb[0].mxu0
  %v1115 = vadd.f32 %v765, %v1114
  %v1116 = vpop.f32.mrb[0].mxu0
  %1117 = vmatprep.mubr.f32.mxu0 %v30
  %1118 = vmatmul.mubr.f32.gmra.mrb[0].mxu0 %v29
  %v1119 = vpop.f32.mrb[0].mxu0
  %v1120 = vadd.f32 %v770, %v1119
  %v1121 = vpop.f32.mrb[0].mxu0
  %1122 = vmatprep.mubr.f32.mxu0 %v37
  %1123 = vmatmul.mubr.f32.gmra.mrb[0].mxu0 %v36
  %v1124 = vpop.f32.mrb[0].mxu0
  %v1125 = vadd.f32 %v775, %v1124
  %v1126 = vpop.f32.mrb[0].mxu0
  %1127 = vmatprep.mubr.f32.mxu0 %v44
  %1128 = vmatmul.mubr.f32.gmra.mrb[0].mxu0 %v43
  %v1129 = vpop.f32.mrb[0].mxu0
  %v1130 = vadd.f32 %v780, %v1129
  %v1131 = vpop.f32.mrb[0].mxu0
  %1132 = vmatprep.mubr.f32.mxu0 %v51
  %1133 = vmatmul.mubr.f32.gmra.mrb[0].mxu0 %v50
  %v1134 = vpop.f32.mrb[0].mxu0
  %v1135 = vadd.f32 %v785, %v1134
  %v1136 = vpop.f32.mrb[0].mxu0
  %1137 = vmatprep.mubr.f32.mxu0 %v58
  %1138 = vmatmul.mubr.f32.gmra.mrb[0].mxu0 %v57
  %v1139 = vpop.f32.mrb[0].mxu0
  %v1140 = vadd.f32 %v790, %v1139
  %v1141 = vpop.f32.mrb[0].mxu0
  %1142 = vmatprep.mubr.f32.mxu0 %v65
  %1143 = vmatmul.mubr.f32.gmra.mrb[0].mxu0 %v64
  %v1144 = vpop.f32.mrb[0].mxu0
  %v1145 = vadd.f32 %v795, %v1144
  %v1146 = vpop.f32.mrb[0].mxu0
  %1147 = vmatprep.mubr.f32.mxu0 %v72
  %1148 = vmatmul.mubr.f32.gmra.mrb[0].mxu0 %v71
  %v1149 = vpop.f32.mrb[0].mxu0
  %v1150 = vadd.f32 %v800, %v1149
  %v1151 = vpop.f32.mrb[0].mxu0
  %1152 = vmatprep.mubr.f32.mxu0 %v79
  %1153 = vmatmul.mubr.f32.gmra.mrb[0].mxu0 %v78
  %v1154 = vpop.f32.mrb[0].mxu0
  %v1155 = vadd.f32 %v805, %v1154
  %v1156 = vpop.f32.mrb[0].mxu0
  %1157 = vmatprep.mubr.f32.mxu0 %v86
  %1158 = vmatmul.mubr.f32.gmra.mrb[0].mxu0 %v85
  %v1159 = vpop.f32.mrb[0].mxu0
  %v1160 = vadd.f32 %v810, %v1159
  %v1161 = vpop.f32.mrb[0].mxu0
  %1162 = vmatprep.mubr.f32.mxu0 %v93
  %1163 = vmatmul.mubr.f32.gmra.mrb[0].mxu0 %v92
  %v1164 = vpop.f32.mrb[0].mxu0
  %v1165 = vadd.f32 %v815, %v1164
  %v1166 = vpop.f32.mrb[0].mxu0
  %1167 = vmatprep.mubr.f32.mxu0 %v100
  %1168 = vmatmul.mubr.f32.gmra.mrb[0].mxu0 %v99
  %v1169 = vpop.f32.mrb[0].mxu0
  %v1170 = vadd.f32 %v820, %v1169
  %v1171 = vpop.f32.mrb[0].mxu0
  %1172 = vmatprep.mubr.f32.mxu0 %v107
  %1173 = vmatmul.mubr.f32.gmra.mrb[0].mxu0 %v106
  %v1174 = vpop.f32.mrb[0].mxu0
  %v1175 = vadd.f32 %v825, %v1174
  %v1176 = vpop.f32.mrb[0].mxu0
  %1177 = vmatprep.mubr.f32.mxu0 %v114
  %1178 = vmatmul.mubr.f32.gmra.mrb[0].mxu0 %v113
  %v1179 = vpop.f32.mrb[0].mxu0
  %v1180 = vadd.f32 %v830, %v1179
  %v1181 = vpop.f32.mrb[0].mxu0
  %1182 = vmatprep.mubr.f32.mxu0 %v121
  %1183 = vmatmul.mubr.f32.gmra.mrb[0].mxu0 %v120
  %v1184 = vpop.f32.mrb[0].mxu0
  %v1185 = vadd.f32 %v835, %v1184
  %v1186 = vpop.f32.mrb[0].mxu0
  %1187 = vmatprep.mubr.f32.mxu0 %v128
  %1188 = vmatmul.mubr.f32.gmra.mrb[0].mxu0 %v127
  %v1189 = vpop.f32.mrb[0].mxu0
  %v1190 = vadd.f32 %v840, %v1189
  %v1191 = vpop.f32.mrb[0].mxu0
  %1192 = vmatprep.mubr.f32.mxu0 %v135
  %1193 = vmatmul.mubr.f32.gmra.mrb[0].mxu0 %v134
  %v1194 = vpop.f32.mrb[0].mxu0
  %v1195 = vadd.f32 %v845, %v1194
  %v1196 = vpop.f32.mrb[0].mxu0
  %1197 = vmatprep.mubr.f32.mxu0 %v142
  %1198 = vmatmul.mubr.f32.gmra.mrb[0].mxu0 %v141
  %v1199 = vpop.f32.mrb[0].mxu0
  %v1200 = vadd.f32 %v850, %v1199
  %v1201 = vpop.f32.mrb[0].mxu0
  %1202 = vmatprep.mubr.f32.mxu0 %v149
  %1203 = vmatmul.mubr.f32.gmra.mrb[0].mxu0 %v148
  %v1204 = vpop.f32.mrb[0].mxu0
  %v1205 = vadd.f32 %v855, %v1204
  %v1206 = vpop.f32.mrb[0].mxu0
  %1207 = vmatprep.mubr.f32.mxu0 %v156
  %1208 = vmatmul.mubr.f32.gmra.mrb[0].mxu0 %v155
  %v1209 = vpop.f32.mrb[0].mxu0
  %v1210 = vadd.f32 %v860, %v1209
  %v1211 = vpop.f32.mrb[0].mxu0
  %1212 = vmatprep.mubr.f32.mxu0 %v163
  %1213 = vmatmul.mubr.f32.gmra.mrb[0].mxu0 %v162
  %v1214 = vpop.f32.mrb[0].mxu0
  %v1215 = vadd.f32 %v865, %v1214
  %v1216 = vpop.f32.mrb[0].mxu0
  %1217 = vmatprep.mubr.f32.mxu0 %v170
  %1218 = vmatmul.mubr.f32.gmra.mrb[0].mxu0 %v169
  %v1219 = vpop.f32.mrb[0].mxu0
  %v1220 = vadd.f32 %v870, %v1219
  %v1221 = vpop.f32.mrb[0].mxu0
  %1222 = vmatprep.mubr.f32.mxu0 %v177
  %1223 = vmatmul.mubr.f32.gmra.mrb[0].mxu0 %v176
  %v1224 = vpop.f32.mrb[0].mxu0
  %v1225 = vadd.f32 %v875, %v1224
  %v1226 = vpop.f32.mrb[0].mxu0
  %1227 = vmatprep.mubr.f32.mxu0 %v184
  %1228 = vmatmul.mubr.f32.gmra.mrb[0].mxu0 %v183
  %v1229 = vpop.f32.mrb[0].mxu0
  %v1230 = vadd.f32 %v880, %v1229
  %v1231 = vpop.f32.mrb[0].mxu0
  %1232 = vmatprep.mubr.f32.mxu0 %v191
  %1233 = vmatmul.mubr.f32.gmra.mrb[0].mxu0 %v190
  %v1234 = vpop.f32.mrb[0].mxu0
  %v1235 = vadd.f32 %v885, %v1234
  %v1236 = vpop.f32.mrb[0].mxu0
  %1237 = vmatprep.mubr.f32.mxu0 %v198
  %1238 = vmatmul.mubr.f32.gmra.mrb[0].mxu0 %v197
  %v1239 = vpop.f32.mrb[0].mxu0
  %v1240 = vadd.f32 %v890, %v1239
  %v1241 = vpop.f32.mrb[0].mxu0
  %1242 = vmatprep.mubr.f32.mxu0 %v205
  %1243 = vmatmul.mubr.f32.gmra.mrb[0].mxu0 %v204
  %v1244 = vpop.f32.mrb[0].mxu0
  %v1245 = vadd.f32 %v895, %v1244
  %v1246 = vpop.f32.mrb[0].mxu0
  %1247 = vmatprep.mubr.f32.mxu0 %v212
  %1248 = vmatmul.mubr.f32.gmra.mrb[0].mxu0 %v211
  %v1249 = vpop.f32.mrb[0].mxu0
  %v1250 = vadd.f32 %v900, %v1249
  %v1251 = vpop.f32.mrb[0].mxu0
  %1252 = vmatprep.mubr.f32.mxu0 %v219
  %1253 = vmatmul.mubr.f32.gmra.mrb[0].mxu0 %v218
  %v1254 = vpop.f32.mrb[0].mxu0
  %v1255 = vadd.f32 %v905, %v1254
  %v1256 = vpop.f32.mrb[0].mxu0
  %1257 = vmatprep.mubr.f32.mxu0 %v226
  %1258 = vmatmul.mubr.f32.gmra.mrb[0].mxu0 %v225
  %v1259 = vpop.f32.mrb[0].mxu0
  %v1260 = vadd.f32 %v910, %v1259
  %v1261 = vpop.f32.mrb[0].mxu0
  %1262 = vmatprep.mubr.f32.mxu0 %v233
  %1263 = vmatmul.mubr.f32.gmra.mrb[0].mxu0 %v232
  %v1264 = vpop.f32.mrb[0].mxu0
  %v1265 = vadd.f32 %v915, %v1264
  %v1266 = vpop.f32.mrb[0].mxu0
  %1267 = vmatprep.mubr.f32.mxu0 %v240
  %1268 = vmatmul.mubr.f32.gmra.mrb[0].mxu0 %v239
  %v1269 = vpop.f32.mrb[0].mxu0
  %v1270 = vadd.f32 %v920, %v1269
  %v1271 = vpop.f32.mrb[0].mxu0
  %1272 = vmatprep.mubr.f32.mxu0 %v247
  %1273 = vmatmul.mubr.f32.gmra.mrb[0].mxu0 %v246
  %v1274 = vpop.f32.mrb[0].mxu0
  %v1275 = vadd.f32 %v925, %v1274
  %v1276 = vpop.f32.mrb[0].mxu0
  %1277 = vmatprep.mubr.f32.mxu0 %v254
  %1278 = vmatmul.mubr.f32.gmra.mrb[0].mxu0 %v253
  %v1279 = vpop.f32.mrb[0].mxu0
  %v1280 = vadd.f32 %v930, %v1279
  %v1281 = vpop.f32.mrb[0].mxu0
  %1282 = vmatprep.mubr.f32.mxu0 %v261
  %1283 = vmatmul.mubr.f32.gmra.mrb[0].mxu0 %v260
  %v1284 = vpop.f32.mrb[0].mxu0
  %v1285 = vadd.f32 %v935, %v1284
  %v1286 = vpop.f32.mrb[0].mxu0
  %1287 = vmatprep.mubr.f32.mxu0 %v268
  %1288 = vmatmul.mubr.f32.gmra.mrb[0].mxu0 %v267
  %v1289 = vpop.f32.mrb[0].mxu0
  %v1290 = vadd.f32 %v940, %v1289
  %v1291 = vpop.f32.mrb[0].mxu0
  %1292 = vmatprep.mubr.f32.mxu0 %v275
  %1293 = vmatmul.mubr.f32.gmra.mrb[0].mxu0 %v274
  %v1294 = vpop.f32.mrb[0].mxu0
  %v1295 = vadd.f32 %v945, %v1294
  %v1296 = vpop.f32.mrb[0].mxu0
  %1297 = vmatprep.mubr.f32.mxu0 %v282
  %1298 = vmatmul.mubr.f32.gmra.mrb[0].mxu0 %v281
  %v1299 = vpop.f32.mrb[0].mxu0
  %v1300 = vadd.f32 %v950, %v1299
  %v1301 = vpop.f32.mrb[0].mxu0
  %1302 = vmatprep.mubr.f32.mxu0 %v289
  %1303 = vmatmul.mubr.f32.gmra.mrb[0].mxu0 %v288
  %v1304 = vpop.f32.mrb[0].mxu0
  %v1305 = vadd.f32 %v955, %v1304
  %v1306 = vpop.f32.mrb[0].mxu0
  %1307 = vmatprep.mubr.f32.mxu0 %v296
  %1308 = vmatmul.mubr.f32.gmra.mrb[0].mxu0 %v295
  %v1309 = vpop.f32.mrb[0].mxu0
  %v1310 = vadd.f32 %v960, %v1309
  %v1311 = vpop.f32.mrb[0].mxu0
  %1312 = vmatprep.mubr.f32.mxu0 %v303
  %1313 = vmatmul.mubr.f32.gmra.mrb[0].mxu0 %v302
  %v1314 = vpop.f32.mrb[0].mxu0
  %v1315 = vadd.f32 %v965, %v1314
  %v1316 = vpop.f32.mrb[0].mxu0
  %1317 = vmatprep.mubr.f32.mxu0 %v310
  %1318 = vmatmul.mubr.f32.gmra.mrb[0].mxu0 %v309
  %v1319 = vpop.f32.mrb[0].mxu0
  %v1320 = vadd.f32 %v970, %v1319
  %v1321 = vpop.f32.mrb[0].mxu0
  %1322 = vmatprep.mubr.f32.mxu0 %v317
  %1323 = vmatmul.mubr.f32.gmra.mrb[0].mxu0 %v316
  %v1324 = vpop.f32.mrb[0].mxu0
  %v1325 = vadd.f32 %v975, %v1324
  %v1326 = vpop.f32.mrb[0].mxu0
  %1327 = vmatprep.mubr.f32.mxu0 %v324
  %1328 = vmatmul.mubr.f32.gmra.mrb[0].mxu0 %v323
  %v1329 = vpop.f32.mrb[0].mxu0
  %v1330 = vadd.f32 %v980, %v1329
  %v1331 = vpop.f32.mrb[0].mxu0
  %1332 = vmatprep.mubr.f32.mxu0 %v331
  %1333 = vmatmul.mubr.f32.gmra.mrb[0].mxu0 %v330
  %v1334 = vpop.f32.mrb[0].mxu0
  %v1335 = vadd.f32 %v985, %v1334
  %v1336 = vpop.f32.mrb[0].mxu0
  %1337 = vmatprep.mubr.f32.mxu0 %v338
  %1338 = vmatmul.mubr.f32.gmra.mrb[0].mxu0 %v337
  %v1339 = vpop.f32.mrb[0].mxu0
  %v1340 = vadd.f32 %v990, %v1339
  %v1341 = vpop.f32.mrb[0].mxu0
  %1342 = vmatprep.mubr.f32.mxu0 %v345
  %1343 = vmatmul.mubr.f32.gmra.mrb[0].mxu0 %v344
  %v1344 = vpop.f32.mrb[0].mxu0
  %v1345 = vadd.f32 %v995, %v1344
  %v1346 = vpop.f32.mrb[0].mxu0
  %1347 = vmatprep.mubr.f32.mxu0 %v352
  %1348 = vmatmul.mubr.f32.gmra.mrb[0].mxu0 %v351
  %v1349 = vpop.f32.mrb[0].mxu0
  %v1350 = vadd.f32 %v1000, %v1349
  %v1351 = vpop.f32.mrb[0].mxu0
  %1352 = vmatprep.mubr.f32.mxu0 %v359
  %1353 = vmatmul.mubr.f32.gmra.mrb[0].mxu0 %v358
  %v1354 = vpop.f32.mrb[0].mxu0
  %v1355 = vadd.f32 %v1005, %v1354
  %v1356 = vpop.f32.mrb[0].mxu0
  %1357 = vmatprep.mubr.f32.mxu0 %v366
  %1358 = vmatmul.mubr.f32.gmra.mrb[0].mxu0 %v365
  %v1359 = vpop.f32.mrb[0].mxu0
  %v1360 = vadd.f32 %v1010, %v1359
  %v1361 = vpop.f32.mrb[0].mxu0
  %1362 = vmatprep.mubr.f32.mxu0 %v373
  %1363 = vmatmul.mubr.f32.gmra.mrb[0].mxu0 %v372
  %v1364 = vpop.f32.mrb[0].mxu0
  %v1365 = vadd.f32 %v1015, %v1364
  %v1366 = vpop.f32.mrb[0].mxu0
  %1367 = vmatprep.mubr.f32.mxu0 %v380
  %1368 = vmatmul.mubr.f32.gmra.mrb[0].mxu0 %v379
  %v1369 = vpop.f32.mrb[0].mxu0
  %v1370 = vadd.f32 %v1020, %v1369
  %v1371 = vpop.f32.mrb[0].mxu0
  %1372 = vmatprep.mubr.f32.mxu0 %v387
  %1373 = vmatmul.mubr.f32.gmra.mrb[0].mxu0 %v386
  %v1374 = vpop.f32.mrb[0].mxu0
  %v1375 = vadd.f32 %v1025, %v1374
  %v1376 = vpop.f32.mrb[0].mxu0
  %1377 = vmatprep.mubr.f32.mxu0 %v394
  %1378 = vmatmul.mubr.f32.gmra.mrb[0].mxu0 %v393
  %v1379 = vpop.f32.mrb[0].mxu0
  %v1380 = vadd.f32 %v1030, %v1379
  %v1381 = vpop.f32.mrb[0].mxu0
  %1382 = vmatprep.mubr.f32.mxu0 %v401
  %1383 = vmatmul.mubr.f32.gmra.mrb[0].mxu0 %v400
  %v1384 = vpop.f32.mrb[0].mxu0
  %v1385 = vadd.f32 %v1035, %v1384
  %v1386 = vpop.f32.mrb[0].mxu0
  %1387 = vmatprep.mubr.f32.mxu0 %v408
  %1388 = vmatmul.mubr.f32.gmra.mrb[0].mxu0 %v407
  %v1389 = vpop.f32.mrb[0].mxu0
  %v1390 = vadd.f32 %v1040, %v1389
  %v1391 = vpop.f32.mrb[0].mxu0
  %1392 = vmatprep.mubr.f32.mxu0 %v415
  %1393 = vmatmul.mubr.f32.gmra.mrb[0].mxu0 %v414
  %v1394 = vpop.f32.mrb[0].mxu0
  %v1395 = vadd.f32 %v1045, %v1394
  %v1396 = vpop.f32.mrb[0].mxu0
  %1397 = vdwg.mxu0
  %1398 = vmatprep.subr.mxu0 0.0
  %1399 = vmatpush1.msra.mxu0 %v483
  %1400 = vmatprep.subr.mxu0 0.0
  %1401 = vmatpush1.msra.mxu0 %v484
  %1402 = vmatprep.subr.mxu0 0.0
  %1403 = vmatpush1.msra.mxu0 %v485
  %1404 = vmatprep.subr.mxu0 0.0
  %1405 = vmatpush1.msra.mxu0 %v486
  %1406 = vmatprep.subr.mxu0 0.0
  %1407 = vmatpush1.msra.mxu0 %v487
  %1408 = vmatprep.subr.mxu0 0.0
  %1409 = vmatpush1.msra.mxu0 %v488
  %1410 = vmatprep.subr.mxu0 0.0
  %1411 = vmatpush1.msra.mxu0 %v489
  %1412 = vmatprep.subr.mxu0 0.0
  %1413 = vmatpush1.msra.mxu0 %v490
  %1414 = vmatprep.subr.mxu0 0.0
  %1415 = vmatpush1.msra.mxu0 %v491
  %1416 = vmatprep.subr.mxu0 0.0
  %1417 = vmatpush1.msra.mxu0 %v492
  %1418 = vmatprep.subr.mxu0 0.0
  %1419 = vmatpush1.msra.mxu0 %v493
  %1420 = vmatprep.subr.mxu0 0.0
  %1421 = vmatpush1.msra.mxu0 %v494
  %1422 = vmatprep.subr.mxu0 0.0
  %1423 = vmatpush1.msra.mxu0 %v495
  %1424 = vmatprep.subr.mxu0 0.0
  %1425 = vmatpush1.msra.mxu0 %v496
  %1426 = vmatprep.subr.mxu0 0.0
  %1427 = vmatpush1.msra.mxu0 %v497
  %1428 = vmatprep.subr.mxu0 0.0
  %1429 = vmatpush1.msra.mxu0 %v498
  %1430 = vmatprep.subr.mxu0 0.0
  %1431 = vmatpush1.msra.mxu0 %v499
  %1432 = vmatprep.subr.mxu0 0.0
  %1433 = vmatpush1.msra.mxu0 %v500
  %1434 = vmatprep.subr.mxu0 0.0
  %1435 = vmatpush1.msra.mxu0 %v501
  %1436 = vmatprep.subr.mxu0 0.0
  %1437 = vmatpush1.msra.mxu0 %v502
  %1438 = vmatprep.subr.mxu0 0.0
  %1439 = vmatpush1.msra.mxu0 %v503
  %1440 = vmatprep.subr.mxu0 0.0
  %1441 = vmatpush1.msra.mxu0 %v504
  %1442 = vmatprep.subr.mxu0 0.0
  %1443 = vmatpush1.msra.mxu0 %v505
  %1444 = vmatprep.subr.mxu0 0.0
  %1445 = vmatpush1.msra.mxu0 %v506
  %1446 = vmatprep.subr.mxu0 0.0
  %1447 = vmatpush1.msra.mxu0 %v507
  %1448 = vmatprep.subr.mxu0 0.0
  %1449 = vmatpush1.msra.mxu0 %v508
  %1450 = vmatprep.subr.mxu0 0.0
  %1451 = vmatpush1.msra.mxu0 %v509
  %1452 = vmatprep.subr.mxu0 0.0
  %1453 = vmatpush1.msra.mxu0 %v510
  %1454 = vmatprep.subr.mxu0 0.0
  %1455 = vmatpush1.msra.mxu0 %v511
  %1456 = vmatprep.subr.mxu0 0.0
  %1457 = vmatpush1.msra.mxu0 %v512
  %1458 = vmatprep.subr.mxu0 0.0
  %1459 = vmatpush1.msra.mxu0 %v513
  %1460 = vmatprep.subr.mxu0 0.0
  %1461 = vmatpush1.msra.mxu0 %v514
  %1462 = vmatprep.mubr.f32.mxu0 %v25
  %1463 = vmatmul.mubr.f32.gmra.mrb[0].mxu0 %v24
  %v1464 = vpop.f32.mrb[0].mxu0
  %v1465 = vadd.f32 %v1115, %v1464
  %v1466 = vpop.f32.mrb[0].mxu0
  %1467 = vmatprep.mubr.f32.mxu0 %v32
  %1468 = vmatmul.mubr.f32.gmra.mrb[0].mxu0 %v31
  %v1469 = vpop.f32.mrb[0].mxu0
  %v1470 = vadd.f32 %v1120, %v1469
  %v1471 = vpop.f32.mrb[0].mxu0
  %1472 = vmatprep.mubr.f32.mxu0 %v39
  %1473 = vmatmul.mubr.f32.gmra.mrb[0].mxu0 %v38
  %v1474 = vpop.f32.mrb[0].mxu0
  %v1475 = vadd.f32 %v1125, %v1474
  %v1476 = vpop.f32.mrb[0].mxu0
  %1477 = vmatprep.mubr.f32.mxu0 %v46
  %1478 = vmatmul.mubr.f32.gmra.mrb[0].mxu0 %v45
  %v1479 = vpop.f32.mrb[0].mxu0
  %v1480 = vadd.f32 %v1130, %v1479
  %v1481 = vpop.f32.mrb[0].mxu0
  %1482 = vmatprep.mubr.f32.mxu0 %v53
  %1483 = vmatmul.mubr.f32.gmra.mrb[0].mxu0 %v52
  %v1484 = vpop.f32.mrb[0].mxu0
  %v1485 = vadd.f32 %v1135, %v1484
  %v1486 = vpop.f32.mrb[0].mxu0
  %1487 = vmatprep.mubr.f32.mxu0 %v60
  %1488 = vmatmul.mubr.f32.gmra.mrb[0].mxu0 %v59
  %v1489 = vpop.f32.mrb[0].mxu0
  %v1490 = vadd.f32 %v1140, %v1489
  %v1491 = vpop.f32.mrb[0].mxu0
  %1492 = vmatprep.mubr.f32.mxu0 %v67
  %1493 = vmatmul.mubr.f32.gmra.mrb[0].mxu0 %v66
  %v1494 = vpop.f32.mrb[0].mxu0
  %v1495 = vadd.f32 %v1145, %v1494
  %v1496 = vpop.f32.mrb[0].mxu0
  %1497 = vmatprep.mubr.f32.mxu0 %v74
  %1498 = vmatmul.mubr.f32.gmra.mrb[0].mxu0 %v73
  %v1499 = vpop.f32.mrb[0].mxu0
  %v1500 = vadd.f32 %v1150, %v1499
  %v1501 = vpop.f32.mrb[0].mxu0
  %1502 = vmatprep.mubr.f32.mxu0 %v81
  %1503 = vmatmul.mubr.f32.gmra.mrb[0].mxu0 %v80
  %v1504 = vpop.f32.mrb[0].mxu0
  %v1505 = vadd.f32 %v1155, %v1504
  %v1506 = vpop.f32.mrb[0].mxu0
  %1507 = vmatprep.mubr.f32.mxu0 %v88
  %1508 = vmatmul.mubr.f32.gmra.mrb[0].mxu0 %v87
  %v1509 = vpop.f32.mrb[0].mxu0
  %v1510 = vadd.f32 %v1160, %v1509
  %v1511 = vpop.f32.mrb[0].mxu0
  %1512 = vmatprep.mubr.f32.mxu0 %v95
  %1513 = vmatmul.mubr.f32.gmra.mrb[0].mxu0 %v94
  %v1514 = vpop.f32.mrb[0].mxu0
  %v1515 = vadd.f32 %v1165, %v1514
  %v1516 = vpop.f32.mrb[0].mxu0
  %1517 = vmatprep.mubr.f32.mxu0 %v102
  %1518 = vmatmul.mubr.f32.gmra.mrb[0].mxu0 %v101
  %v1519 = vpop.f32.mrb[0].mxu0
  %v1520 = vadd.f32 %v1170, %v1519
  %v1521 = vpop.f32.mrb[0].mxu0
  %1522 = vmatprep.mubr.f32.mxu0 %v109
  %1523 = vmatmul.mubr.f32.gmra.mrb[0].mxu0 %v108
  %v1524 = vpop.f32.mrb[0].mxu0
  %v1525 = vadd.f32 %v1175, %v1524
  %v1526 = vpop.f32.mrb[0].mxu0
  %1527 = vmatprep.mubr.f32.mxu0 %v116
  %1528 = vmatmul.mubr.f32.gmra.mrb[0].mxu0 %v115
  %v1529 = vpop.f32.mrb[0].mxu0
  %v1530 = vadd.f32 %v1180, %v1529
  %v1531 = vpop.f32.mrb[0].mxu0
  %1532 = vmatprep.mubr.f32.mxu0 %v123
  %1533 = vmatmul.mubr.f32.gmra.mrb[0].mxu0 %v122
  %v1534 = vpop.f32.mrb[0].mxu0
  %v1535 = vadd.f32 %v1185, %v1534
  %v1536 = vpop.f32.mrb[0].mxu0
  %1537 = vmatprep.mubr.f32.mxu0 %v130
  %1538 = vmatmul.mubr.f32.gmra.mrb[0].mxu0 %v129
  %v1539 = vpop.f32.mrb[0].mxu0
  %v1540 = vadd.f32 %v1190, %v1539
  %v1541 = vpop.f32.mrb[0].mxu0
  %1542 = vmatprep.mubr.f32.mxu0 %v137
  %1543 = vmatmul.mubr.f32.gmra.mrb[0].mxu0 %v136
  %v1544 = vpop.f32.mrb[0].mxu0
  %v1545 = vadd.f32 %v1195, %v1544
  %v1546 = vpop.f32.mrb[0].mxu0
  %1547 = vmatprep.mubr.f32.mxu0 %v144
  %1548 = vmatmul.mubr.f32.gmra.mrb[0].mxu0 %v143
  %v1549 = vpop.f32.mrb[0].mxu0
  %v1550 = vadd.f32 %v1200, %v1549
  %v1551 = vpop.f32.mrb[0].mxu0
  %1552 = vmatprep.mubr.f32.mxu0 %v151
  %1553 = vmatmul.mubr.f32.gmra.mrb[0].mxu0 %v150
  %v1554 = vpop.f32.mrb[0].mxu0
  %v1555 = vadd.f32 %v1205, %v1554
  %v1556 = vpop.f32.mrb[0].mxu0
  %1557 = vmatprep.mubr.f32.mxu0 %v158
  %1558 = vmatmul.mubr.f32.gmra.mrb[0].mxu0 %v157
  %v1559 = vpop.f32.mrb[0].mxu0
  %v1560 = vadd.f32 %v1210, %v1559
  %v1561 = vpop.f32.mrb[0].mxu0
  %1562 = vmatprep.mubr.f32.mxu0 %v165
  %1563 = vmatmul.mubr.f32.gmra.mrb[0].mxu0 %v164
  %v1564 = vpop.f32.mrb[0].mxu0
  %v1565 = vadd.f32 %v1215, %v1564
  %v1566 = vpop.f32.mrb[0].mxu0
  %1567 = vmatprep.mubr.f32.mxu0 %v172
  %1568 = vmatmul.mubr.f32.gmra.mrb[0].mxu0 %v171
  %v1569 = vpop.f32.mrb[0].mxu0
  %v1570 = vadd.f32 %v1220, %v1569
  %v1571 = vpop.f32.mrb[0].mxu0
  %1572 = vmatprep.mubr.f32.mxu0 %v179
  %1573 = vmatmul.mubr.f32.gmra.mrb[0].mxu0 %v178
  %v1574 = vpop.f32.mrb[0].mxu0
  %v1575 = vadd.f32 %v1225, %v1574
  %v1576 = vpop.f32.mrb[0].mxu0
  %1577 = vmatprep.mubr.f32.mxu0 %v186
  %1578 = vmatmul.mubr.f32.gmra.mrb[0].mxu0 %v185
  %v1579 = vpop.f32.mrb[0].mxu0
  %v1580 = vadd.f32 %v1230, %v1579
  %v1581 = vpop.f32.mrb[0].mxu0
  %1582 = vmatprep.mubr.f32.mxu0 %v193
  %1583 = vmatmul.mubr.f32.gmra.mrb[0].mxu0 %v192
  %v1584 = vpop.f32.mrb[0].mxu0
  %v1585 = vadd.f32 %v1235, %v1584
  %v1586 = vpop.f32.mrb[0].mxu0
  %1587 = vmatprep.mubr.f32.mxu0 %v200
  %1588 = vmatmul.mubr.f32.gmra.mrb[0].mxu0 %v199
  %v1589 = vpop.f32.mrb[0].mxu0
  %v1590 = vadd.f32 %v1240, %v1589
  %v1591 = vpop.f32.mrb[0].mxu0
  %1592 = vmatprep.mubr.f32.mxu0 %v207
  %1593 = vmatmul.mubr.f32.gmra.mrb[0].mxu0 %v206
  %v1594 = vpop.f32.mrb[0].mxu0
  %v1595 = vadd.f32 %v1245, %v1594
  %v1596 = vpop.f32.mrb[0].mxu0
  %1597 = vmatprep.mubr.f32.mxu0 %v214
  %1598 = vmatmul.mubr.f32.gmra.mrb[0].mxu0 %v213
  %v1599 = vpop.f32.mrb[0].mxu0
  %v1600 = vadd.f32 %v1250, %v1599
  %v1601 = vpop.f32.mrb[0].mxu0
  %1602 = vmatprep.mubr.f32.mxu0 %v221
  %1603 = vmatmul.mubr.f32.gmra.mrb[0].mxu0 %v220
  %v1604 = vpop.f32.mrb[0].mxu0
  %v1605 = vadd.f32 %v1255, %v1604
  %v1606 = vpop.f32.mrb[0].mxu0
  %1607 = vmatprep.mubr.f32.mxu0 %v228
  %1608 = vmatmul.mubr.f32.gmra.mrb[0].mxu0 %v227
  %v1609 = vpop.f32.mrb[0].mxu0
  %v1610 = vadd.f32 %v1260, %v1609
  %v1611 = vpop.f32.mrb[0].mxu0
  %1612 = vmatprep.mubr.f32.mxu0 %v235
  %1613 = vmatmul.mubr.f32.gmra.mrb[0].mxu0 %v234
  %v1614 = vpop.f32.mrb[0].mxu0
  %v1615 = vadd.f32 %v1265, %v1614
  %v1616 = vpop.f32.mrb[0].mxu0
  %1617 = vmatprep.mubr.f32.mxu0 %v242
  %1618 = vmatmul.mubr.f32.gmra.mrb[0].mxu0 %v241
  %v1619 = vpop.f32.mrb[0].mxu0
  %v1620 = vadd.f32 %v1270, %v1619
  %v1621 = vpop.f32.mrb[0].mxu0
  %1622 = vmatprep.mubr.f32.mxu0 %v249
  %1623 = vmatmul.mubr.f32.gmra.mrb[0].mxu0 %v248
  %v1624 = vpop.f32.mrb[0].mxu0
  %v1625 = vadd.f32 %v1275, %v1624
  %v1626 = vpop.f32.mrb[0].mxu0
  %1627 = vmatprep.mubr.f32.mxu0 %v256
  %1628 = vmatmul.mubr.f32.gmra.mrb[0].mxu0 %v255
  %v1629 = vpop.f32.mrb[0].mxu0
  %v1630 = vadd.f32 %v1280, %v1629
  %v1631 = vpop.f32.mrb[0].mxu0
  %1632 = vmatprep.mubr.f32.mxu0 %v263
  %1633 = vmatmul.mubr.f32.gmra.mrb[0].mxu0 %v262
  %v1634 = vpop.f32.mrb[0].mxu0
  %v1635 = vadd.f32 %v1285, %v1634
  %v1636 = vpop.f32.mrb[0].mxu0
  %1637 = vmatprep.mubr.f32.mxu0 %v270
  %1638 = vmatmul.mubr.f32.gmra.mrb[0].mxu0 %v269
  %v1639 = vpop.f32.mrb[0].mxu0
  %v1640 = vadd.f32 %v1290, %v1639
  %v1641 = vpop.f32.mrb[0].mxu0
  %1642 = vmatprep.mubr.f32.mxu0 %v277
  %1643 = vmatmul.mubr.f32.gmra.mrb[0].mxu0 %v276
  %v1644 = vpop.f32.mrb[0].mxu0
  %v1645 = vadd.f32 %v1295, %v1644
  %v1646 = vpop.f32.mrb[0].mxu0
  %1647 = vmatprep.mubr.f32.mxu0 %v284
  %1648 = vmatmul.mubr.f32.gmra.mrb[0].mxu0 %v283
  %v1649 = vpop.f32.mrb[0].mxu0
  %v1650 = vadd.f32 %v1300, %v1649
  %v1651 = vpop.f32.mrb[0].mxu0
  %1652 = vmatprep.mubr.f32.mxu0 %v291
  %1653 = vmatmul.mubr.f32.gmra.mrb[0].mxu0 %v290
  %v1654 = vpop.f32.mrb[0].mxu0
  %v1655 = vadd.f32 %v1305, %v1654
  %v1656 = vpop.f32.mrb[0].mxu0
  %1657 = vmatprep.mubr.f32.mxu0 %v298
  %1658 = vmatmul.mubr.f32.gmra.mrb[0].mxu0 %v297
  %v1659 = vpop.f32.mrb[0].mxu0
  %v1660 = vadd.f32 %v1310, %v1659
  %v1661 = vpop.f32.mrb[0].mxu0
  %1662 = vmatprep.mubr.f32.mxu0 %v305
  %1663 = vmatmul.mubr.f32.gmra.mrb[0].mxu0 %v304
  %v1664 = vpop.f32.mrb[0].mxu0
  %v1665 = vadd.f32 %v1315, %v1664
  %v1666 = vpop.f32.mrb[0].mxu0
  %1667 = vmatprep.mubr.f32.mxu0 %v312
  %1668 = vmatmul.mubr.f32.gmra.mrb[0].mxu0 %v311
  %v1669 = vpop.f32.mrb[0].mxu0
  %v1670 = vadd.f32 %v1320, %v1669
  %v1671 = vpop.f32.mrb[0].mxu0
  %1672 = vmatprep.mubr.f32.mxu0 %v319
  %1673 = vmatmul.mubr.f32.gmra.mrb[0].mxu0 %v318
  %v1674 = vpop.f32.mrb[0].mxu0
  %v1675 = vadd.f32 %v1325, %v1674
  %v1676 = vpop.f32.mrb[0].mxu0
  %1677 = vmatprep.mubr.f32.mxu0 %v326
  %1678 = vmatmul.mubr.f32.gmra.mrb[0].mxu0 %v325
  %v1679 = vpop.f32.mrb[0].mxu0
  %v1680 = vadd.f32 %v1330, %v1679
  %v1681 = vpop.f32.mrb[0].mxu0
  %1682 = vmatprep.mubr.f32.mxu0 %v333
  %1683 = vmatmul.mubr.f32.gmra.mrb[0].mxu0 %v332
  %v1684 = vpop.f32.mrb[0].mxu0
  %v1685 = vadd.f32 %v1335, %v1684
  %v1686 = vpop.f32.mrb[0].mxu0
  %1687 = vmatprep.mubr.f32.mxu0 %v340
  %1688 = vmatmul.mubr.f32.gmra.mrb[0].mxu0 %v339
  %v1689 = vpop.f32.mrb[0].mxu0
  %v1690 = vadd.f32 %v1340, %v1689
  %v1691 = vpop.f32.mrb[0].mxu0
  %1692 = vmatprep.mubr.f32.mxu0 %v347
  %1693 = vmatmul.mubr.f32.gmra.mrb[0].mxu0 %v346
  %v1694 = vpop.f32.mrb[0].mxu0
  %v1695 = vadd.f32 %v1345, %v1694
  %v1696 = vpop.f32.mrb[0].mxu0
  %1697 = vmatprep.mubr.f32.mxu0 %v354
  %1698 = vmatmul.mubr.f32.gmra.mrb[0].mxu0 %v353
  %v1699 = vpop.f32.mrb[0].mxu0
  %v1700 = vadd.f32 %v1350, %v1699
  %v1701 = vpop.f32.mrb[0].mxu0
  %1702 = vmatprep.mubr.f32.mxu0 %v361
  %1703 = vmatmul.mubr.f32.gmra.mrb[0].mxu0 %v360
  %v1704 = vpop.f32.mrb[0].mxu0
  %v1705 = vadd.f32 %v1355, %v1704
  %v1706 = vpop.f32.mrb[0].mxu0
  %1707 = vmatprep.mubr.f32.mxu0 %v368
  %1708 = vmatmul.mubr.f32.gmra.mrb[0].mxu0 %v367
  %v1709 = vpop.f32.mrb[0].mxu0
  %v1710 = vadd.f32 %v1360, %v1709
  %v1711 = vpop.f32.mrb[0].mxu0
  %1712 = vmatprep.mubr.f32.mxu0 %v375
  %1713 = vmatmul.mubr.f32.gmra.mrb[0].mxu0 %v374
  %v1714 = vpop.f32.mrb[0].mxu0
  %v1715 = vadd.f32 %v1365, %v1714
  %v1716 = vpop.f32.mrb[0].mxu0
  %1717 = vmatprep.mubr.f32.mxu0 %v382
  %1718 = vmatmul.mubr.f32.gmra.mrb[0].mxu0 %v381
  %v1719 = vpop.f32.mrb[0].mxu0
  %v1720 = vadd.f32 %v1370, %v1719
  %v1721 = vpop.f32.mrb[0].mxu0
  %1722 = vmatprep.mubr.f32.mxu0 %v389
  %1723 = vmatmul.mubr.f32.gmra.mrb[0].mxu0 %v388
  %v1724 = vpop.f32.mrb[0].mxu0
  %v1725 = vadd.f32 %v1375, %v1724
  %v1726 = vpop.f32.mrb[0].mxu0
  %1727 = vmatprep.mubr.f32.mxu0 %v396
  %1728 = vmatmul.mubr.f32.gmra.mrb[0].mxu0 %v395
  %v1729 = vpop.f32.mrb[0].mxu0
  %v1730 = vadd.f32 %v1380, %v1729
  %v1731 = vpop.f32.mrb[0].mxu0
  %1732 = vmatprep.mubr.f32.mxu0 %v403
  %1733 = vmatmul.mubr.f32.gmra.mrb[0].mxu0 %v402
  %v1734 = vpop.f32.mrb[0].mxu0
  %v1735 = vadd.f32 %v1385, %v1734
  %v1736 = vpop.f32.mrb[0].mxu0
  %1737 = vmatprep.mubr.f32.mxu0 %v410
  %1738 = vmatmul.mubr.f32.gmra.mrb[0].mxu0 %v409
  %v1739 = vpop.f32.mrb[0].mxu0
  %v1740 = vadd.f32 %v1390, %v1739
  %v1741 = vpop.f32.mrb[0].mxu0
  %1742 = vmatprep.mubr.f32.mxu0 %v417
  %1743 = vmatmul.mubr.f32.gmra.mrb[0].mxu0 %v416
  %v1744 = vpop.f32.mrb[0].mxu0
  %v1745 = vadd.f32 %v1395, %v1744
  %v1746 = vpop.f32.mrb[0].mxu0
  %1747 = vdwg.mxu0
  %1748 = vmatprep.subr.mxu0 0.0
  %1749 = vmatpush1.msra.mxu0 %v515
  %1750 = vmatprep.subr.mxu0 0.0
  %1751 = vmatpush1.msra.mxu0 %v516
  %1752 = vmatprep.subr.mxu0 0.0
  %1753 = vmatpush1.msra.mxu0 %v517
  %1754 = vmatprep.subr.mxu0 0.0
  %1755 = vmatpush1.msra.mxu0 %v518
  %1756 = vmatprep.subr.mxu0 0.0
  %1757 = vmatpush1.msra.mxu0 0.0
  %1758 = vmatprep.subr.mxu0 0.0
  %1759 = vmatpush1.msra.mxu0 0.0
  %1760 = vmatprep.subr.mxu0 0.0
  %1761 = vmatpush1.msra.mxu0 0.0
  %1762 = vmatprep.subr.mxu0 0.0
  %1763 = vmatpush1.msra.mxu0 0.0
  %1764 = vmatprep.subr.mxu0 0.0
  %1765 = vmatpush1.msra.mxu0 0.0
  %1766 = vmatprep.subr.mxu0 0.0
  %1767 = vmatpush1.msra.mxu0 0.0
  %1768 = vmatprep.subr.mxu0 0.0
  %1769 = vmatpush1.msra.mxu0 0.0
  %1770 = vmatprep.subr.mxu0 0.0
  %1771 = vmatpush1.msra.mxu0 0.0
  %1772 = vmatprep.subr.mxu0 0.0
  %1773 = vmatpush1.msra.mxu0 0.0
  %1774 = vmatprep.subr.mxu0 0.0
  %1775 = vmatpush1.msra.mxu0 0.0
  %1776 = vmatprep.subr.mxu0 0.0
  %1777 = vmatpush1.msra.mxu0 0.0
  %1778 = vmatprep.subr.mxu0 0.0
  %1779 = vmatpush1.msra.mxu0 0.0
  %1780 = vmatprep.subr.mxu0 0.0
  %1781 = vmatpush1.msra.mxu0 0.0
  %1782 = vmatprep.subr.mxu0 0.0
  %1783 = vmatpush1.msra.mxu0 0.0
  %1784 = vmatprep.subr.mxu0 0.0
  %1785 = vmatpush1.msra.mxu0 0.0
  %1786 = vmatprep.subr.mxu0 0.0
  %1787 = vmatpush1.msra.mxu0 0.0
  %1788 = vmatprep.subr.mxu0 0.0
  %1789 = vmatpush1.msra.mxu0 0.0
  %1790 = vmatprep.subr.mxu0 0.0
  %1791 = vmatpush1.msra.mxu0 0.0
  %1792 = vmatprep.subr.mxu0 0.0
  %1793 = vmatpush1.msra.mxu0 0.0
  %1794 = vmatprep.subr.mxu0 0.0
  %1795 = vmatpush1.msra.mxu0 0.0
  %1796 = vmatprep.subr.mxu0 0.0
  %1797 = vmatpush1.msra.mxu0 0.0
  %1798 = vmatprep.subr.mxu0 0.0
  %1799 = vmatpush1.msra.mxu0 0.0
  %1800 = vmatprep.subr.mxu0 0.0
  %1801 = vmatpush1.msra.mxu0 0.0
  %1802 = vmatprep.subr.mxu0 0.0
  %1803 = vmatpush1.msra.mxu0 0.0
  %1804 = vmatprep.subr.mxu0 0.0
  %1805 = vmatpush1.msra.mxu0 0.0
  %1806 = vmatprep.subr.mxu0 0.0
  %1807 = vmatpush1.msra.mxu0 0.0
  %1808 = vmatprep.subr.mxu0 0.0
  %1809 = vmatpush1.msra.mxu0 0.0
  %1810 = vmatprep.subr.mxu0 0.0
  %1811 = vmatpush1.msra.mxu0 0.0
  %1812 = vmatprep.mubr.f32.mxu0 0.0
  %1813 = vmatmul.mubr.f32.gmra.mrb[0].mxu0 %v528
  %v1814 = vpop.f32.mrb[0].mxu0
  %v1815 = vadd.f32 %v1465, %v1814
  %v1816 = vpop.f32.mrb[0].mxu0
  %1817 = vmatprep.mubr.f32.mxu0 0.0
  %1818 = vmatmul.mubr.f32.gmra.mrb[0].mxu0 %v531
  %v1819 = vpop.f32.mrb[0].mxu0
  %v1820 = vadd.f32 %v1470, %v1819
  %v1821 = vpop.f32.mrb[0].mxu0
  %1822 = vmatprep.mubr.f32.mxu0 0.0
  %1823 = vmatmul.mubr.f32.gmra.mrb[0].mxu0 %v534
  %v1824 = vpop.f32.mrb[0].mxu0
  %v1825 = vadd.f32 %v1475, %v1824
  %v1826 = vpop.f32.mrb[0].mxu0
  %1827 = vmatprep.mubr.f32.mxu0 0.0
  %1828 = vmatmul.mubr.f32.gmra.mrb[0].mxu0 %v537
  %v1829 = vpop.f32.mrb[0].mxu0
  %v1830 = vadd.f32 %v1480, %v1829
  %v1831 = vpop.f32.mrb[0].mxu0
  %1832 = vmatprep.mubr.f32.mxu0 0.0
  %1833 = vmatmul.mubr.f32.gmra.mrb[0].mxu0 %v540
  %v1834 = vpop.f32.mrb[0].mxu0
  %v1835 = vadd.f32 %v1485, %v1834
  %v1836 = vpop.f32.mrb[0].mxu0
  %1837 = vmatprep.mubr.f32.mxu0 0.0
  %1838 = vmatmul.mubr.f32.gmra.mrb[0].mxu0 %v543
  %v1839 = vpop.f32.mrb[0].mxu0
  %v1840 = vadd.f32 %v1490, %v1839
  %v1841 = vpop.f32.mrb[0].mxu0
  %1842 = vmatprep.mubr.f32.mxu0 0.0
  %1843 = vmatmul.mubr.f32.gmra.mrb[0].mxu0 %v546
  %v1844 = vpop.f32.mrb[0].mxu0
  %v1845 = vadd.f32 %v1495, %v1844
  %v1846 = vpop.f32.mrb[0].mxu0
  %1847 = vmatprep.mubr.f32.mxu0 0.0
  %1848 = vmatmul.mubr.f32.gmra.mrb[0].mxu0 %v549
  %v1849 = vpop.f32.mrb[0].mxu0
  %v1850 = vadd.f32 %v1500, %v1849
  %v1851 = vpop.f32.mrb[0].mxu0
  %1852 = vmatprep.mubr.f32.mxu0 0.0
  %1853 = vmatmul.mubr.f32.gmra.mrb[0].mxu0 %v552
  %v1854 = vpop.f32.mrb[0].mxu0
  %v1855 = vadd.f32 %v1505, %v1854
  %v1856 = vpop.f32.mrb[0].mxu0
  %1857 = vmatprep.mubr.f32.mxu0 0.0
  %1858 = vmatmul.mubr.f32.gmra.mrb[0].mxu0 %v555
  %v1859 = vpop.f32.mrb[0].mxu0
  %v1860 = vadd.f32 %v1510, %v1859
  %v1861 = vpop.f32.mrb[0].mxu0
  %1862 = vmatprep.mubr.f32.mxu0 0.0
  %1863 = vmatmul.mubr.f32.gmra.mrb[0].mxu0 %v558
  %v1864 = vpop.f32.mrb[0].mxu0
  %v1865 = vadd.f32 %v1515, %v1864
  %v1866 = vpop.f32.mrb[0].mxu0
  %1867 = vmatprep.mubr.f32.mxu0 0.0
  %1868 = vmatmul.mubr.f32.gmra.mrb[0].mxu0 %v561
  %v1869 = vpop.f32.mrb[0].mxu0
  %v1870 = vadd.f32 %v1520, %v1869
  %v1871 = vpop.f32.mrb[0].mxu0
  %1872 = vmatprep.mubr.f32.mxu0 0.0
  %1873 = vmatmul.mubr.f32.gmra.mrb[0].mxu0 %v564
  %v1874 = vpop.f32.mrb[0].mxu0
  %v1875 = vadd.f32 %v1525, %v1874
  %v1876 = vpop.f32.mrb[0].mxu0
  %1877 = vmatprep.mubr.f32.mxu0 0.0
  %1878 = vmatmul.mubr.f32.gmra.mrb[0].mxu0 %v567
  %v1879 = vpop.f32.mrb[0].mxu0
  %v1880 = vadd.f32 %v1530, %v1879
  %v1881 = vpop.f32.mrb[0].mxu0
  %1882 = vmatprep.mubr.f32.mxu0 0.0
  %1883 = vmatmul.mubr.f32.gmra.mrb[0].mxu0 %v570
  %v1884 = vpop.f32.mrb[0].mxu0
  %v1885 = vadd.f32 %v1535, %v1884
  %v1886 = vpop.f32.mrb[0].mxu0
  %1887 = vmatprep.mubr.f32.mxu0 0.0
  %1888 = vmatmul.mubr.f32.gmra.mrb[0].mxu0 %v573
  %v1889 = vpop.f32.mrb[0].mxu0
  %v1890 = vadd.f32 %v1540, %v1889
  %v1891 = vpop.f32.mrb[0].mxu0
  %1892 = vmatprep.mubr.f32.mxu0 0.0
  %1893 = vmatmul.mubr.f32.gmra.mrb[0].mxu0 %v576
  %v1894 = vpop.f32.mrb[0].mxu0
  %v1895 = vadd.f32 %v1545, %v1894
  %v1896 = vpop.f32.mrb[0].mxu0
  %1897 = vmatprep.mubr.f32.mxu0 0.0
  %1898 = vmatmul.mubr.f32.gmra.mrb[0].mxu0 %v579
  %v1899 = vpop.f32.mrb[0].mxu0
  %v1900 = vadd.f32 %v1550, %v1899
  %v1901 = vpop.f32.mrb[0].mxu0
  %1902 = vmatprep.mubr.f32.mxu0 0.0
  %1903 = vmatmul.mubr.f32.gmra.mrb[0].mxu0 %v582
  %v1904 = vpop.f32.mrb[0].mxu0
  %v1905 = vadd.f32 %v1555, %v1904
  %v1906 = vpop.f32.mrb[0].mxu0
  %1907 = vmatprep.mubr.f32.mxu0 0.0
  %1908 = vmatmul.mubr.f32.gmra.mrb[0].mxu0 %v585
  %v1909 = vpop.f32.mrb[0].mxu0
  %v1910 = vadd.f32 %v1560, %v1909
  %v1911 = vpop.f32.mrb[0].mxu0
  %1912 = vmatprep.mubr.f32.mxu0 0.0
  %1913 = vmatmul.mubr.f32.gmra.mrb[0].mxu0 %v588
  %v1914 = vpop.f32.mrb[0].mxu0
  %v1915 = vadd.f32 %v1565, %v1914
  %v1916 = vpop.f32.mrb[0].mxu0
  %1917 = vmatprep.mubr.f32.mxu0 0.0
  %1918 = vmatmul.mubr.f32.gmra.mrb[0].mxu0 %v591
  %v1919 = vpop.f32.mrb[0].mxu0
  %v1920 = vadd.f32 %v1570, %v1919
  %v1921 = vpop.f32.mrb[0].mxu0
  %1922 = vmatprep.mubr.f32.mxu0 0.0
  %1923 = vmatmul.mubr.f32.gmra.mrb[0].mxu0 %v594
  %v1924 = vpop.f32.mrb[0].mxu0
  %v1925 = vadd.f32 %v1575, %v1924
  %v1926 = vpop.f32.mrb[0].mxu0
  %1927 = vmatprep.mubr.f32.mxu0 0.0
  %1928 = vmatmul.mubr.f32.gmra.mrb[0].mxu0 %v597
  %v1929 = vpop.f32.mrb[0].mxu0
  %v1930 = vadd.f32 %v1580, %v1929
  %v1931 = vpop.f32.mrb[0].mxu0
  %1932 = vmatprep.mubr.f32.mxu0 0.0
  %1933 = vmatmul.mubr.f32.gmra.mrb[0].mxu0 %v600
  %v1934 = vpop.f32.mrb[0].mxu0
  %v1935 = vadd.f32 %v1585, %v1934
  %v1936 = vpop.f32.mrb[0].mxu0
  %1937 = vmatprep.mubr.f32.mxu0 0.0
  %1938 = vmatmul.mubr.f32.gmra.mrb[0].mxu0 %v603
  %v1939 = vpop.f32.mrb[0].mxu0
  %v1940 = vadd.f32 %v1590, %v1939
  %v1941 = vpop.f32.mrb[0].mxu0
  %1942 = vmatprep.mubr.f32.mxu0 0.0
  %1943 = vmatmul.mubr.f32.gmra.mrb[0].mxu0 %v606
  %v1944 = vpop.f32.mrb[0].mxu0
  %v1945 = vadd.f32 %v1595, %v1944
  %v1946 = vpop.f32.mrb[0].mxu0
  %1947 = vmatprep.mubr.f32.mxu0 0.0
  %1948 = vmatmul.mubr.f32.gmra.mrb[0].mxu0 %v609
  %v1949 = vpop.f32.mrb[0].mxu0
  %v1950 = vadd.f32 %v1600, %v1949
  %v1951 = vpop.f32.mrb[0].mxu0
  %1952 = vmatprep.mubr.f32.mxu0 0.0
  %1953 = vmatmul.mubr.f32.gmra.mrb[0].mxu0 %v612
  %v1954 = vpop.f32.mrb[0].mxu0
  %v1955 = vadd.f32 %v1605, %v1954
  %v1956 = vpop.f32.mrb[0].mxu0
  %1957 = vmatprep.mubr.f32.mxu0 0.0
  %1958 = vmatmul.mubr.f32.gmra.mrb[0].mxu0 %v615
  %v1959 = vpop.f32.mrb[0].mxu0
  %v1960 = vadd.f32 %v1610, %v1959
  %v1961 = vpop.f32.mrb[0].mxu0
  %1962 = vmatprep.mubr.f32.mxu0 0.0
  %1963 = vmatmul.mubr.f32.gmra.mrb[0].mxu0 %v618
  %v1964 = vpop.f32.mrb[0].mxu0
  %v1965 = vadd.f32 %v1615, %v1964
  %v1966 = vpop.f32.mrb[0].mxu0
  %1967 = vmatprep.mubr.f32.mxu0 0.0
  %1968 = vmatmul.mubr.f32.gmra.mrb[0].mxu0 %v621
  %v1969 = vpop.f32.mrb[0].mxu0
  %v1970 = vadd.f32 %v1620, %v1969
  %v1971 = vpop.f32.mrb[0].mxu0
  %1972 = vmatprep.mubr.f32.mxu0 0.0
  %1973 = vmatmul.mubr.f32.gmra.mrb[0].mxu0 %v624
  %v1974 = vpop.f32.mrb[0].mxu0
  %v1975 = vadd.f32 %v1625, %v1974
  %v1976 = vpop.f32.mrb[0].mxu0
  %1977 = vmatprep.mubr.f32.mxu0 0.0
  %1978 = vmatmul.mubr.f32.gmra.mrb[0].mxu0 %v627
  %v1979 = vpop.f32.mrb[0].mxu0
  %v1980 = vadd.f32 %v1630, %v1979
  %v1981 = vpop.f32.mrb[0].mxu0
  %1982 = vmatprep.mubr.f32.mxu0 0.0
  %1983 = vmatmul.mubr.f32.gmra.mrb[0].mxu0 %v630
  %v1984 = vpop.f32.mrb[0].mxu0
  %v1985 = vadd.f32 %v1635, %v1984
  %v1986 = vpop.f32.mrb[0].mxu0
  %1987 = vmatprep.mubr.f32.mxu0 0.0
  %1988 = vmatmul.mubr.f32.gmra.mrb[0].mxu0 %v633
  %v1989 = vpop.f32.mrb[0].mxu0
  %v1990 = vadd.f32 %v1640, %v1989
  %v1991 = vpop.f32.mrb[0].mxu0
  %1992 = vmatprep.mubr.f32.mxu0 0.0
  %1993 = vmatmul.mubr.f32.gmra.mrb[0].mxu0 %v636
  %v1994 = vpop.f32.mrb[0].mxu0
  %v1995 = vadd.f32 %v1645, %v1994
  %v1996 = vpop.f32.mrb[0].mxu0
  %1997 = vmatprep.mubr.f32.mxu0 0.0
  %1998 = vmatmul.mubr.f32.gmra.mrb[0].mxu0 %v639
  %v1999 = vpop.f32.mrb[0].mxu0
  %v2000 = vadd.f32 %v1650, %v1999
  %v2001 = vpop.f32.mrb[0].mxu0
  %2002 = vmatprep.mubr.f32.mxu0 0.0
  %2003 = vmatmul.mubr.f32.gmra.mrb[0].mxu0 %v642
  %v2004 = vpop.f32.mrb[0].mxu0
  %v2005 = vadd.f32 %v1655, %v2004
  %v2006 = vpop.f32.mrb[0].mxu0
  %2007 = vmatprep.mubr.f32.mxu0 0.0
  %2008 = vmatmul.mubr.f32.gmra.mrb[0].mxu0 %v645
  %v2009 = vpop.f32.mrb[0].mxu0
  %v2010 = vadd.f32 %v1660, %v2009
  %v2011 = vpop.f32.mrb[0].mxu0
  %2012 = vmatprep.mubr.f32.mxu0 0.0
  %2013 = vmatmul.mubr.f32.gmra.mrb[0].mxu0 %v648
  %v2014 = vpop.f32.mrb[0].mxu0
  %v2015 = vadd.f32 %v1665, %v2014
  %v2016 = vpop.f32.mrb[0].mxu0
  %2017 = vmatprep.mubr.f32.mxu0 0.0
  %2018 = vmatmul.mubr.f32.gmra.mrb[0].mxu0 %v651
  %v2019 = vpop.f32.mrb[0].mxu0
  %v2020 = vadd.f32 %v1670, %v2019
  %v2021 = vpop.f32.mrb[0].mxu0
  %2022 = vmatprep.mubr.f32.mxu0 0.0
  %2023 = vmatmul.mubr.f32.gmra.mrb[0].mxu0 %v654
  %v2024 = vpop.f32.mrb[0].mxu0
  %v2025 = vadd.f32 %v1675, %v2024
  %v2026 = vpop.f32.mrb[0].mxu0
  %2027 = vmatprep.mubr.f32.mxu0 0.0
  %2028 = vmatmul.mubr.f32.gmra.mrb[0].mxu0 %v657
  %v2029 = vpop.f32.mrb[0].mxu0
  %v2030 = vadd.f32 %v1680, %v2029
  %v2031 = vpop.f32.mrb[0].mxu0
  %2032 = vmatprep.mubr.f32.mxu0 0.0
  %2033 = vmatmul.mubr.f32.gmra.mrb[0].mxu0 %v660
  %v2034 = vpop.f32.mrb[0].mxu0
  %v2035 = vadd.f32 %v1685, %v2034
  %v2036 = vpop.f32.mrb[0].mxu0
  %2037 = vmatprep.mubr.f32.mxu0 0.0
  %2038 = vmatmul.mubr.f32.gmra.mrb[0].mxu0 %v663
  %v2039 = vpop.f32.mrb[0].mxu0
  %v2040 = vadd.f32 %v1690, %v2039
  %v2041 = vpop.f32.mrb[0].mxu0
  %2042 = vmatprep.mubr.f32.mxu0 0.0
  %2043 = vmatmul.mubr.f32.gmra.mrb[0].mxu0 %v666
  %v2044 = vpop.f32.mrb[0].mxu0
  %v2045 = vadd.f32 %v1695, %v2044
  %v2046 = vpop.f32.mrb[0].mxu0
  %2047 = vmatprep.mubr.f32.mxu0 0.0
  %2048 = vmatmul.mubr.f32.gmra.mrb[0].mxu0 %v669
  %v2049 = vpop.f32.mrb[0].mxu0
  %v2050 = vadd.f32 %v1700, %v2049
  %v2051 = vpop.f32.mrb[0].mxu0
  %2052 = vmatprep.mubr.f32.mxu0 0.0
  %2053 = vmatmul.mubr.f32.gmra.mrb[0].mxu0 %v672
  %v2054 = vpop.f32.mrb[0].mxu0
  %v2055 = vadd.f32 %v1705, %v2054
  %v2056 = vpop.f32.mrb[0].mxu0
  %2057 = vmatprep.mubr.f32.mxu0 0.0
  %2058 = vmatmul.mubr.f32.gmra.mrb[0].mxu0 %v675
  %v2059 = vpop.f32.mrb[0].mxu0
  %v2060 = vadd.f32 %v1710, %v2059
  %v2061 = vpop.f32.mrb[0].mxu0
  %2062 = vmatprep.mubr.f32.mxu0 0.0
  %2063 = vmatmul.mubr.f32.gmra.mrb[0].mxu0 %v678
  %v2064 = vpop.f32.mrb[0].mxu0
  %v2065 = vadd.f32 %v1715, %v2064
  %v2066 = vpop.f32.mrb[0].mxu0
  %2067 = vmatprep.mubr.f32.mxu0 0.0
  %2068 = vmatmul.mubr.f32.gmra.mrb[0].mxu0 %v681
  %v2069 = vpop.f32.mrb[0].mxu0
  %v2070 = vadd.f32 %v1720, %v2069
  %v2071 = vpop.f32.mrb[0].mxu0
  %2072 = vmatprep.mubr.f32.mxu0 0.0
  %2073 = vmatmul.mubr.f32.gmra.mrb[0].mxu0 %v684
  %v2074 = vpop.f32.mrb[0].mxu0
  %v2075 = vadd.f32 %v1725, %v2074
  %v2076 = vpop.f32.mrb[0].mxu0
  %2077 = vmatprep.mubr.f32.mxu0 0.0
  %2078 = vmatmul.mubr.f32.gmra.mrb[0].mxu0 %v687
  %v2079 = vpop.f32.mrb[0].mxu0
  %v2080 = vadd.f32 %v1730, %v2079
  %v2081 = vpop.f32.mrb[0].mxu0
  %2082 = vmatprep.mubr.f32.mxu0 0.0
  %2083 = vmatmul.mubr.f32.gmra.mrb[0].mxu0 %v690
  %v2084 = vpop.f32.mrb[0].mxu0
  %v2085 = vadd.f32 %v1735, %v2084
  %v2086 = vpop.f32.mrb[0].mxu0
  %2087 = vmatprep.mubr.f32.mxu0 0.0
  %2088 = vmatmul.mubr.f32.gmra.mrb[0].mxu0 %v693
  %v2089 = vpop.f32.mrb[0].mxu0
  %v2090 = vadd.f32 %v1740, %v2089
  %v2091 = vpop.f32.mrb[0].mxu0
  %2092 = vmatprep.mubr.f32.mxu0 0.0
  %2093 = vmatmul.mubr.f32.gmra.mrb[0].mxu0 %v696
  %v2094 = vpop.f32.mrb[0].mxu0
  %v2095 = vadd.f32 %v1745, %v2094
  %v2096 = vpop.f32.mrb[0].mxu0
  %2097 = vdwg.mxu0
  %vm2098 = vcmask 523264
  %v2099 = vsel %vm2098, %v1815, 0.0
  %v2100 = vsel %vm2098, %v1820, 0.0
  %v2101 = vadd.f32 %v2099, %v2100
  %v2102 = vsel %vm2098, %v1825, 0.0
  %v2103 = vadd.f32 %v2101, %v2102
  %v2104 = vsel %vm2098, %v1830, 0.0
  %v2105 = vadd.f32 %v2103, %v2104
  %v2106 = vsel %vm2098, %v1835, 0.0
  %v2107 = vadd.f32 %v2105, %v2106
  %v2108 = vsel %vm2098, %v1840, 0.0
  %v2109 = vadd.f32 %v2107, %v2108
  %v2110 = vsel %vm2098, %v1845, 0.0
  %v2111 = vadd.f32 %v2109, %v2110
  %v2112 = vsel %vm2098, %v1850, 0.0
  %v2113 = vadd.f32 %v2111, %v2112
  %v2114 = vsel %vm2098, %v1855, 0.0
  %v2115 = vadd.f32 %v2113, %v2114
  %v2116 = vsel %vm2098, %v1860, 0.0
  %v2117 = vadd.f32 %v2115, %v2116
  %v2118 = vsel %vm2098, %v1865, 0.0
  %v2119 = vadd.f32 %v2117, %v2118
  %v2120 = vsel %vm2098, %v1870, 0.0
  %v2121 = vadd.f32 %v2119, %v2120
  %v2122 = vsel %vm2098, %v1875, 0.0
  %v2123 = vadd.f32 %v2121, %v2122
  %v2124 = vsel %vm2098, %v1880, 0.0
  %v2125 = vadd.f32 %v2123, %v2124
  %v2126 = vsel %vm2098, %v1885, 0.0
  %v2127 = vadd.f32 %v2125, %v2126
  %v2128 = vsel %vm2098, %v1890, 0.0
  %v2129 = vadd.f32 %v2127, %v2128
  %v2130 = vsel %vm2098, %v1895, 0.0
  %v2131 = vadd.f32 %v2129, %v2130
  %v2132 = vsel %vm2098, %v1900, 0.0
  %v2133 = vadd.f32 %v2131, %v2132
  %v2134 = vsel %vm2098, %v1905, 0.0
  %v2135 = vadd.f32 %v2133, %v2134
  %v2136 = vsel %vm2098, %v1910, 0.0
  %v2137 = vadd.f32 %v2135, %v2136
  %v2138 = vsel %vm2098, %v1915, 0.0
  %v2139 = vadd.f32 %v2137, %v2138
  %v2140 = vsel %vm2098, %v1920, 0.0
  %v2141 = vadd.f32 %v2139, %v2140
  %v2142 = vsel %vm2098, %v1925, 0.0
  %v2143 = vadd.f32 %v2141, %v2142
  %v2144 = vsel %vm2098, %v1930, 0.0
  %v2145 = vadd.f32 %v2143, %v2144
  %v2146 = vsel %vm2098, %v1935, 0.0
  %v2147 = vadd.f32 %v2145, %v2146
  %v2148 = vsel %vm2098, %v1940, 0.0
  %v2149 = vadd.f32 %v2147, %v2148
  %v2150 = vsel %vm2098, %v1945, 0.0
  %v2151 = vadd.f32 %v2149, %v2150
  %v2152 = vsel %vm2098, %v1950, 0.0
  %v2153 = vadd.f32 %v2151, %v2152
  %v2154 = vsel %vm2098, %v1955, 0.0
  %v2155 = vadd.f32 %v2153, %v2154
  %v2156 = vsel %vm2098, %v1960, 0.0
  %v2157 = vadd.f32 %v2155, %v2156
  %v2158 = vsel %vm2098, %v1965, 0.0
  %v2159 = vadd.f32 %v2157, %v2158
  %v2160 = vsel %vm2098, %v1970, 0.0
  %v2161 = vadd.f32 %v2159, %v2160
  %v2162 = vsel %vm2098, %v1975, 0.0
  %v2163 = vadd.f32 %v2161, %v2162
  %v2164 = vsel %vm2098, %v1980, 0.0
  %v2165 = vadd.f32 %v2163, %v2164
  %v2166 = vsel %vm2098, %v1985, 0.0
  %v2167 = vadd.f32 %v2165, %v2166
  %v2168 = vsel %vm2098, %v1990, 0.0
  %v2169 = vadd.f32 %v2167, %v2168
  %v2170 = vsel %vm2098, %v1995, 0.0
  %v2171 = vadd.f32 %v2169, %v2170
  %v2172 = vsel %vm2098, %v2000, 0.0
  %v2173 = vadd.f32 %v2171, %v2172
  %v2174 = vsel %vm2098, %v2005, 0.0
  %v2175 = vadd.f32 %v2173, %v2174
  %v2176 = vsel %vm2098, %v2010, 0.0
  %v2177 = vadd.f32 %v2175, %v2176
  %v2178 = vsel %vm2098, %v2015, 0.0
  %v2179 = vadd.f32 %v2177, %v2178
  %v2180 = vsel %vm2098, %v2020, 0.0
  %v2181 = vadd.f32 %v2179, %v2180
  %v2182 = vsel %vm2098, %v2025, 0.0
  %v2183 = vadd.f32 %v2181, %v2182
  %v2184 = vsel %vm2098, %v2030, 0.0
  %v2185 = vadd.f32 %v2183, %v2184
  %v2186 = vsel %vm2098, %v2035, 0.0
  %v2187 = vadd.f32 %v2185, %v2186
  %v2188 = vsel %vm2098, %v2040, 0.0
  %v2189 = vadd.f32 %v2187, %v2188
  %v2190 = vsel %vm2098, %v2045, 0.0
  %v2191 = vadd.f32 %v2189, %v2190
  %v2192 = vsel %vm2098, %v2050, 0.0
  %v2193 = vadd.f32 %v2191, %v2192
  %v2194 = vsel %vm2098, %v2055, 0.0
  %v2195 = vadd.f32 %v2193, %v2194
  %v2196 = vsel %vm2098, %v2060, 0.0
  %v2197 = vadd.f32 %v2195, %v2196
  %v2198 = vsel %vm2098, %v2065, 0.0
  %v2199 = vadd.f32 %v2197, %v2198
  %v2200 = vsel %vm2098, %v2070, 0.0
  %v2201 = vadd.f32 %v2199, %v2200
  %v2202 = vsel %vm2098, %v2075, 0.0
  %v2203 = vadd.f32 %v2201, %v2202
  %v2204 = vsel %vm2098, %v2080, 0.0
  %v2205 = vadd.f32 %v2203, %v2204
  %v2206 = vsel %vm2098, %v2085, 0.0
  %v2207 = vadd.f32 %v2205, %v2206
  %v2208 = vsel %vm2098, %v2090, 0.0
  %v2209 = vadd.f32 %v2207, %v2208
  %vm2210 = vcmask 517120
  %v2211 = vsel %vm2210, %v2095, 0.0
  %v2212 = vadd.f32 %v2209, %v2211
  %v2213 = vrot.slane %v2212, 4
  %v2214 = vadd.f32 %v2212, %v2213
  %v2215 = vrot.slane %v2214, 2
  %v2216 = vadd.f32 %v2214, %v2215
  %v2217 = vrot.slane %v2216, 1
  %v2218 = vadd.f32 %v2216, %v2217
  %v2219 = vmul.f32 %v2218, 0.0022222223
  %v2220 = vmul.f32 %v1815, %v1815
  %v2221 = vmul.f32 %v1820, %v1820
  %v2222 = vmul.f32 %v1825, %v1825
  %v2223 = vmul.f32 %v1830, %v1830
  %v2224 = vmul.f32 %v1835, %v1835
  %v2225 = vmul.f32 %v1840, %v1840
  %v2226 = vmul.f32 %v1845, %v1845
  %v2227 = vmul.f32 %v1850, %v1850
  %v2228 = vmul.f32 %v1855, %v1855
  %v2229 = vmul.f32 %v1860, %v1860
  %v2230 = vmul.f32 %v1865, %v1865
  %v2231 = vmul.f32 %v1870, %v1870
  %v2232 = vmul.f32 %v1875, %v1875
  %v2233 = vmul.f32 %v1880, %v1880
  %v2234 = vmul.f32 %v1885, %v1885
  %v2235 = vmul.f32 %v1890, %v1890
  %v2236 = vmul.f32 %v1895, %v1895
  %v2237 = vmul.f32 %v1900, %v1900
  %v2238 = vmul.f32 %v1905, %v1905
  %v2239 = vmul.f32 %v1910, %v1910
  %v2240 = vmul.f32 %v1915, %v1915
  %v2241 = vmul.f32 %v1920, %v1920
  %v2242 = vmul.f32 %v1925, %v1925
  %v2243 = vmul.f32 %v1930, %v1930
  %v2244 = vmul.f32 %v1935, %v1935
  %v2245 = vmul.f32 %v1940, %v1940
  %v2246 = vmul.f32 %v1945, %v1945
  %v2247 = vmul.f32 %v1950, %v1950
  %v2248 = vmul.f32 %v1955, %v1955
  %v2249 = vmul.f32 %v1960, %v1960
  %v2250 = vmul.f32 %v1965, %v1965
  %v2251 = vmul.f32 %v1970, %v1970
  %v2252 = vmul.f32 %v1975, %v1975
  %v2253 = vmul.f32 %v1980, %v1980
  %v2254 = vmul.f32 %v1985, %v1985
  %v2255 = vmul.f32 %v1990, %v1990
  %v2256 = vmul.f32 %v1995, %v1995
  %v2257 = vmul.f32 %v2000, %v2000
  %v2258 = vmul.f32 %v2005, %v2005
  %v2259 = vmul.f32 %v2010, %v2010
  %v2260 = vmul.f32 %v2015, %v2015
  %v2261 = vmul.f32 %v2020, %v2020
  %v2262 = vmul.f32 %v2025, %v2025
  %v2263 = vmul.f32 %v2030, %v2030
  %v2264 = vmul.f32 %v2035, %v2035
  %v2265 = vmul.f32 %v2040, %v2040
  %v2266 = vmul.f32 %v2045, %v2045
  %v2267 = vmul.f32 %v2050, %v2050
  %v2268 = vmul.f32 %v2055, %v2055
  %v2269 = vmul.f32 %v2060, %v2060
  %v2270 = vmul.f32 %v2065, %v2065
  %v2271 = vmul.f32 %v2070, %v2070
  %v2272 = vmul.f32 %v2075, %v2075
  %v2273 = vmul.f32 %v2080, %v2080
  %v2274 = vmul.f32 %v2085, %v2085
  %v2275 = vmul.f32 %v2090, %v2090
  %v2276 = vmul.f32 %v2095, %v2095
  %v2277 = vsel %vm2098, %v2220, 0.0
  %v2278 = vsel %vm2098, %v2221, 0.0
  %v2279 = vadd.f32 %v2277, %v2278
  %v2280 = vsel %vm2098, %v2222, 0.0
  %v2281 = vadd.f32 %v2279, %v2280
  %v2282 = vsel %vm2098, %v2223, 0.0
  %v2283 = vadd.f32 %v2281, %v2282
  %v2284 = vsel %vm2098, %v2224, 0.0
  %v2285 = vadd.f32 %v2283, %v2284
  %v2286 = vsel %vm2098, %v2225, 0.0
  %v2287 = vadd.f32 %v2285, %v2286
  %v2288 = vsel %vm2098, %v2226, 0.0
  %v2289 = vadd.f32 %v2287, %v2288
  %v2290 = vsel %vm2098, %v2227, 0.0
  %v2291 = vadd.f32 %v2289, %v2290
  %v2292 = vsel %vm2098, %v2228, 0.0
  %v2293 = vadd.f32 %v2291, %v2292
  %v2294 = vsel %vm2098, %v2229, 0.0
  %v2295 = vadd.f32 %v2293, %v2294
  %v2296 = vsel %vm2098, %v2230, 0.0
  %v2297 = vadd.f32 %v2295, %v2296
  %v2298 = vsel %vm2098, %v2231, 0.0
  %v2299 = vadd.f32 %v2297, %v2298
  %v2300 = vsel %vm2098, %v2232, 0.0
  %v2301 = vadd.f32 %v2299, %v2300
  %v2302 = vsel %vm2098, %v2233, 0.0
  %v2303 = vadd.f32 %v2301, %v2302
  %v2304 = vsel %vm2098, %v2234, 0.0
  %v2305 = vadd.f32 %v2303, %v2304
  %v2306 = vsel %vm2098, %v2235, 0.0
  %v2307 = vadd.f32 %v2305, %v2306
  %v2308 = vsel %vm2098, %v2236, 0.0
  %v2309 = vadd.f32 %v2307, %v2308
  %v2310 = vsel %vm2098, %v2237, 0.0
  %v2311 = vadd.f32 %v2309, %v2310
  %v2312 = vsel %vm2098, %v2238, 0.0
  %v2313 = vadd.f32 %v2311, %v2312
  %v2314 = vsel %vm2098, %v2239, 0.0
  %v2315 = vadd.f32 %v2313, %v2314
  %v2316 = vsel %vm2098, %v2240, 0.0
  %v2317 = vadd.f32 %v2315, %v2316
  %v2318 = vsel %vm2098, %v2241, 0.0
  %v2319 = vadd.f32 %v2317, %v2318
  %v2320 = vsel %vm2098, %v2242, 0.0
  %v2321 = vadd.f32 %v2319, %v2320
  %v2322 = vsel %vm2098, %v2243, 0.0
  %v2323 = vadd.f32 %v2321, %v2322
  %v2324 = vsel %vm2098, %v2244, 0.0
  %v2325 = vadd.f32 %v2323, %v2324
  %v2326 = vsel %vm2098, %v2245, 0.0
  %v2327 = vadd.f32 %v2325, %v2326
  %v2328 = vsel %vm2098, %v2246, 0.0
  %v2329 = vadd.f32 %v2327, %v2328
  %v2330 = vsel %vm2098, %v2247, 0.0
  %v2331 = vadd.f32 %v2329, %v2330
  %v2332 = vsel %vm2098, %v2248, 0.0
  %v2333 = vadd.f32 %v2331, %v2332
  %v2334 = vsel %vm2098, %v2249, 0.0
  %v2335 = vadd.f32 %v2333, %v2334
  %v2336 = vsel %vm2098, %v2250, 0.0
  %v2337 = vadd.f32 %v2335, %v2336
  %v2338 = vsel %vm2098, %v2251, 0.0
  %v2339 = vadd.f32 %v2337, %v2338
  %v2340 = vsel %vm2098, %v2252, 0.0
  %v2341 = vadd.f32 %v2339, %v2340
  %v2342 = vsel %vm2098, %v2253, 0.0
  %v2343 = vadd.f32 %v2341, %v2342
  %v2344 = vsel %vm2098, %v2254, 0.0
  %v2345 = vadd.f32 %v2343, %v2344
  %v2346 = vsel %vm2098, %v2255, 0.0
  %v2347 = vadd.f32 %v2345, %v2346
  %v2348 = vsel %vm2098, %v2256, 0.0
  %v2349 = vadd.f32 %v2347, %v2348
  %v2350 = vsel %vm2098, %v2257, 0.0
  %v2351 = vadd.f32 %v2349, %v2350
  %v2352 = vsel %vm2098, %v2258, 0.0
  %v2353 = vadd.f32 %v2351, %v2352
  %v2354 = vsel %vm2098, %v2259, 0.0
  %v2355 = vadd.f32 %v2353, %v2354
  %v2356 = vsel %vm2098, %v2260, 0.0
  %v2357 = vadd.f32 %v2355, %v2356
  %v2358 = vsel %vm2098, %v2261, 0.0
  %v2359 = vadd.f32 %v2357, %v2358
  %v2360 = vsel %vm2098, %v2262, 0.0
  %v2361 = vadd.f32 %v2359, %v2360
  %v2362 = vsel %vm2098, %v2263, 0.0
  %v2363 = vadd.f32 %v2361, %v2362
  %v2364 = vsel %vm2098, %v2264, 0.0
  %v2365 = vadd.f32 %v2363, %v2364
  %v2366 = vsel %vm2098, %v2265, 0.0
  %v2367 = vadd.f32 %v2365, %v2366
  %v2368 = vsel %vm2098, %v2266, 0.0
  %v2369 = vadd.f32 %v2367, %v2368
  %v2370 = vsel %vm2098, %v2267, 0.0
  %v2371 = vadd.f32 %v2369, %v2370
  %v2372 = vsel %vm2098, %v2268, 0.0
  %v2373 = vadd.f32 %v2371, %v2372
  %v2374 = vsel %vm2098, %v2269, 0.0
  %v2375 = vadd.f32 %v2373, %v2374
  %v2376 = vsel %vm2098, %v2270, 0.0
  %v2377 = vadd.f32 %v2375, %v2376
  %v2378 = vsel %vm2098, %v2271, 0.0
  %v2379 = vadd.f32 %v2377, %v2378
  %v2380 = vsel %vm2098, %v2272, 0.0
  %v2381 = vadd.f32 %v2379, %v2380
  %v2382 = vsel %vm2098, %v2273, 0.0
  %v2383 = vadd.f32 %v2381, %v2382
  %v2384 = vsel %vm2098, %v2274, 0.0
  %v2385 = vadd.f32 %v2383, %v2384
  %v2386 = vsel %vm2098, %v2275, 0.0
  %v2387 = vadd.f32 %v2385, %v2386
  %v2388 = vsel %vm2210, %v2276, 0.0
  %v2389 = vadd.f32 %v2387, %v2388
  %v2390 = vrot.slane %v2389, 4
  %v2391 = vadd.f32 %v2389, %v2390
  %v2392 = vrot.slane %v2391, 2
  %v2393 = vadd.f32 %v2391, %v2392
  %v2394 = vrot.slane %v2393, 1
  %v2395 = vadd.f32 %v2393, %v2394
  %v2396 = vmul.f32 %v2395, 0.0022222223
  %v2397 = vmul.f32 %v2219, %v2219
  %v2398 = vsub.f32 %v2396, %v2397
  %v2399 = vld [vmem:[%s3] sm:$0x1]
  %v2400 = vsub.f32 %v1815, %v2219
  %v2401 = vsub.f32 %v1820, %v2219
  %v2402 = vsub.f32 %v1825, %v2219
  %v2403 = vsub.f32 %v1830, %v2219
  %v2404 = vsub.f32 %v1835, %v2219
  %v2405 = vsub.f32 %v1840, %v2219
  %v2406 = vsub.f32 %v1845, %v2219
  %v2407 = vsub.f32 %v1850, %v2219
  %v2408 = vsub.f32 %v1855, %v2219
  %v2409 = vsub.f32 %v1860, %v2219
  %v2410 = vsub.f32 %v1865, %v2219
  %v2411 = vsub.f32 %v1870, %v2219
  %v2412 = vsub.f32 %v1875, %v2219
  %v2413 = vsub.f32 %v1880, %v2219
  %v2414 = vsub.f32 %v1885, %v2219
  %v2415 = vsub.f32 %v1890, %v2219
  %v2416 = vsub.f32 %v1895, %v2219
  %v2417 = vsub.f32 %v1900, %v2219
  %v2418 = vsub.f32 %v1905, %v2219
  %v2419 = vsub.f32 %v1910, %v2219
  %v2420 = vsub.f32 %v1915, %v2219
  %v2421 = vsub.f32 %v1920, %v2219
  %v2422 = vsub.f32 %v1925, %v2219
  %v2423 = vsub.f32 %v1930, %v2219
  %v2424 = vsub.f32 %v1935, %v2219
  %v2425 = vsub.f32 %v1940, %v2219
  %v2426 = vsub.f32 %v1945, %v2219
  %v2427 = vsub.f32 %v1950, %v2219
  %v2428 = vsub.f32 %v1955, %v2219
  %v2429 = vsub.f32 %v1960, %v2219
  %v2430 = vsub.f32 %v1965, %v2219
  %v2431 = vsub.f32 %v1970, %v2219
  %v2432 = vsub.f32 %v1975, %v2219
  %v2433 = vsub.f32 %v1980, %v2219
  %v2434 = vsub.f32 %v1985, %v2219
  %v2435 = vsub.f32 %v1990, %v2219
  %v2436 = vsub.f32 %v1995, %v2219
  %v2437 = vsub.f32 %v2000, %v2219
  %v2438 = vsub.f32 %v2005, %v2219
  %v2439 = vsub.f32 %v2010, %v2219
  %v2440 = vsub.f32 %v2015, %v2219
  %v2441 = vsub.f32 %v2020, %v2219
  %v2442 = vsub.f32 %v2025, %v2219
  %v2443 = vsub.f32 %v2030, %v2219
  %v2444 = vsub.f32 %v2035, %v2219
  %v2445 = vsub.f32 %v2040, %v2219
  %v2446 = vsub.f32 %v2045, %v2219
  %v2447 = vsub.f32 %v2050, %v2219
  %v2448 = vsub.f32 %v2055, %v2219
  %v2449 = vsub.f32 %v2060, %v2219
  %v2450 = vsub.f32 %v2065, %v2219
  %v2451 = vsub.f32 %v2070, %v2219
  %v2452 = vsub.f32 %v2075, %v2219
  %v2453 = vsub.f32 %v2080, %v2219
  %v2454 = vsub.f32 %v2085, %v2219
  %v2455 = vsub.f32 %v2090, %v2219
  %v2456 = vsub.f32 %v2095, %v2219
  %v2458 = vlaneseq
  %v2459 = vshrl.u32 %v2458, 7
  %v2460 = vsub.s32 0, %v2459
  %v2461 = vrot.slane %v2399, %v2460
  %v2463 = vmul.f32 %v2461, %v2400
  %v2464 = vmul.f32 %v2461, %v2401
  %v2465 = vmul.f32 %v2461, %v2402
  %v2466 = vmul.f32 %v2461, %v2403
  %v2467 = vmul.f32 %v2461, %v2404
  %v2468 = vmul.f32 %v2461, %v2405
  %v2469 = vmul.f32 %v2461, %v2406
  %v2470 = vmul.f32 %v2461, %v2407
  %v2471 = vmul.f32 %v2461, %v2408
  %v2472 = vmul.f32 %v2461, %v2409
  %v2473 = vmul.f32 %v2461, %v2410
  %v2474 = vmul.f32 %v2461, %v2411
  %v2475 = vmul.f32 %v2461, %v2412
  %v2476 = vmul.f32 %v2461, %v2413
  %v2477 = vmul.f32 %v2461, %v2414
  %v2478 = vmul.f32 %v2461, %v2415
  %v2479 = vmul.f32 %v2461, %v2416
  %v2480 = vmul.f32 %v2461, %v2417
  %v2481 = vmul.f32 %v2461, %v2418
  %v2482 = vmul.f32 %v2461, %v2419
  %v2483 = vmul.f32 %v2461, %v2420
  %v2484 = vmul.f32 %v2461, %v2421
  %v2485 = vmul.f32 %v2461, %v2422
  %v2486 = vmul.f32 %v2461, %v2423
  %v2487 = vmul.f32 %v2461, %v2424
  %v2488 = vmul.f32 %v2461, %v2425
  %v2489 = vmul.f32 %v2461, %v2426
  %v2490 = vmul.f32 %v2461, %v2427
  %v2491 = vmul.f32 %v2461, %v2428
  %v2492 = vmul.f32 %v2461, %v2429
  %v2493 = vmul.f32 %v2461, %v2430
  %v2494 = vmul.f32 %v2461, %v2431
  %v2495 = vmul.f32 %v2461, %v2432
  %v2496 = vmul.f32 %v2461, %v2433
  %v2497 = vmul.f32 %v2461, %v2434
  %v2498 = vmul.f32 %v2461, %v2435
  %v2499 = vmul.f32 %v2461, %v2436
  %v2500 = vmul.f32 %v2461, %v2437
  %v2501 = vmul.f32 %v2461, %v2438
  %v2502 = vmul.f32 %v2461, %v2439
  %v2503 = vmul.f32 %v2461, %v2440
  %v2504 = vmul.f32 %v2461, %v2441
  %v2505 = vmul.f32 %v2461, %v2442
  %v2506 = vmul.f32 %v2461, %v2443
  %v2507 = vmul.f32 %v2461, %v2444
  %v2508 = vmul.f32 %v2461, %v2445
  %v2509 = vmul.f32 %v2461, %v2446
  %v2510 = vmul.f32 %v2461, %v2447
  %v2511 = vmul.f32 %v2461, %v2448
  %v2512 = vmul.f32 %v2461, %v2449
  %v2513 = vmul.f32 %v2461, %v2450
  %v2514 = vmul.f32 %v2461, %v2451
  %v2515 = vmul.f32 %v2461, %v2452
  %v2516 = vmul.f32 %v2461, %v2453
  %v2517 = vmul.f32 %v2461, %v2454
  %v2518 = vmul.f32 %v2461, %v2455
  %v2519 = vmul.f32 %v2461, %v2456
  %v2520 = vadd.f32 %v2398, 1e-05
  %v2521 = vrsqrt.pop %v2520
  %v2522 = vmul.f32 %v2463, %v2521
  %v2523 = vmul.f32 %v2464, %v2521
  %v2524 = vmul.f32 %v2465, %v2521
  %v2525 = vmul.f32 %v2466, %v2521
  %v2526 = vmul.f32 %v2467, %v2521
  %v2527 = vmul.f32 %v2468, %v2521
  %v2528 = vmul.f32 %v2469, %v2521
  %v2529 = vmul.f32 %v2470, %v2521
  %v2530 = vmul.f32 %v2471, %v2521
  %v2531 = vmul.f32 %v2472, %v2521
  %v2532 = vmul.f32 %v2473, %v2521
  %v2533 = vmul.f32 %v2474, %v2521
  %v2534 = vmul.f32 %v2475, %v2521
  %v2535 = vmul.f32 %v2476, %v2521
  %v2536 = vmul.f32 %v2477, %v2521
  %v2537 = vmul.f32 %v2478, %v2521
  %v2538 = vmul.f32 %v2479, %v2521
  %v2539 = vmul.f32 %v2480, %v2521
  %v2540 = vmul.f32 %v2481, %v2521
  %v2541 = vmul.f32 %v2482, %v2521
  %v2542 = vmul.f32 %v2483, %v2521
  %v2543 = vmul.f32 %v2484, %v2521
  %v2544 = vmul.f32 %v2485, %v2521
  %v2545 = vmul.f32 %v2486, %v2521
  %v2546 = vmul.f32 %v2487, %v2521
  %v2547 = vmul.f32 %v2488, %v2521
  %v2548 = vmul.f32 %v2489, %v2521
  %v2549 = vmul.f32 %v2490, %v2521
  %v2550 = vmul.f32 %v2491, %v2521
  %v2551 = vmul.f32 %v2492, %v2521
  %v2552 = vmul.f32 %v2493, %v2521
  %v2553 = vmul.f32 %v2494, %v2521
  %v2554 = vmul.f32 %v2495, %v2521
  %v2555 = vmul.f32 %v2496, %v2521
  %v2556 = vmul.f32 %v2497, %v2521
  %v2557 = vmul.f32 %v2498, %v2521
  %v2558 = vmul.f32 %v2499, %v2521
  %v2559 = vmul.f32 %v2500, %v2521
  %v2560 = vmul.f32 %v2501, %v2521
  %v2561 = vmul.f32 %v2502, %v2521
  %v2562 = vmul.f32 %v2503, %v2521
  %v2563 = vmul.f32 %v2504, %v2521
  %v2564 = vmul.f32 %v2505, %v2521
  %v2565 = vmul.f32 %v2506, %v2521
  %v2566 = vmul.f32 %v2507, %v2521
  %v2567 = vmul.f32 %v2508, %v2521
  %v2568 = vmul.f32 %v2509, %v2521
  %v2569 = vmul.f32 %v2510, %v2521
  %v2570 = vmul.f32 %v2511, %v2521
  %v2571 = vmul.f32 %v2512, %v2521
  %v2572 = vmul.f32 %v2513, %v2521
  %v2573 = vmul.f32 %v2514, %v2521
  %v2574 = vmul.f32 %v2515, %v2521
  %v2575 = vmul.f32 %v2516, %v2521
  %v2576 = vmul.f32 %v2517, %v2521
  %v2577 = vmul.f32 %v2518, %v2521
  %v2578 = vmul.f32 %v2519, %v2521
  %v2579 = vld [vmem:[%s4] sm:$0x1]
  %v2581 = vlaneseq
  %v2582 = vshrl.u32 %v2581, 7
  %v2583 = vsub.s32 0, %v2582
  %v2584 = vrot.slane %v2579, %v2583
  %v2586 = vadd.f32 %v2522, %v2584
  %v2587 = vadd.f32 %v2523, %v2584
  %v2588 = vadd.f32 %v2524, %v2584
  %v2589 = vadd.f32 %v2525, %v2584
  %v2590 = vadd.f32 %v2526, %v2584
  %v2591 = vadd.f32 %v2527, %v2584
  %v2592 = vadd.f32 %v2528, %v2584
  %v2593 = vadd.f32 %v2529, %v2584
  %v2594 = vadd.f32 %v2530, %v2584
  %v2595 = vadd.f32 %v2531, %v2584
  %v2596 = vadd.f32 %v2532, %v2584
  %v2597 = vadd.f32 %v2533, %v2584
  %v2598 = vadd.f32 %v2534, %v2584
  %v2599 = vadd.f32 %v2535, %v2584
  %v2600 = vadd.f32 %v2536, %v2584
  %v2601 = vadd.f32 %v2537, %v2584
  %v2602 = vadd.f32 %v2538, %v2584
  %v2603 = vadd.f32 %v2539, %v2584
  %v2604 = vadd.f32 %v2540, %v2584
  %v2605 = vadd.f32 %v2541, %v2584
  %v2606 = vadd.f32 %v2542, %v2584
  %v2607 = vadd.f32 %v2543, %v2584
  %v2608 = vadd.f32 %v2544, %v2584
  %v2609 = vadd.f32 %v2545, %v2584
  %v2610 = vadd.f32 %v2546, %v2584
  %v2611 = vadd.f32 %v2547, %v2584
  %v2612 = vadd.f32 %v2548, %v2584
  %v2613 = vadd.f32 %v2549, %v2584
  %v2614 = vadd.f32 %v2550, %v2584
  %v2615 = vadd.f32 %v2551, %v2584
  %v2616 = vadd.f32 %v2552, %v2584
  %v2617 = vadd.f32 %v2553, %v2584
  %v2618 = vadd.f32 %v2554, %v2584
  %v2619 = vadd.f32 %v2555, %v2584
  %v2620 = vadd.f32 %v2556, %v2584
  %v2621 = vadd.f32 %v2557, %v2584
  %v2622 = vadd.f32 %v2558, %v2584
  %v2623 = vadd.f32 %v2559, %v2584
  %v2624 = vadd.f32 %v2560, %v2584
  %v2625 = vadd.f32 %v2561, %v2584
  %v2626 = vadd.f32 %v2562, %v2584
  %v2627 = vadd.f32 %v2563, %v2584
  %v2628 = vadd.f32 %v2564, %v2584
  %v2629 = vadd.f32 %v2565, %v2584
  %v2630 = vadd.f32 %v2566, %v2584
  %v2631 = vadd.f32 %v2567, %v2584
  %v2632 = vadd.f32 %v2568, %v2584
  %v2633 = vadd.f32 %v2569, %v2584
  %v2634 = vadd.f32 %v2570, %v2584
  %v2635 = vadd.f32 %v2571, %v2584
  %v2636 = vadd.f32 %v2572, %v2584
  %v2637 = vadd.f32 %v2573, %v2584
  %v2638 = vadd.f32 %v2574, %v2584
  %v2639 = vadd.f32 %v2575, %v2584
  %v2640 = vadd.f32 %v2576, %v2584
  %v2641 = vadd.f32 %v2577, %v2584
  %v2642 = vadd.f32 %v2578, %v2584
  %v2643 = vmax.f32 %v2586, 0.0
  %v2644 = vmax.f32 %v2587, 0.0
  %v2645 = vmax.f32 %v2588, 0.0
  %v2646 = vmax.f32 %v2589, 0.0
  %v2647 = vmax.f32 %v2590, 0.0
  %v2648 = vmax.f32 %v2591, 0.0
  %v2649 = vmax.f32 %v2592, 0.0
  %v2650 = vmax.f32 %v2593, 0.0
  %v2651 = vmax.f32 %v2594, 0.0
  %v2652 = vmax.f32 %v2595, 0.0
  %v2653 = vmax.f32 %v2596, 0.0
  %v2654 = vmax.f32 %v2597, 0.0
  %v2655 = vmax.f32 %v2598, 0.0
  %v2656 = vmax.f32 %v2599, 0.0
  %v2657 = vmax.f32 %v2600, 0.0
  %v2658 = vmax.f32 %v2601, 0.0
  %v2659 = vmax.f32 %v2602, 0.0
  %v2660 = vmax.f32 %v2603, 0.0
  %v2661 = vmax.f32 %v2604, 0.0
  %v2662 = vmax.f32 %v2605, 0.0
  %v2663 = vmax.f32 %v2606, 0.0
  %v2664 = vmax.f32 %v2607, 0.0
  %v2665 = vmax.f32 %v2608, 0.0
  %v2666 = vmax.f32 %v2609, 0.0
  %v2667 = vmax.f32 %v2610, 0.0
  %v2668 = vmax.f32 %v2611, 0.0
  %v2669 = vmax.f32 %v2612, 0.0
  %v2670 = vmax.f32 %v2613, 0.0
  %v2671 = vmax.f32 %v2614, 0.0
  %v2672 = vmax.f32 %v2615, 0.0
  %v2673 = vmax.f32 %v2616, 0.0
  %v2674 = vmax.f32 %v2617, 0.0
  %v2675 = vmax.f32 %v2618, 0.0
  %v2676 = vmax.f32 %v2619, 0.0
  %v2677 = vmax.f32 %v2620, 0.0
  %v2678 = vmax.f32 %v2621, 0.0
  %v2679 = vmax.f32 %v2622, 0.0
  %v2680 = vmax.f32 %v2623, 0.0
  %v2681 = vmax.f32 %v2624, 0.0
  %v2682 = vmax.f32 %v2625, 0.0
  %v2683 = vmax.f32 %v2626, 0.0
  %v2684 = vmax.f32 %v2627, 0.0
  %v2685 = vmax.f32 %v2628, 0.0
  %v2686 = vmax.f32 %v2629, 0.0
  %v2687 = vmax.f32 %v2630, 0.0
  %v2688 = vmax.f32 %v2631, 0.0
  %v2689 = vmax.f32 %v2632, 0.0
  %v2690 = vmax.f32 %v2633, 0.0
  %v2691 = vmax.f32 %v2634, 0.0
  %v2692 = vmax.f32 %v2635, 0.0
  %v2693 = vmax.f32 %v2636, 0.0
  %v2694 = vmax.f32 %v2637, 0.0
  %v2695 = vmax.f32 %v2638, 0.0
  %v2696 = vmax.f32 %v2639, 0.0
  %v2697 = vmax.f32 %v2640, 0.0
  %v2698 = vmax.f32 %v2641, 0.0
  %v2699 = vmax.f32 %v2642, 0.0
  %2700 = vst.msk [vmem:[%s5] sm:$0xff] %vm2098, %v2643
  %2701 = vst.msk [vmem:[%s5 + $0x8] sm:$0xff] %vm2098, %v2644
  %2702 = vst.msk [vmem:[%s5 + $0x10] sm:$0xff] %vm2098, %v2645
  %2703 = vst.msk [vmem:[%s5 + $0x18] sm:$0xff] %vm2098, %v2646
  %2704 = vst.msk [vmem:[%s5 + $0x20] sm:$0xff] %vm2098, %v2647
  %2705 = vst.msk [vmem:[%s5 + $0x28] sm:$0xff] %vm2098, %v2648
  %2706 = vst.msk [vmem:[%s5 + $0x30] sm:$0xff] %vm2098, %v2649
  %2707 = vst.msk [vmem:[%s5 + $0x38] sm:$0xff] %vm2098, %v2650
  %2708 = vst.msk [vmem:[%s5 + $0x40] sm:$0xff] %vm2098, %v2651
  %2709 = vst.msk [vmem:[%s5 + $0x48] sm:$0xff] %vm2098, %v2652
  %2710 = vst.msk [vmem:[%s5 + $0x50] sm:$0xff] %vm2098, %v2653
  %2711 = vst.msk [vmem:[%s5 + $0x58] sm:$0xff] %vm2098, %v2654
  %2712 = vst.msk [vmem:[%s5 + $0x60] sm:$0xff] %vm2098, %v2655
  %2713 = vst.msk [vmem:[%s5 + $0x68] sm:$0xff] %vm2098, %v2656
  %2714 = vst.msk [vmem:[%s5 + $0x70] sm:$0xff] %vm2098, %v2657
  %2715 = vst.msk [vmem:[%s5 + $0x78] sm:$0xff] %vm2098, %v2658
  %2716 = vst.msk [vmem:[%s5 + $0x80] sm:$0xff] %vm2098, %v2659
  %2717 = vst.msk [vmem:[%s5 + $0x88] sm:$0xff] %vm2098, %v2660
  %2718 = vst.msk [vmem:[%s5 + $0x90] sm:$0xff] %vm2098, %v2661
  %2719 = vst.msk [vmem:[%s5 + $0x98] sm:$0xff] %vm2098, %v2662
  %2720 = vst.msk [vmem:[%s5 + $0xa0] sm:$0xff] %vm2098, %v2663
  %2721 = vst.msk [vmem:[%s5 + $0xa8] sm:$0xff] %vm2098, %v2664
  %2722 = vst.msk [vmem:[%s5 + $0xb0] sm:$0xff] %vm2098, %v2665
  %2723 = vst.msk [vmem:[%s5 + $0xb8] sm:$0xff] %vm2098, %v2666
  %2724 = vst.msk [vmem:[%s5 + $0xc0] sm:$0xff] %vm2098, %v2667
  %2725 = vst.msk [vmem:[%s5 + $0xc8] sm:$0xff] %vm2098, %v2668
  %2726 = vst.msk [vmem:[%s5 + $0xd0] sm:$0xff] %vm2098, %v2669
  %2727 = vst.msk [vmem:[%s5 + $0xd8] sm:$0xff] %vm2098, %v2670
  %2728 = vst.msk [vmem:[%s5 + $0xe0] sm:$0xff] %vm2098, %v2671
  %2729 = vst.msk [vmem:[%s5 + $0xe8] sm:$0xff] %vm2098, %v2672
  %2730 = vst.msk [vmem:[%s5 + $0xf0] sm:$0xff] %vm2098, %v2673
  %2731 = vst.msk [vmem:[%s5 + $0xf8] sm:$0xff] %vm2098, %v2674
  %2732 = vst.msk [vmem:[%s5 + $0x100] sm:$0xff] %vm2098, %v2675
  %2733 = vst.msk [vmem:[%s5 + $0x108] sm:$0xff] %vm2098, %v2676
  %2734 = vst.msk [vmem:[%s5 + $0x110] sm:$0xff] %vm2098, %v2677
  %2735 = vst.msk [vmem:[%s5 + $0x118] sm:$0xff] %vm2098, %v2678
  %2736 = vst.msk [vmem:[%s5 + $0x120] sm:$0xff] %vm2098, %v2679
  %2737 = vst.msk [vmem:[%s5 + $0x128] sm:$0xff] %vm2098, %v2680
  %2738 = vst.msk [vmem:[%s5 + $0x130] sm:$0xff] %vm2098, %v2681
  %2739 = vst.msk [vmem:[%s5 + $0x138] sm:$0xff] %vm2098, %v2682
  %2740 = vst.msk [vmem:[%s5 + $0x140] sm:$0xff] %vm2098, %v2683
  %2741 = vst.msk [vmem:[%s5 + $0x148] sm:$0xff] %vm2098, %v2684
  %2742 = vst.msk [vmem:[%s5 + $0x150] sm:$0xff] %vm2098, %v2685
  %2743 = vst.msk [vmem:[%s5 + $0x158] sm:$0xff] %vm2098, %v2686
  %2744 = vst.msk [vmem:[%s5 + $0x160] sm:$0xff] %vm2098, %v2687
  %2745 = vst.msk [vmem:[%s5 + $0x168] sm:$0xff] %vm2098, %v2688
  %2746 = vst.msk [vmem:[%s5 + $0x170] sm:$0xff] %vm2098, %v2689
  %2747 = vst.msk [vmem:[%s5 + $0x178] sm:$0xff] %vm2098, %v2690
  %2748 = vst.msk [vmem:[%s5 + $0x180] sm:$0xff] %vm2098, %v2691
  %2749 = vst.msk [vmem:[%s5 + $0x188] sm:$0xff] %vm2098, %v2692
  %2750 = vst.msk [vmem:[%s5 + $0x190] sm:$0xff] %vm2098, %v2693
  %2751 = vst.msk [vmem:[%s5 + $0x198] sm:$0xff] %vm2098, %v2694
  %2752 = vst.msk [vmem:[%s5 + $0x1a0] sm:$0xff] %vm2098, %v2695
  %2753 = vst.msk [vmem:[%s5 + $0x1a8] sm:$0xff] %vm2098, %v2696
  %2754 = vst.msk [vmem:[%s5 + $0x1b0] sm:$0xff] %vm2098, %v2697
  %2755 = vst.msk [vmem:[%s5 + $0x1b8] sm:$0xff] %vm2098, %v2698
  %2756 = vst.msk [vmem:[%s5 + $0x1c0] sm:$0x3] %vm2210, %v2699
  // Predicated region
  $region22: #{discriminator_forward.5} parent=0 // pred_check
    _
  $region23: #{discriminator_forward.5} parent=0 // pred_check_branch
    %2758 = sbr.rel (0) target = $region25
  $region24: #{discriminator_forward.5} parent=0 // pred_region
    _
  $region25: #{discriminator_forward.5} parent=0 // pred_fallthru
    _
  // Predicated region
  $region26: #{discriminator_forward.5} parent=0 // pred_check
    _
  $region27: #{discriminator_forward.5} parent=0 // pred_check_branch
    %2760 = sbr.rel (0) target = $region29
  $region28: #{discriminator_forward.5} parent=0 // pred_region
    _
  $region29: #{discriminator_forward.5} parent=0 // pred_fallthru
    _

// kernel: discriminator_forward.6
$region0: #{discriminator_forward.6}
  #allocation0 [shape = 'u32[]', space=smem, size = 0x4, offset = 0x4, fixed_abs, tag = 'smem constant byte address 0x4 - core index']
  #allocation1 [shape = 'u32[144,128]{1,0:T(1,128)}', space=vmem, size = 0x12000, scoped, tag = 'internal scratch']
  %s0 = inlined_call_operand.vmem [shape: f32[98,1600], index: 0, kind: input, shape index: {}]
  %s1 = inlined_call_operand.vmem [shape: f32[1600,128], index: 1, kind: input, shape index: {}]
  %s2 = inlined_call_operand.vmem [shape: f32[1,128], index: 2, kind: input, shape index: {}]
  %s3 = inlined_call_operand.vmem [shape: f32[1,128], index: 3, kind: input, shape index: {}]
  %s4 = inlined_call_operand.vmem [shape: f32[1,128], index: 4, kind: input, shape index: {}]
  %s5 = inlined_call_operand.vmem [shape: f32[98,128], index: 5, kind: output, shape index: {}]
  %s6 = sld [smem:[#allocation0]]
  $region30: #{discriminator_forward.6} parent=0
    _
  %s8 = ssub.s32 1, %s6
  %s9 = scalar_select 0, %s8, %s6
  // Predicated region
  $region2: #{discriminator_forward.6} parent=0 // pred_check
    _
  $region3: #{discriminator_forward.6} parent=0 // pred_check_branch
    %11 = sbr.rel (0) target = $region5
  $region4: #{discriminator_forward.6} parent=0 // pred_region
    _
  $region5: #{discriminator_forward.6} parent=0 // pred_fallthru
    _
  // Predicated region
  $region6: #{discriminator_forward.6} parent=0 // pred_check
    _
  $region7: #{discriminator_forward.6} parent=0 // pred_check_branch
    %13 = sbr.rel (0) target = $region9
  $region8: #{discriminator_forward.6} parent=0 // pred_region
    _
  $region9: #{discriminator_forward.6} parent=0 // pred_fallthru
    _
  // Predicated region
  $region10: #{discriminator_forward.6} parent=0 // pred_check
    _
  $region11: #{discriminator_forward.6} parent=0 // pred_check_branch
    %15 = sbr.rel (0) target = $region13
  $region12: #{discriminator_forward.6} parent=0 // pred_region
    _
  $region13: #{discriminator_forward.6} parent=0 // pred_fallthru
    _
  // Predicated region
  $region14: #{discriminator_forward.6} parent=0 // pred_check
    _
  $region15: #{discriminator_forward.6} parent=0 // pred_check_branch
    %17 = sbr.rel (0) target = $region17
  $region16: #{discriminator_forward.6} parent=0 // pred_region
    _
  $region17: #{discriminator_forward.6} parent=0 // pred_fallthru
    _
  // Predicated region
  $region18: #{discriminator_forward.6} parent=0 // pred_check
    _
  $region19: #{discriminator_forward.6} parent=0 // pred_check_branch
    %19 = sbr.rel (0) target = $region21
  $region20: #{discriminator_forward.6} parent=0 // pred_region
    _
  $region21: #{discriminator_forward.6} parent=0 // pred_fallthru
    _
  %v20 = vld [vmem:[%s0] sm:$0xff]
  %v21 = vld [vmem:[%s0 + $0x8] sm:$0xff]
  %v22 = vld [vmem:[%s0 + $0x10] sm:$0xff]
  %v23 = vld [vmem:[%s0 + $0x18] sm:$0xff]
  %v24 = vld [vmem:[%s0 + $0x20] sm:$0xff]
  %v25 = vld [vmem:[%s0 + $0x28] sm:$0xff]
  %v26 = vld [vmem:[%s0 + $0x30] sm:$0xff]
  %v27 = vld [vmem:[%s0 + $0x38] sm:$0xff]
  %v28 = vld [vmem:[%s0 + $0x40] sm:$0xff]
  %v29 = vld [vmem:[%s0 + $0x48] sm:$0xff]
  %v30 = vld [vmem:[%s0 + $0x50] sm:$0xff]
  %v31 = vld [vmem:[%s0 + $0x58] sm:$0xff]
  %v32 = vld [vmem:[%s0 + $0x60] sm:$0xff]
  %v33 = vld [vmem:[%s0 + $0x68] sm:$0xff]
  %v34 = vld [vmem:[%s0 + $0x70] sm:$0xff]
  %v35 = vld [vmem:[%s0 + $0x78] sm:$0xff]
  %v36 = vld [vmem:[%s0 + $0x80] sm:$0xff]
  %v37 = vld [vmem:[%s0 + $0x88] sm:$0xff]
  %v38 = vld [vmem:[%s0 + $0x90] sm:$0xff]
  %v39 = vld [vmem:[%s0 + $0x98] sm:$0xff]
  %v40 = vld [vmem:[%s0 + $0xa0] sm:$0xff]
  %v41 = vld [vmem:[%s0 + $0xa8] sm:$0xff]
  %v42 = vld [vmem:[%s0 + $0xb0] sm:$0xff]
  %v43 = vld [vmem:[%s0 + $0xb8] sm:$0xff]
  %v44 = vld [vmem:[%s0 + $0xc0] sm:$0xff]
  %v45 = vld [vmem:[%s0 + $0xc8] sm:$0xff]
  %v46 = vld [vmem:[%s0 + $0xd0] sm:$0xff]
  %v47 = vld [vmem:[%s0 + $0xd8] sm:$0xff]
  %v48 = vld [vmem:[%s0 + $0xe0] sm:$0xff]
  %v49 = vld [vmem:[%s0 + $0xe8] sm:$0xff]
  %v50 = vld [vmem:[%s0 + $0xf0] sm:$0xff]
  %v51 = vld [vmem:[%s0 + $0xf8] sm:$0xff]
  %v52 = vld [vmem:[%s0 + $0x100] sm:$0xff]
  %v53 = vld [vmem:[%s0 + $0x108] sm:$0xff]
  %v54 = vld [vmem:[%s0 + $0x110] sm:$0xff]
  %v55 = vld [vmem:[%s0 + $0x118] sm:$0xff]
  %v56 = vld [vmem:[%s0 + $0x120] sm:$0xff]
  %v57 = vld [vmem:[%s0 + $0x128] sm:$0xff]
  %v58 = vld [vmem:[%s0 + $0x130] sm:$0xff]
  %v59 = vld [vmem:[%s0 + $0x138] sm:$0xff]
  %v60 = vld [vmem:[%s0 + $0x140] sm:$0xff]
  %v61 = vld [vmem:[%s0 + $0x148] sm:$0xff]
  %v62 = vld [vmem:[%s0 + $0x150] sm:$0xff]
  %v63 = vld [vmem:[%s0 + $0x158] sm:$0xff]
  %v64 = vld [vmem:[%s0 + $0x160] sm:$0xff]
  %v65 = vld [vmem:[%s0 + $0x168] sm:$0xff]
  %v66 = vld [vmem:[%s0 + $0x170] sm:$0xff]
  %v67 = vld [vmem:[%s0 + $0x178] sm:$0xff]
  %v68 = vld [vmem:[%s0 + $0x180] sm:$0xff]
  %v69 = vld [vmem:[%s0 + $0x188] sm:$0xff]
  %v70 = vld [vmem:[%s0 + $0x190] sm:$0xff]
  %v71 = vld [vmem:[%s0 + $0x198] sm:$0xff]
  %v72 = vld [vmem:[%s0 + $0x1a0] sm:$0xff]
  %v73 = vld [vmem:[%s0 + $0x1a8] sm:$0xff]
  %v74 = vld [vmem:[%s0 + $0x1b0] sm:$0xff]
  %v75 = vld [vmem:[%s0 + $0x1b8] sm:$0xff]
  %v76 = vld [vmem:[%s0 + $0x1c0] sm:$0xff]
  %v77 = vld [vmem:[%s0 + $0x1c8] sm:$0xff]
  %v78 = vld [vmem:[%s0 + $0x1d0] sm:$0xff]
  %v79 = vld [vmem:[%s0 + $0x1d8] sm:$0xff]
  %v80 = vld [vmem:[%s0 + $0x1e0] sm:$0xff]
  %v81 = vld [vmem:[%s0 + $0x1e8] sm:$0xff]
  %v82 = vld [vmem:[%s0 + $0x1f0] sm:$0xff]
  %v83 = vld [vmem:[%s0 + $0x1f8] sm:$0xff]
  %v84 = vld [vmem:[%s0 + $0x200] sm:$0xff]
  %v85 = vld [vmem:[%s0 + $0x208] sm:$0xff]
  %v86 = vld [vmem:[%s0 + $0x210] sm:$0xff]
  %v87 = vld [vmem:[%s0 + $0x218] sm:$0xff]
  %v88 = vld [vmem:[%s0 + $0x220] sm:$0xff]
  %v89 = vld [vmem:[%s0 + $0x228] sm:$0xff]
  %v90 = vld [vmem:[%s0 + $0x230] sm:$0xff]
  %v91 = vld [vmem:[%s0 + $0x238] sm:$0xff]
  %v92 = vld [vmem:[%s0 + $0x240] sm:$0xff]
  %v93 = vld [vmem:[%s0 + $0x248] sm:$0xff]
  %v94 = vld [vmem:[%s0 + $0x250] sm:$0xff]
  %v95 = vld [vmem:[%s0 + $0x258] sm:$0xff]
  %v96 = vld [vmem:[%s0 + $0x260] sm:$0xff]
  %v97 = vld [vmem:[%s0 + $0x268] sm:$0xff]
  %v98 = vld [vmem:[%s0 + $0x270] sm:$0xff]
  %v99 = vld [vmem:[%s0 + $0x278] sm:$0xff]
  %v100 = vld [vmem:[%s0 + $0x280] sm:$0xff]
  %v101 = vld [vmem:[%s0 + $0x288] sm:$0xff]
  %v102 = vld [vmem:[%s0 + $0x290] sm:$0xff]
  %v103 = vld [vmem:[%s0 + $0x298] sm:$0xff]
  %v104 = vld [vmem:[%s0 + $0x2a0] sm:$0xff]
  %v105 = vld [vmem:[%s0 + $0x2a8] sm:$0xff]
  %v106 = vld [vmem:[%s0 + $0x2b0] sm:$0xff]
  %v107 = vld [vmem:[%s0 + $0x2b8] sm:$0xff]
  %v108 = vld [vmem:[%s0 + $0x2c0] sm:$0xff]
  %v109 = vld [vmem:[%s0 + $0x2c8] sm:$0xff]
  %v110 = vld [vmem:[%s0 + $0x2d0] sm:$0xff]
  %v111 = vld [vmem:[%s0 + $0x2d8] sm:$0xff]
  %v112 = vld [vmem:[%s0 + $0x2e0] sm:$0xff]
  %v113 = vld [vmem:[%s0 + $0x2e8] sm:$0xff]
  %v114 = vld [vmem:[%s0 + $0x2f0] sm:$0xff]
  %v115 = vld [vmem:[%s0 + $0x2f8] sm:$0xff]
  %v116 = vld [vmem:[%s0 + $0x300] sm:$0xff]
  %v117 = vld [vmem:[%s0 + $0x308] sm:$0xff]
  %v118 = vld [vmem:[%s0 + $0x310] sm:$0xff]
  %v119 = vld [vmem:[%s0 + $0x318] sm:$0xff]
  %v120 = vld [vmem:[%s0 + $0x320] sm:$0xff]
  %v121 = vld [vmem:[%s0 + $0x328] sm:$0xff]
  %v122 = vld [vmem:[%s0 + $0x330] sm:$0xff]
  %v123 = vld [vmem:[%s0 + $0x338] sm:$0xff]
  %v124 = vld [vmem:[%s0 + $0x340] sm:$0xff]
  %v125 = vld [vmem:[%s0 + $0x348] sm:$0xff]
  %v126 = vld [vmem:[%s0 + $0x350] sm:$0xff]
  %v127 = vld [vmem:[%s0 + $0x358] sm:$0xff]
  %v128 = vld [vmem:[%s0 + $0x360] sm:$0xff]
  %v129 = vld [vmem:[%s0 + $0x368] sm:$0xff]
  %v130 = vld [vmem:[%s0 + $0x370] sm:$0xff]
  %v131 = vld [vmem:[%s0 + $0x378] sm:$0xff]
  %v132 = vld [vmem:[%s0 + $0x380] sm:$0xff]
  %v133 = vld [vmem:[%s0 + $0x388] sm:$0xff]
  %v134 = vld [vmem:[%s0 + $0x390] sm:$0xff]
  %v135 = vld [vmem:[%s0 + $0x398] sm:$0xff]
  %v136 = vld [vmem:[%s0 + $0x3a0] sm:$0xff]
  %v137 = vld [vmem:[%s0 + $0x3a8] sm:$0xff]
  %v138 = vld [vmem:[%s0 + $0x3b0] sm:$0xff]
  %v139 = vld [vmem:[%s0 + $0x3b8] sm:$0xff]
  %v140 = vld [vmem:[%s0 + $0x3c0] sm:$0xff]
  %v141 = vld [vmem:[%s0 + $0x3c8] sm:$0xff]
  %v142 = vld [vmem:[%s0 + $0x3d0] sm:$0xff]
  %v143 = vld [vmem:[%s0 + $0x3d8] sm:$0xff]
  %v144 = vld [vmem:[%s0 + $0x3e0] sm:$0xff]
  %v145 = vld [vmem:[%s0 + $0x3e8] sm:$0xff]
  %v146 = vld [vmem:[%s0 + $0x3f0] sm:$0xff]
  %v147 = vld [vmem:[%s0 + $0x3f8] sm:$0xff]
  %v148 = vld [vmem:[%s0 + $0x400] sm:$0xff]
  %v149 = vld [vmem:[%s0 + $0x408] sm:$0xff]
  %v150 = vld [vmem:[%s0 + $0x410] sm:$0xff]
  %v151 = vld [vmem:[%s0 + $0x418] sm:$0xff]
  %v152 = vld [vmem:[%s0 + $0x420] sm:$0xff]
  %v153 = vld [vmem:[%s0 + $0x428] sm:$0xff]
  %v154 = vld [vmem:[%s0 + $0x430] sm:$0xff]
  %v155 = vld [vmem:[%s0 + $0x438] sm:$0xff]
  %v156 = vld [vmem:[%s0 + $0x440] sm:$0xff]
  %v157 = vld [vmem:[%s0 + $0x448] sm:$0xff]
  %v158 = vld [vmem:[%s0 + $0x450] sm:$0xff]
  %v159 = vld [vmem:[%s0 + $0x458] sm:$0xff]
  %v160 = vld [vmem:[%s0 + $0x460] sm:$0xff]
  %v161 = vld [vmem:[%s0 + $0x468] sm:$0xff]
  %v162 = vld [vmem:[%s0 + $0x470] sm:$0xff]
  %v163 = vld [vmem:[%s0 + $0x478] sm:$0xff]
  %v164 = vld [vmem:[%s0 + $0x480] sm:$0xff]
  %v165 = vld [vmem:[%s0 + $0x488] sm:$0xff]
  %v166 = vld [vmem:[%s0 + $0x490] sm:$0xff]
  %v167 = vld [vmem:[%s0 + $0x498] sm:$0xff]
  %v168 = vld [vmem:[%s0 + $0x4a0] sm:$0xff]
  %v169 = vld [vmem:[%s0 + $0x4a8] sm:$0xff]
  %v170 = vld [vmem:[%s0 + $0x4b0] sm:$0xff]
  %v171 = vld [vmem:[%s0 + $0x4b8] sm:$0xff]
  %v172 = vld [vmem:[%s0 + $0x4c0] sm:$0xff]
  %v173 = vld [vmem:[%s0 + $0x4c8] sm:$0xff]
  %v174 = vld [vmem:[%s0 + $0x4d0] sm:$0xff]
  %v175 = vld [vmem:[%s0 + $0x4d8] sm:$0xff]
  %v176 = vld [vmem:[%s0 + $0x4e0] sm:$0x3]
  %v177 = vld [vmem:[%s0 + $0x4e8] sm:$0x3]
  %v178 = vld [vmem:[%s0 + $0x4f0] sm:$0x3]
  %v179 = vld [vmem:[%s0 + $0x4f8] sm:$0x3]
  %v180 = vld [vmem:[%s0 + $0x500] sm:$0x3]
  %v181 = vld [vmem:[%s0 + $0x508] sm:$0x3]
  %v182 = vld [vmem:[%s0 + $0x510] sm:$0x3]
  %v183 = vld [vmem:[%s0 + $0x518] sm:$0x3]
  %v184 = vld [vmem:[%s0 + $0x520] sm:$0x3]
  %v185 = vld [vmem:[%s0 + $0x528] sm:$0x3]
  %v186 = vld [vmem:[%s0 + $0x530] sm:$0x3]
  %v187 = vld [vmem:[%s0 + $0x538] sm:$0x3]
  %v188 = vld [vmem:[%s0 + $0x540] sm:$0x3]
  %v189 = vld [vmem:[%s1] sm:$0xff]
  %v190 = vld [vmem:[%s1 + $0x8] sm:$0xff]
  %v191 = vld [vmem:[%s1 + $0x10] sm:$0xff]
  %v192 = vld [vmem:[%s1 + $0x18] sm:$0xff]
  %v193 = vld [vmem:[%s1 + $0x20] sm:$0xff]
  %v194 = vld [vmem:[%s1 + $0x28] sm:$0xff]
  %v195 = vld [vmem:[%s1 + $0x30] sm:$0xff]
  %v196 = vld [vmem:[%s1 + $0x38] sm:$0xff]
  %v197 = vld [vmem:[%s1 + $0x40] sm:$0xff]
  %v198 = vld [vmem:[%s1 + $0x48] sm:$0xff]
  %v199 = vld [vmem:[%s1 + $0x50] sm:$0xff]
  %v200 = vld [vmem:[%s1 + $0x58] sm:$0xff]
  %v201 = vld [vmem:[%s1 + $0x60] sm:$0xff]
  %v202 = vld [vmem:[%s1 + $0x68] sm:$0xff]
  %v203 = vld [vmem:[%s1 + $0x70] sm:$0xff]
  %v204 = vld [vmem:[%s1 + $0x78] sm:$0xff]
  %v205 = vld [vmem:[%s1 + $0x80] sm:$0xff]
  %v206 = vld [vmem:[%s1 + $0x88] sm:$0xff]
  %v207 = vld [vmem:[%s1 + $0x90] sm:$0xff]
  %v208 = vld [vmem:[%s1 + $0x98] sm:$0xff]
  %v209 = vld [vmem:[%s1 + $0xa0] sm:$0xff]
  %v210 = vld [vmem:[%s1 + $0xa8] sm:$0xff]
  %v211 = vld [vmem:[%s1 + $0xb0] sm:$0xff]
  %v212 = vld [vmem:[%s1 + $0xb8] sm:$0xff]
  %v213 = vld [vmem:[%s1 + $0xc0] sm:$0xff]
  %v214 = vld [vmem:[%s1 + $0xc8] sm:$0xff]
  %v215 = vld [vmem:[%s1 + $0xd0] sm:$0xff]
  %v216 = vld [vmem:[%s1 + $0xd8] sm:$0xff]
  %v217 = vld [vmem:[%s1 + $0xe0] sm:$0xff]
  %v218 = vld [vmem:[%s1 + $0xe8] sm:$0xff]
  %v219 = vld [vmem:[%s1 + $0xf0] sm:$0xff]
  %v220 = vld [vmem:[%s1 + $0xf8] sm:$0xff]
  %v221 = vld [vmem:[%s1 + $0x100] sm:$0xff]
  %v222 = vld [vmem:[%s1 + $0x108] sm:$0xff]
  %v223 = vld [vmem:[%s1 + $0x110] sm:$0xff]
  %v224 = vld [vmem:[%s1 + $0x118] sm:$0xff]
  %v225 = vld [vmem:[%s1 + $0x120] sm:$0xff]
  %v226 = vld [vmem:[%s1 + $0x128] sm:$0xff]
  %v227 = vld [vmem:[%s1 + $0x130] sm:$0xff]
  %v228 = vld [vmem:[%s1 + $0x138] sm:$0xff]
  %v229 = vld [vmem:[%s1 + $0x140] sm:$0xff]
  %v230 = vld [vmem:[%s1 + $0x148] sm:$0xff]
  %v231 = vld [vmem:[%s1 + $0x150] sm:$0xff]
  %v232 = vld [vmem:[%s1 + $0x158] sm:$0xff]
  %v233 = vld [vmem:[%s1 + $0x160] sm:$0xff]
  %v234 = vld [vmem:[%s1 + $0x168] sm:$0xff]
  %v235 = vld [vmem:[%s1 + $0x170] sm:$0xff]
  %v236 = vld [vmem:[%s1 + $0x178] sm:$0xff]
  %v237 = vld [vmem:[%s1 + $0x180] sm:$0xff]
  %v238 = vld [vmem:[%s1 + $0x188] sm:$0xff]
  %v239 = vld [vmem:[%s1 + $0x190] sm:$0xff]
  %v240 = vld [vmem:[%s1 + $0x198] sm:$0xff]
  %v241 = vld [vmem:[%s1 + $0x1a0] sm:$0xff]
  %v242 = vld [vmem:[%s1 + $0x1a8] sm:$0xff]
  %v243 = vld [vmem:[%s1 + $0x1b0] sm:$0xff]
  %v244 = vld [vmem:[%s1 + $0x1b8] sm:$0xff]
  %v245 = vld [vmem:[%s1 + $0x1c0] sm:$0xff]
  %v246 = vld [vmem:[%s1 + $0x1c8] sm:$0xff]
  %v247 = vld [vmem:[%s1 + $0x1d0] sm:$0xff]
  %v248 = vld [vmem:[%s1 + $0x1d8] sm:$0xff]
  %v249 = vld [vmem:[%s1 + $0x1e0] sm:$0xff]
  %v250 = vld [vmem:[%s1 + $0x1e8] sm:$0xff]
  %v251 = vld [vmem:[%s1 + $0x1f0] sm:$0xff]
  %v252 = vld [vmem:[%s1 + $0x1f8] sm:$0xff]
  %v253 = vld [vmem:[%s1 + $0x200] sm:$0xff]
  %v254 = vld [vmem:[%s1 + $0x208] sm:$0xff]
  %v255 = vld [vmem:[%s1 + $0x210] sm:$0xff]
  %v256 = vld [vmem:[%s1 + $0x218] sm:$0xff]
  %v257 = vld [vmem:[%s1 + $0x220] sm:$0xff]
  %v258 = vld [vmem:[%s1 + $0x228] sm:$0xff]
  %v259 = vld [vmem:[%s1 + $0x230] sm:$0xff]
  %v260 = vld [vmem:[%s1 + $0x238] sm:$0xff]
  %v261 = vld [vmem:[%s1 + $0x240] sm:$0xff]
  %v262 = vld [vmem:[%s1 + $0x248] sm:$0xff]
  %v263 = vld [vmem:[%s1 + $0x250] sm:$0xff]
  %v264 = vld [vmem:[%s1 + $0x258] sm:$0xff]
  %v265 = vld [vmem:[%s1 + $0x260] sm:$0xff]
  %v266 = vld [vmem:[%s1 + $0x268] sm:$0xff]
  %v267 = vld [vmem:[%s1 + $0x270] sm:$0xff]
  %v268 = vld [vmem:[%s1 + $0x278] sm:$0xff]
  %v269 = vld [vmem:[%s1 + $0x280] sm:$0xff]
  %v270 = vld [vmem:[%s1 + $0x288] sm:$0xff]
  %v271 = vld [vmem:[%s1 + $0x290] sm:$0xff]
  %v272 = vld [vmem:[%s1 + $0x298] sm:$0xff]
  %v273 = vld [vmem:[%s1 + $0x2a0] sm:$0xff]
  %v274 = vld [vmem:[%s1 + $0x2a8] sm:$0xff]
  %v275 = vld [vmem:[%s1 + $0x2b0] sm:$0xff]
  %v276 = vld [vmem:[%s1 + $0x2b8] sm:$0xff]
  %v277 = vld [vmem:[%s1 + $0x2c0] sm:$0xff]
  %v278 = vld [vmem:[%s1 + $0x2c8] sm:$0xff]
  %v279 = vld [vmem:[%s1 + $0x2d0] sm:$0xff]
  %v280 = vld [vmem:[%s1 + $0x2d8] sm:$0xff]
  %v281 = vld [vmem:[%s1 + $0x2e0] sm:$0xff]
  %v282 = vld [vmem:[%s1 + $0x2e8] sm:$0xff]
  %v283 = vld [vmem:[%s1 + $0x2f0] sm:$0xff]
  %v284 = vld [vmem:[%s1 + $0x2f8] sm:$0xff]
  %v285 = vld [vmem:[%s1 + $0x300] sm:$0xff]
  %v286 = vld [vmem:[%s1 + $0x308] sm:$0xff]
  %v287 = vld [vmem:[%s1 + $0x310] sm:$0xff]
  %v288 = vld [vmem:[%s1 + $0x318] sm:$0xff]
  %v289 = vld [vmem:[%s1 + $0x320] sm:$0xff]
  %v290 = vld [vmem:[%s1 + $0x328] sm:$0xff]
  %v291 = vld [vmem:[%s1 + $0x330] sm:$0xff]
  %v292 = vld [vmem:[%s1 + $0x338] sm:$0xff]
  %v293 = vld [vmem:[%s1 + $0x340] sm:$0xff]
  %v294 = vld [vmem:[%s1 + $0x348] sm:$0xff]
  %v295 = vld [vmem:[%s1 + $0x350] sm:$0xff]
  %v296 = vld [vmem:[%s1 + $0x358] sm:$0xff]
  %v297 = vld [vmem:[%s1 + $0x360] sm:$0xff]
  %v298 = vld [vmem:[%s1 + $0x368] sm:$0xff]
  %v299 = vld [vmem:[%s1 + $0x370] sm:$0xff]
  %v300 = vld [vmem:[%s1 + $0x378] sm:$0xff]
  %v301 = vld [vmem:[%s1 + $0x380] sm:$0xff]
  %v302 = vld [vmem:[%s1 + $0x388] sm:$0xff]
  %v303 = vld [vmem:[%s1 + $0x390] sm:$0xff]
  %v304 = vld [vmem:[%s1 + $0x398] sm:$0xff]
  %v305 = vld [vmem:[%s1 + $0x3a0] sm:$0xff]
  %v306 = vld [vmem:[%s1 + $0x3a8] sm:$0xff]
  %v307 = vld [vmem:[%s1 + $0x3b0] sm:$0xff]
  %v308 = vld [vmem:[%s1 + $0x3b8] sm:$0xff]
  %v309 = vld [vmem:[%s1 + $0x3c0] sm:$0xff]
  %v310 = vld [vmem:[%s1 + $0x3c8] sm:$0xff]
  %v311 = vld [vmem:[%s1 + $0x3d0] sm:$0xff]
  %v312 = vld [vmem:[%s1 + $0x3d8] sm:$0xff]
  %v313 = vld [vmem:[%s1 + $0x3e0] sm:$0xff]
  %v314 = vld [vmem:[%s1 + $0x3e8] sm:$0xff]
  %v315 = vld [vmem:[%s1 + $0x3f0] sm:$0xff]
  %v316 = vld [vmem:[%s1 + $0x3f8] sm:$0xff]
  %v317 = vld [vmem:[%s1 + $0x400] sm:$0xff]
  %v318 = vld [vmem:[%s1 + $0x408] sm:$0xff]
  %v319 = vld [vmem:[%s1 + $0x410] sm:$0xff]
  %v320 = vld [vmem:[%s1 + $0x418] sm:$0xff]
  %v321 = vld [vmem:[%s1 + $0x420] sm:$0xff]
  %v322 = vld [vmem:[%s1 + $0x428] sm:$0xff]
  %v323 = vld [vmem:[%s1 + $0x430] sm:$0xff]
  %v324 = vld [vmem:[%s1 + $0x438] sm:$0xff]
  %v325 = vld [vmem:[%s1 + $0x440] sm:$0xff]
  %v326 = vld [vmem:[%s1 + $0x448] sm:$0xff]
  %v327 = vld [vmem:[%s1 + $0x450] sm:$0xff]
  %v328 = vld [vmem:[%s1 + $0x458] sm:$0xff]
  %v329 = vld [vmem:[%s1 + $0x460] sm:$0xff]
  %v330 = vld [vmem:[%s1 + $0x468] sm:$0xff]
  %v331 = vld [vmem:[%s1 + $0x470] sm:$0xff]
  %v332 = vld [vmem:[%s1 + $0x478] sm:$0xff]
  %v333 = vld [vmem:[%s1 + $0x480] sm:$0xff]
  %v334 = vld [vmem:[%s1 + $0x488] sm:$0xff]
  %v335 = vld [vmem:[%s1 + $0x490] sm:$0xff]
  %v336 = vld [vmem:[%s1 + $0x498] sm:$0xff]
  %v337 = vld [vmem:[%s1 + $0x4a0] sm:$0xff]
  %v338 = vld [vmem:[%s1 + $0x4a8] sm:$0xff]
  %v339 = vld [vmem:[%s1 + $0x4b0] sm:$0xff]
  %v340 = vld [vmem:[%s1 + $0x4b8] sm:$0xff]
  %v341 = vld [vmem:[%s1 + $0x4c0] sm:$0xff]
  %v342 = vld [vmem:[%s1 + $0x4c8] sm:$0xff]
  %v343 = vld [vmem:[%s1 + $0x4d0] sm:$0xff]
  %v344 = vld [vmem:[%s1 + $0x4d8] sm:$0xff]
  %v345 = vld [vmem:[%s1 + $0x4e0] sm:$0xff]
  %v346 = vld [vmem:[%s1 + $0x4e8] sm:$0xff]
  %v347 = vld [vmem:[%s1 + $0x4f0] sm:$0xff]
  %v348 = vld [vmem:[%s1 + $0x4f8] sm:$0xff]
  %v349 = vld [vmem:[%s1 + $0x500] sm:$0xff]
  %v350 = vld [vmem:[%s1 + $0x508] sm:$0xff]
  %v351 = vld [vmem:[%s1 + $0x510] sm:$0xff]
  %v352 = vld [vmem:[%s1 + $0x518] sm:$0xff]
  %v353 = vld [vmem:[%s1 + $0x520] sm:$0xff]
  %v354 = vld [vmem:[%s1 + $0x528] sm:$0xff]
  %v355 = vld [vmem:[%s1 + $0x530] sm:$0xff]
  %v356 = vld [vmem:[%s1 + $0x538] sm:$0xff]
  %v357 = vld [vmem:[%s1 + $0x540] sm:$0xff]
  %v358 = vld [vmem:[%s1 + $0x548] sm:$0xff]
  %v359 = vld [vmem:[%s1 + $0x550] sm:$0xff]
  %v360 = vld [vmem:[%s1 + $0x558] sm:$0xff]
  %v361 = vld [vmem:[%s1 + $0x560] sm:$0xff]
  %v362 = vld [vmem:[%s1 + $0x568] sm:$0xff]
  %v363 = vld [vmem:[%s1 + $0x570] sm:$0xff]
  %v364 = vld [vmem:[%s1 + $0x578] sm:$0xff]
  %v365 = vld [vmem:[%s1 + $0x580] sm:$0xff]
  %v366 = vld [vmem:[%s1 + $0x588] sm:$0xff]
  %v367 = vld [vmem:[%s1 + $0x590] sm:$0xff]
  %v368 = vld [vmem:[%s1 + $0x598] sm:$0xff]
  %v369 = vld [vmem:[%s1 + $0x5a0] sm:$0xff]
  %v370 = vld [vmem:[%s1 + $0x5a8] sm:$0xff]
  %v371 = vld [vmem:[%s1 + $0x5b0] sm:$0xff]
  %v372 = vld [vmem:[%s1 + $0x5b8] sm:$0xff]
  %v373 = vld [vmem:[%s1 + $0x5c0] sm:$0xff]
  %v374 = vld [vmem:[%s1 + $0x5c8] sm:$0xff]
  %v375 = vld [vmem:[%s1 + $0x5d0] sm:$0xff]
  %v376 = vld [vmem:[%s1 + $0x5d8] sm:$0xff]
  %v377 = vld [vmem:[%s1 + $0x5e0] sm:$0xff]
  %v378 = vld [vmem:[%s1 + $0x5e8] sm:$0xff]
  %v379 = vld [vmem:[%s1 + $0x5f0] sm:$0xff]
  %v380 = vld [vmem:[%s1 + $0x5f8] sm:$0xff]
  %v381 = vld [vmem:[%s1 + $0x600] sm:$0xff]
  %v382 = vld [vmem:[%s1 + $0x608] sm:$0xff]
  %v383 = vld [vmem:[%s1 + $0x610] sm:$0xff]
  %v384 = vld [vmem:[%s1 + $0x618] sm:$0xff]
  %v385 = vld [vmem:[%s1 + $0x620] sm:$0xff]
  %v386 = vld [vmem:[%s1 + $0x628] sm:$0xff]
  %v387 = vld [vmem:[%s1 + $0x630] sm:$0xff]
  %v388 = vld [vmem:[%s1 + $0x638] sm:$0xff]
  %v389 = vld [vmem:[%s2] sm:$0x1]
  %v391 = vlaneseq
  %v392 = vshrl.u32 %v391, 7
  %v393 = vsub.s32 0, %v392
  %v394 = vrot.slane %v389, %v393
  %vm396 = vcmask 523264
  %v398 = vsel %vm396, %v32, 0
  %v401 = vsel %vm396, %v45, 0
  %v404 = vsel %vm396, %v58, 0
  %v407 = vsel %vm396, %v71, 0
  %v410 = vsel %vm396, %v84, 0
  %v413 = vsel %vm396, %v97, 0
  %v416 = vsel %vm396, %v110, 0
  %v419 = vsel %vm396, %v123, 0
  %v422 = vsel %vm396, %v136, 0
  %v425 = vsel %vm396, %v149, 0
  %v428 = vsel %vm396, %v162, 0
  %v431 = vsel %vm396, %v175, 0
  %v434 = vsel %vm396, %v188, 0
  %436 = vmatprep.subr.mxu0 0.0
  %437 = vmatpush1.msra.mxu0 %v189
  %438 = vmatprep.subr.mxu0 0.0
  %439 = vmatpush1.msra.mxu0 %v190
  %440 = vmatprep.subr.mxu0 0.0
  %441 = vmatpush1.msra.mxu0 %v191
  %442 = vmatprep.subr.mxu0 0.0
  %443 = vmatpush1.msra.mxu0 %v192
  %444 = vmatprep.subr.mxu0 0.0
  %445 = vmatpush1.msra.mxu0 %v193
  %446 = vmatprep.subr.mxu0 0.0
  %447 = vmatpush1.msra.mxu0 %v194
  %448 = vmatprep.subr.mxu0 0.0
  %449 = vmatpush1.msra.mxu0 %v195
  %450 = vmatprep.subr.mxu0 0.0
  %451 = vmatpush1.msra.mxu0 %v196
  %452 = vmatprep.subr.mxu0 0.0
  %453 = vmatpush1.msra.mxu0 %v197
  %454 = vmatprep.subr.mxu0 0.0
  %455 = vmatpush1.msra.mxu0 %v198
  %456 = vmatprep.subr.mxu0 0.0
  %457 = vmatpush1.msra.mxu0 %v199
  %458 = vmatprep.subr.mxu0 0.0
  %459 = vmatpush1.msra.mxu0 %v200
  %460 = vmatprep.subr.mxu0 0.0
  %461 = vmatpush1.msra.mxu0 %v201
  %462 = vmatprep.subr.mxu0 0.0
  %463 = vmatpush1.msra.mxu0 %v202
  %464 = vmatprep.subr.mxu0 0.0
  %465 = vmatpush1.msra.mxu0 %v203
  %466 = vmatprep.subr.mxu0 0.0
  %467 = vmatpush1.msra.mxu0 %v204
  %468 = vmatprep.subr.mxu0 0.0
  %469 = vmatpush1.msra.mxu0 %v205
  %470 = vmatprep.subr.mxu0 0.0
  %471 = vmatpush1.msra.mxu0 %v206
  %472 = vmatprep.subr.mxu0 0.0
  %473 = vmatpush1.msra.mxu0 %v207
  %474 = vmatprep.subr.mxu0 0.0
  %475 = vmatpush1.msra.mxu0 %v208
  %476 = vmatprep.subr.mxu0 0.0
  %477 = vmatpush1.msra.mxu0 %v209
  %478 = vmatprep.subr.mxu0 0.0
  %479 = vmatpush1.msra.mxu0 %v210
  %480 = vmatprep.subr.mxu0 0.0
  %481 = vmatpush1.msra.mxu0 %v211
  %482 = vmatprep.subr.mxu0 0.0
  %483 = vmatpush1.msra.mxu0 %v212
  %484 = vmatprep.subr.mxu0 0.0
  %485 = vmatpush1.msra.mxu0 %v213
  %486 = vmatprep.subr.mxu0 0.0
  %487 = vmatpush1.msra.mxu0 %v214
  %488 = vmatprep.subr.mxu0 0.0
  %489 = vmatpush1.msra.mxu0 %v215
  %490 = vmatprep.subr.mxu0 0.0
  %491 = vmatpush1.msra.mxu0 %v216
  %492 = vmatprep.subr.mxu0 0.0
  %493 = vmatpush1.msra.mxu0 %v217
  %494 = vmatprep.subr.mxu0 0.0
  %495 = vmatpush1.msra.mxu0 %v218
  %496 = vmatprep.subr.mxu0 0.0
  %497 = vmatpush1.msra.mxu0 %v219
  %498 = vmatprep.subr.mxu0 0.0
  %499 = vmatpush1.msra.mxu0 %v220
  %500 = vmatprep.mubr.f32.mxu0 %v21
  %501 = vmatmul.mubr.f32.gmra.mrb[0].mxu0 %v20
  %v502 = vpop.f32.mrb[0].mxu0
  %v503 = vadd.f32 %v394, %v502
  %v504 = vpop.f32.mrb[0].mxu0
  %505 = vmatprep.mubr.f32.mxu0 %v34
  %506 = vmatmul.mubr.f32.gmra.mrb[0].mxu0 %v33
  %v507 = vpop.f32.mrb[0].mxu0
  %v508 = vadd.f32 %v394, %v507
  %v509 = vpop.f32.mrb[0].mxu0
  %510 = vmatprep.mubr.f32.mxu0 %v47
  %511 = vmatmul.mubr.f32.gmra.mrb[0].mxu0 %v46
  %v512 = vpop.f32.mrb[0].mxu0
  %v513 = vadd.f32 %v394, %v512
  %v514 = vpop.f32.mrb[0].mxu0
  %515 = vmatprep.mubr.f32.mxu0 %v60
  %516 = vmatmul.mubr.f32.gmra.mrb[0].mxu0 %v59
  %v517 = vpop.f32.mrb[0].mxu0
  %v518 = vadd.f32 %v394, %v517
  %v519 = vpop.f32.mrb[0].mxu0
  %520 = vmatprep.mubr.f32.mxu0 %v73
  %521 = vmatmul.mubr.f32.gmra.mrb[0].mxu0 %v72
  %v522 = vpop.f32.mrb[0].mxu0
  %v523 = vadd.f32 %v394, %v522
  %v524 = vpop.f32.mrb[0].mxu0
  %525 = vmatprep.mubr.f32.mxu0 %v86
  %526 = vmatmul.mubr.f32.gmra.mrb[0].mxu0 %v85
  %v527 = vpop.f32.mrb[0].mxu0
  %v528 = vadd.f32 %v394, %v527
  %v529 = vpop.f32.mrb[0].mxu0
  %530 = vmatprep.mubr.f32.mxu0 %v99
  %531 = vmatmul.mubr.f32.gmra.mrb[0].mxu0 %v98
  %v532 = vpop.f32.mrb[0].mxu0
  %v533 = vadd.f32 %v394, %v532
  %v534 = vpop.f32.mrb[0].mxu0
  %535 = vmatprep.mubr.f32.mxu0 %v112
  %536 = vmatmul.mubr.f32.gmra.mrb[0].mxu0 %v111
  %v537 = vpop.f32.mrb[0].mxu0
  %v538 = vadd.f32 %v394, %v537
  %v539 = vpop.f32.mrb[0].mxu0
  %540 = vmatprep.mubr.f32.mxu0 %v125
  %541 = vmatmul.mubr.f32.gmra.mrb[0].mxu0 %v124
  %v542 = vpop.f32.mrb[0].mxu0
  %v543 = vadd.f32 %v394, %v542
  %v544 = vpop.f32.mrb[0].mxu0
  %545 = vmatprep.mubr.f32.mxu0 %v138
  %546 = vmatmul.mubr.f32.gmra.mrb[0].mxu0 %v137
  %v547 = vpop.f32.mrb[0].mxu0
  %v548 = vadd.f32 %v394, %v547
  %v549 = vpop.f32.mrb[0].mxu0
  %550 = vmatprep.mubr.f32.mxu0 %v151
  %551 = vmatmul.mubr.f32.gmra.mrb[0].mxu0 %v150
  %v552 = vpop.f32.mrb[0].mxu0
  %v553 = vadd.f32 %v394, %v552
  %v554 = vpop.f32.mrb[0].mxu0
  %555 = vmatprep.mubr.f32.mxu0 %v164
  %556 = vmatmul.mubr.f32.gmra.mrb[0].mxu0 %v163
  %v557 = vpop.f32.mrb[0].mxu0
  %v558 = vadd.f32 %v394, %v557
  %v559 = vpop.f32.mrb[0].mxu0
  %560 = vmatprep.mubr.f32.mxu0 %v177
  %561 = vmatmul.mubr.f32.gmra.mrb[0].mxu0 %v176
  %v562 = vpop.f32.mrb[0].mxu0
  %v563 = vadd.f32 %v394, %v562
  %v564 = vpop.f32.mrb[0].mxu0
  %565 = vdwg.mxu0
  %566 = vmatprep.subr.mxu0 0.0
  %567 = vmatpush1.msra.mxu0 %v221
  %568 = vmatprep.subr.mxu0 0.0
  %569 = vmatpush1.msra.mxu0 %v222
  %570 = vmatprep.subr.mxu0 0.0
  %571 = vmatpush1.msra.mxu0 %v223
  %572 = vmatprep.subr.mxu0 0.0
  %573 = vmatpush1.msra.mxu0 %v224
  %574 = vmatprep.subr.mxu0 0.0
  %575 = vmatpush1.msra.mxu0 %v225
  %576 = vmatprep.subr.mxu0 0.0
  %577 = vmatpush1.msra.mxu0 %v226
  %578 = vmatprep.subr.mxu0 0.0
  %579 = vmatpush1.msra.mxu0 %v227
  %580 = vmatprep.subr.mxu0 0.0
  %581 = vmatpush1.msra.mxu0 %v228
  %582 = vmatprep.subr.mxu0 0.0
  %583 = vmatpush1.msra.mxu0 %v229
  %584 = vmatprep.subr.mxu0 0.0
  %585 = vmatpush1.msra.mxu0 %v230
  %586 = vmatprep.subr.mxu0 0.0
  %587 = vmatpush1.msra.mxu0 %v231
  %588 = vmatprep.subr.mxu0 0.0
  %589 = vmatpush1.msra.mxu0 %v232
  %590 = vmatprep.subr.mxu0 0.0
  %591 = vmatpush1.msra.mxu0 %v233
  %592 = vmatprep.subr.mxu0 0.0
  %593 = vmatpush1.msra.mxu0 %v234
  %594 = vmatprep.subr.mxu0 0.0
  %595 = vmatpush1.msra.mxu0 %v235
  %596 = vmatprep.subr.mxu0 0.0
  %597 = vmatpush1.msra.mxu0 %v236
  %598 = vmatprep.subr.mxu0 0.0
  %599 = vmatpush1.msra.mxu0 %v237
  %600 = vmatprep.subr.mxu0 0.0
  %601 = vmatpush1.msra.mxu0 %v238
  %602 = vmatprep.subr.mxu0 0.0
  %603 = vmatpush1.msra.mxu0 %v239
  %604 = vmatprep.subr.mxu0 0.0
  %605 = vmatpush1.msra.mxu0 %v240
  %606 = vmatprep.subr.mxu0 0.0
  %607 = vmatpush1.msra.mxu0 %v241
  %608 = vmatprep.subr.mxu0 0.0
  %609 = vmatpush1.msra.mxu0 %v242
  %610 = vmatprep.subr.mxu0 0.0
  %611 = vmatpush1.msra.mxu0 %v243
  %612 = vmatprep.subr.mxu0 0.0
  %613 = vmatpush1.msra.mxu0 %v244
  %614 = vmatprep.subr.mxu0 0.0
  %615 = vmatpush1.msra.mxu0 %v245
  %616 = vmatprep.subr.mxu0 0.0
  %617 = vmatpush1.msra.mxu0 %v246
  %618 = vmatprep.subr.mxu0 0.0
  %619 = vmatpush1.msra.mxu0 %v247
  %620 = vmatprep.subr.mxu0 0.0
  %621 = vmatpush1.msra.mxu0 %v248
  %622 = vmatprep.subr.mxu0 0.0
  %623 = vmatpush1.msra.mxu0 %v249
  %624 = vmatprep.subr.mxu0 0.0
  %625 = vmatpush1.msra.mxu0 %v250
  %626 = vmatprep.subr.mxu0 0.0
  %627 = vmatpush1.msra.mxu0 %v251
  %628 = vmatprep.subr.mxu0 0.0
  %629 = vmatpush1.msra.mxu0 %v252
  %630 = vmatprep.mubr.f32.mxu0 %v23
  %631 = vmatmul.mubr.f32.gmra.mrb[0].mxu0 %v22
  %v632 = vpop.f32.mrb[0].mxu0
  %v633 = vadd.f32 %v503, %v632
  %v634 = vpop.f32.mrb[0].mxu0
  %635 = vmatprep.mubr.f32.mxu0 %v36
  %636 = vmatmul.mubr.f32.gmra.mrb[0].mxu0 %v35
  %v637 = vpop.f32.mrb[0].mxu0
  %v638 = vadd.f32 %v508, %v637
  %v639 = vpop.f32.mrb[0].mxu0
  %640 = vmatprep.mubr.f32.mxu0 %v49
  %641 = vmatmul.mubr.f32.gmra.mrb[0].mxu0 %v48
  %v642 = vpop.f32.mrb[0].mxu0
  %v643 = vadd.f32 %v513, %v642
  %v644 = vpop.f32.mrb[0].mxu0
  %645 = vmatprep.mubr.f32.mxu0 %v62
  %646 = vmatmul.mubr.f32.gmra.mrb[0].mxu0 %v61
  %v647 = vpop.f32.mrb[0].mxu0
  %v648 = vadd.f32 %v518, %v647
  %v649 = vpop.f32.mrb[0].mxu0
  %650 = vmatprep.mubr.f32.mxu0 %v75
  %651 = vmatmul.mubr.f32.gmra.mrb[0].mxu0 %v74
  %v652 = vpop.f32.mrb[0].mxu0
  %v653 = vadd.f32 %v523, %v652
  %v654 = vpop.f32.mrb[0].mxu0
  %655 = vmatprep.mubr.f32.mxu0 %v88
  %656 = vmatmul.mubr.f32.gmra.mrb[0].mxu0 %v87
  %v657 = vpop.f32.mrb[0].mxu0
  %v658 = vadd.f32 %v528, %v657
  %v659 = vpop.f32.mrb[0].mxu0
  %660 = vmatprep.mubr.f32.mxu0 %v101
  %661 = vmatmul.mubr.f32.gmra.mrb[0].mxu0 %v100
  %v662 = vpop.f32.mrb[0].mxu0
  %v663 = vadd.f32 %v533, %v662
  %v664 = vpop.f32.mrb[0].mxu0
  %665 = vmatprep.mubr.f32.mxu0 %v114
  %666 = vmatmul.mubr.f32.gmra.mrb[0].mxu0 %v113
  %v667 = vpop.f32.mrb[0].mxu0
  %v668 = vadd.f32 %v538, %v667
  %v669 = vpop.f32.mrb[0].mxu0
  %670 = vmatprep.mubr.f32.mxu0 %v127
  %671 = vmatmul.mubr.f32.gmra.mrb[0].mxu0 %v126
  %v672 = vpop.f32.mrb[0].mxu0
  %v673 = vadd.f32 %v543, %v672
  %v674 = vpop.f32.mrb[0].mxu0
  %675 = vmatprep.mubr.f32.mxu0 %v140
  %676 = vmatmul.mubr.f32.gmra.mrb[0].mxu0 %v139
  %v677 = vpop.f32.mrb[0].mxu0
  %v678 = vadd.f32 %v548, %v677
  %v679 = vpop.f32.mrb[0].mxu0
  %680 = vmatprep.mubr.f32.mxu0 %v153
  %681 = vmatmul.mubr.f32.gmra.mrb[0].mxu0 %v152
  %v682 = vpop.f32.mrb[0].mxu0
  %v683 = vadd.f32 %v553, %v682
  %v684 = vpop.f32.mrb[0].mxu0
  %685 = vmatprep.mubr.f32.mxu0 %v166
  %686 = vmatmul.mubr.f32.gmra.mrb[0].mxu0 %v165
  %v687 = vpop.f32.mrb[0].mxu0
  %v688 = vadd.f32 %v558, %v687
  %v689 = vpop.f32.mrb[0].mxu0
  %690 = vmatprep.mubr.f32.mxu0 %v179
  %691 = vmatmul.mubr.f32.gmra.mrb[0].mxu0 %v178
  %v692 = vpop.f32.mrb[0].mxu0
  %v693 = vadd.f32 %v563, %v692
  %v694 = vpop.f32.mrb[0].mxu0
  %695 = vdwg.mxu0
  %696 = vmatprep.subr.mxu0 0.0
  %697 = vmatpush1.msra.mxu0 %v253
  %698 = vmatprep.subr.mxu0 0.0
  %699 = vmatpush1.msra.mxu0 %v254
  %700 = vmatprep.subr.mxu0 0.0
  %701 = vmatpush1.msra.mxu0 %v255
  %702 = vmatprep.subr.mxu0 0.0
  %703 = vmatpush1.msra.mxu0 %v256
  %704 = vmatprep.subr.mxu0 0.0
  %705 = vmatpush1.msra.mxu0 %v257
  %706 = vmatprep.subr.mxu0 0.0
  %707 = vmatpush1.msra.mxu0 %v258
  %708 = vmatprep.subr.mxu0 0.0
  %709 = vmatpush1.msra.mxu0 %v259
  %710 = vmatprep.subr.mxu0 0.0
  %711 = vmatpush1.msra.mxu0 %v260
  %712 = vmatprep.subr.mxu0 0.0
  %713 = vmatpush1.msra.mxu0 %v261
  %714 = vmatprep.subr.mxu0 0.0
  %715 = vmatpush1.msra.mxu0 %v262
  %716 = vmatprep.subr.mxu0 0.0
  %717 = vmatpush1.msra.mxu0 %v263
  %718 = vmatprep.subr.mxu0 0.0
  %719 = vmatpush1.msra.mxu0 %v264
  %720 = vmatprep.subr.mxu0 0.0
  %721 = vmatpush1.msra.mxu0 %v265
  %722 = vmatprep.subr.mxu0 0.0
  %723 = vmatpush1.msra.mxu0 %v266
  %724 = vmatprep.subr.mxu0 0.0
  %725 = vmatpush1.msra.mxu0 %v267
  %726 = vmatprep.subr.mxu0 0.0
  %727 = vmatpush1.msra.mxu0 %v268
  %728 = vmatprep.subr.mxu0 0.0
  %729 = vmatpush1.msra.mxu0 %v269
  %730 = vmatprep.subr.mxu0 0.0
  %731 = vmatpush1.msra.mxu0 %v270
  %732 = vmatprep.subr.mxu0 0.0
  %733 = vmatpush1.msra.mxu0 %v271
  %734 = vmatprep.subr.mxu0 0.0
  %735 = vmatpush1.msra.mxu0 %v272
  %736 = vmatprep.subr.mxu0 0.0
  %737 = vmatpush1.msra.mxu0 %v273
  %738 = vmatprep.subr.mxu0 0.0
  %739 = vmatpush1.msra.mxu0 %v274
  %740 = vmatprep.subr.mxu0 0.0
  %741 = vmatpush1.msra.mxu0 %v275
  %742 = vmatprep.subr.mxu0 0.0
  %743 = vmatpush1.msra.mxu0 %v276
  %744 = vmatprep.subr.mxu0 0.0
  %745 = vmatpush1.msra.mxu0 %v277
  %746 = vmatprep.subr.mxu0 0.0
  %747 = vmatpush1.msra.mxu0 %v278
  %748 = vmatprep.subr.mxu0 0.0
  %749 = vmatpush1.msra.mxu0 %v279
  %750 = vmatprep.subr.mxu0 0.0
  %751 = vmatpush1.msra.mxu0 %v280
  %752 = vmatprep.subr.mxu0 0.0
  %753 = vmatpush1.msra.mxu0 %v281
  %754 = vmatprep.subr.mxu0 0.0
  %755 = vmatpush1.msra.mxu0 %v282
  %756 = vmatprep.subr.mxu0 0.0
  %757 = vmatpush1.msra.mxu0 %v283
  %758 = vmatprep.subr.mxu0 0.0
  %759 = vmatpush1.msra.mxu0 %v284
  %760 = vmatprep.mubr.f32.mxu0 %v25
  %761 = vmatmul.mubr.f32.gmra.mrb[0].mxu0 %v24
  %v762 = vpop.f32.mrb[0].mxu0
  %v763 = vadd.f32 %v633, %v762
  %v764 = vpop.f32.mrb[0].mxu0
  %765 = vmatprep.mubr.f32.mxu0 %v38
  %766 = vmatmul.mubr.f32.gmra.mrb[0].mxu0 %v37
  %v767 = vpop.f32.mrb[0].mxu0
  %v768 = vadd.f32 %v638, %v767
  %v769 = vpop.f32.mrb[0].mxu0
  %770 = vmatprep.mubr.f32.mxu0 %v51
  %771 = vmatmul.mubr.f32.gmra.mrb[0].mxu0 %v50
  %v772 = vpop.f32.mrb[0].mxu0
  %v773 = vadd.f32 %v643, %v772
  %v774 = vpop.f32.mrb[0].mxu0
  %775 = vmatprep.mubr.f32.mxu0 %v64
  %776 = vmatmul.mubr.f32.gmra.mrb[0].mxu0 %v63
  %v777 = vpop.f32.mrb[0].mxu0
  %v778 = vadd.f32 %v648, %v777
  %v779 = vpop.f32.mrb[0].mxu0
  %780 = vmatprep.mubr.f32.mxu0 %v77
  %781 = vmatmul.mubr.f32.gmra.mrb[0].mxu0 %v76
  %v782 = vpop.f32.mrb[0].mxu0
  %v783 = vadd.f32 %v653, %v782
  %v784 = vpop.f32.mrb[0].mxu0
  %785 = vmatprep.mubr.f32.mxu0 %v90
  %786 = vmatmul.mubr.f32.gmra.mrb[0].mxu0 %v89
  %v787 = vpop.f32.mrb[0].mxu0
  %v788 = vadd.f32 %v658, %v787
  %v789 = vpop.f32.mrb[0].mxu0
  %790 = vmatprep.mubr.f32.mxu0 %v103
  %791 = vmatmul.mubr.f32.gmra.mrb[0].mxu0 %v102
  %v792 = vpop.f32.mrb[0].mxu0
  %v793 = vadd.f32 %v663, %v792
  %v794 = vpop.f32.mrb[0].mxu0
  %795 = vmatprep.mubr.f32.mxu0 %v116
  %796 = vmatmul.mubr.f32.gmra.mrb[0].mxu0 %v115
  %v797 = vpop.f32.mrb[0].mxu0
  %v798 = vadd.f32 %v668, %v797
  %v799 = vpop.f32.mrb[0].mxu0
  %800 = vmatprep.mubr.f32.mxu0 %v129
  %801 = vmatmul.mubr.f32.gmra.mrb[0].mxu0 %v128
  %v802 = vpop.f32.mrb[0].mxu0
  %v803 = vadd.f32 %v673, %v802
  %v804 = vpop.f32.mrb[0].mxu0
  %805 = vmatprep.mubr.f32.mxu0 %v142
  %806 = vmatmul.mubr.f32.gmra.mrb[0].mxu0 %v141
  %v807 = vpop.f32.mrb[0].mxu0
  %v808 = vadd.f32 %v678, %v807
  %v809 = vpop.f32.mrb[0].mxu0
  %810 = vmatprep.mubr.f32.mxu0 %v155
  %811 = vmatmul.mubr.f32.gmra.mrb[0].mxu0 %v154
  %v812 = vpop.f32.mrb[0].mxu0
  %v813 = vadd.f32 %v683, %v812
  %v814 = vpop.f32.mrb[0].mxu0
  %815 = vmatprep.mubr.f32.mxu0 %v168
  %816 = vmatmul.mubr.f32.gmra.mrb[0].mxu0 %v167
  %v817 = vpop.f32.mrb[0].mxu0
  %v818 = vadd.f32 %v688, %v817
  %v819 = vpop.f32.mrb[0].mxu0
  %820 = vmatprep.mubr.f32.mxu0 %v181
  %821 = vmatmul.mubr.f32.gmra.mrb[0].mxu0 %v180
  %v822 = vpop.f32.mrb[0].mxu0
  %v823 = vadd.f32 %v693, %v822
  %v824 = vpop.f32.mrb[0].mxu0
  %825 = vdwg.mxu0
  %826 = vmatprep.subr.mxu0 0.0
  %827 = vmatpush1.msra.mxu0 %v285
  %828 = vmatprep.subr.mxu0 0.0
  %829 = vmatpush1.msra.mxu0 %v286
  %830 = vmatprep.subr.mxu0 0.0
  %831 = vmatpush1.msra.mxu0 %v287
  %832 = vmatprep.subr.mxu0 0.0
  %833 = vmatpush1.msra.mxu0 %v288
  %834 = vmatprep.subr.mxu0 0.0
  %835 = vmatpush1.msra.mxu0 %v289
  %836 = vmatprep.subr.mxu0 0.0
  %837 = vmatpush1.msra.mxu0 %v290
  %838 = vmatprep.subr.mxu0 0.0
  %839 = vmatpush1.msra.mxu0 %v291
  %840 = vmatprep.subr.mxu0 0.0
  %841 = vmatpush1.msra.mxu0 %v292
  %842 = vmatprep.subr.mxu0 0.0
  %843 = vmatpush1.msra.mxu0 %v293
  %844 = vmatprep.subr.mxu0 0.0
  %845 = vmatpush1.msra.mxu0 %v294
  %846 = vmatprep.subr.mxu0 0.0
  %847 = vmatpush1.msra.mxu0 %v295
  %848 = vmatprep.subr.mxu0 0.0
  %849 = vmatpush1.msra.mxu0 %v296
  %850 = vmatprep.subr.mxu0 0.0
  %851 = vmatpush1.msra.mxu0 %v297
  %852 = vmatprep.subr.mxu0 0.0
  %853 = vmatpush1.msra.mxu0 %v298
  %854 = vmatprep.subr.mxu0 0.0
  %855 = vmatpush1.msra.mxu0 %v299
  %856 = vmatprep.subr.mxu0 0.0
  %857 = vmatpush1.msra.mxu0 %v300
  %858 = vmatprep.subr.mxu0 0.0
  %859 = vmatpush1.msra.mxu0 %v301
  %860 = vmatprep.subr.mxu0 0.0
  %861 = vmatpush1.msra.mxu0 %v302
  %862 = vmatprep.subr.mxu0 0.0
  %863 = vmatpush1.msra.mxu0 %v303
  %864 = vmatprep.subr.mxu0 0.0
  %865 = vmatpush1.msra.mxu0 %v304
  %866 = vmatprep.subr.mxu0 0.0
  %867 = vmatpush1.msra.mxu0 %v305
  %868 = vmatprep.subr.mxu0 0.0
  %869 = vmatpush1.msra.mxu0 %v306
  %870 = vmatprep.subr.mxu0 0.0
  %871 = vmatpush1.msra.mxu0 %v307
  %872 = vmatprep.subr.mxu0 0.0
  %873 = vmatpush1.msra.mxu0 %v308
  %874 = vmatprep.subr.mxu0 0.0
  %875 = vmatpush1.msra.mxu0 %v309
  %876 = vmatprep.subr.mxu0 0.0
  %877 = vmatpush1.msra.mxu0 %v310
  %878 = vmatprep.subr.mxu0 0.0
  %879 = vmatpush1.msra.mxu0 %v311
  %880 = vmatprep.subr.mxu0 0.0
  %881 = vmatpush1.msra.mxu0 %v312
  %882 = vmatprep.subr.mxu0 0.0
  %883 = vmatpush1.msra.mxu0 %v313
  %884 = vmatprep.subr.mxu0 0.0
  %885 = vmatpush1.msra.mxu0 %v314
  %886 = vmatprep.subr.mxu0 0.0
  %887 = vmatpush1.msra.mxu0 %v315
  %888 = vmatprep.subr.mxu0 0.0
  %889 = vmatpush1.msra.mxu0 %v316
  %890 = vmatprep.mubr.f32.mxu0 %v27
  %891 = vmatmul.mubr.f32.gmra.mrb[0].mxu0 %v26
  %v892 = vpop.f32.mrb[0].mxu0
  %v893 = vadd.f32 %v763, %v892
  %v894 = vpop.f32.mrb[0].mxu0
  %895 = vmatprep.mubr.f32.mxu0 %v40
  %896 = vmatmul.mubr.f32.gmra.mrb[0].mxu0 %v39
  %v897 = vpop.f32.mrb[0].mxu0
  %v898 = vadd.f32 %v768, %v897
  %v899 = vpop.f32.mrb[0].mxu0
  %900 = vmatprep.mubr.f32.mxu0 %v53
  %901 = vmatmul.mubr.f32.gmra.mrb[0].mxu0 %v52
  %v902 = vpop.f32.mrb[0].mxu0
  %v903 = vadd.f32 %v773, %v902
  %v904 = vpop.f32.mrb[0].mxu0
  %905 = vmatprep.mubr.f32.mxu0 %v66
  %906 = vmatmul.mubr.f32.gmra.mrb[0].mxu0 %v65
  %v907 = vpop.f32.mrb[0].mxu0
  %v908 = vadd.f32 %v778, %v907
  %v909 = vpop.f32.mrb[0].mxu0
  %910 = vmatprep.mubr.f32.mxu0 %v79
  %911 = vmatmul.mubr.f32.gmra.mrb[0].mxu0 %v78
  %v912 = vpop.f32.mrb[0].mxu0
  %v913 = vadd.f32 %v783, %v912
  %v914 = vpop.f32.mrb[0].mxu0
  %915 = vmatprep.mubr.f32.mxu0 %v92
  %916 = vmatmul.mubr.f32.gmra.mrb[0].mxu0 %v91
  %v917 = vpop.f32.mrb[0].mxu0
  %v918 = vadd.f32 %v788, %v917
  %v919 = vpop.f32.mrb[0].mxu0
  %920 = vmatprep.mubr.f32.mxu0 %v105
  %921 = vmatmul.mubr.f32.gmra.mrb[0].mxu0 %v104
  %v922 = vpop.f32.mrb[0].mxu0
  %v923 = vadd.f32 %v793, %v922
  %v924 = vpop.f32.mrb[0].mxu0
  %925 = vmatprep.mubr.f32.mxu0 %v118
  %926 = vmatmul.mubr.f32.gmra.mrb[0].mxu0 %v117
  %v927 = vpop.f32.mrb[0].mxu0
  %v928 = vadd.f32 %v798, %v927
  %v929 = vpop.f32.mrb[0].mxu0
  %930 = vmatprep.mubr.f32.mxu0 %v131
  %931 = vmatmul.mubr.f32.gmra.mrb[0].mxu0 %v130
  %v932 = vpop.f32.mrb[0].mxu0
  %v933 = vadd.f32 %v803, %v932
  %v934 = vpop.f32.mrb[0].mxu0
  %935 = vmatprep.mubr.f32.mxu0 %v144
  %936 = vmatmul.mubr.f32.gmra.mrb[0].mxu0 %v143
  %v937 = vpop.f32.mrb[0].mxu0
  %v938 = vadd.f32 %v808, %v937
  %v939 = vpop.f32.mrb[0].mxu0
  %940 = vmatprep.mubr.f32.mxu0 %v157
  %941 = vmatmul.mubr.f32.gmra.mrb[0].mxu0 %v156
  %v942 = vpop.f32.mrb[0].mxu0
  %v943 = vadd.f32 %v813, %v942
  %v944 = vpop.f32.mrb[0].mxu0
  %945 = vmatprep.mubr.f32.mxu0 %v170
  %946 = vmatmul.mubr.f32.gmra.mrb[0].mxu0 %v169
  %v947 = vpop.f32.mrb[0].mxu0
  %v948 = vadd.f32 %v818, %v947
  %v949 = vpop.f32.mrb[0].mxu0
  %950 = vmatprep.mubr.f32.mxu0 %v183
  %951 = vmatmul.mubr.f32.gmra.mrb[0].mxu0 %v182
  %v952 = vpop.f32.mrb[0].mxu0
  %v953 = vadd.f32 %v823, %v952
  %v954 = vpop.f32.mrb[0].mxu0
  %955 = vdwg.mxu0
  %956 = vmatprep.subr.mxu0 0.0
  %957 = vmatpush1.msra.mxu0 %v317
  %958 = vmatprep.subr.mxu0 0.0
  %959 = vmatpush1.msra.mxu0 %v318
  %960 = vmatprep.subr.mxu0 0.0
  %961 = vmatpush1.msra.mxu0 %v319
  %962 = vmatprep.subr.mxu0 0.0
  %963 = vmatpush1.msra.mxu0 %v320
  %964 = vmatprep.subr.mxu0 0.0
  %965 = vmatpush1.msra.mxu0 %v321
  %966 = vmatprep.subr.mxu0 0.0
  %967 = vmatpush1.msra.mxu0 %v322
  %968 = vmatprep.subr.mxu0 0.0
  %969 = vmatpush1.msra.mxu0 %v323
  %970 = vmatprep.subr.mxu0 0.0
  %971 = vmatpush1.msra.mxu0 %v324
  %972 = vmatprep.subr.mxu0 0.0
  %973 = vmatpush1.msra.mxu0 %v325
  %974 = vmatprep.subr.mxu0 0.0
  %975 = vmatpush1.msra.mxu0 %v326
  %976 = vmatprep.subr.mxu0 0.0
  %977 = vmatpush1.msra.mxu0 %v327
  %978 = vmatprep.subr.mxu0 0.0
  %979 = vmatpush1.msra.mxu0 %v328
  %980 = vmatprep.subr.mxu0 0.0
  %981 = vmatpush1.msra.mxu0 %v329
  %982 = vmatprep.subr.mxu0 0.0
  %983 = vmatpush1.msra.mxu0 %v330
  %984 = vmatprep.subr.mxu0 0.0
  %985 = vmatpush1.msra.mxu0 %v331
  %986 = vmatprep.subr.mxu0 0.0
  %987 = vmatpush1.msra.mxu0 %v332
  %988 = vmatprep.subr.mxu0 0.0
  %989 = vmatpush1.msra.mxu0 %v333
  %990 = vmatprep.subr.mxu0 0.0
  %991 = vmatpush1.msra.mxu0 %v334
  %992 = vmatprep.subr.mxu0 0.0
  %993 = vmatpush1.msra.mxu0 %v335
  %994 = vmatprep.subr.mxu0 0.0
  %995 = vmatpush1.msra.mxu0 %v336
  %996 = vmatprep.subr.mxu0 0.0
  %997 = vmatpush1.msra.mxu0 %v337
  %998 = vmatprep.subr.mxu0 0.0
  %999 = vmatpush1.msra.mxu0 %v338
  %1000 = vmatprep.subr.mxu0 0.0
  %1001 = vmatpush1.msra.mxu0 %v339
  %1002 = vmatprep.subr.mxu0 0.0
  %1003 = vmatpush1.msra.mxu0 %v340
  %1004 = vmatprep.subr.mxu0 0.0
  %1005 = vmatpush1.msra.mxu0 %v341
  %1006 = vmatprep.subr.mxu0 0.0
  %1007 = vmatpush1.msra.mxu0 %v342
  %1008 = vmatprep.subr.mxu0 0.0
  %1009 = vmatpush1.msra.mxu0 %v343
  %1010 = vmatprep.subr.mxu0 0.0
  %1011 = vmatpush1.msra.mxu0 %v344
  %1012 = vmatprep.subr.mxu0 0.0
  %1013 = vmatpush1.msra.mxu0 %v345
  %1014 = vmatprep.subr.mxu0 0.0
  %1015 = vmatpush1.msra.mxu0 %v346
  %1016 = vmatprep.subr.mxu0 0.0
  %1017 = vmatpush1.msra.mxu0 %v347
  %1018 = vmatprep.subr.mxu0 0.0
  %1019 = vmatpush1.msra.mxu0 %v348
  %1020 = vmatprep.mubr.f32.mxu0 %v29
  %1021 = vmatmul.mubr.f32.gmra.mrb[0].mxu0 %v28
  %v1022 = vpop.f32.mrb[0].mxu0
  %v1023 = vadd.f32 %v893, %v1022
  %v1024 = vpop.f32.mrb[0].mxu0
  %1025 = vmatprep.mubr.f32.mxu0 %v42
  %1026 = vmatmul.mubr.f32.gmra.mrb[0].mxu0 %v41
  %v1027 = vpop.f32.mrb[0].mxu0
  %v1028 = vadd.f32 %v898, %v1027
  %v1029 = vpop.f32.mrb[0].mxu0
  %1030 = vmatprep.mubr.f32.mxu0 %v55
  %1031 = vmatmul.mubr.f32.gmra.mrb[0].mxu0 %v54
  %v1032 = vpop.f32.mrb[0].mxu0
  %v1033 = vadd.f32 %v903, %v1032
  %v1034 = vpop.f32.mrb[0].mxu0
  %1035 = vmatprep.mubr.f32.mxu0 %v68
  %1036 = vmatmul.mubr.f32.gmra.mrb[0].mxu0 %v67
  %v1037 = vpop.f32.mrb[0].mxu0
  %v1038 = vadd.f32 %v908, %v1037
  %v1039 = vpop.f32.mrb[0].mxu0
  %1040 = vmatprep.mubr.f32.mxu0 %v81
  %1041 = vmatmul.mubr.f32.gmra.mrb[0].mxu0 %v80
  %v1042 = vpop.f32.mrb[0].mxu0
  %v1043 = vadd.f32 %v913, %v1042
  %v1044 = vpop.f32.mrb[0].mxu0
  %1045 = vmatprep.mubr.f32.mxu0 %v94
  %1046 = vmatmul.mubr.f32.gmra.mrb[0].mxu0 %v93
  %v1047 = vpop.f32.mrb[0].mxu0
  %v1048 = vadd.f32 %v918, %v1047
  %v1049 = vpop.f32.mrb[0].mxu0
  %1050 = vmatprep.mubr.f32.mxu0 %v107
  %1051 = vmatmul.mubr.f32.gmra.mrb[0].mxu0 %v106
  %v1052 = vpop.f32.mrb[0].mxu0
  %v1053 = vadd.f32 %v923, %v1052
  %v1054 = vpop.f32.mrb[0].mxu0
  %1055 = vmatprep.mubr.f32.mxu0 %v120
  %1056 = vmatmul.mubr.f32.gmra.mrb[0].mxu0 %v119
  %v1057 = vpop.f32.mrb[0].mxu0
  %v1058 = vadd.f32 %v928, %v1057
  %v1059 = vpop.f32.mrb[0].mxu0
  %1060 = vmatprep.mubr.f32.mxu0 %v133
  %1061 = vmatmul.mubr.f32.gmra.mrb[0].mxu0 %v132
  %v1062 = vpop.f32.mrb[0].mxu0
  %v1063 = vadd.f32 %v933, %v1062
  %v1064 = vpop.f32.mrb[0].mxu0
  %1065 = vmatprep.mubr.f32.mxu0 %v146
  %1066 = vmatmul.mubr.f32.gmra.mrb[0].mxu0 %v145
  %v1067 = vpop.f32.mrb[0].mxu0
  %v1068 = vadd.f32 %v938, %v1067
  %v1069 = vpop.f32.mrb[0].mxu0
  %1070 = vmatprep.mubr.f32.mxu0 %v159
  %1071 = vmatmul.mubr.f32.gmra.mrb[0].mxu0 %v158
  %v1072 = vpop.f32.mrb[0].mxu0
  %v1073 = vadd.f32 %v943, %v1072
  %v1074 = vpop.f32.mrb[0].mxu0
  %1075 = vmatprep.mubr.f32.mxu0 %v172
  %1076 = vmatmul.mubr.f32.gmra.mrb[0].mxu0 %v171
  %v1077 = vpop.f32.mrb[0].mxu0
  %v1078 = vadd.f32 %v948, %v1077
  %v1079 = vpop.f32.mrb[0].mxu0
  %1080 = vmatprep.mubr.f32.mxu0 %v185
  %1081 = vmatmul.mubr.f32.gmra.mrb[0].mxu0 %v184
  %v1082 = vpop.f32.mrb[0].mxu0
  %v1083 = vadd.f32 %v953, %v1082
  %v1084 = vpop.f32.mrb[0].mxu0
  %1085 = vdwg.mxu0
  %1086 = vmatprep.subr.mxu0 0.0
  %1087 = vmatpush1.msra.mxu0 %v349
  %1088 = vmatprep.subr.mxu0 0.0
  %1089 = vmatpush1.msra.mxu0 %v350
  %1090 = vmatprep.subr.mxu0 0.0
  %1091 = vmatpush1.msra.mxu0 %v351
  %1092 = vmatprep.subr.mxu0 0.0
  %1093 = vmatpush1.msra.mxu0 %v352
  %1094 = vmatprep.subr.mxu0 0.0
  %1095 = vmatpush1.msra.mxu0 %v353
  %1096 = vmatprep.subr.mxu0 0.0
  %1097 = vmatpush1.msra.mxu0 %v354
  %1098 = vmatprep.subr.mxu0 0.0
  %1099 = vmatpush1.msra.mxu0 %v355
  %1100 = vmatprep.subr.mxu0 0.0
  %1101 = vmatpush1.msra.mxu0 %v356
  %1102 = vmatprep.subr.mxu0 0.0
  %1103 = vmatpush1.msra.mxu0 %v357
  %1104 = vmatprep.subr.mxu0 0.0
  %1105 = vmatpush1.msra.mxu0 %v358
  %1106 = vmatprep.subr.mxu0 0.0
  %1107 = vmatpush1.msra.mxu0 %v359
  %1108 = vmatprep.subr.mxu0 0.0
  %1109 = vmatpush1.msra.mxu0 %v360
  %1110 = vmatprep.subr.mxu0 0.0
  %1111 = vmatpush1.msra.mxu0 %v361
  %1112 = vmatprep.subr.mxu0 0.0
  %1113 = vmatpush1.msra.mxu0 %v362
  %1114 = vmatprep.subr.mxu0 0.0
  %1115 = vmatpush1.msra.mxu0 %v363
  %1116 = vmatprep.subr.mxu0 0.0
  %1117 = vmatpush1.msra.mxu0 %v364
  %1118 = vmatprep.subr.mxu0 0.0
  %1119 = vmatpush1.msra.mxu0 %v365
  %1120 = vmatprep.subr.mxu0 0.0
  %1121 = vmatpush1.msra.mxu0 %v366
  %1122 = vmatprep.subr.mxu0 0.0
  %1123 = vmatpush1.msra.mxu0 %v367
  %1124 = vmatprep.subr.mxu0 0.0
  %1125 = vmatpush1.msra.mxu0 %v368
  %1126 = vmatprep.subr.mxu0 0.0
  %1127 = vmatpush1.msra.mxu0 %v369
  %1128 = vmatprep.subr.mxu0 0.0
  %1129 = vmatpush1.msra.mxu0 %v370
  %1130 = vmatprep.subr.mxu0 0.0
  %1131 = vmatpush1.msra.mxu0 %v371
  %1132 = vmatprep.subr.mxu0 0.0
  %1133 = vmatpush1.msra.mxu0 %v372
  %1134 = vmatprep.subr.mxu0 0.0
  %1135 = vmatpush1.msra.mxu0 %v373
  %1136 = vmatprep.subr.mxu0 0.0
  %1137 = vmatpush1.msra.mxu0 %v374
  %1138 = vmatprep.subr.mxu0 0.0
  %1139 = vmatpush1.msra.mxu0 %v375
  %1140 = vmatprep.subr.mxu0 0.0
  %1141 = vmatpush1.msra.mxu0 %v376
  %1142 = vmatprep.subr.mxu0 0.0
  %1143 = vmatpush1.msra.mxu0 %v377
  %1144 = vmatprep.subr.mxu0 0.0
  %1145 = vmatpush1.msra.mxu0 %v378
  %1146 = vmatprep.subr.mxu0 0.0
  %1147 = vmatpush1.msra.mxu0 %v379
  %1148 = vmatprep.subr.mxu0 0.0
  %1149 = vmatpush1.msra.mxu0 %v380
  %1150 = vmatprep.mubr.f32.mxu0 %v31
  %1151 = vmatmul.mubr.f32.gmra.mrb[0].mxu0 %v30
  %v1152 = vpop.f32.mrb[0].mxu0
  %v1153 = vadd.f32 %v1023, %v1152
  %v1154 = vpop.f32.mrb[0].mxu0
  %1155 = vmatprep.mubr.f32.mxu0 %v44
  %1156 = vmatmul.mubr.f32.gmra.mrb[0].mxu0 %v43
  %v1157 = vpop.f32.mrb[0].mxu0
  %v1158 = vadd.f32 %v1028, %v1157
  %v1159 = vpop.f32.mrb[0].mxu0
  %1160 = vmatprep.mubr.f32.mxu0 %v57
  %1161 = vmatmul.mubr.f32.gmra.mrb[0].mxu0 %v56
  %v1162 = vpop.f32.mrb[0].mxu0
  %v1163 = vadd.f32 %v1033, %v1162
  %v1164 = vpop.f32.mrb[0].mxu0
  %1165 = vmatprep.mubr.f32.mxu0 %v70
  %1166 = vmatmul.mubr.f32.gmra.mrb[0].mxu0 %v69
  %v1167 = vpop.f32.mrb[0].mxu0
  %v1168 = vadd.f32 %v1038, %v1167
  %v1169 = vpop.f32.mrb[0].mxu0
  %1170 = vmatprep.mubr.f32.mxu0 %v83
  %1171 = vmatmul.mubr.f32.gmra.mrb[0].mxu0 %v82
  %v1172 = vpop.f32.mrb[0].mxu0
  %v1173 = vadd.f32 %v1043, %v1172
  %v1174 = vpop.f32.mrb[0].mxu0
  %1175 = vmatprep.mubr.f32.mxu0 %v96
  %1176 = vmatmul.mubr.f32.gmra.mrb[0].mxu0 %v95
  %v1177 = vpop.f32.mrb[0].mxu0
  %v1178 = vadd.f32 %v1048, %v1177
  %v1179 = vpop.f32.mrb[0].mxu0
  %1180 = vmatprep.mubr.f32.mxu0 %v109
  %1181 = vmatmul.mubr.f32.gmra.mrb[0].mxu0 %v108
  %v1182 = vpop.f32.mrb[0].mxu0
  %v1183 = vadd.f32 %v1053, %v1182
  %v1184 = vpop.f32.mrb[0].mxu0
  %1185 = vmatprep.mubr.f32.mxu0 %v122
  %1186 = vmatmul.mubr.f32.gmra.mrb[0].mxu0 %v121
  %v1187 = vpop.f32.mrb[0].mxu0
  %v1188 = vadd.f32 %v1058, %v1187
  %v1189 = vpop.f32.mrb[0].mxu0
  %1190 = vmatprep.mubr.f32.mxu0 %v135
  %1191 = vmatmul.mubr.f32.gmra.mrb[0].mxu0 %v134
  %v1192 = vpop.f32.mrb[0].mxu0
  %v1193 = vadd.f32 %v1063, %v1192
  %v1194 = vpop.f32.mrb[0].mxu0
  %1195 = vmatprep.mubr.f32.mxu0 %v148
  %1196 = vmatmul.mubr.f32.gmra.mrb[0].mxu0 %v147
  %v1197 = vpop.f32.mrb[0].mxu0
  %v1198 = vadd.f32 %v1068, %v1197
  %v1199 = vpop.f32.mrb[0].mxu0
  %1200 = vmatprep.mubr.f32.mxu0 %v161
  %1201 = vmatmul.mubr.f32.gmra.mrb[0].mxu0 %v160
  %v1202 = vpop.f32.mrb[0].mxu0
  %v1203 = vadd.f32 %v1073, %v1202
  %v1204 = vpop.f32.mrb[0].mxu0
  %1205 = vmatprep.mubr.f32.mxu0 %v174
  %1206 = vmatmul.mubr.f32.gmra.mrb[0].mxu0 %v173
  %v1207 = vpop.f32.mrb[0].mxu0
  %v1208 = vadd.f32 %v1078, %v1207
  %v1209 = vpop.f32.mrb[0].mxu0
  %1210 = vmatprep.mubr.f32.mxu0 %v187
  %1211 = vmatmul.mubr.f32.gmra.mrb[0].mxu0 %v186
  %v1212 = vpop.f32.mrb[0].mxu0
  %v1213 = vadd.f32 %v1083, %v1212
  %v1214 = vpop.f32.mrb[0].mxu0
  %1215 = vdwg.mxu0
  %1216 = vmatprep.subr.mxu0 0.0
  %1217 = vmatpush1.msra.mxu0 %v381
  %1218 = vmatprep.subr.mxu0 0.0
  %1219 = vmatpush1.msra.mxu0 %v382
  %1220 = vmatprep.subr.mxu0 0.0
  %1221 = vmatpush1.msra.mxu0 %v383
  %1222 = vmatprep.subr.mxu0 0.0
  %1223 = vmatpush1.msra.mxu0 %v384
  %1224 = vmatprep.subr.mxu0 0.0
  %1225 = vmatpush1.msra.mxu0 %v385
  %1226 = vmatprep.subr.mxu0 0.0
  %1227 = vmatpush1.msra.mxu0 %v386
  %1228 = vmatprep.subr.mxu0 0.0
  %1229 = vmatpush1.msra.mxu0 %v387
  %1230 = vmatprep.subr.mxu0 0.0
  %1231 = vmatpush1.msra.mxu0 %v388
  %1232 = vmatprep.subr.mxu0 0.0
  %1233 = vmatpush1.msra.mxu0 0.0
  %1234 = vmatprep.subr.mxu0 0.0
  %1235 = vmatpush1.msra.mxu0 0.0
  %1236 = vmatprep.subr.mxu0 0.0
  %1237 = vmatpush1.msra.mxu0 0.0
  %1238 = vmatprep.subr.mxu0 0.0
  %1239 = vmatpush1.msra.mxu0 0.0
  %1240 = vmatprep.subr.mxu0 0.0
  %1241 = vmatpush1.msra.mxu0 0.0
  %1242 = vmatprep.subr.mxu0 0.0
  %1243 = vmatpush1.msra.mxu0 0.0
  %1244 = vmatprep.subr.mxu0 0.0
  %1245 = vmatpush1.msra.mxu0 0.0
  %1246 = vmatprep.subr.mxu0 0.0
  %1247 = vmatpush1.msra.mxu0 0.0
  %1248 = vmatprep.subr.mxu0 0.0
  %1249 = vmatpush1.msra.mxu0 0.0
  %1250 = vmatprep.subr.mxu0 0.0
  %1251 = vmatpush1.msra.mxu0 0.0
  %1252 = vmatprep.subr.mxu0 0.0
  %1253 = vmatpush1.msra.mxu0 0.0
  %1254 = vmatprep.subr.mxu0 0.0
  %1255 = vmatpush1.msra.mxu0 0.0
  %1256 = vmatprep.subr.mxu0 0.0
  %1257 = vmatpush1.msra.mxu0 0.0
  %1258 = vmatprep.subr.mxu0 0.0
  %1259 = vmatpush1.msra.mxu0 0.0
  %1260 = vmatprep.subr.mxu0 0.0
  %1261 = vmatpush1.msra.mxu0 0.0
  %1262 = vmatprep.subr.mxu0 0.0
  %1263 = vmatpush1.msra.mxu0 0.0
  %1264 = vmatprep.subr.mxu0 0.0
  %1265 = vmatpush1.msra.mxu0 0.0
  %1266 = vmatprep.subr.mxu0 0.0
  %1267 = vmatpush1.msra.mxu0 0.0
  %1268 = vmatprep.subr.mxu0 0.0
  %1269 = vmatpush1.msra.mxu0 0.0
  %1270 = vmatprep.subr.mxu0 0.0
  %1271 = vmatpush1.msra.mxu0 0.0
  %1272 = vmatprep.subr.mxu0 0.0
  %1273 = vmatpush1.msra.mxu0 0.0
  %1274 = vmatprep.subr.mxu0 0.0
  %1275 = vmatpush1.msra.mxu0 0.0
  %1276 = vmatprep.subr.mxu0 0.0
  %1277 = vmatpush1.msra.mxu0 0.0
  %1278 = vmatprep.subr.mxu0 0.0
  %1279 = vmatpush1.msra.mxu0 0.0
  %1280 = vmatprep.mubr.f32.mxu0 0.0
  %1281 = vmatmul.mubr.f32.gmra.mrb[0].mxu0 %v398
  %v1282 = vpop.f32.mrb[0].mxu0
  %v1283 = vadd.f32 %v1153, %v1282
  %v1284 = vpop.f32.mrb[0].mxu0
  %1285 = vmatprep.mubr.f32.mxu0 0.0
  %1286 = vmatmul.mubr.f32.gmra.mrb[0].mxu0 %v401
  %v1287 = vpop.f32.mrb[0].mxu0
  %v1288 = vadd.f32 %v1158, %v1287
  %v1289 = vpop.f32.mrb[0].mxu0
  %1290 = vmatprep.mubr.f32.mxu0 0.0
  %1291 = vmatmul.mubr.f32.gmra.mrb[0].mxu0 %v404
  %v1292 = vpop.f32.mrb[0].mxu0
  %v1293 = vadd.f32 %v1163, %v1292
  %v1294 = vpop.f32.mrb[0].mxu0
  %1295 = vmatprep.mubr.f32.mxu0 0.0
  %1296 = vmatmul.mubr.f32.gmra.mrb[0].mxu0 %v407
  %v1297 = vpop.f32.mrb[0].mxu0
  %v1298 = vadd.f32 %v1168, %v1297
  %v1299 = vpop.f32.mrb[0].mxu0
  %1300 = vmatprep.mubr.f32.mxu0 0.0
  %1301 = vmatmul.mubr.f32.gmra.mrb[0].mxu0 %v410
  %v1302 = vpop.f32.mrb[0].mxu0
  %v1303 = vadd.f32 %v1173, %v1302
  %v1304 = vpop.f32.mrb[0].mxu0
  %1305 = vmatprep.mubr.f32.mxu0 0.0
  %1306 = vmatmul.mubr.f32.gmra.mrb[0].mxu0 %v413
  %v1307 = vpop.f32.mrb[0].mxu0
  %v1308 = vadd.f32 %v1178, %v1307
  %v1309 = vpop.f32.mrb[0].mxu0
  %1310 = vmatprep.mubr.f32.mxu0 0.0
  %1311 = vmatmul.mubr.f32.gmra.mrb[0].mxu0 %v416
  %v1312 = vpop.f32.mrb[0].mxu0
  %v1313 = vadd.f32 %v1183, %v1312
  %v1314 = vpop.f32.mrb[0].mxu0
  %1315 = vmatprep.mubr.f32.mxu0 0.0
  %1316 = vmatmul.mubr.f32.gmra.mrb[0].mxu0 %v419
  %v1317 = vpop.f32.mrb[0].mxu0
  %v1318 = vadd.f32 %v1188, %v1317
  %v1319 = vpop.f32.mrb[0].mxu0
  %1320 = vmatprep.mubr.f32.mxu0 0.0
  %1321 = vmatmul.mubr.f32.gmra.mrb[0].mxu0 %v422
  %v1322 = vpop.f32.mrb[0].mxu0
  %v1323 = vadd.f32 %v1193, %v1322
  %v1324 = vpop.f32.mrb[0].mxu0
  %1325 = vmatprep.mubr.f32.mxu0 0.0
  %1326 = vmatmul.mubr.f32.gmra.mrb[0].mxu0 %v425
  %v1327 = vpop.f32.mrb[0].mxu0
  %v1328 = vadd.f32 %v1198, %v1327
  %v1329 = vpop.f32.mrb[0].mxu0
  %1330 = vmatprep.mubr.f32.mxu0 0.0
  %1331 = vmatmul.mubr.f32.gmra.mrb[0].mxu0 %v428
  %v1332 = vpop.f32.mrb[0].mxu0
  %v1333 = vadd.f32 %v1203, %v1332
  %v1334 = vpop.f32.mrb[0].mxu0
  %1335 = vmatprep.mubr.f32.mxu0 0.0
  %1336 = vmatmul.mubr.f32.gmra.mrb[0].mxu0 %v431
  %v1337 = vpop.f32.mrb[0].mxu0
  %v1338 = vadd.f32 %v1208, %v1337
  %v1339 = vpop.f32.mrb[0].mxu0
  %1340 = vmatprep.mubr.f32.mxu0 0.0
  %1341 = vmatmul.mubr.f32.gmra.mrb[0].mxu0 %v434
  %v1342 = vpop.f32.mrb[0].mxu0
  %v1343 = vadd.f32 %v1213, %v1342
  %v1344 = vpop.f32.mrb[0].mxu0
  %1345 = vdwg.mxu0
  %v1346 = vadd.f32 %v1283, %v1288
  %v1347 = vadd.f32 %v1346, %v1293
  %v1348 = vadd.f32 %v1347, %v1298
  %v1349 = vadd.f32 %v1348, %v1303
  %v1350 = vadd.f32 %v1349, %v1308
  %v1351 = vadd.f32 %v1350, %v1313
  %v1352 = vadd.f32 %v1351, %v1318
  %v1353 = vadd.f32 %v1352, %v1323
  %v1354 = vadd.f32 %v1353, %v1328
  %v1355 = vadd.f32 %v1354, %v1333
  %v1356 = vadd.f32 %v1355, %v1338
  %vm1357 = vcmask 1041408
  %v1358 = vsel %vm1357, %v1343, 0.0
  %v1359 = vadd.f32 %v1356, %v1358
  %v1360 = vrot.slane %v1359, 4
  %v1361 = vadd.f32 %v1359, %v1360
  %v1362 = vrot.slane %v1361, 2
  %v1363 = vadd.f32 %v1361, %v1362
  %v1364 = vrot.slane %v1363, 1
  %v1365 = vadd.f32 %v1363, %v1364
  %v1366 = vmul.f32 %v1365, 0.010204081
  %v1367 = vmul.f32 %v1283, %v1283
  %v1368 = vmul.f32 %v1288, %v1288
  %v1369 = vmul.f32 %v1293, %v1293
  %v1370 = vmul.f32 %v1298, %v1298
  %v1371 = vmul.f32 %v1303, %v1303
  %v1372 = vmul.f32 %v1308, %v1308
  %v1373 = vmul.f32 %v1313, %v1313
  %v1374 = vmul.f32 %v1318, %v1318
  %v1375 = vmul.f32 %v1323, %v1323
  %v1376 = vmul.f32 %v1328, %v1328
  %v1377 = vmul.f32 %v1333, %v1333
  %v1378 = vmul.f32 %v1338, %v1338
  %v1379 = vmul.f32 %v1343, %v1343
  %v1380 = vadd.f32 %v1367, %v1368
  %v1381 = vadd.f32 %v1380, %v1369
  %v1382 = vadd.f32 %v1381, %v1370
  %v1383 = vadd.f32 %v1382, %v1371
  %v1384 = vadd.f32 %v1383, %v1372
  %v1385 = vadd.f32 %v1384, %v1373
  %v1386 = vadd.f32 %v1385, %v1374
  %v1387 = vadd.f32 %v1386, %v1375
  %v1388 = vadd.f32 %v1387, %v1376
  %v1389 = vadd.f32 %v1388, %v1377
  %v1390 = vadd.f32 %v1389, %v1378
  %v1391 = vsel %vm1357, %v1379, 0.0
  %v1392 = vadd.f32 %v1390, %v1391
  %v1393 = vrot.slane %v1392, 4
  %v1394 = vadd.f32 %v1392, %v1393
  %v1395 = vrot.slane %v1394, 2
  %v1396 = vadd.f32 %v1394, %v1395
  %v1397 = vrot.slane %v1396, 1
  %v1398 = vadd.f32 %v1396, %v1397
  %v1399 = vmul.f32 %v1398, 0.010204081
  %v1400 = vmul.f32 %v1366, %v1366
  %v1401 = vsub.f32 %v1399, %v1400
  %v1402 = vld [vmem:[%s3] sm:$0x1]
  %v1403 = vsub.f32 %v1283, %v1366
  %v1404 = vsub.f32 %v1288, %v1366
  %v1405 = vsub.f32 %v1293, %v1366
  %v1406 = vsub.f32 %v1298, %v1366
  %v1407 = vsub.f32 %v1303, %v1366
  %v1408 = vsub.f32 %v1308, %v1366
  %v1409 = vsub.f32 %v1313, %v1366
  %v1410 = vsub.f32 %v1318, %v1366
  %v1411 = vsub.f32 %v1323, %v1366
  %v1412 = vsub.f32 %v1328, %v1366
  %v1413 = vsub.f32 %v1333, %v1366
  %v1414 = vsub.f32 %v1338, %v1366
  %v1415 = vsub.f32 %v1343, %v1366
  %v1417 = vlaneseq
  %v1418 = vshrl.u32 %v1417, 7
  %v1419 = vsub.s32 0, %v1418
  %v1420 = vrot.slane %v1402, %v1419
  %v1422 = vmul.f32 %v1420, %v1403
  %v1423 = vmul.f32 %v1420, %v1404
  %v1424 = vmul.f32 %v1420, %v1405
  %v1425 = vmul.f32 %v1420, %v1406
  %v1426 = vmul.f32 %v1420, %v1407
  %v1427 = vmul.f32 %v1420, %v1408
  %v1428 = vmul.f32 %v1420, %v1409
  %v1429 = vmul.f32 %v1420, %v1410
  %v1430 = vmul.f32 %v1420, %v1411
  %v1431 = vmul.f32 %v1420, %v1412
  %v1432 = vmul.f32 %v1420, %v1413
  %v1433 = vmul.f32 %v1420, %v1414
  %v1434 = vmul.f32 %v1420, %v1415
  %v1435 = vadd.f32 %v1401, 1e-05
  %v1436 = vrsqrt.pop %v1435
  %v1437 = vmul.f32 %v1422, %v1436
  %v1438 = vmul.f32 %v1423, %v1436
  %v1439 = vmul.f32 %v1424, %v1436
  %v1440 = vmul.f32 %v1425, %v1436
  %v1441 = vmul.f32 %v1426, %v1436
  %v1442 = vmul.f32 %v1427, %v1436
  %v1443 = vmul.f32 %v1428, %v1436
  %v1444 = vmul.f32 %v1429, %v1436
  %v1445 = vmul.f32 %v1430, %v1436
  %v1446 = vmul.f32 %v1431, %v1436
  %v1447 = vmul.f32 %v1432, %v1436
  %v1448 = vmul.f32 %v1433, %v1436
  %v1449 = vmul.f32 %v1434, %v1436
  %v1450 = vld [vmem:[%s4] sm:$0x1]
  %v1452 = vlaneseq
  %v1453 = vshrl.u32 %v1452, 7
  %v1454 = vsub.s32 0, %v1453
  %v1455 = vrot.slane %v1450, %v1454
  %v1457 = vadd.f32 %v1437, %v1455
  %v1458 = vadd.f32 %v1438, %v1455
  %v1459 = vadd.f32 %v1439, %v1455
  %v1460 = vadd.f32 %v1440, %v1455
  %v1461 = vadd.f32 %v1441, %v1455
  %v1462 = vadd.f32 %v1442, %v1455
  %v1463 = vadd.f32 %v1443, %v1455
  %v1464 = vadd.f32 %v1444, %v1455
  %v1465 = vadd.f32 %v1445, %v1455
  %v1466 = vadd.f32 %v1446, %v1455
  %v1467 = vadd.f32 %v1447, %v1455
  %v1468 = vadd.f32 %v1448, %v1455
  %v1469 = vadd.f32 %v1449, %v1455
  %v1470 = vmax.f32 %v1457, 0.0
  %v1471 = vmax.f32 %v1458, 0.0
  %v1472 = vmax.f32 %v1459, 0.0
  %v1473 = vmax.f32 %v1460, 0.0
  %v1474 = vmax.f32 %v1461, 0.0
  %v1475 = vmax.f32 %v1462, 0.0
  %v1476 = vmax.f32 %v1463, 0.0
  %v1477 = vmax.f32 %v1464, 0.0
  %v1478 = vmax.f32 %v1465, 0.0
  %v1479 = vmax.f32 %v1466, 0.0
  %v1480 = vmax.f32 %v1467, 0.0
  %v1481 = vmax.f32 %v1468, 0.0
  %v1482 = vmax.f32 %v1469, 0.0
  %1483 = vst [vmem:[%s5] sm:$0xff] %v1470
  %1484 = vst [vmem:[%s5 + $0x8] sm:$0xff] %v1471
  %1485 = vst [vmem:[%s5 + $0x10] sm:$0xff] %v1472
  %1486 = vst [vmem:[%s5 + $0x18] sm:$0xff] %v1473
  %1487 = vst [vmem:[%s5 + $0x20] sm:$0xff] %v1474
  %1488 = vst [vmem:[%s5 + $0x28] sm:$0xff] %v1475
  %1489 = vst [vmem:[%s5 + $0x30] sm:$0xff] %v1476
  %1490 = vst [vmem:[%s5 + $0x38] sm:$0xff] %v1477
  %1491 = vst [vmem:[%s5 + $0x40] sm:$0xff] %v1478
  %1492 = vst [vmem:[%s5 + $0x48] sm:$0xff] %v1479
  %1493 = vst [vmem:[%s5 + $0x50] sm:$0xff] %v1480
  %1494 = vst [vmem:[%s5 + $0x58] sm:$0xff] %v1481
  %1495 = vst [vmem:[%s5 + $0x60] sm:$0x3] %v1482
  // Predicated region
  $region22: #{discriminator_forward.6} parent=0 // pred_check
    _
  $region23: #{discriminator_forward.6} parent=0 // pred_check_branch
    %1497 = sbr.rel (0) target = $region25
  $region24: #{discriminator_forward.6} parent=0 // pred_region
    _
  $region25: #{discriminator_forward.6} parent=0 // pred_fallthru
    _
  // Predicated region
  $region26: #{discriminator_forward.6} parent=0 // pred_check
    _
  $region27: #{discriminator_forward.6} parent=0 // pred_check_branch
    %1499 = sbr.rel (0) target = $region29
  $region28: #{discriminator_forward.6} parent=0 // pred_region
    _
  $region29: #{discriminator_forward.6} parent=0 // pred_fallthru
    _

// kernel: tile.7
$region0: #{tile.7}
  %s0 = inlined_call_operand.vmem [shape: f32[2,9,256], index: 0, kind: input, shape index: {}]
  %s1 = inlined_call_operand.vmem [shape: f32[18,256], index: 1, kind: output, shape index: {}]
  %v2 = vld [vmem:[%s0] sm:$0xff]
  %3 = vst [vmem:[%s1] sm:$0xff] %v2
  %s4 = scalar_lea.vmem %s0, 8
  %v5 = vld [vmem:[%s4] sm:$0xff]
  %s6 = scalar_lea.vmem %s1, 8
  %7 = vst [vmem:[%s6] sm:$0xff] %v5
  %s8 = scalar_lea.vmem %s0, 16
  %v9 = vld [vmem:[%s8] ss:$8 sm:$0x7]
  %s10 = scalar_lea.vmem %s1, 16
  %11 = vst [vmem:[%s10] ss:$8 sm:$0x3] %v9
  %s12 = scalar_lea.vmem %s1, 15
  %13 = vst [vmem:[%s12] sm:$0x4] %v9
  %s14 = scalar_lea.vmem %s0, 33
  %v15 = vld [vmem:[%s14] sm:$0xff]
  %s16 = scalar_lea.vmem %s1, 18
  %17 = vst [vmem:[%s16] sm:$0x3f] %v15
  %s18 = scalar_lea.vmem %s1, 74
  %19 = vst [vmem:[%s18] ss:$-7 sm:$0xc0] %v15
  %s20 = scalar_lea.vmem %s0, 41
  %v21 = vld [vmem:[%s20] sm:$0xff]
  %s22 = scalar_lea.vmem %s1, 26
  %23 = vst [vmem:[%s22] sm:$0x3f] %v21
  %s24 = scalar_lea.vmem %s1, 82
  %25 = vst [vmem:[%s24] ss:$-7 sm:$0xc0] %v21
  %s26 = scalar_lea.vmem %s0, 56
  %v27 = vld [vmem:[%s26] sm:$0x1]
  %s28 = scalar_lea.vmem %s1, 41
  %29 = vst [vmem:[%s28] sm:$0x1] %v27

// kernel: discriminator_forward.7
$region0: #{discriminator_forward.7}
  #allocation0 [shape = 'u32[]', space=smem, size = 0x4, offset = 0x4, fixed_abs, tag = 'smem constant byte address 0x4 - core index']
  #allocation1 [shape = 'u32[144,128]{1,0:T(1,128)}', space=vmem, size = 0x12000, scoped, tag = 'internal scratch']
  #allocation2 [shape = 'f32[1,1]{1,0:T(1,128)S(1)}', space=vmem, size = 0x200, scoped, tag = 'scoped memory for discriminator_forward.7']
  %s0 = inlined_call_operand.vmem [shape: f32[18,3200], index: 0, kind: input, shape index: {}]
  %s1 = inlined_call_operand.vmem [shape: f32[3200,256], index: 1, kind: input, shape index: {}]
  %s2 = inlined_call_operand.vmem [shape: f32[1,256], index: 2, kind: input, shape index: {}]
  %s3 = inlined_call_operand.vmem [shape: f32[1,256], index: 3, kind: input, shape index: {}]
  %s4 = inlined_call_operand.vmem [shape: f32[1,256], index: 4, kind: input, shape index: {}]
  %s5 = inlined_call_operand.vmem [shape: f32[18,256], index: 5, kind: input, shape index: {}]
  %s6 = inlined_call_operand.vmem [shape: f32[2,18], index: 6, kind: input, shape index: {}]
  %s7 = inlined_call_operand.<no memory space> [shape: f32[1,1], index: 7, kind: input, shape index: {}]
  %s8 = inlined_call_operand.vmem [shape: f32[2,1], index: 8, kind: output, shape index: {}]
  %s9 = sld [smem:[#allocation0]]
  $region42: #{discriminator_forward.7} parent=0
    _
  %s11 = ssub.s32 1, %s9
  %s12 = scalar_select 0, %s11, %s9
  %v13 = vstv %s7
  %14 = vst [vmem:[#allocation2] sm:$0x1] %v13
  // Predicated region
  $region2: #{discriminator_forward.7} parent=0 // pred_check
    _
  $region3: #{discriminator_forward.7} parent=0 // pred_check_branch
    %16 = sbr.rel (0) target = $region5
  $region4: #{discriminator_forward.7} parent=0 // pred_region
    _
  $region5: #{discriminator_forward.7} parent=0 // pred_fallthru
    _
  // Predicated region
  $region6: #{discriminator_forward.7} parent=0 // pred_check
    _
  $region7: #{discriminator_forward.7} parent=0 // pred_check_branch
    %18 = sbr.rel (0) target = $region9
  $region8: #{discriminator_forward.7} parent=0 // pred_region
    _
  $region9: #{discriminator_forward.7} parent=0 // pred_fallthru
    _
  // Predicated region
  $region10: #{discriminator_forward.7} parent=0 // pred_check
    _
  $region11: #{discriminator_forward.7} parent=0 // pred_check_branch
    %20 = sbr.rel (0) target = $region13
  $region12: #{discriminator_forward.7} parent=0 // pred_region
    _
  $region13: #{discriminator_forward.7} parent=0 // pred_fallthru
    _
  // Predicated region
  $region14: #{discriminator_forward.7} parent=0 // pred_check
    _
  $region15: #{discriminator_forward.7} parent=0 // pred_check_branch
    %22 = sbr.rel (0) target = $region17
  $region16: #{discriminator_forward.7} parent=0 // pred_region
    _
  $region17: #{discriminator_forward.7} parent=0 // pred_fallthru
    _
  // Predicated region
  $region18: #{discriminator_forward.7} parent=0 // pred_check
    _
  $region19: #{discriminator_forward.7} parent=0 // pred_check_branch
    %24 = sbr.rel (0) target = $region21
  $region20: #{discriminator_forward.7} parent=0 // pred_region
    _
  $region21: #{discriminator_forward.7} parent=0 // pred_fallthru
    _
  // Predicated region
  $region22: #{discriminator_forward.7} parent=0 // pred_check
    _
  $region23: #{discriminator_forward.7} parent=0 // pred_check_branch
    %26 = sbr.rel (0) target = $region25
  $region24: #{discriminator_forward.7} parent=0 // pred_region
    _
  $region25: #{discriminator_forward.7} parent=0 // pred_fallthru
    _
  // Predicated region
  $region26: #{discriminator_forward.7} parent=0 // pred_check
    _
  $region27: #{discriminator_forward.7} parent=0 // pred_check_branch
    %28 = sbr.rel (0) target = $region29
  $region28: #{discriminator_forward.7} parent=0 // pred_region
    _
  $region29: #{discriminator_forward.7} parent=0 // pred_fallthru
    _
  // Predicated region
  $region30: #{discriminator_forward.7} parent=0 // pred_check
    _
  $region31: #{discriminator_forward.7} parent=0 // pred_check_branch
    %30 = sbr.rel (0) target = $region33
  $region32: #{discriminator_forward.7} parent=0 // pred_region
    _
  $region33: #{discriminator_forward.7} parent=0 // pred_fallthru
    _
  %v31 = vld [vmem:[%s0] sm:$0xff]
  %v32 = vld [vmem:[%s0 + $0x8] sm:$0xff]
  %v33 = vld [vmem:[%s0 + $0x10] sm:$0xff]
  %v34 = vld [vmem:[%s0 + $0x18] sm:$0xff]
  %v35 = vld [vmem:[%s0 + $0x20] sm:$0xff]
  %v36 = vld [vmem:[%s0 + $0x28] sm:$0xff]
  %v37 = vld [vmem:[%s0 + $0x30] sm:$0xff]
  %v38 = vld [vmem:[%s0 + $0x38] sm:$0xff]
  %v39 = vld [vmem:[%s0 + $0x40] sm:$0xff]
  %v40 = vld [vmem:[%s0 + $0x48] sm:$0xff]
  %v41 = vld [vmem:[%s0 + $0x50] sm:$0xff]
  %v42 = vld [vmem:[%s0 + $0x58] sm:$0xff]
  %v43 = vld [vmem:[%s0 + $0x60] sm:$0xff]
  %v44 = vld [vmem:[%s0 + $0x68] sm:$0xff]
  %v45 = vld [vmem:[%s0 + $0x70] sm:$0xff]
  %v46 = vld [vmem:[%s0 + $0x78] sm:$0xff]
  %v47 = vld [vmem:[%s0 + $0x80] sm:$0xff]
  %v48 = vld [vmem:[%s0 + $0x88] sm:$0xff]
  %v49 = vld [vmem:[%s0 + $0x90] sm:$0xff]
  %v50 = vld [vmem:[%s0 + $0x98] sm:$0xff]
  %v51 = vld [vmem:[%s0 + $0xa0] sm:$0xff]
  %v52 = vld [vmem:[%s0 + $0xa8] sm:$0xff]
  %v53 = vld [vmem:[%s0 + $0xb0] sm:$0xff]
  %v54 = vld [vmem:[%s0 + $0xb8] sm:$0xff]
  %v55 = vld [vmem:[%s0 + $0xc0] sm:$0xff]
  %v56 = vld [vmem:[%s0 + $0xc8] sm:$0xff]
  %v57 = vld [vmem:[%s0 + $0xd0] sm:$0xff]
  %v58 = vld [vmem:[%s0 + $0xd8] sm:$0xff]
  %v59 = vld [vmem:[%s0 + $0xe0] sm:$0xff]
  %v60 = vld [vmem:[%s0 + $0xe8] sm:$0xff]
  %v61 = vld [vmem:[%s0 + $0xf0] sm:$0xff]
  %v62 = vld [vmem:[%s0 + $0xf8] sm:$0xff]
  %v63 = vld [vmem:[%s0 + $0x100] sm:$0xff]
  %v64 = vld [vmem:[%s0 + $0x108] sm:$0xff]
  %v65 = vld [vmem:[%s0 + $0x110] sm:$0xff]
  %v66 = vld [vmem:[%s0 + $0x118] sm:$0xff]
  %v67 = vld [vmem:[%s0 + $0x120] sm:$0xff]
  %v68 = vld [vmem:[%s0 + $0x128] sm:$0xff]
  %v69 = vld [vmem:[%s0 + $0x130] sm:$0xff]
  %v70 = vld [vmem:[%s0 + $0x138] sm:$0xff]
  %v71 = vld [vmem:[%s0 + $0x140] sm:$0xff]
  %v72 = vld [vmem:[%s0 + $0x148] sm:$0xff]
  %v73 = vld [vmem:[%s0 + $0x150] sm:$0xff]
  %v74 = vld [vmem:[%s0 + $0x158] sm:$0xff]
  %v75 = vld [vmem:[%s0 + $0x160] sm:$0xff]
  %v76 = vld [vmem:[%s0 + $0x168] sm:$0xff]
  %v77 = vld [vmem:[%s0 + $0x170] sm:$0xff]
  %v78 = vld [vmem:[%s0 + $0x178] sm:$0xff]
  %v79 = vld [vmem:[%s0 + $0x180] sm:$0xff]
  %v80 = vld [vmem:[%s0 + $0x188] sm:$0xff]
  %v81 = vld [vmem:[%s0 + $0x190] sm:$0x3]
  %v82 = vld [vmem:[%s0 + $0x198] sm:$0x3]
  %v83 = vld [vmem:[%s0 + $0x1a0] sm:$0x3]
  %v84 = vld [vmem:[%s0 + $0x1a8] sm:$0x3]
  %v85 = vld [vmem:[%s0 + $0x1b0] sm:$0x3]
  %v86 = vld [vmem:[%s0 + $0x1b8] sm:$0x3]
  %v87 = vld [vmem:[%s0 + $0x1c0] sm:$0x3]
  %v88 = vld [vmem:[%s0 + $0x1c8] sm:$0x3]
  %v89 = vld [vmem:[%s0 + $0x1d0] sm:$0x3]
  %v90 = vld [vmem:[%s0 + $0x1d8] sm:$0x3]
  %v91 = vld [vmem:[%s0 + $0x1e0] sm:$0x3]
  %v92 = vld [vmem:[%s0 + $0x1e8] sm:$0x3]
  %v93 = vld [vmem:[%s0 + $0x1f0] sm:$0x3]
  %v94 = vld [vmem:[%s0 + $0x1f8] sm:$0x3]
  %v95 = vld [vmem:[%s0 + $0x200] sm:$0x3]
  %v96 = vld [vmem:[%s0 + $0x208] sm:$0x3]
  %v97 = vld [vmem:[%s0 + $0x210] sm:$0x3]
  %v98 = vld [vmem:[%s0 + $0x218] sm:$0x3]
  %v99 = vld [vmem:[%s0 + $0x220] sm:$0x3]
  %v100 = vld [vmem:[%s0 + $0x228] sm:$0x3]
  %v101 = vld [vmem:[%s0 + $0x230] sm:$0x3]
  %v102 = vld [vmem:[%s0 + $0x238] sm:$0x3]
  %v103 = vld [vmem:[%s0 + $0x240] sm:$0x3]
  %v104 = vld [vmem:[%s0 + $0x248] sm:$0x3]
  %v105 = vld [vmem:[%s0 + $0x250] sm:$0x3]
  %v106 = vld [vmem:[%s1] sm:$0xff]
  %v107 = vld [vmem:[%s1 + $0x8] sm:$0xff]
  %v108 = vld [vmem:[%s1 + $0x10] sm:$0xff]
  %v109 = vld [vmem:[%s1 + $0x18] sm:$0xff]
  %v110 = vld [vmem:[%s1 + $0x20] sm:$0xff]
  %v111 = vld [vmem:[%s1 + $0x28] sm:$0xff]
  %v112 = vld [vmem:[%s1 + $0x30] sm:$0xff]
  %v113 = vld [vmem:[%s1 + $0x38] sm:$0xff]
  %v114 = vld [vmem:[%s1 + $0x40] sm:$0xff]
  %v115 = vld [vmem:[%s1 + $0x48] sm:$0xff]
  %v116 = vld [vmem:[%s1 + $0x50] sm:$0xff]
  %v117 = vld [vmem:[%s1 + $0x58] sm:$0xff]
  %v118 = vld [vmem:[%s1 + $0x60] sm:$0xff]
  %v119 = vld [vmem:[%s1 + $0x68] sm:$0xff]
  %v120 = vld [vmem:[%s1 + $0x70] sm:$0xff]
  %v121 = vld [vmem:[%s1 + $0x78] sm:$0xff]
  %v122 = vld [vmem:[%s1 + $0x80] sm:$0xff]
  %v123 = vld [vmem:[%s1 + $0x88] sm:$0xff]
  %v124 = vld [vmem:[%s1 + $0x90] sm:$0xff]
  %v125 = vld [vmem:[%s1 + $0x98] sm:$0xff]
  %v126 = vld [vmem:[%s1 + $0xa0] sm:$0xff]
  %v127 = vld [vmem:[%s1 + $0xa8] sm:$0xff]
  %v128 = vld [vmem:[%s1 + $0xb0] sm:$0xff]
  %v129 = vld [vmem:[%s1 + $0xb8] sm:$0xff]
  %v130 = vld [vmem:[%s1 + $0xc0] sm:$0xff]
  %v131 = vld [vmem:[%s1 + $0xc8] sm:$0xff]
  %v132 = vld [vmem:[%s1 + $0xd0] sm:$0xff]
  %v133 = vld [vmem:[%s1 + $0xd8] sm:$0xff]
  %v134 = vld [vmem:[%s1 + $0xe0] sm:$0xff]
  %v135 = vld [vmem:[%s1 + $0xe8] sm:$0xff]
  %v136 = vld [vmem:[%s1 + $0xf0] sm:$0xff]
  %v137 = vld [vmem:[%s1 + $0xf8] sm:$0xff]
  %v138 = vld [vmem:[%s1 + $0x100] sm:$0xff]
  %v139 = vld [vmem:[%s1 + $0x108] sm:$0xff]
  %v140 = vld [vmem:[%s1 + $0x110] sm:$0xff]
  %v141 = vld [vmem:[%s1 + $0x118] sm:$0xff]
  %v142 = vld [vmem:[%s1 + $0x120] sm:$0xff]
  %v143 = vld [vmem:[%s1 + $0x128] sm:$0xff]
  %v144 = vld [vmem:[%s1 + $0x130] sm:$0xff]
  %v145 = vld [vmem:[%s1 + $0x138] sm:$0xff]
  %v146 = vld [vmem:[%s1 + $0x140] sm:$0xff]
  %v147 = vld [vmem:[%s1 + $0x148] sm:$0xff]
  %v148 = vld [vmem:[%s1 + $0x150] sm:$0xff]
  %v149 = vld [vmem:[%s1 + $0x158] sm:$0xff]
  %v150 = vld [vmem:[%s1 + $0x160] sm:$0xff]
  %v151 = vld [vmem:[%s1 + $0x168] sm:$0xff]
  %v152 = vld [vmem:[%s1 + $0x170] sm:$0xff]
  %v153 = vld [vmem:[%s1 + $0x178] sm:$0xff]
  %v154 = vld [vmem:[%s1 + $0x180] sm:$0xff]
  %v155 = vld [vmem:[%s1 + $0x188] sm:$0xff]
  %v156 = vld [vmem:[%s1 + $0x190] sm:$0xff]
  %v157 = vld [vmem:[%s1 + $0x198] sm:$0xff]
  %v158 = vld [vmem:[%s1 + $0x1a0] sm:$0xff]
  %v159 = vld [vmem:[%s1 + $0x1a8] sm:$0xff]
  %v160 = vld [vmem:[%s1 + $0x1b0] sm:$0xff]
  %v161 = vld [vmem:[%s1 + $0x1b8] sm:$0xff]
  %v162 = vld [vmem:[%s1 + $0x1c0] sm:$0xff]
  %v163 = vld [vmem:[%s1 + $0x1c8] sm:$0xff]
  %v164 = vld [vmem:[%s1 + $0x1d0] sm:$0xff]
  %v165 = vld [vmem:[%s1 + $0x1d8] sm:$0xff]
  %v166 = vld [vmem:[%s1 + $0x1e0] sm:$0xff]
  %v167 = vld [vmem:[%s1 + $0x1e8] sm:$0xff]
  %v168 = vld [vmem:[%s1 + $0x1f0] sm:$0xff]
  %v169 = vld [vmem:[%s1 + $0x1f8] sm:$0xff]
  %v170 = vld [vmem:[%s1 + $0x200] sm:$0xff]
  %v171 = vld [vmem:[%s1 + $0x208] sm:$0xff]
  %v172 = vld [vmem:[%s1 + $0x210] sm:$0xff]
  %v173 = vld [vmem:[%s1 + $0x218] sm:$0xff]
  %v174 = vld [vmem:[%s1 + $0x220] sm:$0xff]
  %v175 = vld [vmem:[%s1 + $0x228] sm:$0xff]
  %v176 = vld [vmem:[%s1 + $0x230] sm:$0xff]
  %v177 = vld [vmem:[%s1 + $0x238] sm:$0xff]
  %v178 = vld [vmem:[%s1 + $0x240] sm:$0xff]
  %v179 = vld [vmem:[%s1 + $0x248] sm:$0xff]
  %v180 = vld [vmem:[%s1 + $0x250] sm:$0xff]
  %v181 = vld [vmem:[%s1 + $0x258] sm:$0xff]
  %v182 = vld [vmem:[%s1 + $0x260] sm:$0xff]
  %v183 = vld [vmem:[%s1 + $0x268] sm:$0xff]
  %v184 = vld [vmem:[%s1 + $0x270] sm:$0xff]
  %v185 = vld [vmem:[%s1 + $0x278] sm:$0xff]
  %v186 = vld [vmem:[%s1 + $0x280] sm:$0xff]
  %v187 = vld [vmem:[%s1 + $0x288] sm:$0xff]
  %v188 = vld [vmem:[%s1 + $0x290] sm:$0xff]
  %v189 = vld [vmem:[%s1 + $0x298] sm:$0xff]
  %v190 = vld [vmem:[%s1 + $0x2a0] sm:$0xff]
  %v191 = vld [vmem:[%s1 + $0x2a8] sm:$0xff]
  %v192 = vld [vmem:[%s1 + $0x2b0] sm:$0xff]
  %v193 = vld [vmem:[%s1 + $0x2b8] sm:$0xff]
  %v194 = vld [vmem:[%s1 + $0x2c0] sm:$0xff]
  %v195 = vld [vmem:[%s1 + $0x2c8] sm:$0xff]
  %v196 = vld [vmem:[%s1 + $0x2d0] sm:$0xff]
  %v197 = vld [vmem:[%s1 + $0x2d8] sm:$0xff]
  %v198 = vld [vmem:[%s1 + $0x2e0] sm:$0xff]
  %v199 = vld [vmem:[%s1 + $0x2e8] sm:$0xff]
  %v200 = vld [vmem:[%s1 + $0x2f0] sm:$0xff]
  %v201 = vld [vmem:[%s1 + $0x2f8] sm:$0xff]
  %v202 = vld [vmem:[%s1 + $0x300] sm:$0xff]
  %v203 = vld [vmem:[%s1 + $0x308] sm:$0xff]
  %v204 = vld [vmem:[%s1 + $0x310] sm:$0xff]
  %v205 = vld [vmem:[%s1 + $0x318] sm:$0xff]
  %v206 = vld [vmem:[%s1 + $0x320] sm:$0xff]
  %v207 = vld [vmem:[%s1 + $0x328] sm:$0xff]
  %v208 = vld [vmem:[%s1 + $0x330] sm:$0xff]
  %v209 = vld [vmem:[%s1 + $0x338] sm:$0xff]
  %v210 = vld [vmem:[%s1 + $0x340] sm:$0xff]
  %v211 = vld [vmem:[%s1 + $0x348] sm:$0xff]
  %v212 = vld [vmem:[%s1 + $0x350] sm:$0xff]
  %v213 = vld [vmem:[%s1 + $0x358] sm:$0xff]
  %v214 = vld [vmem:[%s1 + $0x360] sm:$0xff]
  %v215 = vld [vmem:[%s1 + $0x368] sm:$0xff]
  %v216 = vld [vmem:[%s1 + $0x370] sm:$0xff]
  %v217 = vld [vmem:[%s1 + $0x378] sm:$0xff]
  %v218 = vld [vmem:[%s1 + $0x380] sm:$0xff]
  %v219 = vld [vmem:[%s1 + $0x388] sm:$0xff]
  %v220 = vld [vmem:[%s1 + $0x390] sm:$0xff]
  %v221 = vld [vmem:[%s1 + $0x398] sm:$0xff]
  %v222 = vld [vmem:[%s1 + $0x3a0] sm:$0xff]
  %v223 = vld [vmem:[%s1 + $0x3a8] sm:$0xff]
  %v224 = vld [vmem:[%s1 + $0x3b0] sm:$0xff]
  %v225 = vld [vmem:[%s1 + $0x3b8] sm:$0xff]
  %v226 = vld [vmem:[%s1 + $0x3c0] sm:$0xff]
  %v227 = vld [vmem:[%s1 + $0x3c8] sm:$0xff]
  %v228 = vld [vmem:[%s1 + $0x3d0] sm:$0xff]
  %v229 = vld [vmem:[%s1 + $0x3d8] sm:$0xff]
  %v230 = vld [vmem:[%s1 + $0x3e0] sm:$0xff]
  %v231 = vld [vmem:[%s1 + $0x3e8] sm:$0xff]
  %v232 = vld [vmem:[%s1 + $0x3f0] sm:$0xff]
  %v233 = vld [vmem:[%s1 + $0x3f8] sm:$0xff]
  %v234 = vld [vmem:[%s1 + $0x400] sm:$0xff]
  %v235 = vld [vmem:[%s1 + $0x408] sm:$0xff]
  %v236 = vld [vmem:[%s1 + $0x410] sm:$0xff]
  %v237 = vld [vmem:[%s1 + $0x418] sm:$0xff]
  %v238 = vld [vmem:[%s1 + $0x420] sm:$0xff]
  %v239 = vld [vmem:[%s1 + $0x428] sm:$0xff]
  %v240 = vld [vmem:[%s1 + $0x430] sm:$0xff]
  %v241 = vld [vmem:[%s1 + $0x438] sm:$0xff]
  %v242 = vld [vmem:[%s1 + $0x440] sm:$0xff]
  %v243 = vld [vmem:[%s1 + $0x448] sm:$0xff]
  %v244 = vld [vmem:[%s1 + $0x450] sm:$0xff]
  %v245 = vld [vmem:[%s1 + $0x458] sm:$0xff]
  %v246 = vld [vmem:[%s1 + $0x460] sm:$0xff]
  %v247 = vld [vmem:[%s1 + $0x468] sm:$0xff]
  %v248 = vld [vmem:[%s1 + $0x470] sm:$0xff]
  %v249 = vld [vmem:[%s1 + $0x478] sm:$0xff]
  %v250 = vld [vmem:[%s1 + $0x480] sm:$0xff]
  %v251 = vld [vmem:[%s1 + $0x488] sm:$0xff]
  %v252 = vld [vmem:[%s1 + $0x490] sm:$0xff]
  %v253 = vld [vmem:[%s1 + $0x498] sm:$0xff]
  %v254 = vld [vmem:[%s1 + $0x4a0] sm:$0xff]
  %v255 = vld [vmem:[%s1 + $0x4a8] sm:$0xff]
  %v256 = vld [vmem:[%s1 + $0x4b0] sm:$0xff]
  %v257 = vld [vmem:[%s1 + $0x4b8] sm:$0xff]
  %v258 = vld [vmem:[%s1 + $0x4c0] sm:$0xff]
  %v259 = vld [vmem:[%s1 + $0x4c8] sm:$0xff]
  %v260 = vld [vmem:[%s1 + $0x4d0] sm:$0xff]
  %v261 = vld [vmem:[%s1 + $0x4d8] sm:$0xff]
  %v262 = vld [vmem:[%s1 + $0x4e0] sm:$0xff]
  %v263 = vld [vmem:[%s1 + $0x4e8] sm:$0xff]
  %v264 = vld [vmem:[%s1 + $0x4f0] sm:$0xff]
  %v265 = vld [vmem:[%s1 + $0x4f8] sm:$0xff]
  %v266 = vld [vmem:[%s1 + $0x500] sm:$0xff]
  %v267 = vld [vmem:[%s1 + $0x508] sm:$0xff]
  %v268 = vld [vmem:[%s1 + $0x510] sm:$0xff]
  %v269 = vld [vmem:[%s1 + $0x518] sm:$0xff]
  %v270 = vld [vmem:[%s1 + $0x520] sm:$0xff]
  %v271 = vld [vmem:[%s1 + $0x528] sm:$0xff]
  %v272 = vld [vmem:[%s1 + $0x530] sm:$0xff]
  %v273 = vld [vmem:[%s1 + $0x538] sm:$0xff]
  %v274 = vld [vmem:[%s1 + $0x540] sm:$0xff]
  %v275 = vld [vmem:[%s1 + $0x548] sm:$0xff]
  %v276 = vld [vmem:[%s1 + $0x550] sm:$0xff]
  %v277 = vld [vmem:[%s1 + $0x558] sm:$0xff]
  %v278 = vld [vmem:[%s1 + $0x560] sm:$0xff]
  %v279 = vld [vmem:[%s1 + $0x568] sm:$0xff]
  %v280 = vld [vmem:[%s1 + $0x570] sm:$0xff]
  %v281 = vld [vmem:[%s1 + $0x578] sm:$0xff]
  %v282 = vld [vmem:[%s1 + $0x580] sm:$0xff]
  %v283 = vld [vmem:[%s1 + $0x588] sm:$0xff]
  %v284 = vld [vmem:[%s1 + $0x590] sm:$0xff]
  %v285 = vld [vmem:[%s1 + $0x598] sm:$0xff]
  %v286 = vld [vmem:[%s1 + $0x5a0] sm:$0xff]
  %v287 = vld [vmem:[%s1 + $0x5a8] sm:$0xff]
  %v288 = vld [vmem:[%s1 + $0x5b0] sm:$0xff]
  %v289 = vld [vmem:[%s1 + $0x5b8] sm:$0xff]
  %v290 = vld [vmem:[%s1 + $0x5c0] sm:$0xff]
  %v291 = vld [vmem:[%s1 + $0x5c8] sm:$0xff]
  %v292 = vld [vmem:[%s1 + $0x5d0] sm:$0xff]
  %v293 = vld [vmem:[%s1 + $0x5d8] sm:$0xff]
  %v294 = vld [vmem:[%s1 + $0x5e0] sm:$0xff]
  %v295 = vld [vmem:[%s1 + $0x5e8] sm:$0xff]
  %v296 = vld [vmem:[%s1 + $0x5f0] sm:$0xff]
  %v297 = vld [vmem:[%s1 + $0x5f8] sm:$0xff]
  %v298 = vld [vmem:[%s1 + $0x600] sm:$0xff]
  %v299 = vld [vmem:[%s1 + $0x608] sm:$0xff]
  %v300 = vld [vmem:[%s1 + $0x610] sm:$0xff]
  %v301 = vld [vmem:[%s1 + $0x618] sm:$0xff]
  %v302 = vld [vmem:[%s1 + $0x620] sm:$0xff]
  %v303 = vld [vmem:[%s1 + $0x628] sm:$0xff]
  %v304 = vld [vmem:[%s1 + $0x630] sm:$0xff]
  %v305 = vld [vmem:[%s1 + $0x638] sm:$0xff]
  %v306 = vld [vmem:[%s1 + $0x640] sm:$0xff]
  %v307 = vld [vmem:[%s1 + $0x648] sm:$0xff]
  %v308 = vld [vmem:[%s1 + $0x650] sm:$0xff]
  %v309 = vld [vmem:[%s1 + $0x658] sm:$0xff]
  %v310 = vld [vmem:[%s1 + $0x660] sm:$0xff]
  %v311 = vld [vmem:[%s1 + $0x668] sm:$0xff]
  %v312 = vld [vmem:[%s1 + $0x670] sm:$0xff]
  %v313 = vld [vmem:[%s1 + $0x678] sm:$0xff]
  %v314 = vld [vmem:[%s1 + $0x680] sm:$0xff]
  %v315 = vld [vmem:[%s1 + $0x688] sm:$0xff]
  %v316 = vld [vmem:[%s1 + $0x690] sm:$0xff]
  %v317 = vld [vmem:[%s1 + $0x698] sm:$0xff]
  %v318 = vld [vmem:[%s1 + $0x6a0] sm:$0xff]
  %v319 = vld [vmem:[%s1 + $0x6a8] sm:$0xff]
  %v320 = vld [vmem:[%s1 + $0x6b0] sm:$0xff]
  %v321 = vld [vmem:[%s1 + $0x6b8] sm:$0xff]
  %v322 = vld [vmem:[%s1 + $0x6c0] sm:$0xff]
  %v323 = vld [vmem:[%s1 + $0x6c8] sm:$0xff]
  %v324 = vld [vmem:[%s1 + $0x6d0] sm:$0xff]
  %v325 = vld [vmem:[%s1 + $0x6d8] sm:$0xff]
  %v326 = vld [vmem:[%s1 + $0x6e0] sm:$0xff]
  %v327 = vld [vmem:[%s1 + $0x6e8] sm:$0xff]
  %v328 = vld [vmem:[%s1 + $0x6f0] sm:$0xff]
  %v329 = vld [vmem:[%s1 + $0x6f8] sm:$0xff]
  %v330 = vld [vmem:[%s1 + $0x700] sm:$0xff]
  %v331 = vld [vmem:[%s1 + $0x708] sm:$0xff]
  %v332 = vld [vmem:[%s1 + $0x710] sm:$0xff]
  %v333 = vld [vmem:[%s1 + $0x718] sm:$0xff]
  %v334 = vld [vmem:[%s1 + $0x720] sm:$0xff]
  %v335 = vld [vmem:[%s1 + $0x728] sm:$0xff]
  %v336 = vld [vmem:[%s1 + $0x730] sm:$0xff]
  %v337 = vld [vmem:[%s1 + $0x738] sm:$0xff]
  %v338 = vld [vmem:[%s1 + $0x740] sm:$0xff]
  %v339 = vld [vmem:[%s1 + $0x748] sm:$0xff]
  %v340 = vld [vmem:[%s1 + $0x750] sm:$0xff]
  %v341 = vld [vmem:[%s1 + $0x758] sm:$0xff]
  %v342 = vld [vmem:[%s1 + $0x760] sm:$0xff]
  %v343 = vld [vmem:[%s1 + $0x768] sm:$0xff]
  %v344 = vld [vmem:[%s1 + $0x770] sm:$0xff]
  %v345 = vld [vmem:[%s1 + $0x778] sm:$0xff]
  %v346 = vld [vmem:[%s1 + $0x780] sm:$0xff]
  %v347 = vld [vmem:[%s1 + $0x788] sm:$0xff]
  %v348 = vld [vmem:[%s1 + $0x790] sm:$0xff]
  %v349 = vld [vmem:[%s1 + $0x798] sm:$0xff]
  %v350 = vld [vmem:[%s1 + $0x7a0] sm:$0xff]
  %v351 = vld [vmem:[%s1 + $0x7a8] sm:$0xff]
  %v352 = vld [vmem:[%s1 + $0x7b0] sm:$0xff]
  %v353 = vld [vmem:[%s1 + $0x7b8] sm:$0xff]
  %v354 = vld [vmem:[%s1 + $0x7c0] sm:$0xff]
  %v355 = vld [vmem:[%s1 + $0x7c8] sm:$0xff]
  %v356 = vld [vmem:[%s1 + $0x7d0] sm:$0xff]
  %v357 = vld [vmem:[%s1 + $0x7d8] sm:$0xff]
  %v358 = vld [vmem:[%s1 + $0x7e0] sm:$0xff]
  %v359 = vld [vmem:[%s1 + $0x7e8] sm:$0xff]
  %v360 = vld [vmem:[%s1 + $0x7f0] sm:$0xff]
  %v361 = vld [vmem:[%s1 + $0x7f8] sm:$0xff]
  %v362 = vld [vmem:[%s1 + $0x800] sm:$0xff]
  %v363 = vld [vmem:[%s1 + $0x808] sm:$0xff]
  %v364 = vld [vmem:[%s1 + $0x810] sm:$0xff]
  %v365 = vld [vmem:[%s1 + $0x818] sm:$0xff]
  %v366 = vld [vmem:[%s1 + $0x820] sm:$0xff]
  %v367 = vld [vmem:[%s1 + $0x828] sm:$0xff]
  %v368 = vld [vmem:[%s1 + $0x830] sm:$0xff]
  %v369 = vld [vmem:[%s1 + $0x838] sm:$0xff]
  %v370 = vld [vmem:[%s1 + $0x840] sm:$0xff]
  %v371 = vld [vmem:[%s1 + $0x848] sm:$0xff]
  %v372 = vld [vmem:[%s1 + $0x850] sm:$0xff]
  %v373 = vld [vmem:[%s1 + $0x858] sm:$0xff]
  %v374 = vld [vmem:[%s1 + $0x860] sm:$0xff]
  %v375 = vld [vmem:[%s1 + $0x868] sm:$0xff]
  %v376 = vld [vmem:[%s1 + $0x870] sm:$0xff]
  %v377 = vld [vmem:[%s1 + $0x878] sm:$0xff]
  %v378 = vld [vmem:[%s1 + $0x880] sm:$0xff]
  %v379 = vld [vmem:[%s1 + $0x888] sm:$0xff]
  %v380 = vld [vmem:[%s1 + $0x890] sm:$0xff]
  %v381 = vld [vmem:[%s1 + $0x898] sm:$0xff]
  %v382 = vld [vmem:[%s1 + $0x8a0] sm:$0xff]
  %v383 = vld [vmem:[%s1 + $0x8a8] sm:$0xff]
  %v384 = vld [vmem:[%s1 + $0x8b0] sm:$0xff]
  %v385 = vld [vmem:[%s1 + $0x8b8] sm:$0xff]
  %v386 = vld [vmem:[%s1 + $0x8c0] sm:$0xff]
  %v387 = vld [vmem:[%s1 + $0x8c8] sm:$0xff]
  %v388 = vld [vmem:[%s1 + $0x8d0] sm:$0xff]
  %v389 = vld [vmem:[%s1 + $0x8d8] sm:$0xff]
  %v390 = vld [vmem:[%s1 + $0x8e0] sm:$0xff]
  %v391 = vld [vmem:[%s1 + $0x8e8] sm:$0xff]
  %v392 = vld [vmem:[%s1 + $0x8f0] sm:$0xff]
  %v393 = vld [vmem:[%s1 + $0x8f8] sm:$0xff]
  %v394 = vld [vmem:[%s1 + $0x900] sm:$0xff]
  %v395 = vld [vmem:[%s1 + $0x908] sm:$0xff]
  %v396 = vld [vmem:[%s1 + $0x910] sm:$0xff]
  %v397 = vld [vmem:[%s1 + $0x918] sm:$0xff]
  %v398 = vld [vmem:[%s1 + $0x920] sm:$0xff]
  %v399 = vld [vmem:[%s1 + $0x928] sm:$0xff]
  %v400 = vld [vmem:[%s1 + $0x930] sm:$0xff]
  %v401 = vld [vmem:[%s1 + $0x938] sm:$0xff]
  %v402 = vld [vmem:[%s1 + $0x940] sm:$0xff]
  %v403 = vld [vmem:[%s1 + $0x948] sm:$0xff]
  %v404 = vld [vmem:[%s1 + $0x950] sm:$0xff]
  %v405 = vld [vmem:[%s1 + $0x958] sm:$0xff]
  %v406 = vld [vmem:[%s1 + $0x960] sm:$0xff]
  %v407 = vld [vmem:[%s1 + $0x968] sm:$0xff]
  %v408 = vld [vmem:[%s1 + $0x970] sm:$0xff]
  %v409 = vld [vmem:[%s1 + $0x978] sm:$0xff]
  %v410 = vld [vmem:[%s1 + $0x980] sm:$0xff]
  %v411 = vld [vmem:[%s1 + $0x988] sm:$0xff]
  %v412 = vld [vmem:[%s1 + $0x990] sm:$0xff]
  %v413 = vld [vmem:[%s1 + $0x998] sm:$0xff]
  %v414 = vld [vmem:[%s1 + $0x9a0] sm:$0xff]
  %v415 = vld [vmem:[%s1 + $0x9a8] sm:$0xff]
  %v416 = vld [vmem:[%s1 + $0x9b0] sm:$0xff]
  %v417 = vld [vmem:[%s1 + $0x9b8] sm:$0xff]
  %v418 = vld [vmem:[%s1 + $0x9c0] sm:$0xff]
  %v419 = vld [vmem:[%s1 + $0x9c8] sm:$0xff]
  %v420 = vld [vmem:[%s1 + $0x9d0] sm:$0xff]
  %v421 = vld [vmem:[%s1 + $0x9d8] sm:$0xff]
  %v422 = vld [vmem:[%s1 + $0x9e0] sm:$0xff]
  %v423 = vld [vmem:[%s1 + $0x9e8] sm:$0xff]
  %v424 = vld [vmem:[%s1 + $0x9f0] sm:$0xff]
  %v425 = vld [vmem:[%s1 + $0x9f8] sm:$0xff]
  %v426 = vld [vmem:[%s1 + $0xa00] sm:$0xff]
  %v427 = vld [vmem:[%s1 + $0xa08] sm:$0xff]
  %v428 = vld [vmem:[%s1 + $0xa10] sm:$0xff]
  %v429 = vld [vmem:[%s1 + $0xa18] sm:$0xff]
  %v430 = vld [vmem:[%s1 + $0xa20] sm:$0xff]
  %v431 = vld [vmem:[%s1 + $0xa28] sm:$0xff]
  %v432 = vld [vmem:[%s1 + $0xa30] sm:$0xff]
  %v433 = vld [vmem:[%s1 + $0xa38] sm:$0xff]
  %v434 = vld [vmem:[%s1 + $0xa40] sm:$0xff]
  %v435 = vld [vmem:[%s1 + $0xa48] sm:$0xff]
  %v436 = vld [vmem:[%s1 + $0xa50] sm:$0xff]
  %v437 = vld [vmem:[%s1 + $0xa58] sm:$0xff]
  %v438 = vld [vmem:[%s1 + $0xa60] sm:$0xff]
  %v439 = vld [vmem:[%s1 + $0xa68] sm:$0xff]
  %v440 = vld [vmem:[%s1 + $0xa70] sm:$0xff]
  %v441 = vld [vmem:[%s1 + $0xa78] sm:$0xff]
  %v442 = vld [vmem:[%s1 + $0xa80] sm:$0xff]
  %v443 = vld [vmem:[%s1 + $0xa88] sm:$0xff]
  %v444 = vld [vmem:[%s1 + $0xa90] sm:$0xff]
  %v445 = vld [vmem:[%s1 + $0xa98] sm:$0xff]
  %v446 = vld [vmem:[%s1 + $0xaa0] sm:$0xff]
  %v447 = vld [vmem:[%s1 + $0xaa8] sm:$0xff]
  %v448 = vld [vmem:[%s1 + $0xab0] sm:$0xff]
  %v449 = vld [vmem:[%s1 + $0xab8] sm:$0xff]
  %v450 = vld [vmem:[%s1 + $0xac0] sm:$0xff]
  %v451 = vld [vmem:[%s1 + $0xac8] sm:$0xff]
  %v452 = vld [vmem:[%s1 + $0xad0] sm:$0xff]
  %v453 = vld [vmem:[%s1 + $0xad8] sm:$0xff]
  %v454 = vld [vmem:[%s1 + $0xae0] sm:$0xff]
  %v455 = vld [vmem:[%s1 + $0xae8] sm:$0xff]
  %v456 = vld [vmem:[%s1 + $0xaf0] sm:$0xff]
  %v457 = vld [vmem:[%s1 + $0xaf8] sm:$0xff]
  %v458 = vld [vmem:[%s1 + $0xb00] sm:$0xff]
  %v459 = vld [vmem:[%s1 + $0xb08] sm:$0xff]
  %v460 = vld [vmem:[%s1 + $0xb10] sm:$0xff]
  %v461 = vld [vmem:[%s1 + $0xb18] sm:$0xff]
  %v462 = vld [vmem:[%s1 + $0xb20] sm:$0xff]
  %v463 = vld [vmem:[%s1 + $0xb28] sm:$0xff]
  %v464 = vld [vmem:[%s1 + $0xb30] sm:$0xff]
  %v465 = vld [vmem:[%s1 + $0xb38] sm:$0xff]
  %v466 = vld [vmem:[%s1 + $0xb40] sm:$0xff]
  %v467 = vld [vmem:[%s1 + $0xb48] sm:$0xff]
  %v468 = vld [vmem:[%s1 + $0xb50] sm:$0xff]
  %v469 = vld [vmem:[%s1 + $0xb58] sm:$0xff]
  %v470 = vld [vmem:[%s1 + $0xb60] sm:$0xff]
  %v471 = vld [vmem:[%s1 + $0xb68] sm:$0xff]
  %v472 = vld [vmem:[%s1 + $0xb70] sm:$0xff]
  %v473 = vld [vmem:[%s1 + $0xb78] sm:$0xff]
  %v474 = vld [vmem:[%s1 + $0xb80] sm:$0xff]
  %v475 = vld [vmem:[%s1 + $0xb88] sm:$0xff]
  %v476 = vld [vmem:[%s1 + $0xb90] sm:$0xff]
  %v477 = vld [vmem:[%s1 + $0xb98] sm:$0xff]
  %v478 = vld [vmem:[%s1 + $0xba0] sm:$0xff]
  %v479 = vld [vmem:[%s1 + $0xba8] sm:$0xff]
  %v480 = vld [vmem:[%s1 + $0xbb0] sm:$0xff]
  %v481 = vld [vmem:[%s1 + $0xbb8] sm:$0xff]
  %v482 = vld [vmem:[%s1 + $0xbc0] sm:$0xff]
  %v483 = vld [vmem:[%s1 + $0xbc8] sm:$0xff]
  %v484 = vld [vmem:[%s1 + $0xbd0] sm:$0xff]
  %v485 = vld [vmem:[%s1 + $0xbd8] sm:$0xff]
  %v486 = vld [vmem:[%s1 + $0xbe0] sm:$0xff]
  %v487 = vld [vmem:[%s1 + $0xbe8] sm:$0xff]
  %v488 = vld [vmem:[%s1 + $0xbf0] sm:$0xff]
  %v489 = vld [vmem:[%s1 + $0xbf8] sm:$0xff]
  %v490 = vld [vmem:[%s1 + $0xc00] sm:$0xff]
  %v491 = vld [vmem:[%s1 + $0xc08] sm:$0xff]
  %v492 = vld [vmem:[%s1 + $0xc10] sm:$0xff]
  %v493 = vld [vmem:[%s1 + $0xc18] sm:$0xff]
  %v494 = vld [vmem:[%s1 + $0xc20] sm:$0xff]
  %v495 = vld [vmem:[%s1 + $0xc28] sm:$0xff]
  %v496 = vld [vmem:[%s1 + $0xc30] sm:$0xff]
  %v497 = vld [vmem:[%s1 + $0xc38] sm:$0xff]
  %v498 = vld [vmem:[%s1 + $0xc40] sm:$0xff]
  %v499 = vld [vmem:[%s1 + $0xc48] sm:$0xff]
  %v500 = vld [vmem:[%s1 + $0xc50] sm:$0xff]
  %v501 = vld [vmem:[%s1 + $0xc58] sm:$0xff]
  %v502 = vld [vmem:[%s1 + $0xc60] sm:$0xff]
  %v503 = vld [vmem:[%s1 + $0xc68] sm:$0xff]
  %v504 = vld [vmem:[%s1 + $0xc70] sm:$0xff]
  %v505 = vld [vmem:[%s1 + $0xc78] sm:$0xff]
  %v506 = vld [vmem:[%s1 + $0xc80] sm:$0xff]
  %v507 = vld [vmem:[%s1 + $0xc88] sm:$0xff]
  %v508 = vld [vmem:[%s1 + $0xc90] sm:$0xff]
  %v509 = vld [vmem:[%s1 + $0xc98] sm:$0xff]
  %v510 = vld [vmem:[%s1 + $0xca0] sm:$0xff]
  %v511 = vld [vmem:[%s1 + $0xca8] sm:$0xff]
  %v512 = vld [vmem:[%s1 + $0xcb0] sm:$0xff]
  %v513 = vld [vmem:[%s1 + $0xcb8] sm:$0xff]
  %v514 = vld [vmem:[%s1 + $0xcc0] sm:$0xff]
  %v515 = vld [vmem:[%s1 + $0xcc8] sm:$0xff]
  %v516 = vld [vmem:[%s1 + $0xcd0] sm:$0xff]
  %v517 = vld [vmem:[%s1 + $0xcd8] sm:$0xff]
  %v518 = vld [vmem:[%s1 + $0xce0] sm:$0xff]
  %v519 = vld [vmem:[%s1 + $0xce8] sm:$0xff]
  %v520 = vld [vmem:[%s1 + $0xcf0] sm:$0xff]
  %v521 = vld [vmem:[%s1 + $0xcf8] sm:$0xff]
  %v522 = vld [vmem:[%s1 + $0xd00] sm:$0xff]
  %v523 = vld [vmem:[%s1 + $0xd08] sm:$0xff]
  %v524 = vld [vmem:[%s1 + $0xd10] sm:$0xff]
  %v525 = vld [vmem:[%s1 + $0xd18] sm:$0xff]
  %v526 = vld [vmem:[%s1 + $0xd20] sm:$0xff]
  %v527 = vld [vmem:[%s1 + $0xd28] sm:$0xff]
  %v528 = vld [vmem:[%s1 + $0xd30] sm:$0xff]
  %v529 = vld [vmem:[%s1 + $0xd38] sm:$0xff]
  %v530 = vld [vmem:[%s1 + $0xd40] sm:$0xff]
  %v531 = vld [vmem:[%s1 + $0xd48] sm:$0xff]
  %v532 = vld [vmem:[%s1 + $0xd50] sm:$0xff]
  %v533 = vld [vmem:[%s1 + $0xd58] sm:$0xff]
  %v534 = vld [vmem:[%s1 + $0xd60] sm:$0xff]
  %v535 = vld [vmem:[%s1 + $0xd68] sm:$0xff]
  %v536 = vld [vmem:[%s1 + $0xd70] sm:$0xff]
  %v537 = vld [vmem:[%s1 + $0xd78] sm:$0xff]
  %v538 = vld [vmem:[%s1 + $0xd80] sm:$0xff]
  %v539 = vld [vmem:[%s1 + $0xd88] sm:$0xff]
  %v540 = vld [vmem:[%s1 + $0xd90] sm:$0xff]
  %v541 = vld [vmem:[%s1 + $0xd98] sm:$0xff]
  %v542 = vld [vmem:[%s1 + $0xda0] sm:$0xff]
  %v543 = vld [vmem:[%s1 + $0xda8] sm:$0xff]
  %v544 = vld [vmem:[%s1 + $0xdb0] sm:$0xff]
  %v545 = vld [vmem:[%s1 + $0xdb8] sm:$0xff]
  %v546 = vld [vmem:[%s1 + $0xdc0] sm:$0xff]
  %v547 = vld [vmem:[%s1 + $0xdc8] sm:$0xff]
  %v548 = vld [vmem:[%s1 + $0xdd0] sm:$0xff]
  %v549 = vld [vmem:[%s1 + $0xdd8] sm:$0xff]
  %v550 = vld [vmem:[%s1 + $0xde0] sm:$0xff]
  %v551 = vld [vmem:[%s1 + $0xde8] sm:$0xff]
  %v552 = vld [vmem:[%s1 + $0xdf0] sm:$0xff]
  %v553 = vld [vmem:[%s1 + $0xdf8] sm:$0xff]
  %v554 = vld [vmem:[%s1 + $0xe00] sm:$0xff]
  %v555 = vld [vmem:[%s1 + $0xe08] sm:$0xff]
  %v556 = vld [vmem:[%s1 + $0xe10] sm:$0xff]
  %v557 = vld [vmem:[%s1 + $0xe18] sm:$0xff]
  %v558 = vld [vmem:[%s1 + $0xe20] sm:$0xff]
  %v559 = vld [vmem:[%s1 + $0xe28] sm:$0xff]
  %v560 = vld [vmem:[%s1 + $0xe30] sm:$0xff]
  %v561 = vld [vmem:[%s1 + $0xe38] sm:$0xff]
  %v562 = vld [vmem:[%s1 + $0xe40] sm:$0xff]
  %v563 = vld [vmem:[%s1 + $0xe48] sm:$0xff]
  %v564 = vld [vmem:[%s1 + $0xe50] sm:$0xff]
  %v565 = vld [vmem:[%s1 + $0xe58] sm:$0xff]
  %v566 = vld [vmem:[%s1 + $0xe60] sm:$0xff]
  %v567 = vld [vmem:[%s1 + $0xe68] sm:$0xff]
  %v568 = vld [vmem:[%s1 + $0xe70] sm:$0xff]
  %v569 = vld [vmem:[%s1 + $0xe78] sm:$0xff]
  %v570 = vld [vmem:[%s1 + $0xe80] sm:$0xff]
  %v571 = vld [vmem:[%s1 + $0xe88] sm:$0xff]
  %v572 = vld [vmem:[%s1 + $0xe90] sm:$0xff]
  %v573 = vld [vmem:[%s1 + $0xe98] sm:$0xff]
  %v574 = vld [vmem:[%s1 + $0xea0] sm:$0xff]
  %v575 = vld [vmem:[%s1 + $0xea8] sm:$0xff]
  %v576 = vld [vmem:[%s1 + $0xeb0] sm:$0xff]
  %v577 = vld [vmem:[%s1 + $0xeb8] sm:$0xff]
  %v578 = vld [vmem:[%s1 + $0xec0] sm:$0xff]
  %v579 = vld [vmem:[%s1 + $0xec8] sm:$0xff]
  %v580 = vld [vmem:[%s1 + $0xed0] sm:$0xff]
  %v581 = vld [vmem:[%s1 + $0xed8] sm:$0xff]
  %v582 = vld [vmem:[%s1 + $0xee0] sm:$0xff]
  %v583 = vld [vmem:[%s1 + $0xee8] sm:$0xff]
  %v584 = vld [vmem:[%s1 + $0xef0] sm:$0xff]
  %v585 = vld [vmem:[%s1 + $0xef8] sm:$0xff]
  %v586 = vld [vmem:[%s1 + $0xf00] sm:$0xff]
  %v587 = vld [vmem:[%s1 + $0xf08] sm:$0xff]
  %v588 = vld [vmem:[%s1 + $0xf10] sm:$0xff]
  %v589 = vld [vmem:[%s1 + $0xf18] sm:$0xff]
  %v590 = vld [vmem:[%s1 + $0xf20] sm:$0xff]
  %v591 = vld [vmem:[%s1 + $0xf28] sm:$0xff]
  %v592 = vld [vmem:[%s1 + $0xf30] sm:$0xff]
  %v593 = vld [vmem:[%s1 + $0xf38] sm:$0xff]
  %v594 = vld [vmem:[%s1 + $0xf40] sm:$0xff]
  %v595 = vld [vmem:[%s1 + $0xf48] sm:$0xff]
  %v596 = vld [vmem:[%s1 + $0xf50] sm:$0xff]
  %v597 = vld [vmem:[%s1 + $0xf58] sm:$0xff]
  %v598 = vld [vmem:[%s1 + $0xf60] sm:$0xff]
  %v599 = vld [vmem:[%s1 + $0xf68] sm:$0xff]
  %v600 = vld [vmem:[%s1 + $0xf70] sm:$0xff]
  %v601 = vld [vmem:[%s1 + $0xf78] sm:$0xff]
  %v602 = vld [vmem:[%s1 + $0xf80] sm:$0xff]
  %v603 = vld [vmem:[%s1 + $0xf88] sm:$0xff]
  %v604 = vld [vmem:[%s1 + $0xf90] sm:$0xff]
  %v605 = vld [vmem:[%s1 + $0xf98] sm:$0xff]
  %v606 = vld [vmem:[%s1 + $0xfa0] sm:$0xff]
  %v607 = vld [vmem:[%s1 + $0xfa8] sm:$0xff]
  %v608 = vld [vmem:[%s1 + $0xfb0] sm:$0xff]
  %v609 = vld [vmem:[%s1 + $0xfb8] sm:$0xff]
  %v610 = vld [vmem:[%s1 + $0xfc0] sm:$0xff]
  %v611 = vld [vmem:[%s1 + $0xfc8] sm:$0xff]
  %v612 = vld [vmem:[%s1 + $0xfd0] sm:$0xff]
  %v613 = vld [vmem:[%s1 + $0xfd8] sm:$0xff]
  %v614 = vld [vmem:[%s1 + $0xfe0] sm:$0xff]
  %v615 = vld [vmem:[%s1 + $0xfe8] sm:$0xff]
  %v616 = vld [vmem:[%s1 + $0xff0] sm:$0xff]
  %v617 = vld [vmem:[%s1 + $0xff8] sm:$0xff]
  %v618 = vld [vmem:[%s1 + $0x1000] sm:$0xff]
  %v619 = vld [vmem:[%s1 + $0x1008] sm:$0xff]
  %v620 = vld [vmem:[%s1 + $0x1010] sm:$0xff]
  %v621 = vld [vmem:[%s1 + $0x1018] sm:$0xff]
  %v622 = vld [vmem:[%s1 + $0x1020] sm:$0xff]
  %v623 = vld [vmem:[%s1 + $0x1028] sm:$0xff]
  %v624 = vld [vmem:[%s1 + $0x1030] sm:$0xff]
  %v625 = vld [vmem:[%s1 + $0x1038] sm:$0xff]
  %v626 = vld [vmem:[%s1 + $0x1040] sm:$0xff]
  %v627 = vld [vmem:[%s1 + $0x1048] sm:$0xff]
  %v628 = vld [vmem:[%s1 + $0x1050] sm:$0xff]
  %v629 = vld [vmem:[%s1 + $0x1058] sm:$0xff]
  %v630 = vld [vmem:[%s1 + $0x1060] sm:$0xff]
  %v631 = vld [vmem:[%s1 + $0x1068] sm:$0xff]
  %v632 = vld [vmem:[%s1 + $0x1070] sm:$0xff]
  %v633 = vld [vmem:[%s1 + $0x1078] sm:$0xff]
  %v634 = vld [vmem:[%s1 + $0x1080] sm:$0xff]
  %v635 = vld [vmem:[%s1 + $0x1088] sm:$0xff]
  %v636 = vld [vmem:[%s1 + $0x1090] sm:$0xff]
  %v637 = vld [vmem:[%s1 + $0x1098] sm:$0xff]
  %v638 = vld [vmem:[%s1 + $0x10a0] sm:$0xff]
  %v639 = vld [vmem:[%s1 + $0x10a8] sm:$0xff]
  %v640 = vld [vmem:[%s1 + $0x10b0] sm:$0xff]
  %v641 = vld [vmem:[%s1 + $0x10b8] sm:$0xff]
  %v642 = vld [vmem:[%s1 + $0x10c0] sm:$0xff]
  %v643 = vld [vmem:[%s1 + $0x10c8] sm:$0xff]
  %v644 = vld [vmem:[%s1 + $0x10d0] sm:$0xff]
  %v645 = vld [vmem:[%s1 + $0x10d8] sm:$0xff]
  %v646 = vld [vmem:[%s1 + $0x10e0] sm:$0xff]
  %v647 = vld [vmem:[%s1 + $0x10e8] sm:$0xff]
  %v648 = vld [vmem:[%s1 + $0x10f0] sm:$0xff]
  %v649 = vld [vmem:[%s1 + $0x10f8] sm:$0xff]
  %v650 = vld [vmem:[%s1 + $0x1100] sm:$0xff]
  %v651 = vld [vmem:[%s1 + $0x1108] sm:$0xff]
  %v652 = vld [vmem:[%s1 + $0x1110] sm:$0xff]
  %v653 = vld [vmem:[%s1 + $0x1118] sm:$0xff]
  %v654 = vld [vmem:[%s1 + $0x1120] sm:$0xff]
  %v655 = vld [vmem:[%s1 + $0x1128] sm:$0xff]
  %v656 = vld [vmem:[%s1 + $0x1130] sm:$0xff]
  %v657 = vld [vmem:[%s1 + $0x1138] sm:$0xff]
  %v658 = vld [vmem:[%s1 + $0x1140] sm:$0xff]
  %v659 = vld [vmem:[%s1 + $0x1148] sm:$0xff]
  %v660 = vld [vmem:[%s1 + $0x1150] sm:$0xff]
  %v661 = vld [vmem:[%s1 + $0x1158] sm:$0xff]
  %v662 = vld [vmem:[%s1 + $0x1160] sm:$0xff]
  %v663 = vld [vmem:[%s1 + $0x1168] sm:$0xff]
  %v664 = vld [vmem:[%s1 + $0x1170] sm:$0xff]
  %v665 = vld [vmem:[%s1 + $0x1178] sm:$0xff]
  %v666 = vld [vmem:[%s1 + $0x1180] sm:$0xff]
  %v667 = vld [vmem:[%s1 + $0x1188] sm:$0xff]
  %v668 = vld [vmem:[%s1 + $0x1190] sm:$0xff]
  %v669 = vld [vmem:[%s1 + $0x1198] sm:$0xff]
  %v670 = vld [vmem:[%s1 + $0x11a0] sm:$0xff]
  %v671 = vld [vmem:[%s1 + $0x11a8] sm:$0xff]
  %v672 = vld [vmem:[%s1 + $0x11b0] sm:$0xff]
  %v673 = vld [vmem:[%s1 + $0x11b8] sm:$0xff]
  %v674 = vld [vmem:[%s1 + $0x11c0] sm:$0xff]
  %v675 = vld [vmem:[%s1 + $0x11c8] sm:$0xff]
  %v676 = vld [vmem:[%s1 + $0x11d0] sm:$0xff]
  %v677 = vld [vmem:[%s1 + $0x11d8] sm:$0xff]
  %v678 = vld [vmem:[%s1 + $0x11e0] sm:$0xff]
  %v679 = vld [vmem:[%s1 + $0x11e8] sm:$0xff]
  %v680 = vld [vmem:[%s1 + $0x11f0] sm:$0xff]
  %v681 = vld [vmem:[%s1 + $0x11f8] sm:$0xff]
  %v682 = vld [vmem:[%s1 + $0x1200] sm:$0xff]
  %v683 = vld [vmem:[%s1 + $0x1208] sm:$0xff]
  %v684 = vld [vmem:[%s1 + $0x1210] sm:$0xff]
  %v685 = vld [vmem:[%s1 + $0x1218] sm:$0xff]
  %v686 = vld [vmem:[%s1 + $0x1220] sm:$0xff]
  %v687 = vld [vmem:[%s1 + $0x1228] sm:$0xff]
  %v688 = vld [vmem:[%s1 + $0x1230] sm:$0xff]
  %v689 = vld [vmem:[%s1 + $0x1238] sm:$0xff]
  %v690 = vld [vmem:[%s1 + $0x1240] sm:$0xff]
  %v691 = vld [vmem:[%s1 + $0x1248] sm:$0xff]
  %v692 = vld [vmem:[%s1 + $0x1250] sm:$0xff]
  %v693 = vld [vmem:[%s1 + $0x1258] sm:$0xff]
  %v694 = vld [vmem:[%s1 + $0x1260] sm:$0xff]
  %v695 = vld [vmem:[%s1 + $0x1268] sm:$0xff]
  %v696 = vld [vmem:[%s1 + $0x1270] sm:$0xff]
  %v697 = vld [vmem:[%s1 + $0x1278] sm:$0xff]
  %v698 = vld [vmem:[%s1 + $0x1280] sm:$0xff]
  %v699 = vld [vmem:[%s1 + $0x1288] sm:$0xff]
  %v700 = vld [vmem:[%s1 + $0x1290] sm:$0xff]
  %v701 = vld [vmem:[%s1 + $0x1298] sm:$0xff]
  %v702 = vld [vmem:[%s1 + $0x12a0] sm:$0xff]
  %v703 = vld [vmem:[%s1 + $0x12a8] sm:$0xff]
  %v704 = vld [vmem:[%s1 + $0x12b0] sm:$0xff]
  %v705 = vld [vmem:[%s1 + $0x12b8] sm:$0xff]
  %v706 = vld [vmem:[%s1 + $0x12c0] sm:$0xff]
  %v707 = vld [vmem:[%s1 + $0x12c8] sm:$0xff]
  %v708 = vld [vmem:[%s1 + $0x12d0] sm:$0xff]
  %v709 = vld [vmem:[%s1 + $0x12d8] sm:$0xff]
  %v710 = vld [vmem:[%s1 + $0x12e0] sm:$0xff]
  %v711 = vld [vmem:[%s1 + $0x12e8] sm:$0xff]
  %v712 = vld [vmem:[%s1 + $0x12f0] sm:$0xff]
  %v713 = vld [vmem:[%s1 + $0x12f8] sm:$0xff]
  %v714 = vld [vmem:[%s1 + $0x1300] sm:$0xff]
  %v715 = vld [vmem:[%s1 + $0x1308] sm:$0xff]
  %v716 = vld [vmem:[%s1 + $0x1310] sm:$0xff]
  %v717 = vld [vmem:[%s1 + $0x1318] sm:$0xff]
  %v718 = vld [vmem:[%s1 + $0x1320] sm:$0xff]
  %v719 = vld [vmem:[%s1 + $0x1328] sm:$0xff]
  %v720 = vld [vmem:[%s1 + $0x1330] sm:$0xff]
  %v721 = vld [vmem:[%s1 + $0x1338] sm:$0xff]
  %v722 = vld [vmem:[%s1 + $0x1340] sm:$0xff]
  %v723 = vld [vmem:[%s1 + $0x1348] sm:$0xff]
  %v724 = vld [vmem:[%s1 + $0x1350] sm:$0xff]
  %v725 = vld [vmem:[%s1 + $0x1358] sm:$0xff]
  %v726 = vld [vmem:[%s1 + $0x1360] sm:$0xff]
  %v727 = vld [vmem:[%s1 + $0x1368] sm:$0xff]
  %v728 = vld [vmem:[%s1 + $0x1370] sm:$0xff]
  %v729 = vld [vmem:[%s1 + $0x1378] sm:$0xff]
  %v730 = vld [vmem:[%s1 + $0x1380] sm:$0xff]
  %v731 = vld [vmem:[%s1 + $0x1388] sm:$0xff]
  %v732 = vld [vmem:[%s1 + $0x1390] sm:$0xff]
  %v733 = vld [vmem:[%s1 + $0x1398] sm:$0xff]
  %v734 = vld [vmem:[%s1 + $0x13a0] sm:$0xff]
  %v735 = vld [vmem:[%s1 + $0x13a8] sm:$0xff]
  %v736 = vld [vmem:[%s1 + $0x13b0] sm:$0xff]
  %v737 = vld [vmem:[%s1 + $0x13b8] sm:$0xff]
  %v738 = vld [vmem:[%s1 + $0x13c0] sm:$0xff]
  %v739 = vld [vmem:[%s1 + $0x13c8] sm:$0xff]
  %v740 = vld [vmem:[%s1 + $0x13d0] sm:$0xff]
  %v741 = vld [vmem:[%s1 + $0x13d8] sm:$0xff]
  %v742 = vld [vmem:[%s1 + $0x13e0] sm:$0xff]
  %v743 = vld [vmem:[%s1 + $0x13e8] sm:$0xff]
  %v744 = vld [vmem:[%s1 + $0x13f0] sm:$0xff]
  %v745 = vld [vmem:[%s1 + $0x13f8] sm:$0xff]
  %v746 = vld [vmem:[%s1 + $0x1400] sm:$0xff]
  %v747 = vld [vmem:[%s1 + $0x1408] sm:$0xff]
  %v748 = vld [vmem:[%s1 + $0x1410] sm:$0xff]
  %v749 = vld [vmem:[%s1 + $0x1418] sm:$0xff]
  %v750 = vld [vmem:[%s1 + $0x1420] sm:$0xff]
  %v751 = vld [vmem:[%s1 + $0x1428] sm:$0xff]
  %v752 = vld [vmem:[%s1 + $0x1430] sm:$0xff]
  %v753 = vld [vmem:[%s1 + $0x1438] sm:$0xff]
  %v754 = vld [vmem:[%s1 + $0x1440] sm:$0xff]
  %v755 = vld [vmem:[%s1 + $0x1448] sm:$0xff]
  %v756 = vld [vmem:[%s1 + $0x1450] sm:$0xff]
  %v757 = vld [vmem:[%s1 + $0x1458] sm:$0xff]
  %v758 = vld [vmem:[%s1 + $0x1460] sm:$0xff]
  %v759 = vld [vmem:[%s1 + $0x1468] sm:$0xff]
  %v760 = vld [vmem:[%s1 + $0x1470] sm:$0xff]
  %v761 = vld [vmem:[%s1 + $0x1478] sm:$0xff]
  %v762 = vld [vmem:[%s1 + $0x1480] sm:$0xff]
  %v763 = vld [vmem:[%s1 + $0x1488] sm:$0xff]
  %v764 = vld [vmem:[%s1 + $0x1490] sm:$0xff]
  %v765 = vld [vmem:[%s1 + $0x1498] sm:$0xff]
  %v766 = vld [vmem:[%s1 + $0x14a0] sm:$0xff]
  %v767 = vld [vmem:[%s1 + $0x14a8] sm:$0xff]
  %v768 = vld [vmem:[%s1 + $0x14b0] sm:$0xff]
  %v769 = vld [vmem:[%s1 + $0x14b8] sm:$0xff]
  %v770 = vld [vmem:[%s1 + $0x14c0] sm:$0xff]
  %v771 = vld [vmem:[%s1 + $0x14c8] sm:$0xff]
  %v772 = vld [vmem:[%s1 + $0x14d0] sm:$0xff]
  %v773 = vld [vmem:[%s1 + $0x14d8] sm:$0xff]
  %v774 = vld [vmem:[%s1 + $0x14e0] sm:$0xff]
  %v775 = vld [vmem:[%s1 + $0x14e8] sm:$0xff]
  %v776 = vld [vmem:[%s1 + $0x14f0] sm:$0xff]
  %v777 = vld [vmem:[%s1 + $0x14f8] sm:$0xff]
  %v778 = vld [vmem:[%s1 + $0x1500] sm:$0xff]
  %v779 = vld [vmem:[%s1 + $0x1508] sm:$0xff]
  %v780 = vld [vmem:[%s1 + $0x1510] sm:$0xff]
  %v781 = vld [vmem:[%s1 + $0x1518] sm:$0xff]
  %v782 = vld [vmem:[%s1 + $0x1520] sm:$0xff]
  %v783 = vld [vmem:[%s1 + $0x1528] sm:$0xff]
  %v784 = vld [vmem:[%s1 + $0x1530] sm:$0xff]
  %v785 = vld [vmem:[%s1 + $0x1538] sm:$0xff]
  %v786 = vld [vmem:[%s1 + $0x1540] sm:$0xff]
  %v787 = vld [vmem:[%s1 + $0x1548] sm:$0xff]
  %v788 = vld [vmem:[%s1 + $0x1550] sm:$0xff]
  %v789 = vld [vmem:[%s1 + $0x1558] sm:$0xff]
  %v790 = vld [vmem:[%s1 + $0x1560] sm:$0xff]
  %v791 = vld [vmem:[%s1 + $0x1568] sm:$0xff]
  %v792 = vld [vmem:[%s1 + $0x1570] sm:$0xff]
  %v793 = vld [vmem:[%s1 + $0x1578] sm:$0xff]
  %v794 = vld [vmem:[%s1 + $0x1580] sm:$0xff]
  %v795 = vld [vmem:[%s1 + $0x1588] sm:$0xff]
  %v796 = vld [vmem:[%s1 + $0x1590] sm:$0xff]
  %v797 = vld [vmem:[%s1 + $0x1598] sm:$0xff]
  %v798 = vld [vmem:[%s1 + $0x15a0] sm:$0xff]
  %v799 = vld [vmem:[%s1 + $0x15a8] sm:$0xff]
  %v800 = vld [vmem:[%s1 + $0x15b0] sm:$0xff]
  %v801 = vld [vmem:[%s1 + $0x15b8] sm:$0xff]
  %v802 = vld [vmem:[%s1 + $0x15c0] sm:$0xff]
  %v803 = vld [vmem:[%s1 + $0x15c8] sm:$0xff]
  %v804 = vld [vmem:[%s1 + $0x15d0] sm:$0xff]
  %v805 = vld [vmem:[%s1 + $0x15d8] sm:$0xff]
  %v806 = vld [vmem:[%s1 + $0x15e0] sm:$0xff]
  %v807 = vld [vmem:[%s1 + $0x15e8] sm:$0xff]
  %v808 = vld [vmem:[%s1 + $0x15f0] sm:$0xff]
  %v809 = vld [vmem:[%s1 + $0x15f8] sm:$0xff]
  %v810 = vld [vmem:[%s1 + $0x1600] sm:$0xff]
  %v811 = vld [vmem:[%s1 + $0x1608] sm:$0xff]
  %v812 = vld [vmem:[%s1 + $0x1610] sm:$0xff]
  %v813 = vld [vmem:[%s1 + $0x1618] sm:$0xff]
  %v814 = vld [vmem:[%s1 + $0x1620] sm:$0xff]
  %v815 = vld [vmem:[%s1 + $0x1628] sm:$0xff]
  %v816 = vld [vmem:[%s1 + $0x1630] sm:$0xff]
  %v817 = vld [vmem:[%s1 + $0x1638] sm:$0xff]
  %v818 = vld [vmem:[%s1 + $0x1640] sm:$0xff]
  %v819 = vld [vmem:[%s1 + $0x1648] sm:$0xff]
  %v820 = vld [vmem:[%s1 + $0x1650] sm:$0xff]
  %v821 = vld [vmem:[%s1 + $0x1658] sm:$0xff]
  %v822 = vld [vmem:[%s1 + $0x1660] sm:$0xff]
  %v823 = vld [vmem:[%s1 + $0x1668] sm:$0xff]
  %v824 = vld [vmem:[%s1 + $0x1670] sm:$0xff]
  %v825 = vld [vmem:[%s1 + $0x1678] sm:$0xff]
  %v826 = vld [vmem:[%s1 + $0x1680] sm:$0xff]
  %v827 = vld [vmem:[%s1 + $0x1688] sm:$0xff]
  %v828 = vld [vmem:[%s1 + $0x1690] sm:$0xff]
  %v829 = vld [vmem:[%s1 + $0x1698] sm:$0xff]
  %v830 = vld [vmem:[%s1 + $0x16a0] sm:$0xff]
  %v831 = vld [vmem:[%s1 + $0x16a8] sm:$0xff]
  %v832 = vld [vmem:[%s1 + $0x16b0] sm:$0xff]
  %v833 = vld [vmem:[%s1 + $0x16b8] sm:$0xff]
  %v834 = vld [vmem:[%s1 + $0x16c0] sm:$0xff]
  %v835 = vld [vmem:[%s1 + $0x16c8] sm:$0xff]
  %v836 = vld [vmem:[%s1 + $0x16d0] sm:$0xff]
  %v837 = vld [vmem:[%s1 + $0x16d8] sm:$0xff]
  %v838 = vld [vmem:[%s1 + $0x16e0] sm:$0xff]
  %v839 = vld [vmem:[%s1 + $0x16e8] sm:$0xff]
  %v840 = vld [vmem:[%s1 + $0x16f0] sm:$0xff]
  %v841 = vld [vmem:[%s1 + $0x16f8] sm:$0xff]
  %v842 = vld [vmem:[%s1 + $0x1700] sm:$0xff]
  %v843 = vld [vmem:[%s1 + $0x1708] sm:$0xff]
  %v844 = vld [vmem:[%s1 + $0x1710] sm:$0xff]
  %v845 = vld [vmem:[%s1 + $0x1718] sm:$0xff]
  %v846 = vld [vmem:[%s1 + $0x1720] sm:$0xff]
  %v847 = vld [vmem:[%s1 + $0x1728] sm:$0xff]
  %v848 = vld [vmem:[%s1 + $0x1730] sm:$0xff]
  %v849 = vld [vmem:[%s1 + $0x1738] sm:$0xff]
  %v850 = vld [vmem:[%s1 + $0x1740] sm:$0xff]
  %v851 = vld [vmem:[%s1 + $0x1748] sm:$0xff]
  %v852 = vld [vmem:[%s1 + $0x1750] sm:$0xff]
  %v853 = vld [vmem:[%s1 + $0x1758] sm:$0xff]
  %v854 = vld [vmem:[%s1 + $0x1760] sm:$0xff]
  %v855 = vld [vmem:[%s1 + $0x1768] sm:$0xff]
  %v856 = vld [vmem:[%s1 + $0x1770] sm:$0xff]
  %v857 = vld [vmem:[%s1 + $0x1778] sm:$0xff]
  %v858 = vld [vmem:[%s1 + $0x1780] sm:$0xff]
  %v859 = vld [vmem:[%s1 + $0x1788] sm:$0xff]
  %v860 = vld [vmem:[%s1 + $0x1790] sm:$0xff]
  %v861 = vld [vmem:[%s1 + $0x1798] sm:$0xff]
  %v862 = vld [vmem:[%s1 + $0x17a0] sm:$0xff]
  %v863 = vld [vmem:[%s1 + $0x17a8] sm:$0xff]
  %v864 = vld [vmem:[%s1 + $0x17b0] sm:$0xff]
  %v865 = vld [vmem:[%s1 + $0x17b8] sm:$0xff]
  %v866 = vld [vmem:[%s1 + $0x17c0] sm:$0xff]
  %v867 = vld [vmem:[%s1 + $0x17c8] sm:$0xff]
  %v868 = vld [vmem:[%s1 + $0x17d0] sm:$0xff]
  %v869 = vld [vmem:[%s1 + $0x17d8] sm:$0xff]
  %v870 = vld [vmem:[%s1 + $0x17e0] sm:$0xff]
  %v871 = vld [vmem:[%s1 + $0x17e8] sm:$0xff]
  %v872 = vld [vmem:[%s1 + $0x17f0] sm:$0xff]
  %v873 = vld [vmem:[%s1 + $0x17f8] sm:$0xff]
  %v874 = vld [vmem:[%s1 + $0x1800] sm:$0xff]
  %v875 = vld [vmem:[%s1 + $0x1808] sm:$0xff]
  %v876 = vld [vmem:[%s1 + $0x1810] sm:$0xff]
  %v877 = vld [vmem:[%s1 + $0x1818] sm:$0xff]
  %v878 = vld [vmem:[%s1 + $0x1820] sm:$0xff]
  %v879 = vld [vmem:[%s1 + $0x1828] sm:$0xff]
  %v880 = vld [vmem:[%s1 + $0x1830] sm:$0xff]
  %v881 = vld [vmem:[%s1 + $0x1838] sm:$0xff]
  %v882 = vld [vmem:[%s1 + $0x1840] sm:$0xff]
  %v883 = vld [vmem:[%s1 + $0x1848] sm:$0xff]
  %v884 = vld [vmem:[%s1 + $0x1850] sm:$0xff]
  %v885 = vld [vmem:[%s1 + $0x1858] sm:$0xff]
  %v886 = vld [vmem:[%s1 + $0x1860] sm:$0xff]
  %v887 = vld [vmem:[%s1 + $0x1868] sm:$0xff]
  %v888 = vld [vmem:[%s1 + $0x1870] sm:$0xff]
  %v889 = vld [vmem:[%s1 + $0x1878] sm:$0xff]
  %v890 = vld [vmem:[%s1 + $0x1880] sm:$0xff]
  %v891 = vld [vmem:[%s1 + $0x1888] sm:$0xff]
  %v892 = vld [vmem:[%s1 + $0x1890] sm:$0xff]
  %v893 = vld [vmem:[%s1 + $0x1898] sm:$0xff]
  %v894 = vld [vmem:[%s1 + $0x18a0] sm:$0xff]
  %v895 = vld [vmem:[%s1 + $0x18a8] sm:$0xff]
  %v896 = vld [vmem:[%s1 + $0x18b0] sm:$0xff]
  %v897 = vld [vmem:[%s1 + $0x18b8] sm:$0xff]
  %v898 = vld [vmem:[%s1 + $0x18c0] sm:$0xff]
  %v899 = vld [vmem:[%s1 + $0x18c8] sm:$0xff]
  %v900 = vld [vmem:[%s1 + $0x18d0] sm:$0xff]
  %v901 = vld [vmem:[%s1 + $0x18d8] sm:$0xff]
  %v902 = vld [vmem:[%s1 + $0x18e0] sm:$0xff]
  %v903 = vld [vmem:[%s1 + $0x18e8] sm:$0xff]
  %v904 = vld [vmem:[%s1 + $0x18f0] sm:$0xff]
  %v905 = vld [vmem:[%s1 + $0x18f8] sm:$0xff]
  %v906 = vld [vmem:[%s2] sm:$0x3]
  %v908 = vlaneseq
  %v909 = vshrl.u32 %v908, 7
  %v910 = vsub.s32 0, %v909
  %v911 = vrot.slane %v906, %v910
  %v912 = vlaneseq
  %v913 = vshrl.u32 %v912, 7
  %v914 = vsub.s32 1, %v913
  %v915 = vrot.slane %v906, %v914
  %918 = vmatprep.subr.mxu0 %v107
  %919 = vmatpush1.msra.mxu0 %v106
  %920 = vmatprep.subr.mxu0 %v109
  %921 = vmatpush1.msra.mxu0 %v108
  %922 = vmatprep.subr.mxu0 %v111
  %923 = vmatpush1.msra.mxu0 %v110
  %924 = vmatprep.subr.mxu0 %v113
  %925 = vmatpush1.msra.mxu0 %v112
  %926 = vmatprep.subr.mxu0 %v115
  %927 = vmatpush1.msra.mxu0 %v114
  %928 = vmatprep.subr.mxu0 %v117
  %929 = vmatpush1.msra.mxu0 %v116
  %930 = vmatprep.subr.mxu0 %v119
  %931 = vmatpush1.msra.mxu0 %v118
  %932 = vmatprep.subr.mxu0 %v121
  %933 = vmatpush1.msra.mxu0 %v120
  %934 = vmatprep.subr.mxu0 %v123
  %935 = vmatpush1.msra.mxu0 %v122
  %936 = vmatprep.subr.mxu0 %v125
  %937 = vmatpush1.msra.mxu0 %v124
  %938 = vmatprep.subr.mxu0 %v127
  %939 = vmatpush1.msra.mxu0 %v126
  %940 = vmatprep.subr.mxu0 %v129
  %941 = vmatpush1.msra.mxu0 %v128
  %942 = vmatprep.subr.mxu0 %v131
  %943 = vmatpush1.msra.mxu0 %v130
  %944 = vmatprep.subr.mxu0 %v133
  %945 = vmatpush1.msra.mxu0 %v132
  %946 = vmatprep.subr.mxu0 %v135
  %947 = vmatpush1.msra.mxu0 %v134
  %948 = vmatprep.subr.mxu0 %v137
  %949 = vmatpush1.msra.mxu0 %v136
  %950 = vmatprep.subr.mxu0 %v139
  %951 = vmatpush1.msra.mxu0 %v138
  %952 = vmatprep.subr.mxu0 %v141
  %953 = vmatpush1.msra.mxu0 %v140
  %954 = vmatprep.subr.mxu0 %v143
  %955 = vmatpush1.msra.mxu0 %v142
  %956 = vmatprep.subr.mxu0 %v145
  %957 = vmatpush1.msra.mxu0 %v144
  %958 = vmatprep.subr.mxu0 %v147
  %959 = vmatpush1.msra.mxu0 %v146
  %960 = vmatprep.subr.mxu0 %v149
  %961 = vmatpush1.msra.mxu0 %v148
  %962 = vmatprep.subr.mxu0 %v151
  %963 = vmatpush1.msra.mxu0 %v150
  %964 = vmatprep.subr.mxu0 %v153
  %965 = vmatpush1.msra.mxu0 %v152
  %966 = vmatprep.subr.mxu0 %v155
  %967 = vmatpush1.msra.mxu0 %v154
  %968 = vmatprep.subr.mxu0 %v157
  %969 = vmatpush1.msra.mxu0 %v156
  %970 = vmatprep.subr.mxu0 %v159
  %971 = vmatpush1.msra.mxu0 %v158
  %972 = vmatprep.subr.mxu0 %v161
  %973 = vmatpush1.msra.mxu0 %v160
  %974 = vmatprep.subr.mxu0 %v163
  %975 = vmatpush1.msra.mxu0 %v162
  %976 = vmatprep.subr.mxu0 %v165
  %977 = vmatpush1.msra.mxu0 %v164
  %978 = vmatprep.subr.mxu0 %v167
  %979 = vmatpush1.msra.mxu0 %v166
  %980 = vmatprep.subr.mxu0 %v169
  %981 = vmatpush1.msra.mxu0 %v168
  %982 = vmatprep.mubr.f32.mxu0 %v32
  %983 = vmatmul.mubr.f32.gmra.mrb[0].mxu0 %v31
  %v984 = vpop.f32.mrb[0].mxu0
  %v985 = vadd.f32 %v911, %v984
  %v986 = vpop.f32.mrb[0].mxu0
  %v987 = vadd.f32 %v915, %v986
  %988 = vmatprep.mubr.f32.mxu0 %v57
  %989 = vmatmul.mubr.f32.gmra.mrb[0].mxu0 %v56
  %v990 = vpop.f32.mrb[0].mxu0
  %v991 = vadd.f32 %v911, %v990
  %v992 = vpop.f32.mrb[0].mxu0
  %v993 = vadd.f32 %v915, %v992
  %994 = vmatprep.mubr.f32.mxu0 %v82
  %995 = vmatmul.mubr.f32.gmra.mrb[0].mxu0 %v81
  %v996 = vpop.f32.mrb[0].mxu0
  %v997 = vadd.f32 %v911, %v996
  %v998 = vpop.f32.mrb[0].mxu0
  %v999 = vadd.f32 %v915, %v998
  %1000 = vdwg.mxu0
  %1001 = vmatprep.subr.mxu0 %v171
  %1002 = vmatpush1.msra.mxu0 %v170
  %1003 = vmatprep.subr.mxu0 %v173
  %1004 = vmatpush1.msra.mxu0 %v172
  %1005 = vmatprep.subr.mxu0 %v175
  %1006 = vmatpush1.msra.mxu0 %v174
  %1007 = vmatprep.subr.mxu0 %v177
  %1008 = vmatpush1.msra.mxu0 %v176
  %1009 = vmatprep.subr.mxu0 %v179
  %1010 = vmatpush1.msra.mxu0 %v178
  %1011 = vmatprep.subr.mxu0 %v181
  %1012 = vmatpush1.msra.mxu0 %v180
  %1013 = vmatprep.subr.mxu0 %v183
  %1014 = vmatpush1.msra.mxu0 %v182
  %1015 = vmatprep.subr.mxu0 %v185
  %1016 = vmatpush1.msra.mxu0 %v184
  %1017 = vmatprep.subr.mxu0 %v187
  %1018 = vmatpush1.msra.mxu0 %v186
  %1019 = vmatprep.subr.mxu0 %v189
  %1020 = vmatpush1.msra.mxu0 %v188
  %1021 = vmatprep.subr.mxu0 %v191
  %1022 = vmatpush1.msra.mxu0 %v190
  %1023 = vmatprep.subr.mxu0 %v193
  %1024 = vmatpush1.msra.mxu0 %v192
  %1025 = vmatprep.subr.mxu0 %v195
  %1026 = vmatpush1.msra.mxu0 %v194
  %1027 = vmatprep.subr.mxu0 %v197
  %1028 = vmatpush1.msra.mxu0 %v196
  %1029 = vmatprep.subr.mxu0 %v199
  %1030 = vmatpush1.msra.mxu0 %v198
  %1031 = vmatprep.subr.mxu0 %v201
  %1032 = vmatpush1.msra.mxu0 %v200
  %1033 = vmatprep.subr.mxu0 %v203
  %1034 = vmatpush1.msra.mxu0 %v202
  %1035 = vmatprep.subr.mxu0 %v205
  %1036 = vmatpush1.msra.mxu0 %v204
  %1037 = vmatprep.subr.mxu0 %v207
  %1038 = vmatpush1.msra.mxu0 %v206
  %1039 = vmatprep.subr.mxu0 %v209
  %1040 = vmatpush1.msra.mxu0 %v208
  %1041 = vmatprep.subr.mxu0 %v211
  %1042 = vmatpush1.msra.mxu0 %v210
  %1043 = vmatprep.subr.mxu0 %v213
  %1044 = vmatpush1.msra.mxu0 %v212
  %1045 = vmatprep.subr.mxu0 %v215
  %1046 = vmatpush1.msra.mxu0 %v214
  %1047 = vmatprep.subr.mxu0 %v217
  %1048 = vmatpush1.msra.mxu0 %v216
  %1049 = vmatprep.subr.mxu0 %v219
  %1050 = vmatpush1.msra.mxu0 %v218
  %1051 = vmatprep.subr.mxu0 %v221
  %1052 = vmatpush1.msra.mxu0 %v220
  %1053 = vmatprep.subr.mxu0 %v223
  %1054 = vmatpush1.msra.mxu0 %v222
  %1055 = vmatprep.subr.mxu0 %v225
  %1056 = vmatpush1.msra.mxu0 %v224
  %1057 = vmatprep.subr.mxu0 %v227
  %1058 = vmatpush1.msra.mxu0 %v226
  %1059 = vmatprep.subr.mxu0 %v229
  %1060 = vmatpush1.msra.mxu0 %v228
  %1061 = vmatprep.subr.mxu0 %v231
  %1062 = vmatpush1.msra.mxu0 %v230
  %1063 = vmatprep.subr.mxu0 %v233
  %1064 = vmatpush1.msra.mxu0 %v232
  %1065 = vmatprep.mubr.f32.mxu0 %v34
  %1066 = vmatmul.mubr.f32.gmra.mrb[0].mxu0 %v33
  %v1067 = vpop.f32.mrb[0].mxu0
  %v1068 = vadd.f32 %v985, %v1067
  %v1069 = vpop.f32.mrb[0].mxu0
  %v1070 = vadd.f32 %v987, %v1069
  %1071 = vmatprep.mubr.f32.mxu0 %v59
  %1072 = vmatmul.mubr.f32.gmra.mrb[0].mxu0 %v58
  %v1073 = vpop.f32.mrb[0].mxu0
  %v1074 = vadd.f32 %v991, %v1073
  %v1075 = vpop.f32.mrb[0].mxu0
  %v1076 = vadd.f32 %v993, %v1075
  %1077 = vmatprep.mubr.f32.mxu0 %v84
  %1078 = vmatmul.mubr.f32.gmra.mrb[0].mxu0 %v83
  %v1079 = vpop.f32.mrb[0].mxu0
  %v1080 = vadd.f32 %v997, %v1079
  %v1081 = vpop.f32.mrb[0].mxu0
  %v1082 = vadd.f32 %v999, %v1081
  %1083 = vdwg.mxu0
  %1084 = vmatprep.subr.mxu0 %v235
  %1085 = vmatpush1.msra.mxu0 %v234
  %1086 = vmatprep.subr.mxu0 %v237
  %1087 = vmatpush1.msra.mxu0 %v236
  %1088 = vmatprep.subr.mxu0 %v239
  %1089 = vmatpush1.msra.mxu0 %v238
  %1090 = vmatprep.subr.mxu0 %v241
  %1091 = vmatpush1.msra.mxu0 %v240
  %1092 = vmatprep.subr.mxu0 %v243
  %1093 = vmatpush1.msra.mxu0 %v242
  %1094 = vmatprep.subr.mxu0 %v245
  %1095 = vmatpush1.msra.mxu0 %v244
  %1096 = vmatprep.subr.mxu0 %v247
  %1097 = vmatpush1.msra.mxu0 %v246
  %1098 = vmatprep.subr.mxu0 %v249
  %1099 = vmatpush1.msra.mxu0 %v248
  %1100 = vmatprep.subr.mxu0 %v251
  %1101 = vmatpush1.msra.mxu0 %v250
  %1102 = vmatprep.subr.mxu0 %v253
  %1103 = vmatpush1.msra.mxu0 %v252
  %1104 = vmatprep.subr.mxu0 %v255
  %1105 = vmatpush1.msra.mxu0 %v254
  %1106 = vmatprep.subr.mxu0 %v257
  %1107 = vmatpush1.msra.mxu0 %v256
  %1108 = vmatprep.subr.mxu0 %v259
  %1109 = vmatpush1.msra.mxu0 %v258
  %1110 = vmatprep.subr.mxu0 %v261
  %1111 = vmatpush1.msra.mxu0 %v260
  %1112 = vmatprep.subr.mxu0 %v263
  %1113 = vmatpush1.msra.mxu0 %v262
  %1114 = vmatprep.subr.mxu0 %v265
  %1115 = vmatpush1.msra.mxu0 %v264
  %1116 = vmatprep.subr.mxu0 %v267
  %1117 = vmatpush1.msra.mxu0 %v266
  %1118 = vmatprep.subr.mxu0 %v269
  %1119 = vmatpush1.msra.mxu0 %v268
  %1120 = vmatprep.subr.mxu0 %v271
  %1121 = vmatpush1.msra.mxu0 %v270
  %1122 = vmatprep.subr.mxu0 %v273
  %1123 = vmatpush1.msra.mxu0 %v272
  %1124 = vmatprep.subr.mxu0 %v275
  %1125 = vmatpush1.msra.mxu0 %v274
  %1126 = vmatprep.subr.mxu0 %v277
  %1127 = vmatpush1.msra.mxu0 %v276
  %1128 = vmatprep.subr.mxu0 %v279
  %1129 = vmatpush1.msra.mxu0 %v278
  %1130 = vmatprep.subr.mxu0 %v281
  %1131 = vmatpush1.msra.mxu0 %v280
  %1132 = vmatprep.subr.mxu0 %v283
  %1133 = vmatpush1.msra.mxu0 %v282
  %1134 = vmatprep.subr.mxu0 %v285
  %1135 = vmatpush1.msra.mxu0 %v284
  %1136 = vmatprep.subr.mxu0 %v287
  %1137 = vmatpush1.msra.mxu0 %v286
  %1138 = vmatprep.subr.mxu0 %v289
  %1139 = vmatpush1.msra.mxu0 %v288
  %1140 = vmatprep.subr.mxu0 %v291
  %1141 = vmatpush1.msra.mxu0 %v290
  %1142 = vmatprep.subr.mxu0 %v293
  %1143 = vmatpush1.msra.mxu0 %v292
  %1144 = vmatprep.subr.mxu0 %v295
  %1145 = vmatpush1.msra.mxu0 %v294
  %1146 = vmatprep.subr.mxu0 %v297
  %1147 = vmatpush1.msra.mxu0 %v296
  %1148 = vmatprep.mubr.f32.mxu0 %v36
  %1149 = vmatmul.mubr.f32.gmra.mrb[0].mxu0 %v35
  %v1150 = vpop.f32.mrb[0].mxu0
  %v1151 = vadd.f32 %v1068, %v1150
  %v1152 = vpop.f32.mrb[0].mxu0
  %v1153 = vadd.f32 %v1070, %v1152
  %1154 = vmatprep.mubr.f32.mxu0 %v61
  %1155 = vmatmul.mubr.f32.gmra.mrb[0].mxu0 %v60
  %v1156 = vpop.f32.mrb[0].mxu0
  %v1157 = vadd.f32 %v1074, %v1156
  %v1158 = vpop.f32.mrb[0].mxu0
  %v1159 = vadd.f32 %v1076, %v1158
  %1160 = vmatprep.mubr.f32.mxu0 %v86
  %1161 = vmatmul.mubr.f32.gmra.mrb[0].mxu0 %v85
  %v1162 = vpop.f32.mrb[0].mxu0
  %v1163 = vadd.f32 %v1080, %v1162
  %v1164 = vpop.f32.mrb[0].mxu0
  %v1165 = vadd.f32 %v1082, %v1164
  %1166 = vdwg.mxu0
  %1167 = vmatprep.subr.mxu0 %v299
  %1168 = vmatpush1.msra.mxu0 %v298
  %1169 = vmatprep.subr.mxu0 %v301
  %1170 = vmatpush1.msra.mxu0 %v300
  %1171 = vmatprep.subr.mxu0 %v303
  %1172 = vmatpush1.msra.mxu0 %v302
  %1173 = vmatprep.subr.mxu0 %v305
  %1174 = vmatpush1.msra.mxu0 %v304
  %1175 = vmatprep.subr.mxu0 %v307
  %1176 = vmatpush1.msra.mxu0 %v306
  %1177 = vmatprep.subr.mxu0 %v309
  %1178 = vmatpush1.msra.mxu0 %v308
  %1179 = vmatprep.subr.mxu0 %v311
  %1180 = vmatpush1.msra.mxu0 %v310
  %1181 = vmatprep.subr.mxu0 %v313
  %1182 = vmatpush1.msra.mxu0 %v312
  %1183 = vmatprep.subr.mxu0 %v315
  %1184 = vmatpush1.msra.mxu0 %v314
  %1185 = vmatprep.subr.mxu0 %v317
  %1186 = vmatpush1.msra.mxu0 %v316
  %1187 = vmatprep.subr.mxu0 %v319
  %1188 = vmatpush1.msra.mxu0 %v318
  %1189 = vmatprep.subr.mxu0 %v321
  %1190 = vmatpush1.msra.mxu0 %v320
  %1191 = vmatprep.subr.mxu0 %v323
  %1192 = vmatpush1.msra.mxu0 %v322
  %1193 = vmatprep.subr.mxu0 %v325
  %1194 = vmatpush1.msra.mxu0 %v324
  %1195 = vmatprep.subr.mxu0 %v327
  %1196 = vmatpush1.msra.mxu0 %v326
  %1197 = vmatprep.subr.mxu0 %v329
  %1198 = vmatpush1.msra.mxu0 %v328
  %1199 = vmatprep.subr.mxu0 %v331
  %1200 = vmatpush1.msra.mxu0 %v330
  %1201 = vmatprep.subr.mxu0 %v333
  %1202 = vmatpush1.msra.mxu0 %v332
  %1203 = vmatprep.subr.mxu0 %v335
  %1204 = vmatpush1.msra.mxu0 %v334
  %1205 = vmatprep.subr.mxu0 %v337
  %1206 = vmatpush1.msra.mxu0 %v336
  %1207 = vmatprep.subr.mxu0 %v339
  %1208 = vmatpush1.msra.mxu0 %v338
  %1209 = vmatprep.subr.mxu0 %v341
  %1210 = vmatpush1.msra.mxu0 %v340
  %1211 = vmatprep.subr.mxu0 %v343
  %1212 = vmatpush1.msra.mxu0 %v342
  %1213 = vmatprep.subr.mxu0 %v345
  %1214 = vmatpush1.msra.mxu0 %v344
  %1215 = vmatprep.subr.mxu0 %v347
  %1216 = vmatpush1.msra.mxu0 %v346
  %1217 = vmatprep.subr.mxu0 %v349
  %1218 = vmatpush1.msra.mxu0 %v348
  %1219 = vmatprep.subr.mxu0 %v351
  %1220 = vmatpush1.msra.mxu0 %v350
  %1221 = vmatprep.subr.mxu0 %v353
  %1222 = vmatpush1.msra.mxu0 %v352
  %1223 = vmatprep.subr.mxu0 %v355
  %1224 = vmatpush1.msra.mxu0 %v354
  %1225 = vmatprep.subr.mxu0 %v357
  %1226 = vmatpush1.msra.mxu0 %v356
  %1227 = vmatprep.subr.mxu0 %v359
  %1228 = vmatpush1.msra.mxu0 %v358
  %1229 = vmatprep.subr.mxu0 %v361
  %1230 = vmatpush1.msra.mxu0 %v360
  %1231 = vmatprep.mubr.f32.mxu0 %v38
  %1232 = vmatmul.mubr.f32.gmra.mrb[0].mxu0 %v37
  %v1233 = vpop.f32.mrb[0].mxu0
  %v1234 = vadd.f32 %v1151, %v1233
  %v1235 = vpop.f32.mrb[0].mxu0
  %v1236 = vadd.f32 %v1153, %v1235
  %1237 = vmatprep.mubr.f32.mxu0 %v63
  %1238 = vmatmul.mubr.f32.gmra.mrb[0].mxu0 %v62
  %v1239 = vpop.f32.mrb[0].mxu0
  %v1240 = vadd.f32 %v1157, %v1239
  %v1241 = vpop.f32.mrb[0].mxu0
  %v1242 = vadd.f32 %v1159, %v1241
  %1243 = vmatprep.mubr.f32.mxu0 %v88
  %1244 = vmatmul.mubr.f32.gmra.mrb[0].mxu0 %v87
  %v1245 = vpop.f32.mrb[0].mxu0
  %v1246 = vadd.f32 %v1163, %v1245
  %v1247 = vpop.f32.mrb[0].mxu0
  %v1248 = vadd.f32 %v1165, %v1247
  %1249 = vdwg.mxu0
  %1250 = vmatprep.subr.mxu0 %v363
  %1251 = vmatpush1.msra.mxu0 %v362
  %1252 = vmatprep.subr.mxu0 %v365
  %1253 = vmatpush1.msra.mxu0 %v364
  %1254 = vmatprep.subr.mxu0 %v367
  %1255 = vmatpush1.msra.mxu0 %v366
  %1256 = vmatprep.subr.mxu0 %v369
  %1257 = vmatpush1.msra.mxu0 %v368
  %1258 = vmatprep.subr.mxu0 %v371
  %1259 = vmatpush1.msra.mxu0 %v370
  %1260 = vmatprep.subr.mxu0 %v373
  %1261 = vmatpush1.msra.mxu0 %v372
  %1262 = vmatprep.subr.mxu0 %v375
  %1263 = vmatpush1.msra.mxu0 %v374
  %1264 = vmatprep.subr.mxu0 %v377
  %1265 = vmatpush1.msra.mxu0 %v376
  %1266 = vmatprep.subr.mxu0 %v379
  %1267 = vmatpush1.msra.mxu0 %v378
  %1268 = vmatprep.subr.mxu0 %v381
  %1269 = vmatpush1.msra.mxu0 %v380
  %1270 = vmatprep.subr.mxu0 %v383
  %1271 = vmatpush1.msra.mxu0 %v382
  %1272 = vmatprep.subr.mxu0 %v385
  %1273 = vmatpush1.msra.mxu0 %v384
  %1274 = vmatprep.subr.mxu0 %v387
  %1275 = vmatpush1.msra.mxu0 %v386
  %1276 = vmatprep.subr.mxu0 %v389
  %1277 = vmatpush1.msra.mxu0 %v388
  %1278 = vmatprep.subr.mxu0 %v391
  %1279 = vmatpush1.msra.mxu0 %v390
  %1280 = vmatprep.subr.mxu0 %v393
  %1281 = vmatpush1.msra.mxu0 %v392
  %1282 = vmatprep.subr.mxu0 %v395
  %1283 = vmatpush1.msra.mxu0 %v394
  %1284 = vmatprep.subr.mxu0 %v397
  %1285 = vmatpush1.msra.mxu0 %v396
  %1286 = vmatprep.subr.mxu0 %v399
  %1287 = vmatpush1.msra.mxu0 %v398
  %1288 = vmatprep.subr.mxu0 %v401
  %1289 = vmatpush1.msra.mxu0 %v400
  %1290 = vmatprep.subr.mxu0 %v403
  %1291 = vmatpush1.msra.mxu0 %v402
  %1292 = vmatprep.subr.mxu0 %v405
  %1293 = vmatpush1.msra.mxu0 %v404
  %1294 = vmatprep.subr.mxu0 %v407
  %1295 = vmatpush1.msra.mxu0 %v406
  %1296 = vmatprep.subr.mxu0 %v409
  %1297 = vmatpush1.msra.mxu0 %v408
  %1298 = vmatprep.subr.mxu0 %v411
  %1299 = vmatpush1.msra.mxu0 %v410
  %1300 = vmatprep.subr.mxu0 %v413
  %1301 = vmatpush1.msra.mxu0 %v412
  %1302 = vmatprep.subr.mxu0 %v415
  %1303 = vmatpush1.msra.mxu0 %v414
  %1304 = vmatprep.subr.mxu0 %v417
  %1305 = vmatpush1.msra.mxu0 %v416
  %1306 = vmatprep.subr.mxu0 %v419
  %1307 = vmatpush1.msra.mxu0 %v418
  %1308 = vmatprep.subr.mxu0 %v421
  %1309 = vmatpush1.msra.mxu0 %v420
  %1310 = vmatprep.subr.mxu0 %v423
  %1311 = vmatpush1.msra.mxu0 %v422
  %1312 = vmatprep.subr.mxu0 %v425
  %1313 = vmatpush1.msra.mxu0 %v424
  %1314 = vmatprep.mubr.f32.mxu0 %v40
  %1315 = vmatmul.mubr.f32.gmra.mrb[0].mxu0 %v39
  %v1316 = vpop.f32.mrb[0].mxu0
  %v1317 = vadd.f32 %v1234, %v1316
  %v1318 = vpop.f32.mrb[0].mxu0
  %v1319 = vadd.f32 %v1236, %v1318
  %1320 = vmatprep.mubr.f32.mxu0 %v65
  %1321 = vmatmul.mubr.f32.gmra.mrb[0].mxu0 %v64
  %v1322 = vpop.f32.mrb[0].mxu0
  %v1323 = vadd.f32 %v1240, %v1322
  %v1324 = vpop.f32.mrb[0].mxu0
  %v1325 = vadd.f32 %v1242, %v1324
  %1326 = vmatprep.mubr.f32.mxu0 %v90
  %1327 = vmatmul.mubr.f32.gmra.mrb[0].mxu0 %v89
  %v1328 = vpop.f32.mrb[0].mxu0
  %v1329 = vadd.f32 %v1246, %v1328
  %v1330 = vpop.f32.mrb[0].mxu0
  %v1331 = vadd.f32 %v1248, %v1330
  %1332 = vdwg.mxu0
  %1333 = vmatprep.subr.mxu0 %v427
  %1334 = vmatpush1.msra.mxu0 %v426
  %1335 = vmatprep.subr.mxu0 %v429
  %1336 = vmatpush1.msra.mxu0 %v428
  %1337 = vmatprep.subr.mxu0 %v431
  %1338 = vmatpush1.msra.mxu0 %v430
  %1339 = vmatprep.subr.mxu0 %v433
  %1340 = vmatpush1.msra.mxu0 %v432
  %1341 = vmatprep.subr.mxu0 %v435
  %1342 = vmatpush1.msra.mxu0 %v434
  %1343 = vmatprep.subr.mxu0 %v437
  %1344 = vmatpush1.msra.mxu0 %v436
  %1345 = vmatprep.subr.mxu0 %v439
  %1346 = vmatpush1.msra.mxu0 %v438
  %1347 = vmatprep.subr.mxu0 %v441
  %1348 = vmatpush1.msra.mxu0 %v440
  %1349 = vmatprep.subr.mxu0 %v443
  %1350 = vmatpush1.msra.mxu0 %v442
  %1351 = vmatprep.subr.mxu0 %v445
  %1352 = vmatpush1.msra.mxu0 %v444
  %1353 = vmatprep.subr.mxu0 %v447
  %1354 = vmatpush1.msra.mxu0 %v446
  %1355 = vmatprep.subr.mxu0 %v449
  %1356 = vmatpush1.msra.mxu0 %v448
  %1357 = vmatprep.subr.mxu0 %v451
  %1358 = vmatpush1.msra.mxu0 %v450
  %1359 = vmatprep.subr.mxu0 %v453
  %1360 = vmatpush1.msra.mxu0 %v452
  %1361 = vmatprep.subr.mxu0 %v455
  %1362 = vmatpush1.msra.mxu0 %v454
  %1363 = vmatprep.subr.mxu0 %v457
  %1364 = vmatpush1.msra.mxu0 %v456
  %1365 = vmatprep.subr.mxu0 %v459
  %1366 = vmatpush1.msra.mxu0 %v458
  %1367 = vmatprep.subr.mxu0 %v461
  %1368 = vmatpush1.msra.mxu0 %v460
  %1369 = vmatprep.subr.mxu0 %v463
  %1370 = vmatpush1.msra.mxu0 %v462
  %1371 = vmatprep.subr.mxu0 %v465
  %1372 = vmatpush1.msra.mxu0 %v464
  %1373 = vmatprep.subr.mxu0 %v467
  %1374 = vmatpush1.msra.mxu0 %v466
  %1375 = vmatprep.subr.mxu0 %v469
  %1376 = vmatpush1.msra.mxu0 %v468
  %1377 = vmatprep.subr.mxu0 %v471
  %1378 = vmatpush1.msra.mxu0 %v470
  %1379 = vmatprep.subr.mxu0 %v473
  %1380 = vmatpush1.msra.mxu0 %v472
  %1381 = vmatprep.subr.mxu0 %v475
  %1382 = vmatpush1.msra.mxu0 %v474
  %1383 = vmatprep.subr.mxu0 %v477
  %1384 = vmatpush1.msra.mxu0 %v476
  %1385 = vmatprep.subr.mxu0 %v479
  %1386 = vmatpush1.msra.mxu0 %v478
  %1387 = vmatprep.subr.mxu0 %v481
  %1388 = vmatpush1.msra.mxu0 %v480
  %1389 = vmatprep.subr.mxu0 %v483
  %1390 = vmatpush1.msra.mxu0 %v482
  %1391 = vmatprep.subr.mxu0 %v485
  %1392 = vmatpush1.msra.mxu0 %v484
  %1393 = vmatprep.subr.mxu0 %v487
  %1394 = vmatpush1.msra.mxu0 %v486
  %1395 = vmatprep.subr.mxu0 %v489
  %1396 = vmatpush1.msra.mxu0 %v488
  %1397 = vmatprep.mubr.f32.mxu0 %v42
  %1398 = vmatmul.mubr.f32.gmra.mrb[0].mxu0 %v41
  %v1399 = vpop.f32.mrb[0].mxu0
  %v1400 = vadd.f32 %v1317, %v1399
  %v1401 = vpop.f32.mrb[0].mxu0
  %v1402 = vadd.f32 %v1319, %v1401
  %1403 = vmatprep.mubr.f32.mxu0 %v67
  %1404 = vmatmul.mubr.f32.gmra.mrb[0].mxu0 %v66
  %v1405 = vpop.f32.mrb[0].mxu0
  %v1406 = vadd.f32 %v1323, %v1405
  %v1407 = vpop.f32.mrb[0].mxu0
  %v1408 = vadd.f32 %v1325, %v1407
  %1409 = vmatprep.mubr.f32.mxu0 %v92
  %1410 = vmatmul.mubr.f32.gmra.mrb[0].mxu0 %v91
  %v1411 = vpop.f32.mrb[0].mxu0
  %v1412 = vadd.f32 %v1329, %v1411
  %v1413 = vpop.f32.mrb[0].mxu0
  %v1414 = vadd.f32 %v1331, %v1413
  %1415 = vdwg.mxu0
  %1416 = vmatprep.subr.mxu0 %v491
  %1417 = vmatpush1.msra.mxu0 %v490
  %1418 = vmatprep.subr.mxu0 %v493
  %1419 = vmatpush1.msra.mxu0 %v492
  %1420 = vmatprep.subr.mxu0 %v495
  %1421 = vmatpush1.msra.mxu0 %v494
  %1422 = vmatprep.subr.mxu0 %v497
  %1423 = vmatpush1.msra.mxu0 %v496
  %1424 = vmatprep.subr.mxu0 %v499
  %1425 = vmatpush1.msra.mxu0 %v498
  %1426 = vmatprep.subr.mxu0 %v501
  %1427 = vmatpush1.msra.mxu0 %v500
  %1428 = vmatprep.subr.mxu0 %v503
  %1429 = vmatpush1.msra.mxu0 %v502
  %1430 = vmatprep.subr.mxu0 %v505
  %1431 = vmatpush1.msra.mxu0 %v504
  %1432 = vmatprep.subr.mxu0 %v507
  %1433 = vmatpush1.msra.mxu0 %v506
  %1434 = vmatprep.subr.mxu0 %v509
  %1435 = vmatpush1.msra.mxu0 %v508
  %1436 = vmatprep.subr.mxu0 %v511
  %1437 = vmatpush1.msra.mxu0 %v510
  %1438 = vmatprep.subr.mxu0 %v513
  %1439 = vmatpush1.msra.mxu0 %v512
  %1440 = vmatprep.subr.mxu0 %v515
  %1441 = vmatpush1.msra.mxu0 %v514
  %1442 = vmatprep.subr.mxu0 %v517
  %1443 = vmatpush1.msra.mxu0 %v516
  %1444 = vmatprep.subr.mxu0 %v519
  %1445 = vmatpush1.msra.mxu0 %v518
  %1446 = vmatprep.subr.mxu0 %v521
  %1447 = vmatpush1.msra.mxu0 %v520
  %1448 = vmatprep.subr.mxu0 %v523
  %1449 = vmatpush1.msra.mxu0 %v522
  %1450 = vmatprep.subr.mxu0 %v525
  %1451 = vmatpush1.msra.mxu0 %v524
  %1452 = vmatprep.subr.mxu0 %v527
  %1453 = vmatpush1.msra.mxu0 %v526
  %1454 = vmatprep.subr.mxu0 %v529
  %1455 = vmatpush1.msra.mxu0 %v528
  %1456 = vmatprep.subr.mxu0 %v531
  %1457 = vmatpush1.msra.mxu0 %v530
  %1458 = vmatprep.subr.mxu0 %v533
  %1459 = vmatpush1.msra.mxu0 %v532
  %1460 = vmatprep.subr.mxu0 %v535
  %1461 = vmatpush1.msra.mxu0 %v534
  %1462 = vmatprep.subr.mxu0 %v537
  %1463 = vmatpush1.msra.mxu0 %v536
  %1464 = vmatprep.subr.mxu0 %v539
  %1465 = vmatpush1.msra.mxu0 %v538
  %1466 = vmatprep.subr.mxu0 %v541
  %1467 = vmatpush1.msra.mxu0 %v540
  %1468 = vmatprep.subr.mxu0 %v543
  %1469 = vmatpush1.msra.mxu0 %v542
  %1470 = vmatprep.subr.mxu0 %v545
  %1471 = vmatpush1.msra.mxu0 %v544
  %1472 = vmatprep.subr.mxu0 %v547
  %1473 = vmatpush1.msra.mxu0 %v546
  %1474 = vmatprep.subr.mxu0 %v549
  %1475 = vmatpush1.msra.mxu0 %v548
  %1476 = vmatprep.subr.mxu0 %v551
  %1477 = vmatpush1.msra.mxu0 %v550
  %1478 = vmatprep.subr.mxu0 %v553
  %1479 = vmatpush1.msra.mxu0 %v552
  %1480 = vmatprep.mubr.f32.mxu0 %v44
  %1481 = vmatmul.mubr.f32.gmra.mrb[0].mxu0 %v43
  %v1482 = vpop.f32.mrb[0].mxu0
  %v1483 = vadd.f32 %v1400, %v1482
  %v1484 = vpop.f32.mrb[0].mxu0
  %v1485 = vadd.f32 %v1402, %v1484
  %1486 = vmatprep.mubr.f32.mxu0 %v69
  %1487 = vmatmul.mubr.f32.gmra.mrb[0].mxu0 %v68
  %v1488 = vpop.f32.mrb[0].mxu0
  %v1489 = vadd.f32 %v1406, %v1488
  %v1490 = vpop.f32.mrb[0].mxu0
  %v1491 = vadd.f32 %v1408, %v1490
  %1492 = vmatprep.mubr.f32.mxu0 %v94
  %1493 = vmatmul.mubr.f32.gmra.mrb[0].mxu0 %v93
  %v1494 = vpop.f32.mrb[0].mxu0
  %v1495 = vadd.f32 %v1412, %v1494
  %v1496 = vpop.f32.mrb[0].mxu0
  %v1497 = vadd.f32 %v1414, %v1496
  %1498 = vdwg.mxu0
  %1499 = vmatprep.subr.mxu0 %v555
  %1500 = vmatpush1.msra.mxu0 %v554
  %1501 = vmatprep.subr.mxu0 %v557
  %1502 = vmatpush1.msra.mxu0 %v556
  %1503 = vmatprep.subr.mxu0 %v559
  %1504 = vmatpush1.msra.mxu0 %v558
  %1505 = vmatprep.subr.mxu0 %v561
  %1506 = vmatpush1.msra.mxu0 %v560
  %1507 = vmatprep.subr.mxu0 %v563
  %1508 = vmatpush1.msra.mxu0 %v562
  %1509 = vmatprep.subr.mxu0 %v565
  %1510 = vmatpush1.msra.mxu0 %v564
  %1511 = vmatprep.subr.mxu0 %v567
  %1512 = vmatpush1.msra.mxu0 %v566
  %1513 = vmatprep.subr.mxu0 %v569
  %1514 = vmatpush1.msra.mxu0 %v568
  %1515 = vmatprep.subr.mxu0 %v571
  %1516 = vmatpush1.msra.mxu0 %v570
  %1517 = vmatprep.subr.mxu0 %v573
  %1518 = vmatpush1.msra.mxu0 %v572
  %1519 = vmatprep.subr.mxu0 %v575
  %1520 = vmatpush1.msra.mxu0 %v574
  %1521 = vmatprep.subr.mxu0 %v577
  %1522 = vmatpush1.msra.mxu0 %v576
  %1523 = vmatprep.subr.mxu0 %v579
  %1524 = vmatpush1.msra.mxu0 %v578
  %1525 = vmatprep.subr.mxu0 %v581
  %1526 = vmatpush1.msra.mxu0 %v580
  %1527 = vmatprep.subr.mxu0 %v583
  %1528 = vmatpush1.msra.mxu0 %v582
  %1529 = vmatprep.subr.mxu0 %v585
  %1530 = vmatpush1.msra.mxu0 %v584
  %1531 = vmatprep.subr.mxu0 %v587
  %1532 = vmatpush1.msra.mxu0 %v586
  %1533 = vmatprep.subr.mxu0 %v589
  %1534 = vmatpush1.msra.mxu0 %v588
  %1535 = vmatprep.subr.mxu0 %v591
  %1536 = vmatpush1.msra.mxu0 %v590
  %1537 = vmatprep.subr.mxu0 %v593
  %1538 = vmatpush1.msra.mxu0 %v592
  %1539 = vmatprep.subr.mxu0 %v595
  %1540 = vmatpush1.msra.mxu0 %v594
  %1541 = vmatprep.subr.mxu0 %v597
  %1542 = vmatpush1.msra.mxu0 %v596
  %1543 = vmatprep.subr.mxu0 %v599
  %1544 = vmatpush1.msra.mxu0 %v598
  %1545 = vmatprep.subr.mxu0 %v601
  %1546 = vmatpush1.msra.mxu0 %v600
  %1547 = vmatprep.subr.mxu0 %v603
  %1548 = vmatpush1.msra.mxu0 %v602
  %1549 = vmatprep.subr.mxu0 %v605
  %1550 = vmatpush1.msra.mxu0 %v604
  %1551 = vmatprep.subr.mxu0 %v607
  %1552 = vmatpush1.msra.mxu0 %v606
  %1553 = vmatprep.subr.mxu0 %v609
  %1554 = vmatpush1.msra.mxu0 %v608
  %1555 = vmatprep.subr.mxu0 %v611
  %1556 = vmatpush1.msra.mxu0 %v610
  %1557 = vmatprep.subr.mxu0 %v613
  %1558 = vmatpush1.msra.mxu0 %v612
  %1559 = vmatprep.subr.mxu0 %v615
  %1560 = vmatpush1.msra.mxu0 %v614
  %1561 = vmatprep.subr.mxu0 %v617
  %1562 = vmatpush1.msra.mxu0 %v616
  %1563 = vmatprep.mubr.f32.mxu0 %v46
  %1564 = vmatmul.mubr.f32.gmra.mrb[0].mxu0 %v45
  %v1565 = vpop.f32.mrb[0].mxu0
  %v1566 = vadd.f32 %v1483, %v1565
  %v1567 = vpop.f32.mrb[0].mxu0
  %v1568 = vadd.f32 %v1485, %v1567
  %1569 = vmatprep.mubr.f32.mxu0 %v71
  %1570 = vmatmul.mubr.f32.gmra.mrb[0].mxu0 %v70
  %v1571 = vpop.f32.mrb[0].mxu0
  %v1572 = vadd.f32 %v1489, %v1571
  %v1573 = vpop.f32.mrb[0].mxu0
  %v1574 = vadd.f32 %v1491, %v1573
  %1575 = vmatprep.mubr.f32.mxu0 %v96
  %1576 = vmatmul.mubr.f32.gmra.mrb[0].mxu0 %v95
  %v1577 = vpop.f32.mrb[0].mxu0
  %v1578 = vadd.f32 %v1495, %v1577
  %v1579 = vpop.f32.mrb[0].mxu0
  %v1580 = vadd.f32 %v1497, %v1579
  %1581 = vdwg.mxu0
  %1582 = vmatprep.subr.mxu0 %v619
  %1583 = vmatpush1.msra.mxu0 %v618
  %1584 = vmatprep.subr.mxu0 %v621
  %1585 = vmatpush1.msra.mxu0 %v620
  %1586 = vmatprep.subr.mxu0 %v623
  %1587 = vmatpush1.msra.mxu0 %v622
  %1588 = vmatprep.subr.mxu0 %v625
  %1589 = vmatpush1.msra.mxu0 %v624
  %1590 = vmatprep.subr.mxu0 %v627
  %1591 = vmatpush1.msra.mxu0 %v626
  %1592 = vmatprep.subr.mxu0 %v629
  %1593 = vmatpush1.msra.mxu0 %v628
  %1594 = vmatprep.subr.mxu0 %v631
  %1595 = vmatpush1.msra.mxu0 %v630
  %1596 = vmatprep.subr.mxu0 %v633
  %1597 = vmatpush1.msra.mxu0 %v632
  %1598 = vmatprep.subr.mxu0 %v635
  %1599 = vmatpush1.msra.mxu0 %v634
  %1600 = vmatprep.subr.mxu0 %v637
  %1601 = vmatpush1.msra.mxu0 %v636
  %1602 = vmatprep.subr.mxu0 %v639
  %1603 = vmatpush1.msra.mxu0 %v638
  %1604 = vmatprep.subr.mxu0 %v641
  %1605 = vmatpush1.msra.mxu0 %v640
  %1606 = vmatprep.subr.mxu0 %v643
  %1607 = vmatpush1.msra.mxu0 %v642
  %1608 = vmatprep.subr.mxu0 %v645
  %1609 = vmatpush1.msra.mxu0 %v644
  %1610 = vmatprep.subr.mxu0 %v647
  %1611 = vmatpush1.msra.mxu0 %v646
  %1612 = vmatprep.subr.mxu0 %v649
  %1613 = vmatpush1.msra.mxu0 %v648
  %1614 = vmatprep.subr.mxu0 %v651
  %1615 = vmatpush1.msra.mxu0 %v650
  %1616 = vmatprep.subr.mxu0 %v653
  %1617 = vmatpush1.msra.mxu0 %v652
  %1618 = vmatprep.subr.mxu0 %v655
  %1619 = vmatpush1.msra.mxu0 %v654
  %1620 = vmatprep.subr.mxu0 %v657
  %1621 = vmatpush1.msra.mxu0 %v656
  %1622 = vmatprep.subr.mxu0 %v659
  %1623 = vmatpush1.msra.mxu0 %v658
  %1624 = vmatprep.subr.mxu0 %v661
  %1625 = vmatpush1.msra.mxu0 %v660
  %1626 = vmatprep.subr.mxu0 %v663
  %1627 = vmatpush1.msra.mxu0 %v662
  %1628 = vmatprep.subr.mxu0 %v665
  %1629 = vmatpush1.msra.mxu0 %v664
  %1630 = vmatprep.subr.mxu0 %v667
  %1631 = vmatpush1.msra.mxu0 %v666
  %1632 = vmatprep.subr.mxu0 %v669
  %1633 = vmatpush1.msra.mxu0 %v668
  %1634 = vmatprep.subr.mxu0 %v671
  %1635 = vmatpush1.msra.mxu0 %v670
  %1636 = vmatprep.subr.mxu0 %v673
  %1637 = vmatpush1.msra.mxu0 %v672
  %1638 = vmatprep.subr.mxu0 %v675
  %1639 = vmatpush1.msra.mxu0 %v674
  %1640 = vmatprep.subr.mxu0 %v677
  %1641 = vmatpush1.msra.mxu0 %v676
  %1642 = vmatprep.subr.mxu0 %v679
  %1643 = vmatpush1.msra.mxu0 %v678
  %1644 = vmatprep.subr.mxu0 %v681
  %1645 = vmatpush1.msra.mxu0 %v680
  %1646 = vmatprep.mubr.f32.mxu0 %v48
  %1647 = vmatmul.mubr.f32.gmra.mrb[0].mxu0 %v47
  %v1648 = vpop.f32.mrb[0].mxu0
  %v1649 = vadd.f32 %v1566, %v1648
  %v1650 = vpop.f32.mrb[0].mxu0
  %v1651 = vadd.f32 %v1568, %v1650
  %1652 = vmatprep.mubr.f32.mxu0 %v73
  %1653 = vmatmul.mubr.f32.gmra.mrb[0].mxu0 %v72
  %v1654 = vpop.f32.mrb[0].mxu0
  %v1655 = vadd.f32 %v1572, %v1654
  %v1656 = vpop.f32.mrb[0].mxu0
  %v1657 = vadd.f32 %v1574, %v1656
  %1658 = vmatprep.mubr.f32.mxu0 %v98
  %1659 = vmatmul.mubr.f32.gmra.mrb[0].mxu0 %v97
  %v1660 = vpop.f32.mrb[0].mxu0
  %v1661 = vadd.f32 %v1578, %v1660
  %v1662 = vpop.f32.mrb[0].mxu0
  %v1663 = vadd.f32 %v1580, %v1662
  %1664 = vdwg.mxu0
  %1665 = vmatprep.subr.mxu0 %v683
  %1666 = vmatpush1.msra.mxu0 %v682
  %1667 = vmatprep.subr.mxu0 %v685
  %1668 = vmatpush1.msra.mxu0 %v684
  %1669 = vmatprep.subr.mxu0 %v687
  %1670 = vmatpush1.msra.mxu0 %v686
  %1671 = vmatprep.subr.mxu0 %v689
  %1672 = vmatpush1.msra.mxu0 %v688
  %1673 = vmatprep.subr.mxu0 %v691
  %1674 = vmatpush1.msra.mxu0 %v690
  %1675 = vmatprep.subr.mxu0 %v693
  %1676 = vmatpush1.msra.mxu0 %v692
  %1677 = vmatprep.subr.mxu0 %v695
  %1678 = vmatpush1.msra.mxu0 %v694
  %1679 = vmatprep.subr.mxu0 %v697
  %1680 = vmatpush1.msra.mxu0 %v696
  %1681 = vmatprep.subr.mxu0 %v699
  %1682 = vmatpush1.msra.mxu0 %v698
  %1683 = vmatprep.subr.mxu0 %v701
  %1684 = vmatpush1.msra.mxu0 %v700
  %1685 = vmatprep.subr.mxu0 %v703
  %1686 = vmatpush1.msra.mxu0 %v702
  %1687 = vmatprep.subr.mxu0 %v705
  %1688 = vmatpush1.msra.mxu0 %v704
  %1689 = vmatprep.subr.mxu0 %v707
  %1690 = vmatpush1.msra.mxu0 %v706
  %1691 = vmatprep.subr.mxu0 %v709
  %1692 = vmatpush1.msra.mxu0 %v708
  %1693 = vmatprep.subr.mxu0 %v711
  %1694 = vmatpush1.msra.mxu0 %v710
  %1695 = vmatprep.subr.mxu0 %v713
  %1696 = vmatpush1.msra.mxu0 %v712
  %1697 = vmatprep.subr.mxu0 %v715
  %1698 = vmatpush1.msra.mxu0 %v714
  %1699 = vmatprep.subr.mxu0 %v717
  %1700 = vmatpush1.msra.mxu0 %v716
  %1701 = vmatprep.subr.mxu0 %v719
  %1702 = vmatpush1.msra.mxu0 %v718
  %1703 = vmatprep.subr.mxu0 %v721
  %1704 = vmatpush1.msra.mxu0 %v720
  %1705 = vmatprep.subr.mxu0 %v723
  %1706 = vmatpush1.msra.mxu0 %v722
  %1707 = vmatprep.subr.mxu0 %v725
  %1708 = vmatpush1.msra.mxu0 %v724
  %1709 = vmatprep.subr.mxu0 %v727
  %1710 = vmatpush1.msra.mxu0 %v726
  %1711 = vmatprep.subr.mxu0 %v729
  %1712 = vmatpush1.msra.mxu0 %v728
  %1713 = vmatprep.subr.mxu0 %v731
  %1714 = vmatpush1.msra.mxu0 %v730
  %1715 = vmatprep.subr.mxu0 %v733
  %1716 = vmatpush1.msra.mxu0 %v732
  %1717 = vmatprep.subr.mxu0 %v735
  %1718 = vmatpush1.msra.mxu0 %v734
  %1719 = vmatprep.subr.mxu0 %v737
  %1720 = vmatpush1.msra.mxu0 %v736
  %1721 = vmatprep.subr.mxu0 %v739
  %1722 = vmatpush1.msra.mxu0 %v738
  %1723 = vmatprep.subr.mxu0 %v741
  %1724 = vmatpush1.msra.mxu0 %v740
  %1725 = vmatprep.subr.mxu0 %v743
  %1726 = vmatpush1.msra.mxu0 %v742
  %1727 = vmatprep.subr.mxu0 %v745
  %1728 = vmatpush1.msra.mxu0 %v744
  %1729 = vmatprep.mubr.f32.mxu0 %v50
  %1730 = vmatmul.mubr.f32.gmra.mrb[0].mxu0 %v49
  %v1731 = vpop.f32.mrb[0].mxu0
  %v1732 = vadd.f32 %v1649, %v1731
  %v1733 = vpop.f32.mrb[0].mxu0
  %v1734 = vadd.f32 %v1651, %v1733
  %1735 = vmatprep.mubr.f32.mxu0 %v75
  %1736 = vmatmul.mubr.f32.gmra.mrb[0].mxu0 %v74
  %v1737 = vpop.f32.mrb[0].mxu0
  %v1738 = vadd.f32 %v1655, %v1737
  %v1739 = vpop.f32.mrb[0].mxu0
  %v1740 = vadd.f32 %v1657, %v1739
  %1741 = vmatprep.mubr.f32.mxu0 %v100
  %1742 = vmatmul.mubr.f32.gmra.mrb[0].mxu0 %v99
  %v1743 = vpop.f32.mrb[0].mxu0
  %v1744 = vadd.f32 %v1661, %v1743
  %v1745 = vpop.f32.mrb[0].mxu0
  %v1746 = vadd.f32 %v1663, %v1745
  %1747 = vdwg.mxu0
  %1748 = vmatprep.subr.mxu0 %v747
  %1749 = vmatpush1.msra.mxu0 %v746
  %1750 = vmatprep.subr.mxu0 %v749
  %1751 = vmatpush1.msra.mxu0 %v748
  %1752 = vmatprep.subr.mxu0 %v751
  %1753 = vmatpush1.msra.mxu0 %v750
  %1754 = vmatprep.subr.mxu0 %v753
  %1755 = vmatpush1.msra.mxu0 %v752
  %1756 = vmatprep.subr.mxu0 %v755
  %1757 = vmatpush1.msra.mxu0 %v754
  %1758 = vmatprep.subr.mxu0 %v757
  %1759 = vmatpush1.msra.mxu0 %v756
  %1760 = vmatprep.subr.mxu0 %v759
  %1761 = vmatpush1.msra.mxu0 %v758
  %1762 = vmatprep.subr.mxu0 %v761
  %1763 = vmatpush1.msra.mxu0 %v760
  %1764 = vmatprep.subr.mxu0 %v763
  %1765 = vmatpush1.msra.mxu0 %v762
  %1766 = vmatprep.subr.mxu0 %v765
  %1767 = vmatpush1.msra.mxu0 %v764
  %1768 = vmatprep.subr.mxu0 %v767
  %1769 = vmatpush1.msra.mxu0 %v766
  %1770 = vmatprep.subr.mxu0 %v769
  %1771 = vmatpush1.msra.mxu0 %v768
  %1772 = vmatprep.subr.mxu0 %v771
  %1773 = vmatpush1.msra.mxu0 %v770
  %1774 = vmatprep.subr.mxu0 %v773
  %1775 = vmatpush1.msra.mxu0 %v772
  %1776 = vmatprep.subr.mxu0 %v775
  %1777 = vmatpush1.msra.mxu0 %v774
  %1778 = vmatprep.subr.mxu0 %v777
  %1779 = vmatpush1.msra.mxu0 %v776
  %1780 = vmatprep.subr.mxu0 %v779
  %1781 = vmatpush1.msra.mxu0 %v778
  %1782 = vmatprep.subr.mxu0 %v781
  %1783 = vmatpush1.msra.mxu0 %v780
  %1784 = vmatprep.subr.mxu0 %v783
  %1785 = vmatpush1.msra.mxu0 %v782
  %1786 = vmatprep.subr.mxu0 %v785
  %1787 = vmatpush1.msra.mxu0 %v784
  %1788 = vmatprep.subr.mxu0 %v787
  %1789 = vmatpush1.msra.mxu0 %v786
  %1790 = vmatprep.subr.mxu0 %v789
  %1791 = vmatpush1.msra.mxu0 %v788
  %1792 = vmatprep.subr.mxu0 %v791
  %1793 = vmatpush1.msra.mxu0 %v790
  %1794 = vmatprep.subr.mxu0 %v793
  %1795 = vmatpush1.msra.mxu0 %v792
  %1796 = vmatprep.subr.mxu0 %v795
  %1797 = vmatpush1.msra.mxu0 %v794
  %1798 = vmatprep.subr.mxu0 %v797
  %1799 = vmatpush1.msra.mxu0 %v796
  %1800 = vmatprep.subr.mxu0 %v799
  %1801 = vmatpush1.msra.mxu0 %v798
  %1802 = vmatprep.subr.mxu0 %v801
  %1803 = vmatpush1.msra.mxu0 %v800
  %1804 = vmatprep.subr.mxu0 %v803
  %1805 = vmatpush1.msra.mxu0 %v802
  %1806 = vmatprep.subr.mxu0 %v805
  %1807 = vmatpush1.msra.mxu0 %v804
  %1808 = vmatprep.subr.mxu0 %v807
  %1809 = vmatpush1.msra.mxu0 %v806
  %1810 = vmatprep.subr.mxu0 %v809
  %1811 = vmatpush1.msra.mxu0 %v808
  %1812 = vmatprep.mubr.f32.mxu0 %v52
  %1813 = vmatmul.mubr.f32.gmra.mrb[0].mxu0 %v51
  %v1814 = vpop.f32.mrb[0].mxu0
  %v1815 = vadd.f32 %v1732, %v1814
  %v1816 = vpop.f32.mrb[0].mxu0
  %v1817 = vadd.f32 %v1734, %v1816
  %1818 = vmatprep.mubr.f32.mxu0 %v77
  %1819 = vmatmul.mubr.f32.gmra.mrb[0].mxu0 %v76
  %v1820 = vpop.f32.mrb[0].mxu0
  %v1821 = vadd.f32 %v1738, %v1820
  %v1822 = vpop.f32.mrb[0].mxu0
  %v1823 = vadd.f32 %v1740, %v1822
  %1824 = vmatprep.mubr.f32.mxu0 %v102
  %1825 = vmatmul.mubr.f32.gmra.mrb[0].mxu0 %v101
  %v1826 = vpop.f32.mrb[0].mxu0
  %v1827 = vadd.f32 %v1744, %v1826
  %v1828 = vpop.f32.mrb[0].mxu0
  %v1829 = vadd.f32 %v1746, %v1828
  %1830 = vdwg.mxu0
  %1831 = vmatprep.subr.mxu0 %v811
  %1832 = vmatpush1.msra.mxu0 %v810
  %1833 = vmatprep.subr.mxu0 %v813
  %1834 = vmatpush1.msra.mxu0 %v812
  %1835 = vmatprep.subr.mxu0 %v815
  %1836 = vmatpush1.msra.mxu0 %v814
  %1837 = vmatprep.subr.mxu0 %v817
  %1838 = vmatpush1.msra.mxu0 %v816
  %1839 = vmatprep.subr.mxu0 %v819
  %1840 = vmatpush1.msra.mxu0 %v818
  %1841 = vmatprep.subr.mxu0 %v821
  %1842 = vmatpush1.msra.mxu0 %v820
  %1843 = vmatprep.subr.mxu0 %v823
  %1844 = vmatpush1.msra.mxu0 %v822
  %1845 = vmatprep.subr.mxu0 %v825
  %1846 = vmatpush1.msra.mxu0 %v824
  %1847 = vmatprep.subr.mxu0 %v827
  %1848 = vmatpush1.msra.mxu0 %v826
  %1849 = vmatprep.subr.mxu0 %v829
  %1850 = vmatpush1.msra.mxu0 %v828
  %1851 = vmatprep.subr.mxu0 %v831
  %1852 = vmatpush1.msra.mxu0 %v830
  %1853 = vmatprep.subr.mxu0 %v833
  %1854 = vmatpush1.msra.mxu0 %v832
  %1855 = vmatprep.subr.mxu0 %v835
  %1856 = vmatpush1.msra.mxu0 %v834
  %1857 = vmatprep.subr.mxu0 %v837
  %1858 = vmatpush1.msra.mxu0 %v836
  %1859 = vmatprep.subr.mxu0 %v839
  %1860 = vmatpush1.msra.mxu0 %v838
  %1861 = vmatprep.subr.mxu0 %v841
  %1862 = vmatpush1.msra.mxu0 %v840
  %1863 = vmatprep.subr.mxu0 %v843
  %1864 = vmatpush1.msra.mxu0 %v842
  %1865 = vmatprep.subr.mxu0 %v845
  %1866 = vmatpush1.msra.mxu0 %v844
  %1867 = vmatprep.subr.mxu0 %v847
  %1868 = vmatpush1.msra.mxu0 %v846
  %1869 = vmatprep.subr.mxu0 %v849
  %1870 = vmatpush1.msra.mxu0 %v848
  %1871 = vmatprep.subr.mxu0 %v851
  %1872 = vmatpush1.msra.mxu0 %v850
  %1873 = vmatprep.subr.mxu0 %v853
  %1874 = vmatpush1.msra.mxu0 %v852
  %1875 = vmatprep.subr.mxu0 %v855
  %1876 = vmatpush1.msra.mxu0 %v854
  %1877 = vmatprep.subr.mxu0 %v857
  %1878 = vmatpush1.msra.mxu0 %v856
  %1879 = vmatprep.subr.mxu0 %v859
  %1880 = vmatpush1.msra.mxu0 %v858
  %1881 = vmatprep.subr.mxu0 %v861
  %1882 = vmatpush1.msra.mxu0 %v860
  %1883 = vmatprep.subr.mxu0 %v863
  %1884 = vmatpush1.msra.mxu0 %v862
  %1885 = vmatprep.subr.mxu0 %v865
  %1886 = vmatpush1.msra.mxu0 %v864
  %1887 = vmatprep.subr.mxu0 %v867
  %1888 = vmatpush1.msra.mxu0 %v866
  %1889 = vmatprep.subr.mxu0 %v869
  %1890 = vmatpush1.msra.mxu0 %v868
  %1891 = vmatprep.subr.mxu0 %v871
  %1892 = vmatpush1.msra.mxu0 %v870
  %1893 = vmatprep.subr.mxu0 %v873
  %1894 = vmatpush1.msra.mxu0 %v872
  %1895 = vmatprep.mubr.f32.mxu0 %v54
  %1896 = vmatmul.mubr.f32.gmra.mrb[0].mxu0 %v53
  %v1897 = vpop.f32.mrb[0].mxu0
  %v1898 = vadd.f32 %v1815, %v1897
  %v1899 = vpop.f32.mrb[0].mxu0
  %v1900 = vadd.f32 %v1817, %v1899
  %1901 = vmatprep.mubr.f32.mxu0 %v79
  %1902 = vmatmul.mubr.f32.gmra.mrb[0].mxu0 %v78
  %v1903 = vpop.f32.mrb[0].mxu0
  %v1904 = vadd.f32 %v1821, %v1903
  %v1905 = vpop.f32.mrb[0].mxu0
  %v1906 = vadd.f32 %v1823, %v1905
  %1907 = vmatprep.mubr.f32.mxu0 %v104
  %1908 = vmatmul.mubr.f32.gmra.mrb[0].mxu0 %v103
  %v1909 = vpop.f32.mrb[0].mxu0
  %v1910 = vadd.f32 %v1827, %v1909
  %v1911 = vpop.f32.mrb[0].mxu0
  %v1912 = vadd.f32 %v1829, %v1911
  %1913 = vdwg.mxu0
  %1914 = vmatprep.subr.mxu0 %v875
  %1915 = vmatpush1.msra.mxu0 %v874
  %1916 = vmatprep.subr.mxu0 %v877
  %1917 = vmatpush1.msra.mxu0 %v876
  %1918 = vmatprep.subr.mxu0 %v879
  %1919 = vmatpush1.msra.mxu0 %v878
  %1920 = vmatprep.subr.mxu0 %v881
  %1921 = vmatpush1.msra.mxu0 %v880
  %1922 = vmatprep.subr.mxu0 %v883
  %1923 = vmatpush1.msra.mxu0 %v882
  %1924 = vmatprep.subr.mxu0 %v885
  %1925 = vmatpush1.msra.mxu0 %v884
  %1926 = vmatprep.subr.mxu0 %v887
  %1927 = vmatpush1.msra.mxu0 %v886
  %1928 = vmatprep.subr.mxu0 %v889
  %1929 = vmatpush1.msra.mxu0 %v888
  %1930 = vmatprep.subr.mxu0 %v891
  %1931 = vmatpush1.msra.mxu0 %v890
  %1932 = vmatprep.subr.mxu0 %v893
  %1933 = vmatpush1.msra.mxu0 %v892
  %1934 = vmatprep.subr.mxu0 %v895
  %1935 = vmatpush1.msra.mxu0 %v894
  %1936 = vmatprep.subr.mxu0 %v897
  %1937 = vmatpush1.msra.mxu0 %v896
  %1938 = vmatprep.subr.mxu0 %v899
  %1939 = vmatpush1.msra.mxu0 %v898
  %1940 = vmatprep.subr.mxu0 %v901
  %1941 = vmatpush1.msra.mxu0 %v900
  %1942 = vmatprep.subr.mxu0 %v903
  %1943 = vmatpush1.msra.mxu0 %v902
  %1944 = vmatprep.subr.mxu0 %v905
  %1945 = vmatpush1.msra.mxu0 %v904
  %1946 = vmatprep.subr.mxu0 0.0
  %1947 = vmatpush1.msra.mxu0 0.0
  %1948 = vmatprep.subr.mxu0 0.0
  %1949 = vmatpush1.msra.mxu0 0.0
  %1950 = vmatprep.subr.mxu0 0.0
  %1951 = vmatpush1.msra.mxu0 0.0
  %1952 = vmatprep.subr.mxu0 0.0
  %1953 = vmatpush1.msra.mxu0 0.0
  %1954 = vmatprep.subr.mxu0 0.0
  %1955 = vmatpush1.msra.mxu0 0.0
  %1956 = vmatprep.subr.mxu0 0.0
  %1957 = vmatpush1.msra.mxu0 0.0
  %1958 = vmatprep.subr.mxu0 0.0
  %1959 = vmatpush1.msra.mxu0 0.0
  %1960 = vmatprep.subr.mxu0 0.0
  %1961 = vmatpush1.msra.mxu0 0.0
  %1962 = vmatprep.subr.mxu0 0.0
  %1963 = vmatpush1.msra.mxu0 0.0
  %1964 = vmatprep.subr.mxu0 0.0
  %1965 = vmatpush1.msra.mxu0 0.0
  %1966 = vmatprep.subr.mxu0 0.0
  %1967 = vmatpush1.msra.mxu0 0.0
  %1968 = vmatprep.subr.mxu0 0.0
  %1969 = vmatpush1.msra.mxu0 0.0
  %1970 = vmatprep.subr.mxu0 0.0
  %1971 = vmatpush1.msra.mxu0 0.0
  %1972 = vmatprep.subr.mxu0 0.0
  %1973 = vmatpush1.msra.mxu0 0.0
  %1974 = vmatprep.subr.mxu0 0.0
  %1975 = vmatpush1.msra.mxu0 0.0
  %1976 = vmatprep.subr.mxu0 0.0
  %1977 = vmatpush1.msra.mxu0 0.0
  %1978 = vmatprep.mubr.f32.mxu0 0.0
  %1979 = vmatmul.mubr.f32.gmra.mrb[0].mxu0 %v55
  %v1980 = vpop.f32.mrb[0].mxu0
  %v1981 = vadd.f32 %v1898, %v1980
  %v1982 = vpop.f32.mrb[0].mxu0
  %v1983 = vadd.f32 %v1900, %v1982
  %1984 = vmatprep.mubr.f32.mxu0 0.0
  %1985 = vmatmul.mubr.f32.gmra.mrb[0].mxu0 %v80
  %v1986 = vpop.f32.mrb[0].mxu0
  %v1987 = vadd.f32 %v1904, %v1986
  %v1988 = vpop.f32.mrb[0].mxu0
  %v1989 = vadd.f32 %v1906, %v1988
  %1990 = vmatprep.mubr.f32.mxu0 0.0
  %1991 = vmatmul.mubr.f32.gmra.mrb[0].mxu0 %v105
  %v1992 = vpop.f32.mrb[0].mxu0
  %v1993 = vadd.f32 %v1910, %v1992
  %v1994 = vpop.f32.mrb[0].mxu0
  %v1995 = vadd.f32 %v1912, %v1994
  %1996 = vdwg.mxu0
  %v1997 = vadd.f32 %v1981, %v1987
  %vm1998 = vcmask 1041408
  %v1999 = vsel %vm1998, %v1993, 0.0
  %v2000 = vadd.f32 %v1997, %v1999
  %v2001 = vrot.slane %v2000, 4
  %v2002 = vadd.f32 %v2000, %v2001
  %v2003 = vrot.slane %v2002, 2
  %v2004 = vadd.f32 %v2002, %v2003
  %v2005 = vrot.slane %v2004, 1
  %v2006 = vadd.f32 %v2004, %v2005
  %v2007 = vadd.f32 %v1983, %v1989
  %v2008 = vsel %vm1998, %v1995, 0.0
  %v2009 = vadd.f32 %v2007, %v2008
  %v2010 = vrot.slane %v2009, 4
  %v2011 = vadd.f32 %v2009, %v2010
  %v2012 = vrot.slane %v2011, 2
  %v2013 = vadd.f32 %v2011, %v2012
  %v2014 = vrot.slane %v2013, 1
  %v2015 = vadd.f32 %v2013, %v2014
  %v2016 = vmul.f32 %v2006, 0.055555556
  %v2017 = vmul.f32 %v2015, 0.055555556
  %v2018 = vmul.f32 %v1981, %v1981
  %v2019 = vmul.f32 %v1983, %v1983
  %v2020 = vmul.f32 %v1987, %v1987
  %v2021 = vmul.f32 %v1989, %v1989
  %v2022 = vmul.f32 %v1993, %v1993
  %v2023 = vmul.f32 %v1995, %v1995
  %v2024 = vadd.f32 %v2018, %v2020
  %v2025 = vsel %vm1998, %v2022, 0.0
  %v2026 = vadd.f32 %v2024, %v2025
  %v2027 = vrot.slane %v2026, 4
  %v2028 = vadd.f32 %v2026, %v2027
  %v2029 = vrot.slane %v2028, 2
  %v2030 = vadd.f32 %v2028, %v2029
  %v2031 = vrot.slane %v2030, 1
  %v2032 = vadd.f32 %v2030, %v2031
  %v2033 = vadd.f32 %v2019, %v2021
  %v2034 = vsel %vm1998, %v2023, 0.0
  %v2035 = vadd.f32 %v2033, %v2034
  %v2036 = vrot.slane %v2035, 4
  %v2037 = vadd.f32 %v2035, %v2036
  %v2038 = vrot.slane %v2037, 2
  %v2039 = vadd.f32 %v2037, %v2038
  %v2040 = vrot.slane %v2039, 1
  %v2041 = vadd.f32 %v2039, %v2040
  %v2042 = vmul.f32 %v2032, 0.055555556
  %v2043 = vmul.f32 %v2041, 0.055555556
  %v2044 = vmul.f32 %v2016, %v2016
  %v2045 = vmul.f32 %v2017, %v2017
  %v2046 = vsub.f32 %v2042, %v2044
  %v2047 = vsub.f32 %v2043, %v2045
  %v2048 = vld [vmem:[%s3] sm:$0x3]
  %v2049 = vsub.f32 %v1981, %v2016
  %v2050 = vsub.f32 %v1983, %v2017
  %v2051 = vsub.f32 %v1987, %v2016
  %v2052 = vsub.f32 %v1989, %v2017
  %v2053 = vsub.f32 %v1993, %v2016
  %v2054 = vsub.f32 %v1995, %v2017
  %v2056 = vlaneseq
  %v2057 = vshrl.u32 %v2056, 7
  %v2058 = vsub.s32 0, %v2057
  %v2059 = vrot.slane %v2048, %v2058
  %v2060 = vlaneseq
  %v2061 = vshrl.u32 %v2060, 7
  %v2062 = vsub.s32 1, %v2061
  %v2063 = vrot.slane %v2048, %v2062
  %v2066 = vmul.f32 %v2059, %v2049
  %v2067 = vmul.f32 %v2063, %v2050
  %v2068 = vmul.f32 %v2059, %v2051
  %v2069 = vmul.f32 %v2063, %v2052
  %v2070 = vmul.f32 %v2059, %v2053
  %v2071 = vmul.f32 %v2063, %v2054
  %v2072 = vadd.f32 %v2046, 1e-05
  %v2073 = vadd.f32 %v2047, 1e-05
  %v2074 = vrsqrt.pop %v2072
  %v2075 = vrsqrt.pop %v2073
  %v2076 = vmul.f32 %v2066, %v2074
  %v2077 = vmul.f32 %v2067, %v2075
  %v2078 = vmul.f32 %v2068, %v2074
  %v2079 = vmul.f32 %v2069, %v2075
  %v2080 = vmul.f32 %v2070, %v2074
  %v2081 = vmul.f32 %v2071, %v2075
  %v2082 = vld [vmem:[%s4] sm:$0x3]
  %v2084 = vlaneseq
  %v2085 = vshrl.u32 %v2084, 7
  %v2086 = vsub.s32 0, %v2085
  %v2087 = vrot.slane %v2082, %v2086
  %v2088 = vlaneseq
  %v2089 = vshrl.u32 %v2088, 7
  %v2090 = vsub.s32 1, %v2089
  %v2091 = vrot.slane %v2082, %v2090
  %v2094 = vadd.f32 %v2076, %v2087
  %v2095 = vadd.f32 %v2077, %v2091
  %v2096 = vadd.f32 %v2078, %v2087
  %v2097 = vadd.f32 %v2079, %v2091
  %v2098 = vadd.f32 %v2080, %v2087
  %v2099 = vadd.f32 %v2081, %v2091
  %v2100 = vmax.f32 %v2094, 0.0
  %v2101 = vmax.f32 %v2095, 0.0
  %v2102 = vmax.f32 %v2096, 0.0
  %v2103 = vmax.f32 %v2097, 0.0
  %v2104 = vmax.f32 %v2098, 0.0
  %v2105 = vmax.f32 %v2099, 0.0
  %v2106 = vld [vmem:[%s6] sm:$0x3]
  %v2107 = vld [vmem:[%s5] sm:$0xff]
  %v2108 = vld [vmem:[%s5 + $0x8] sm:$0xff]
  %v2109 = vld [vmem:[%s5 + $0x10] sm:$0xff]
  %v2110 = vld [vmem:[%s5 + $0x18] sm:$0xff]
  %v2111 = vld [vmem:[%s5 + $0x20] sm:$0x3]
  %v2112 = vld [vmem:[%s5 + $0x28] sm:$0x3]
  %v2113 = vmul.f32 %v2100, %v2107
  %v2114 = vmul.f32 %v2101, %v2108
  %v2115 = vmul.f32 %v2102, %v2109
  %v2116 = vmul.f32 %v2103, %v2110
  %v2117 = vmul.f32 %v2104, %v2111
  %v2118 = vmul.f32 %v2105, %v2112
  %vm2119 = vcmask 146432
  %v2121 = vsel %vm2119, %v2106, 0
  %v2124 = vsel %vm1998, %v2117, 0
  %v2127 = vsel %vm1998, %v2118, 0
  %2129 = vmatprep.subr.mxu0 %v2114
  %2130 = vmatpush1.msra.mxu0 %v2113
  %2131 = vmatprep.subr.mxu0 %v2116
  %2132 = vmatpush1.msra.mxu0 %v2115
  %2133 = vmatprep.subr.mxu0 %v2127
  %2134 = vmatpush1.msra.mxu0 %v2124
  %2135 = vmatprep.subr.mxu0 0.0
  %2136 = vmatpush1.msra.mxu0 0.0
  %2137 = vmatprep.subr.mxu0 0.0
  %2138 = vmatpush1.msra.mxu0 0.0
  %2139 = vmatprep.subr.mxu0 0.0
  %2140 = vmatpush1.msra.mxu0 0.0
  %2141 = vmatprep.subr.mxu0 0.0
  %2142 = vmatpush1.msra.mxu0 0.0
  %2143 = vmatprep.subr.mxu0 0.0
  %2144 = vmatpush1.msra.mxu0 0.0
  %2145 = vmatprep.subr.mxu0 0.0
  %2146 = vmatpush1.msra.mxu0 0.0
  %2147 = vmatprep.subr.mxu0 0.0
  %2148 = vmatpush1.msra.mxu0 0.0
  %2149 = vmatprep.subr.mxu0 0.0
  %2150 = vmatpush1.msra.mxu0 0.0
  %2151 = vmatprep.subr.mxu0 0.0
  %2152 = vmatpush1.msra.mxu0 0.0
  %2153 = vmatprep.subr.mxu0 0.0
  %2154 = vmatpush1.msra.mxu0 0.0
  %2155 = vmatprep.subr.mxu0 0.0
  %2156 = vmatpush1.msra.mxu0 0.0
  %2157 = vmatprep.subr.mxu0 0.0
  %2158 = vmatpush1.msra.mxu0 0.0
  %2159 = vmatprep.subr.mxu0 0.0
  %2160 = vmatpush1.msra.mxu0 0.0
  %2161 = vmatprep.subr.mxu0 0.0
  %2162 = vmatpush1.msra.mxu0 0.0
  %2163 = vmatprep.subr.mxu0 0.0
  %2164 = vmatpush1.msra.mxu0 0.0
  %2165 = vmatprep.subr.mxu0 0.0
  %2166 = vmatpush1.msra.mxu0 0.0
  %2167 = vmatprep.subr.mxu0 0.0
  %2168 = vmatpush1.msra.mxu0 0.0
  %2169 = vmatprep.subr.mxu0 0.0
  %2170 = vmatpush1.msra.mxu0 0.0
  %2171 = vmatprep.subr.mxu0 0.0
  %2172 = vmatpush1.msra.mxu0 0.0
  %2173 = vmatprep.subr.mxu0 0.0
  %2174 = vmatpush1.msra.mxu0 0.0
  %2175 = vmatprep.subr.mxu0 0.0
  %2176 = vmatpush1.msra.mxu0 0.0
  %2177 = vmatprep.subr.mxu0 0.0
  %2178 = vmatpush1.msra.mxu0 0.0
  %2179 = vmatprep.subr.mxu0 0.0
  %2180 = vmatpush1.msra.mxu0 0.0
  %2181 = vmatprep.subr.mxu0 0.0
  %2182 = vmatpush1.msra.mxu0 0.0
  %2183 = vmatprep.subr.mxu0 0.0
  %2184 = vmatpush1.msra.mxu0 0.0
  %2185 = vmatprep.subr.mxu0 0.0
  %2186 = vmatpush1.msra.mxu0 0.0
  %2187 = vmatprep.subr.mxu0 0.0
  %2188 = vmatpush1.msra.mxu0 0.0
  %2189 = vmatprep.subr.mxu0 0.0
  %2190 = vmatpush1.msra.mxu0 0.0
  %2191 = vmatprep.subr.mxu0 0.0
  %2192 = vmatpush1.msra.mxu0 0.0
  %2193 = vmatprep.mubr.f32.mxu0 0.0
  %2194 = vmatmul.mubr.f32.gmra.mrb[0].mxu0 %v2121
  %v2195 = vpop.f32.mrb[0].mxu0
  %v2196 = vadd.f32 0.0, %v2195
  %v2197 = vpop.f32.mrb[0].mxu0
  %v2198 = vadd.f32 0.0, %v2197
  %2199 = vdwg.mxu0
  %v2200 = vsel %vm1998, %v2196, 0.0
  %v2201 = vsel %vm1998, %v2198, 0.0
  %v2202 = vadd.f32 %v2200, %v2201
  %2203 = vadd.xlane.f32.xlu0 %v2202
  %v2204 = vpop.xlane.xlu0 %2203
  %v2205 = vld [vmem:[#allocation2] sm:$0x1]
  %v2207 = vlaneseq
  %v2208 = vshrl.u32 %v2207, 7
  %v2209 = vsub.s32 0, %v2208
  %v2210 = vrot.slane %v2205, %v2209
  %v2212 = vadd.f32 %v2204, %v2210
  %vm2213 = vcmask 1024
  %2214 = vst.msk [vmem:[%s8] sm:$0x3] %vm2213, %v2212
  // Predicated region
  $region34: #{discriminator_forward.7} parent=0 // pred_check
    _
  $region35: #{discriminator_forward.7} parent=0 // pred_check_branch
    %2216 = sbr.rel (0) target = $region37
  $region36: #{discriminator_forward.7} parent=0 // pred_region
    _
  $region37: #{discriminator_forward.7} parent=0 // pred_fallthru
    _
  // Predicated region
  $region38: #{discriminator_forward.7} parent=0 // pred_check
    _
  $region39: #{discriminator_forward.7} parent=0 // pred_check_branch
    %2218 = sbr.rel (0) target = $region41
  $region40: #{discriminator_forward.7} parent=0 // pred_region
    _
  $region41: #{discriminator_forward.7} parent=0 // pred_fallthru
    _

</llo_original>
